<compile_context>
chip_gen: v6e
topology: v6e:2x2x1
jax: 0.10.0
libtpu: 0.0.40
codegen_flags: <defaults>
</compile_context>

<pallas_src>
import math

import jax
import jax.numpy as jnp
import numpy as np
from jax import lax
from jax.experimental import pallas as pl
from jax.experimental.pallas import tpu as pltpu

VOCAB_SIZE = 32006
VOCAB_PAD = 32768           # padded to a multiple of the pooler tile width

# model hyper-parameters (small, consistent with the module's __init__)
NUM_LAYERS = 2
OUT_F = 32                  # out_features  (embedding / dense width)
LSTM_F = 32                 # lstm_features (hidden size)
BERT_H = 64                 # bert_hsize
MAX_LEN = 8


# ---------------------------------------------------------------------------
# Fused decoder-core kernel
#   dense1 -> LayerNorm -> 2-layer LSTM -> attention -> dense_out -> dense_feature
# ---------------------------------------------------------------------------
def _decoder_core_kernel(
    emb_ref,                                    # (N, OUT_F) f32, time-major rows
    kv_ref,                                     # (B, S, LSTM_F)
    h0_ref, c0_ref,                             # (L, B, H)
    d1_wt_ref, d1_b_ref,                        # (OUT_F, OUT_F), (1, OUT_F)
    ln_g_ref, ln_b_ref,                         # (1, OUT_F)
    wih0_ref, whh0_ref, b0_ref,                 # (OUT_F,4H), (H,4H), (1,4H)
    wih1_ref, whh1_ref, b1_ref,                 # (H,4H),    (H,4H), (1,4H)
    wqkv_ref, bqkv_ref,                         # (LSTM_F, 3*OUT_F), (1, 3*OUT_F)
    dout_wt_ref, dout_b_ref,
    dfeat_wt_ref, dfeat_b_ref,
    cntxt_ref,                                  # out: (N, OUT_F) batch-major
    fvs_ref,                                    # out: (B, T, BERT_H)
    hn_ref, cn_ref,                             # out: (L, B, H)
    o0_sc, dec_sc,                              # VMEM scratch: (N,H) time-major, (B,T,H)
):
    b, s, _ = kv_ref.shape
    t = fvs_ref.shape[1]
    h = h0_ref.shape[-1]
    n = b * t
    out_f = wqkv_ref.shape[1] // 3

    # ---- dense1 + LayerNorm (rows are time-major: row = t*B + b) ----
    x = jnp.dot(emb_ref[...], d1_wt_ref[...],
                preferred_element_type=jnp.float32) + d1_b_ref[...]
    mu = jnp.mean(x, axis=-1, keepdims=True)
    var = jnp.mean((x - mu) ** 2, axis=-1, keepdims=True)
    x = (x - mu) * lax.rsqrt(var + 1e-5) * ln_g_ref[...] + ln_b_ref[...]
    # TODO(synk): Dropout(p=0.2) elided (deterministic / eval behaviour).

    # ---- 2-layer LSTM: input projection hoisted, recurrence fully unrolled,
    #      per-timestep outputs stored directly into VMEM scratch (no
    #      stack/reshape relayout afterwards). ----
    def lstm_layer(gx, whh_t, h_in, c_in, store_fn):
        h_t, c_t = h_in, c_in
        for step in range(t):                   # static trip-count -> full unroll
            gates = gx[step * b:(step + 1) * b, :] + jnp.dot(
                h_t, whh_t, preferred_element_type=jnp.float32)
            sig = jax.nn.sigmoid(gates)         # one EUP pass over all 4 gates
            th = jnp.tanh(gates)
            i_g = sig[:, 0 * h:1 * h]
            f_g = sig[:, 1 * h:2 * h]
            g_g = th[:, 2 * h:3 * h]
            o_g = sig[:, 3 * h:4 * h]
            c_t = f_g * c_t + i_g * g_g
            h_t = o_g * jnp.tanh(c_t)
            store_fn(step, h_t)
        return h_t, c_t

    # layer 0: hoisted input projection for all timesteps at once (T*B, 4H)
    gx0 = jnp.dot(x, wih0_ref[...], preferred_element_type=jnp.float32) + b0_ref[...]

    def store0(step, h_t):                      # time-major scratch for layer-1 hoist
        o0_sc[step * b:(step + 1) * b, :] = h_t

    hn0, cn0 = lstm_layer(gx0, whh0_ref[...], h0_ref[0], c0_ref[0], store0)

    # layer 1
    gx1 = jnp.dot(o0_sc[...], wih1_ref[...],
                  preferred_element_type=jnp.float32) + b1_ref[...]

    def store1(step, h_t):                      # batch-major scratch (B, T, H)
        dec_sc[:, step:step + 1, :] = h_t.reshape(b, 1, h)

    hn1, cn1 = lstm_layer(gx1, whh1_ref[...], h0_ref[1], c0_ref[1], store1)

    hn_ref[0] = hn0
    hn_ref[1] = hn1
    cn_ref[0] = cn0
    cn_ref[1] = cn1

    # decoder outputs, batch-major: (B, T, H) -> (B*T, H) (contiguous merge)
    dec2d = dec_sc[...].reshape(n, h)
    kv2d = kv_ref[...].reshape(b * s, h)

    # ---- attention (assumed learned Q/K/V + scaled dot-product) ----
    # TODO(synk): build_attention() is not defined in the reference source;
    #             learned-projection SDPA with scale 1/sqrt(OUT_F) is assumed.
    # Single fused Q/K/V projection over the stacked [dec; kv] operand:
    # one MXU round-trip instead of three on this latency-bound chain.
    qkv_in = jnp.concatenate([dec2d, kv2d], axis=0)          # (N + B*S, LSTM_F)
    proj = jnp.dot(qkv_in, wqkv_ref[...],
                   preferred_element_type=jnp.float32) + bqkv_ref[...]
    q = proj[:n, 0:out_f].reshape(b, t, out_f)
    k = proj[n:, out_f:2 * out_f].reshape(b, s, out_f)
    v = proj[n:, 2 * out_f:3 * out_f].reshape(b, s, out_f)

    scale = 1.0 / math.sqrt(out_f)
    sc = jnp.einsum('bte,bse->bts', q, k,
                    preferred_element_type=jnp.float32) * scale
    sc = sc - jnp.max(sc, axis=-1, keepdims=True)
    p = jnp.exp(sc)
    p = p / jnp.sum(p, axis=-1, keepdims=True)               # exact softmax
    ctx = jnp.einsum('bts,bse->bte', p, v, preferred_element_type=jnp.float32)

    # ---- dense_out + dense_feature ----
    c2 = jnp.dot(ctx.reshape(n, out_f), dout_wt_ref[...],
                 preferred_element_type=jnp.float32) + dout_b_ref[...]
    fvs = jnp.dot(c2, dfeat_wt_ref[...],
                  preferred_element_type=jnp.float32) + dfeat_b_ref[...]

    cntxt_ref[...] = c2
    fvs_ref[...] = fvs.reshape(b, t, fvs.shape[-1])


def _decoder_core(params, emb_tm, key_value, h0, c0, seq_len):
    b, s, lf = key_value.shape
    n = emb_tm.shape[0]
    nl, _, hh = h0.shape

    def fs(shape):
        nd = len(shape)
        return pl.BlockSpec(shape, lambda i, _nd=nd: (0,) * _nd)

    in_specs = [
        fs((n, OUT_F)),                                         # gathered embeddings
        fs((b, s, lf)),                                         # key_value
        fs((nl, b, hh)), fs((nl, b, hh)),                       # h0, c0
        fs((OUT_F, OUT_F)), fs((1, OUT_F)),                     # dense1
        fs((1, OUT_F)), fs((1, OUT_F)),                         # layer_norm0
        fs((OUT_F, 4 * LSTM_F)), fs((LSTM_F, 4 * LSTM_F)), fs((1, 4 * LSTM_F)),
        fs((LSTM_F, 4 * LSTM_F)), fs((LSTM_F, 4 * LSTM_F)), fs((1, 4 * LSTM_F)),
        fs((LSTM_F, 3 * OUT_F)), fs((1, 3 * OUT_F)),            # fused q/k/v
        fs((OUT_F, OUT_F)), fs((1, OUT_F)),                     # dence_out
        fs((OUT_F, BERT_H)), fs((1, BERT_H)),                   # dence_feature
    ]
    out_specs = [
        fs((n, OUT_F)),
        fs((b, seq_len, BERT_H)),
        fs((nl, b, hh)),
        fs((nl, b, hh)),
    ]
    out_shape = (
        jax.ShapeDtypeStruct((n, OUT_F), jnp.float32),          # cntxt (for pooler)
        jax.ShapeDtypeStruct((b, seq_len, BERT_H), jnp.float32),# out_fvs
        jax.ShapeDtypeStruct((nl, b, hh), jnp.float32),         # hn
        jax.ShapeDtypeStruct((nl, b, hh), jnp.float32),         # cn
    )
    return pl.pallas_call(
        _decoder_core_kernel,
        out_shape=out_shape,
        grid=(1,),
        in_specs=in_specs,
        out_specs=out_specs,
        scratch_shapes=[pltpu.VMEM((n, LSTM_F), jnp.float32),           # layer-0 outs
                        pltpu.VMEM((b, seq_len, LSTM_F), jnp.float32)], # layer-1 outs
        compiler_params=pltpu.CompilerParams(dimension_semantics=("arbitrary",)),
    )(emb_tm, key_value, h0, c0,
      params["dense1_wt"], params["dense1_b"],
      params["ln0_g"], params["ln0_b"],
      params["lstm_wih0_t"], params["lstm_whh0_t"], params["lstm_b0"],
      params["lstm_wih1_t"], params["lstm_whh1_t"], params["lstm_b1"],
      params["attn_wqkv_t"], params["attn_bqkv"],
      params["dout_wt"], params["dout_b"],
      params["dfeat_wt"], params["dfeat_b"])


# ---------------------------------------------------------------------------
# Vocab projection (pooler): large lane-dense tiles over the 32k dim, bf16 weights
# ---------------------------------------------------------------------------
def _pooler_kernel(x_ref, wt_ref, b_ref, o_ref):
    x = x_ref[...].astype(wt_ref.dtype)                    # bf16 activations -> MXU
    o_ref[...] = (jnp.dot(x, wt_ref[...], preferred_element_type=jnp.float32)
                  + b_ref[...])


def _default_pooler_tile():
    # v7x has 2 TensorCores -> keep an even step count >= 2 (8192 -> 4 steps,
    # 2 per TC).  Single-TC chips (v5e/v6e) prefer fewer, larger steps
    # (16384 -> 2 steps) to cut ~0.35 us/step grid overhead while keeping the
    # weight DMA pipelined.  VMEM stays far under every generation's limit.
    try:
        kind = jax.devices()[0].device_kind.lower()
    except Exception:
        return 8192
    if "v7" in kind:
        return 8192
    return 16384


POOLER_TILE = _default_pooler_tile()


def _pooler_weight_spec(k, tile_out, steps):
    idx = lambda j: (0, j)
    # Deeper buffering on the only large streamed operand, only worthwhile
    # when there are >= 4 grid steps.  Fall back gracefully if this JAX
    # version does not support pipeline_mode.
    if steps >= 4 and hasattr(pl, "Buffered"):
        try:
            return pl.BlockSpec((k, tile_out), idx, pipeline_mode=pl.Buffered(3))
        except TypeError:
            pass
    return pl.BlockSpec((k, tile_out), idx)


def pooler_projection(x2d, wt_pad, b_pad, tile_out=POOLER_TILE):
    n, k = x2d.shape
    vpad = wt_pad.shape[1]
    steps = vpad // tile_out
    # Output has the true vocab width; only the final tile's out-of-bounds
    # columns (>= VOCAB_SIZE) are masked on writeback -- no post-kernel slice.
    return pl.pallas_call(
        _pooler_kernel,
        out_shape=jax.ShapeDtypeStruct((n, VOCAB_SIZE), jnp.float32),
        grid=(steps,),
        in_specs=[pl.BlockSpec((n, k), lambda j: (0, 0)),
                  _pooler_weight_spec(k, tile_out, steps),
                  pl.BlockSpec((1, tile_out), lambda j: (0, j))],
        out_specs=pl.BlockSpec((n, tile_out), lambda j: (0, j)),
        compiler_params=pltpu.CompilerParams(dimension_semantics=("parallel",)),
    )(x2d, wt_pad, b_pad)


# ---------------------------------------------------------------------------
# Parameters: pre-transposed / pre-padded / pre-fused at init
# ---------------------------------------------------------------------------
def init_params(key):
    keys = iter(jax.random.split(key, 64))

    def unif(shape, fan_in):
        bound = 1.0 / math.sqrt(fan_in)
        return jax.random.uniform(next(keys), shape, jnp.float32, -bound, bound)

    p = {}
    p["embedding"] = jax.random.normal(next(keys), (VOCAB_SIZE, OUT_F), jnp.float32)
    p["dense1_wt"] = unif((OUT_F, OUT_F), OUT_F).T                    # (in, out)
    p["dense1_b"] = unif((OUT_F,), OUT_F).reshape(1, OUT_F)
    p["ln0_g"] = jnp.ones((1, OUT_F), jnp.float32)
    p["ln0_b"] = jnp.zeros((1, OUT_F), jnp.float32)
    for l in range(NUM_LAYERS):
        in_f = OUT_F if l == 0 else LSTM_F
        p[f"lstm_wih{l}_t"] = unif((4 * LSTM_F, in_f), LSTM_F).T      # (in, 4H)
        p[f"lstm_whh{l}_t"] = unif((4 * LSTM_F, LSTM_F), LSTM_F).T    # (H, 4H)
        bih = unif((4 * LSTM_F,), LSTM_F)
        bhh = unif((4 * LSTM_F,), LSTM_F)
        p[f"lstm_b{l}"] = (bih + bhh).reshape(1, 4 * LSTM_F)
    # attention: assumed learned Q/K/V projections (build_attention undefined),
    # fused into a single (LSTM_F, 3*OUT_F) weight for one MXU round-trip.
    wq_t = unif((OUT_F, LSTM_F), LSTM_F).T
    bq = unif((OUT_F,), LSTM_F).reshape(1, OUT_F)
    wk_t = unif((OUT_F, LSTM_F), LSTM_F).T
    bk = unif((OUT_F,), LSTM_F).reshape(1, OUT_F)
    wv_t = unif((OUT_F, LSTM_F), LSTM_F).T
    bv = unif((OUT_F,), LSTM_F).reshape(1, OUT_F)
    p["attn_wqkv_t"] = jnp.concatenate([wq_t, wk_t, wv_t], axis=1)    # (H, 3*OUT_F)
    p["attn_bqkv"] = jnp.concatenate([bq, bk, bv], axis=1)            # (1, 3*OUT_F)
    p["dout_wt"] = unif((OUT_F, OUT_F), OUT_F).T
    p["dout_b"] = unif((OUT_F,), OUT_F).reshape(1, OUT_F)
    p["dfeat_wt"] = unif((BERT_H, OUT_F), OUT_F).T                    # (OUT_F, BERT_H)
    p["dfeat_b"] = unif((BERT_H,), OUT_F).reshape(1, BERT_H)
    # pooler: pre-transposed, padded to VOCAB_PAD, stored bf16 (HBM-BW bound)
    pooler_w = unif((VOCAB_SIZE, OUT_F), OUT_F)
    pooler_b = unif((VOCAB_SIZE,), OUT_F)
    wt_pad = jnp.zeros((OUT_F, VOCAB_PAD), jnp.float32).at[:, :VOCAB_SIZE].set(pooler_w.T)
    p["pooler_wt_pad"] = wt_pad.astype(jnp.bfloat16)
    p["pooler_b_pad"] = jnp.zeros((1, VOCAB_PAD), jnp.float32).at[:, :VOCAB_SIZE].set(
        pooler_b.reshape(1, VOCAB_SIZE))
    return p


# ---------------------------------------------------------------------------
# Decoder.train_forward
# ---------------------------------------------------------------------------
@jax.jit
def decoder_train_forward(params, key_value, h, c, model_input):
    b, t = model_input.shape
    # time-major flatten of token ids (row = t*B + b) -> contiguous per-step
    # slices inside the fused LSTM recurrence.
    ids_tm = model_input.astype(jnp.int32).transpose(1, 0).reshape(-1)
    # embedding gather via XLA (tiny; fuses with the transpose and the result
    # is prefetched by the Pallas prologue as a normal VMEM operand).
    emb_tm = jnp.take(params["embedding"], ids_tm, axis=0)
    cntxt2d, out_fvs, hn, cn = _decoder_core(params, emb_tm, key_value, h, c, t)
    logits = pooler_projection(
        cntxt2d, params["pooler_wt_pad"], params["pooler_b_pad"]
    ).reshape(b, t, VOCAB_SIZE)
    return logits, (hn, cn), out_fvs


# ---------------------------------------------------------------------------
if __name__ == "__main__":
    key = jax.random.PRNGKey(0)
    k_params, k_kv, k_h, k_c, k_resp = jax.random.split(key, 5)

    params = init_params(k_params)

    B, S_ENC = 2, 8
    # encoder outputs / states
    key_value = jax.random.normal(k_kv, (B, S_ENC, LSTM_F), jnp.float32)
    h0 = jax.random.normal(k_h, (NUM_LAYERS, B, LSTM_F), jnp.float32)
    c0 = jax.random.normal(k_c, (NUM_LAYERS, B, LSTM_F), jnp.float32)

    # response: variable-length id sequences; pad to max length (pack/pad glue
    # done host-side; the reference LSTM also runs on the dense padded tensor).
    resp_ids = np.array(jax.random.randint(k_resp, (B, MAX_LEN), 0, VOCAB_SIZE))
    lengths = [MAX_LEN, 5]
    model_input = np.zeros((B, MAX_LEN), dtype=np.int32)
    for i, L in enumerate(lengths):
        model_input[i, :L] = resp_ids[i, :L]
    model_input = jnp.asarray(model_input)

    logits, (hn, cn), out_fvs = decoder_train_forward(
        params, key_value, h0, c0, model_input)

    jax.block_until_ready((logits, hn, cn, out_fvs))
    assert logits.shape == (B, MAX_LEN, VOCAB_SIZE)
    assert hn.shape == (NUM_LAYERS, B, LSTM_F) and cn.shape == (NUM_LAYERS, B, LSTM_F)
    assert out_fvs.shape == (B, MAX_LEN, BERT_H)
    assert bool(jnp.all(jnp.isfinite(logits))) and bool(jnp.all(jnp.isfinite(out_fvs)))
    assert bool(jnp.all(jnp.isfinite(hn))) and bool(jnp.all(jnp.isfinite(cn)))
    print("KERNEL_OK")
</pallas_src>

<mosaic_0001>
module attributes {stable_mosaic.version = 11 : i64} {
  func.func @_pooler_kernel(%arg0: i32, %arg1: memref<16x32xf32, #tpu.memory_space<vmem>>, %arg2: memref<32x16384xbf16, #tpu.memory_space<vmem>>, %arg3: memref<1x16384xf32, #tpu.memory_space<vmem>>, %arg4: memref<16x16384xf32, #tpu.memory_space<vmem>>) attributes {dimension_semantics = [#tpu.dimension_semantics<parallel>], iteration_bounds = array<i64: 2>, scalar_prefetch = 0 : i64, scratch_operands = 0 : i64, tpu.core_type = #tpu.core_type<tc>, window_params = [{pipeline_mode = #tpu.pipeline_mode<synchronous>, transform_indices = @transform_0, window_bounds = array<i64: 16, 32>}, {transform_indices = @transform_1, window_bounds = array<i64: 32, 16384>}, {transform_indices = @transform_2, window_bounds = array<i64: 1, 16384>}, {transform_indices = @transform_3, window_bounds = array<i64: 16, 16384>}]} {
    %c0 = arith.constant 0 : index
    %c0_0 = arith.constant 0 : index
    %0 = vector.load %arg1[%c0, %c0_0] : memref<16x32xf32, #tpu.memory_space<vmem>>, vector<16x32xf32>
    %1 = arith.truncf %0 : vector<16x32xf32> to vector<16x32xbf16>
    %c0_1 = arith.constant 0 : index
    %c0_2 = arith.constant 0 : index
    %2 = vector.load %arg2[%c0_1, %c0_2] : memref<32x16384xbf16, #tpu.memory_space<vmem>>, vector<32x16384xbf16>
    %cst = arith.constant dense<0.000000e+00> : vector<16x16384xf32>
    %3 = tpu.matmul %1, %2, %cst {dimension_numbers = #tpu.dot_dimension_numbers<[1], [0], [0], [1], [0, 0, 1, 1], [], []>} : vector<16x32xbf16>, vector<32x16384xbf16>, vector<16x16384xf32> -> vector<16x16384xf32>
    %c0_3 = arith.constant 0 : index
    %c0_4 = arith.constant 0 : index
    %4 = vector.load %arg3[%c0_3, %c0_4] : memref<1x16384xf32, #tpu.memory_space<vmem>>, vector<1x16384xf32>
    %5 = vector.broadcast %4 : vector<1x16384xf32> to vector<16x16384xf32>
    %6 = arith.addf %3, %5 : vector<16x16384xf32>
    %c0_5 = arith.constant 0 : index
    %c0_6 = arith.constant 0 : index
    %7 = vector.load %arg4[%c0_5, %c0_6] : memref<16x16384xf32, #tpu.memory_space<vmem>>, vector<16x16384xf32>
    tpu.vector_store %arg4[%c0_5, %c0_6], %6 {strides = array<i32>} : memref<16x16384xf32, #tpu.memory_space<vmem>>, vector<16x16384xf32>,
    return
  }
  func.func @transform_0(%arg0: i32) -> (i32, i32) {
    %c0_i32 = arith.constant 0 : i32
    %c0_i32_0 = arith.constant 0 : i32
    %c0_i32_1 = arith.constant 0 : i32
    return %c0_i32, %c0_i32_0 : i32, i32
  }
  func.func @transform_1(%arg0: i32) -> (i32, i32) {
    %c0_i32 = arith.constant 0 : i32
    %c0_i32_0 = arith.constant 0 : i32
    return %c0_i32, %arg0 : i32, i32
  }
  func.func @transform_2(%arg0: i32) -> (i32, i32) {
    %c0_i32 = arith.constant 0 : i32
    %c0_i32_0 = arith.constant 0 : i32
    return %c0_i32, %arg0 : i32, i32
  }
  func.func @transform_3(%arg0: i32) -> (i32, i32) {
    %c0_i32 = arith.constant 0 : i32
    %c0_i32_0 = arith.constant 0 : i32
    return %c0_i32, %arg0 : i32, i32
  }
}

module attributes {stable_mosaic.version = 11 : i64} {
  func.func @_decoder_core_kernel(%arg0: i32, %arg1: memref<16x32xf32, #tpu.memory_space<vmem>>, %arg2: memref<2x8x32xf32, #tpu.memory_space<vmem>>, %arg3: memref<2x2x32xf32, #tpu.memory_space<vmem>>, %arg4: memref<2x2x32xf32, #tpu.memory_space<vmem>>, %arg5: memref<32x32xf32, #tpu.memory_space<vmem>>, %arg6: memref<1x32xf32, #tpu.memory_space<vmem>>, %arg7: memref<1x32xf32, #tpu.memory_space<vmem>>, %arg8: memref<1x32xf32, #tpu.memory_space<vmem>>, %arg9: memref<32x128xf32, #tpu.memory_space<vmem>>, %arg10: memref<32x128xf32, #tpu.memory_space<vmem>>, %arg11: memref<1x128xf32, #tpu.memory_space<vmem>>, %arg12: memref<32x128xf32, #tpu.memory_space<vmem>>, %arg13: memref<32x128xf32, #tpu.memory_space<vmem>>, %arg14: memref<1x128xf32, #tpu.memory_space<vmem>>, %arg15: memref<32x96xf32, #tpu.memory_space<vmem>>, %arg16: memref<1x96xf32, #tpu.memory_space<vmem>>, %arg17: memref<32x32xf32, #tpu.memory_space<vmem>>, %arg18: memref<1x32xf32, #tpu.memory_space<vmem>>, %arg19: memref<32x64xf32, #tpu.memory_space<vmem>>, %arg20: memref<1x64xf32, #tpu.memory_space<vmem>>, %arg21: memref<16x32xf32, #tpu.memory_space<vmem>>, %arg22: memref<2x8x64xf32, #tpu.memory_space<vmem>>, %arg23: memref<2x2x32xf32, #tpu.memory_space<vmem>>, %arg24: memref<2x2x32xf32, #tpu.memory_space<vmem>>, %arg25: memref<16x32xf32, #tpu.memory_space<vmem>>, %arg26: memref<2x8x32xf32, #tpu.memory_space<vmem>>) attributes {dimension_semantics = [#tpu.dimension_semantics<arbitrary>], iteration_bounds = array<i64: 1>, scalar_prefetch = 0 : i64, scratch_operands = 2 : i64, tpu.core_type = #tpu.core_type<tc>, window_params = [{pipeline_mode = #tpu.pipeline_mode<synchronous>, transform_indices = @transform_0, window_bounds = array<i64: 16, 32>}, {pipeline_mode = #tpu.pipeline_mode<synchronous>, transform_indices = @transform_1, window_bounds = array<i64: 2, 8, 32>}, {pipeline_mode = #tpu.pipeline_mode<synchronous>, transform_indices = @transform_2, window_bounds = array<i64: 2, 2, 32>}, {pipeline_mode = #tpu.pipeline_mode<synchronous>, transform_indices = @transform_3, window_bounds = array<i64: 2, 2, 32>}, {pipeline_mode = #tpu.pipeline_mode<synchronous>, transform_indices = @transform_4, window_bounds = array<i64: 32, 32>}, {pipeline_mode = #tpu.pipeline_mode<synchronous>, transform_indices = @transform_5, window_bounds = array<i64: 1, 32>}, {pipeline_mode = #tpu.pipeline_mode<synchronous>, transform_indices = @transform_6, window_bounds = array<i64: 1, 32>}, {pipeline_mode = #tpu.pipeline_mode<synchronous>, transform_indices = @transform_7, window_bounds = array<i64: 1, 32>}, {pipeline_mode = #tpu.pipeline_mode<synchronous>, transform_indices = @transform_8, window_bounds = array<i64: 32, 128>}, {pipeline_mode = #tpu.pipeline_mode<synchronous>, transform_indices = @transform_9, window_bounds = array<i64: 32, 128>}, {pipeline_mode = #tpu.pipeline_mode<synchronous>, transform_indices = @transform_10, window_bounds = array<i64: 1, 128>}, {pipeline_mode = #tpu.pipeline_mode<synchronous>, transform_indices = @transform_11, window_bounds = array<i64: 32, 128>}, {pipeline_mode = #tpu.pipeline_mode<synchronous>, transform_indices = @transform_12, window_bounds = array<i64: 32, 128>}, {pipeline_mode = #tpu.pipeline_mode<synchronous>, transform_indices = @transform_13, window_bounds = array<i64: 1, 128>}, {pipeline_mode = #tpu.pipeline_mode<synchronous>, transform_indices = @transform_14, window_bounds = array<i64: 32, 96>}, {pipeline_mode = #tpu.pipeline_mode<synchronous>, transform_indices = @transform_15, window_bounds = array<i64: 1, 96>}, {pipeline_mode = #tpu.pipeline_mode<synchronous>, transform_indices = @transform_16, window_bounds = array<i64: 32, 32>}, {pipeline_mode = #tpu.pipeline_mode<synchronous>, transform_indices = @transform_17, window_bounds = array<i64: 1, 32>}, {pipeline_mode = #tpu.pipeline_mode<synchronous>, transform_indices = @transform_18, window_bounds = array<i64: 32, 64>}, {pipeline_mode = #tpu.pipeline_mode<synchronous>, transform_indices = @transform_19, window_bounds = array<i64: 1, 64>}, {pipeline_mode = #tpu.pipeline_mode<synchronous>, transform_indices = @transform_20, window_bounds = array<i64: 16, 32>}, {pipeline_mode = #tpu.pipeline_mode<synchronous>, transform_indices = @transform_21, window_bounds = array<i64: 2, 8, 64>}, {pipeline_mode = #tpu.pipeline_mode<synchronous>, transform_indices = @transform_22, window_bounds = array<i64: 2, 2, 32>}, {pipeline_mode = #tpu.pipeline_mode<synchronous>, transform_indices = @transform_23, window_bounds = array<i64: 2, 2, 32>}]} {
    %c0 = arith.constant 0 : index
    %c0_0 = arith.constant 0 : index
    %0 = vector.load %arg1[%c0, %c0_0] : memref<16x32xf32, #tpu.memory_space<vmem>>, vector<16x32xf32>
    %c0_1 = arith.constant 0 : index
    %c0_2 = arith.constant 0 : index
    %1 = vector.load %arg5[%c0_1, %c0_2] : memref<32x32xf32, #tpu.memory_space<vmem>>, vector<32x32xf32>
    %cst = arith.constant dense<0.000000e+00> : vector<16x32xf32>
    %2 = tpu.matmul %0, %1, %cst {dimension_numbers = #tpu.dot_dimension_numbers<[1], [0], [0], [1], [0, 0, 1, 1], [], []>} : vector<16x32xf32>, vector<32x32xf32>, vector<16x32xf32> -> vector<16x32xf32>
    %c0_3 = arith.constant 0 : index
    %c0_4 = arith.constant 0 : index
    %3 = vector.load %arg6[%c0_3, %c0_4] : memref<1x32xf32, #tpu.memory_space<vmem>>, vector<1x32xf32>
    %4 = vector.broadcast %3 : vector<1x32xf32> to vector<16x32xf32>
    %5 = arith.addf %2, %4 : vector<16x32xf32>
    %cst_5 = arith.constant dense<0.000000e+00> : vector<16xf32>
    %6 = vector.multi_reduction <add>, %5, %cst_5 [1] : vector<16x32xf32> to vector<16xf32>
    %7 = vector.shape_cast %6 : vector<16xf32> to vector<16x1xf32>
    %cst_6 = arith.constant 3.200000e+01 : f32
    %8 = vector.broadcast %cst_6 : f32 to vector<16x1xf32>
    %9 = arith.divf %7, %8 : vector<16x1xf32>
    %10 = vector.broadcast %9 : vector<16x1xf32> to vector<16x32xf32>
    %11 = arith.subf %5, %10 : vector<16x32xf32>
    %12 = arith.mulf %11, %11 : vector<16x32xf32>
    %cst_7 = arith.constant dense<0.000000e+00> : vector<16xf32>
    %13 = vector.multi_reduction <add>, %12, %cst_7 [1] : vector<16x32xf32> to vector<16xf32>
    %14 = vector.shape_cast %13 : vector<16xf32> to vector<16x1xf32>
    %cst_8 = arith.constant 3.200000e+01 : f32
    %15 = vector.broadcast %cst_8 : f32 to vector<16x1xf32>
    %16 = arith.divf %14, %15 : vector<16x1xf32>
    %17 = vector.broadcast %9 : vector<16x1xf32> to vector<16x32xf32>
    %18 = arith.subf %5, %17 : vector<16x32xf32>
    %cst_9 = arith.constant 9.99999974E-6 : f32
    %19 = vector.broadcast %cst_9 : f32 to vector<16x1xf32>
    %20 = arith.addf %16, %19 : vector<16x1xf32>
    %21 = math.rsqrt %20 : vector<16x1xf32>
    %22 = vector.broadcast %21 : vector<16x1xf32> to vector<16x32xf32>
    %23 = arith.mulf %18, %22 : vector<16x32xf32>
    %c0_10 = arith.constant 0 : index
    %c0_11 = arith.constant 0 : index
    %24 = vector.load %arg7[%c0_10, %c0_11] : memref<1x32xf32, #tpu.memory_space<vmem>>, vector<1x32xf32>
    %25 = vector.broadcast %24 : vector<1x32xf32> to vector<16x32xf32>
    %26 = arith.mulf %23, %25 : vector<16x32xf32>
    %c0_12 = arith.constant 0 : index
    %c0_13 = arith.constant 0 : index
    %27 = vector.load %arg8[%c0_12, %c0_13] : memref<1x32xf32, #tpu.memory_space<vmem>>, vector<1x32xf32>
    %28 = vector.broadcast %27 : vector<1x32xf32> to vector<16x32xf32>
    %29 = arith.addf %26, %28 : vector<16x32xf32>
    %c0_14 = arith.constant 0 : index
    %c0_15 = arith.constant 0 : index
    %30 = vector.load %arg9[%c0_14, %c0_15] : memref<32x128xf32, #tpu.memory_space<vmem>>, vector<32x128xf32>
    %cst_16 = arith.constant dense<0.000000e+00> : vector<16x128xf32>
    %31 = tpu.matmul %29, %30, %cst_16 {dimension_numbers = #tpu.dot_dimension_numbers<[1], [0], [0], [1], [0, 0, 1, 1], [], []>} : vector<16x32xf32>, vector<32x128xf32>, vector<16x128xf32> -> vector<16x128xf32>
    %c0_17 = arith.constant 0 : index
    %c0_18 = arith.constant 0 : index
    %32 = vector.load %arg11[%c0_17, %c0_18] : memref<1x128xf32, #tpu.memory_space<vmem>>, vector<1x128xf32>
    %33 = vector.broadcast %32 : vector<1x128xf32> to vector<16x128xf32>
    %34 = arith.addf %31, %33 : vector<16x128xf32>
    %c0_19 = arith.constant 0 : index
    %c0_20 = arith.constant 0 : index
    %35 = vector.load %arg10[%c0_19, %c0_20] : memref<32x128xf32, #tpu.memory_space<vmem>>, vector<32x128xf32>
    %c0_21 = arith.constant 0 : index
    %c0_22 = arith.constant 0 : index
    %c0_23 = arith.constant 0 : index
    %36 = vector.load %arg3[%c0_21, %c0_22, %c0_23] : memref<2x2x32xf32, #tpu.memory_space<vmem>>, vector<1x2x32xf32>
    %37 = vector.shape_cast %36 : vector<1x2x32xf32> to vector<2x32xf32>
    %c0_24 = arith.constant 0 : index
    %c0_25 = arith.constant 0 : index
    %c0_26 = arith.constant 0 : index
    %38 = vector.load %arg4[%c0_24, %c0_25, %c0_26] : memref<2x2x32xf32, #tpu.memory_space<vmem>>, vector<1x2x32xf32>
    %39 = vector.shape_cast %38 : vector<1x2x32xf32> to vector<2x32xf32>
    %40 = vector.extract_strided_slice %34 {offsets = [0, 0], sizes = [2, 128], strides = [1, 1]} : vector<16x128xf32> to vector<2x128xf32>
    %cst_27 = arith.constant dense<0.000000e+00> : vector<2x128xf32>
    %41 = tpu.matmul %37, %35, %cst_27 {dimension_numbers = #tpu.dot_dimension_numbers<[1], [0], [0], [1], [0, 0, 1, 1], [], []>} : vector<2x32xf32>, vector<32x128xf32>, vector<2x128xf32> -> vector<2x128xf32>
    %42 = arith.addf %40, %41 : vector<2x128xf32>
    %43 = arith.negf %42 : vector<2x128xf32>
    %44 = math.exp %43 : vector<2x128xf32>
    %cst_28 = arith.constant 1.000000e+00 : f32
    %45 = vector.broadcast %cst_28 : f32 to vector<2x128xf32>
    %46 = arith.addf %45, %44 : vector<2x128xf32>
    %47 = arith.divf %45, %46 : vector<2x128xf32>
    %48 = math.tanh %42 : vector<2x128xf32>
    %49 = vector.extract_strided_slice %47 {offsets = [0, 0], sizes = [2, 32], strides = [1, 1]} : vector<2x128xf32> to vector<2x32xf32>
    %50 = vector.extract_strided_slice %47 {offsets = [0, 32], sizes = [2, 32], strides = [1, 1]} : vector<2x128xf32> to vector<2x32xf32>
    %51 = vector.extract_strided_slice %48 {offsets = [0, 64], sizes = [2, 32], strides = [1, 1]} : vector<2x128xf32> to vector<2x32xf32>
    %52 = vector.extract_strided_slice %47 {offsets = [0, 96], sizes = [2, 32], strides = [1, 1]} : vector<2x128xf32> to vector<2x32xf32>
    %53 = arith.mulf %50, %39 : vector<2x32xf32>
    %54 = arith.mulf %49, %51 : vector<2x32xf32>
    %55 = arith.addf %53, %54 : vector<2x32xf32>
    %56 = math.tanh %55 : vector<2x32xf32>
    %57 = arith.mulf %52, %56 : vector<2x32xf32>
    %c0_29 = arith.constant 0 : index
    %c0_30 = arith.constant 0 : index
    %58 = vector.load %arg25[%c0_29, %c0_30] : memref<16x32xf32, #tpu.memory_space<vmem>>, vector<2x32xf32>
    tpu.vector_store %arg25[%c0_29, %c0_30], %57 {strides = array<i32>} : memref<16x32xf32, #tpu.memory_space<vmem>>, vector<2x32xf32>,
    %59 = vector.extract_strided_slice %34 {offsets = [2, 0], sizes = [2, 128], strides = [1, 1]} : vector<16x128xf32> to vector<2x128xf32>
    %cst_31 = arith.constant dense<0.000000e+00> : vector<2x128xf32>
    %60 = tpu.matmul %57, %35, %cst_31 {dimension_numbers = #tpu.dot_dimension_numbers<[1], [0], [0], [1], [0, 0, 1, 1], [], []>} : vector<2x32xf32>, vector<32x128xf32>, vector<2x128xf32> -> vector<2x128xf32>
    %61 = arith.addf %59, %60 : vector<2x128xf32>
    %62 = arith.negf %61 : vector<2x128xf32>
    %63 = math.exp %62 : vector<2x128xf32>
    %cst_32 = arith.constant 1.000000e+00 : f32
    %64 = vector.broadcast %cst_32 : f32 to vector<2x128xf32>
    %65 = arith.addf %64, %63 : vector<2x128xf32>
    %66 = arith.divf %64, %65 : vector<2x128xf32>
    %67 = math.tanh %61 : vector<2x128xf32>
    %68 = vector.extract_strided_slice %66 {offsets = [0, 0], sizes = [2, 32], strides = [1, 1]} : vector<2x128xf32> to vector<2x32xf32>
    %69 = vector.extract_strided_slice %66 {offsets = [0, 32], sizes = [2, 32], strides = [1, 1]} : vector<2x128xf32> to vector<2x32xf32>
    %70 = vector.extract_strided_slice %67 {offsets = [0, 64], sizes = [2, 32], strides = [1, 1]} : vector<2x128xf32> to vector<2x32xf32>
    %71 = vector.extract_strided_slice %66 {offsets = [0, 96], sizes = [2, 32], strides = [1, 1]} : vector<2x128xf32> to vector<2x32xf32>
    %72 = arith.mulf %69, %55 : vector<2x32xf32>
    %73 = arith.mulf %68, %70 : vector<2x32xf32>
    %74 = arith.addf %72, %73 : vector<2x32xf32>
    %75 = math.tanh %74 : vector<2x32xf32>
    %76 = arith.mulf %71, %75 : vector<2x32xf32>
    %c2 = arith.constant 2 : index
    %c0_33 = arith.constant 0 : index
    %77 = vector.load %arg25[%c2, %c0_33] : memref<16x32xf32, #tpu.memory_space<vmem>>, vector<2x32xf32>
    tpu.vector_store %arg25[%c2, %c0_33], %76 {strides = array<i32>} : memref<16x32xf32, #tpu.memory_space<vmem>>, vector<2x32xf32>,
    %78 = vector.extract_strided_slice %34 {offsets = [4, 0], sizes = [2, 128], strides = [1, 1]} : vector<16x128xf32> to vector<2x128xf32>
    %cst_34 = arith.constant dense<0.000000e+00> : vector<2x128xf32>
    %79 = tpu.matmul %76, %35, %cst_34 {dimension_numbers = #tpu.dot_dimension_numbers<[1], [0], [0], [1], [0, 0, 1, 1], [], []>} : vector<2x32xf32>, vector<32x128xf32>, vector<2x128xf32> -> vector<2x128xf32>
    %80 = arith.addf %78, %79 : vector<2x128xf32>
    %81 = arith.negf %80 : vector<2x128xf32>
    %82 = math.exp %81 : vector<2x128xf32>
    %cst_35 = arith.constant 1.000000e+00 : f32
    %83 = vector.broadcast %cst_35 : f32 to vector<2x128xf32>
    %84 = arith.addf %83, %82 : vector<2x128xf32>
    %85 = arith.divf %83, %84 : vector<2x128xf32>
    %86 = math.tanh %80 : vector<2x128xf32>
    %87 = vector.extract_strided_slice %85 {offsets = [0, 0], sizes = [2, 32], strides = [1, 1]} : vector<2x128xf32> to vector<2x32xf32>
    %88 = vector.extract_strided_slice %85 {offsets = [0, 32], sizes = [2, 32], strides = [1, 1]} : vector<2x128xf32> to vector<2x32xf32>
    %89 = vector.extract_strided_slice %86 {offsets = [0, 64], sizes = [2, 32], strides = [1, 1]} : vector<2x128xf32> to vector<2x32xf32>
    %90 = vector.extract_strided_slice %85 {offsets = [0, 96], sizes = [2, 32], strides = [1, 1]} : vector<2x128xf32> to vector<2x32xf32>
    %91 = arith.mulf %88, %74 : vector<2x32xf32>
    %92 = arith.mulf %87, %89 : vector<2x32xf32>
    %93 = arith.addf %91, %92 : vector<2x32xf32>
    %94 = math.tanh %93 : vector<2x32xf32>
    %95 = arith.mulf %90, %94 : vector<2x32xf32>
    %c4 = arith.constant 4 : index
    %c0_36 = arith.constant 0 : index
    %96 = vector.load %arg25[%c4, %c0_36] : memref<16x32xf32, #tpu.memory_space<vmem>>, vector<2x32xf32>
    tpu.vector_store %arg25[%c4, %c0_36], %95 {strides = array<i32>} : memref<16x32xf32, #tpu.memory_space<vmem>>, vector<2x32xf32>,
    %97 = vector.extract_strided_slice %34 {offsets = [6, 0], sizes = [2, 128], strides = [1, 1]} : vector<16x128xf32> to vector<2x128xf32>
    %cst_37 = arith.constant dense<0.000000e+00> : vector<2x128xf32>
    %98 = tpu.matmul %95, %35, %cst_37 {dimension_numbers = #tpu.dot_dimension_numbers<[1], [0], [0], [1], [0, 0, 1, 1], [], []>} : vector<2x32xf32>, vector<32x128xf32>, vector<2x128xf32> -> vector<2x128xf32>
    %99 = arith.addf %97, %98 : vector<2x128xf32>
    %100 = arith.negf %99 : vector<2x128xf32>
    %101 = math.exp %100 : vector<2x128xf32>
    %cst_38 = arith.constant 1.000000e+00 : f32
    %102 = vector.broadcast %cst_38 : f32 to vector<2x128xf32>
    %103 = arith.addf %102, %101 : vector<2x128xf32>
    %104 = arith.divf %102, %103 : vector<2x128xf32>
    %105 = math.tanh %99 : vector<2x128xf32>
    %106 = vector.extract_strided_slice %104 {offsets = [0, 0], sizes = [2, 32], strides = [1, 1]} : vector<2x128xf32> to vector<2x32xf32>
    %107 = vector.extract_strided_slice %104 {offsets = [0, 32], sizes = [2, 32], strides = [1, 1]} : vector<2x128xf32> to vector<2x32xf32>
    %108 = vector.extract_strided_slice %105 {offsets = [0, 64], sizes = [2, 32], strides = [1, 1]} : vector<2x128xf32> to vector<2x32xf32>
    %109 = vector.extract_strided_slice %104 {offsets = [0, 96], sizes = [2, 32], strides = [1, 1]} : vector<2x128xf32> to vector<2x32xf32>
    %110 = arith.mulf %107, %93 : vector<2x32xf32>
    %111 = arith.mulf %106, %108 : vector<2x32xf32>
    %112 = arith.addf %110, %111 : vector<2x32xf32>
    %113 = math.tanh %112 : vector<2x32xf32>
    %114 = arith.mulf %109, %113 : vector<2x32xf32>
    %c6 = arith.constant 6 : index
    %c0_39 = arith.constant 0 : index
    %115 = vector.load %arg25[%c6, %c0_39] : memref<16x32xf32, #tpu.memory_space<vmem>>, vector<2x32xf32>
    tpu.vector_store %arg25[%c6, %c0_39], %114 {strides = array<i32>} : memref<16x32xf32, #tpu.memory_space<vmem>>, vector<2x32xf32>,
    %116 = vector.extract_strided_slice %34 {offsets = [8, 0], sizes = [2, 128], strides = [1, 1]} : vector<16x128xf32> to vector<2x128xf32>
    %cst_40 = arith.constant dense<0.000000e+00> : vector<2x128xf32>
    %117 = tpu.matmul %114, %35, %cst_40 {dimension_numbers = #tpu.dot_dimension_numbers<[1], [0], [0], [1], [0, 0, 1, 1], [], []>} : vector<2x32xf32>, vector<32x128xf32>, vector<2x128xf32> -> vector<2x128xf32>
    %118 = arith.addf %116, %117 : vector<2x128xf32>
    %119 = arith.negf %118 : vector<2x128xf32>
    %120 = math.exp %119 : vector<2x128xf32>
    %cst_41 = arith.constant 1.000000e+00 : f32
    %121 = vector.broadcast %cst_41 : f32 to vector<2x128xf32>
    %122 = arith.addf %121, %120 : vector<2x128xf32>
    %123 = arith.divf %121, %122 : vector<2x128xf32>
    %124 = math.tanh %118 : vector<2x128xf32>
    %125 = vector.extract_strided_slice %123 {offsets = [0, 0], sizes = [2, 32], strides = [1, 1]} : vector<2x128xf32> to vector<2x32xf32>
    %126 = vector.extract_strided_slice %123 {offsets = [0, 32], sizes = [2, 32], strides = [1, 1]} : vector<2x128xf32> to vector<2x32xf32>
    %127 = vector.extract_strided_slice %124 {offsets = [0, 64], sizes = [2, 32], strides = [1, 1]} : vector<2x128xf32> to vector<2x32xf32>
    %128 = vector.extract_strided_slice %123 {offsets = [0, 96], sizes = [2, 32], strides = [1, 1]} : vector<2x128xf32> to vector<2x32xf32>
    %129 = arith.mulf %126, %112 : vector<2x32xf32>
    %130 = arith.mulf %125, %127 : vector<2x32xf32>
    %131 = arith.addf %129, %130 : vector<2x32xf32>
    %132 = math.tanh %131 : vector<2x32xf32>
    %133 = arith.mulf %128, %132 : vector<2x32xf32>
    %c8 = arith.constant 8 : index
    %c0_42 = arith.constant 0 : index
    %134 = vector.load %arg25[%c8, %c0_42] : memref<16x32xf32, #tpu.memory_space<vmem>>, vector<2x32xf32>
    tpu.vector_store %arg25[%c8, %c0_42], %133 {strides = array<i32>} : memref<16x32xf32, #tpu.memory_space<vmem>>, vector<2x32xf32>,
    %135 = vector.extract_strided_slice %34 {offsets = [10, 0], sizes = [2, 128], strides = [1, 1]} : vector<16x128xf32> to vector<2x128xf32>
    %cst_43 = arith.constant dense<0.000000e+00> : vector<2x128xf32>
    %136 = tpu.matmul %133, %35, %cst_43 {dimension_numbers = #tpu.dot_dimension_numbers<[1], [0], [0], [1], [0, 0, 1, 1], [], []>} : vector<2x32xf32>, vector<32x128xf32>, vector<2x128xf32> -> vector<2x128xf32>
    %137 = arith.addf %135, %136 : vector<2x128xf32>
    %138 = arith.negf %137 : vector<2x128xf32>
    %139 = math.exp %138 : vector<2x128xf32>
    %cst_44 = arith.constant 1.000000e+00 : f32
    %140 = vector.broadcast %cst_44 : f32 to vector<2x128xf32>
    %141 = arith.addf %140, %139 : vector<2x128xf32>
    %142 = arith.divf %140, %141 : vector<2x128xf32>
    %143 = math.tanh %137 : vector<2x128xf32>
    %144 = vector.extract_strided_slice %142 {offsets = [0, 0], sizes = [2, 32], strides = [1, 1]} : vector<2x128xf32> to vector<2x32xf32>
    %145 = vector.extract_strided_slice %142 {offsets = [0, 32], sizes = [2, 32], strides = [1, 1]} : vector<2x128xf32> to vector<2x32xf32>
    %146 = vector.extract_strided_slice %143 {offsets = [0, 64], sizes = [2, 32], strides = [1, 1]} : vector<2x128xf32> to vector<2x32xf32>
    %147 = vector.extract_strided_slice %142 {offsets = [0, 96], sizes = [2, 32], strides = [1, 1]} : vector<2x128xf32> to vector<2x32xf32>
    %148 = arith.mulf %145, %131 : vector<2x32xf32>
    %149 = arith.mulf %144, %146 : vector<2x32xf32>
    %150 = arith.addf %148, %149 : vector<2x32xf32>
    %151 = math.tanh %150 : vector<2x32xf32>
    %152 = arith.mulf %147, %151 : vector<2x32xf32>
    %c10 = arith.constant 10 : index
    %c0_45 = arith.constant 0 : index
    %153 = vector.load %arg25[%c10, %c0_45] : memref<16x32xf32, #tpu.memory_space<vmem>>, vector<2x32xf32>
    tpu.vector_store %arg25[%c10, %c0_45], %152 {strides = array<i32>} : memref<16x32xf32, #tpu.memory_space<vmem>>, vector<2x32xf32>,
    %154 = vector.extract_strided_slice %34 {offsets = [12, 0], sizes = [2, 128], strides = [1, 1]} : vector<16x128xf32> to vector<2x128xf32>
    %cst_46 = arith.constant dense<0.000000e+00> : vector<2x128xf32>
    %155 = tpu.matmul %152, %35, %cst_46 {dimension_numbers = #tpu.dot_dimension_numbers<[1], [0], [0], [1], [0, 0, 1, 1], [], []>} : vector<2x32xf32>, vector<32x128xf32>, vector<2x128xf32> -> vector<2x128xf32>
    %156 = arith.addf %154, %155 : vector<2x128xf32>
    %157 = arith.negf %156 : vector<2x128xf32>
    %158 = math.exp %157 : vector<2x128xf32>
    %cst_47 = arith.constant 1.000000e+00 : f32
    %159 = vector.broadcast %cst_47 : f32 to vector<2x128xf32>
    %160 = arith.addf %159, %158 : vector<2x128xf32>
    %161 = arith.divf %159, %160 : vector<2x128xf32>
    %162 = math.tanh %156 : vector<2x128xf32>
    %163 = vector.extract_strided_slice %161 {offsets = [0, 0], sizes = [2, 32], strides = [1, 1]} : vector<2x128xf32> to vector<2x32xf32>
    %164 = vector.extract_strided_slice %161 {offsets = [0, 32], sizes = [2, 32], strides = [1, 1]} : vector<2x128xf32> to vector<2x32xf32>
    %165 = vector.extract_strided_slice %162 {offsets = [0, 64], sizes = [2, 32], strides = [1, 1]} : vector<2x128xf32> to vector<2x32xf32>
    %166 = vector.extract_strided_slice %161 {offsets = [0, 96], sizes = [2, 32], strides = [1, 1]} : vector<2x128xf32> to vector<2x32xf32>
    %167 = arith.mulf %164, %150 : vector<2x32xf32>
    %168 = arith.mulf %163, %165 : vector<2x32xf32>
    %169 = arith.addf %167, %168 : vector<2x32xf32>
    %170 = math.tanh %169 : vector<2x32xf32>
    %171 = arith.mulf %166, %170 : vector<2x32xf32>
    %c12 = arith.constant 12 : index
    %c0_48 = arith.constant 0 : index
    %172 = vector.load %arg25[%c12, %c0_48] : memref<16x32xf32, #tpu.memory_space<vmem>>, vector<2x32xf32>
    tpu.vector_store %arg25[%c12, %c0_48], %171 {strides = array<i32>} : memref<16x32xf32, #tpu.memory_space<vmem>>, vector<2x32xf32>,
    %173 = vector.extract_strided_slice %34 {offsets = [14, 0], sizes = [2, 128], strides = [1, 1]} : vector<16x128xf32> to vector<2x128xf32>
    %cst_49 = arith.constant dense<0.000000e+00> : vector<2x128xf32>
    %174 = tpu.matmul %171, %35, %cst_49 {dimension_numbers = #tpu.dot_dimension_numbers<[1], [0], [0], [1], [0, 0, 1, 1], [], []>} : vector<2x32xf32>, vector<32x128xf32>, vector<2x128xf32> -> vector<2x128xf32>
    %175 = arith.addf %173, %174 : vector<2x128xf32>
    %176 = arith.negf %175 : vector<2x128xf32>
    %177 = math.exp %176 : vector<2x128xf32>
    %cst_50 = arith.constant 1.000000e+00 : f32
    %178 = vector.broadcast %cst_50 : f32 to vector<2x128xf32>
    %179 = arith.addf %178, %177 : vector<2x128xf32>
    %180 = arith.divf %178, %179 : vector<2x128xf32>
    %181 = math.tanh %175 : vector<2x128xf32>
    %182 = vector.extract_strided_slice %180 {offsets = [0, 0], sizes = [2, 32], strides = [1, 1]} : vector<2x128xf32> to vector<2x32xf32>
    %183 = vector.extract_strided_slice %180 {offsets = [0, 32], sizes = [2, 32], strides = [1, 1]} : vector<2x128xf32> to vector<2x32xf32>
    %184 = vector.extract_strided_slice %181 {offsets = [0, 64], sizes = [2, 32], strides = [1, 1]} : vector<2x128xf32> to vector<2x32xf32>
    %185 = vector.extract_strided_slice %180 {offsets = [0, 96], sizes = [2, 32], strides = [1, 1]} : vector<2x128xf32> to vector<2x32xf32>
    %186 = arith.mulf %183, %169 : vector<2x32xf32>
    %187 = arith.mulf %182, %184 : vector<2x32xf32>
    %188 = arith.addf %186, %187 : vector<2x32xf32>
    %189 = math.tanh %188 : vector<2x32xf32>
    %190 = arith.mulf %185, %189 : vector<2x32xf32>
    %c14 = arith.constant 14 : index
    %c0_51 = arith.constant 0 : index
    %191 = vector.load %arg25[%c14, %c0_51] : memref<16x32xf32, #tpu.memory_space<vmem>>, vector<2x32xf32>
    tpu.vector_store %arg25[%c14, %c0_51], %190 {strides = array<i32>} : memref<16x32xf32, #tpu.memory_space<vmem>>, vector<2x32xf32>,
    %c0_52 = arith.constant 0 : index
    %c0_53 = arith.constant 0 : index
    %192 = vector.load %arg25[%c0_52, %c0_53] : memref<16x32xf32, #tpu.memory_space<vmem>>, vector<16x32xf32>
    %c0_54 = arith.constant 0 : index
    %c0_55 = arith.constant 0 : index
    %193 = vector.load %arg12[%c0_54, %c0_55] : memref<32x128xf32, #tpu.memory_space<vmem>>, vector<32x128xf32>
    %cst_56 = arith.constant dense<0.000000e+00> : vector<16x128xf32>
    %194 = tpu.matmul %192, %193, %cst_56 {dimension_numbers = #tpu.dot_dimension_numbers<[1], [0], [0], [1], [0, 0, 1, 1], [], []>} : vector<16x32xf32>, vector<32x128xf32>, vector<16x128xf32> -> vector<16x128xf32>
    %c0_57 = arith.constant 0 : index
    %c0_58 = arith.constant 0 : index
    %195 = vector.load %arg14[%c0_57, %c0_58] : memref<1x128xf32, #tpu.memory_space<vmem>>, vector<1x128xf32>
    %196 = vector.broadcast %195 : vector<1x128xf32> to vector<16x128xf32>
    %197 = arith.addf %194, %196 : vector<16x128xf32>
    %c0_59 = arith.constant 0 : index
    %c0_60 = arith.constant 0 : index
    %198 = vector.load %arg13[%c0_59, %c0_60] : memref<32x128xf32, #tpu.memory_space<vmem>>, vector<32x128xf32>
    %c1 = arith.constant 1 : index
    %c0_61 = arith.constant 0 : index
    %c0_62 = arith.constant 0 : index
    %199 = vector.load %arg3[%c1, %c0_61, %c0_62] : memref<2x2x32xf32, #tpu.memory_space<vmem>>, vector<1x2x32xf32>
    %200 = vector.shape_cast %199 : vector<1x2x32xf32> to vector<2x32xf32>
    %c1_63 = arith.constant 1 : index
    %c0_64 = arith.constant 0 : index
    %c0_65 = arith.constant 0 : index
    %201 = vector.load %arg4[%c1_63, %c0_64, %c0_65] : memref<2x2x32xf32, #tpu.memory_space<vmem>>, vector<1x2x32xf32>
    %202 = vector.shape_cast %201 : vector<1x2x32xf32> to vector<2x32xf32>
    %203 = vector.extract_strided_slice %197 {offsets = [0, 0], sizes = [2, 128], strides = [1, 1]} : vector<16x128xf32> to vector<2x128xf32>
    %cst_66 = arith.constant dense<0.000000e+00> : vector<2x128xf32>
    %204 = tpu.matmul %200, %198, %cst_66 {dimension_numbers = #tpu.dot_dimension_numbers<[1], [0], [0], [1], [0, 0, 1, 1], [], []>} : vector<2x32xf32>, vector<32x128xf32>, vector<2x128xf32> -> vector<2x128xf32>
    %205 = arith.addf %203, %204 : vector<2x128xf32>
    %206 = arith.negf %205 : vector<2x128xf32>
    %207 = math.exp %206 : vector<2x128xf32>
    %cst_67 = arith.constant 1.000000e+00 : f32
    %208 = vector.broadcast %cst_67 : f32 to vector<2x128xf32>
    %209 = arith.addf %208, %207 : vector<2x128xf32>
    %210 = arith.divf %208, %209 : vector<2x128xf32>
    %211 = math.tanh %205 : vector<2x128xf32>
    %212 = vector.extract_strided_slice %210 {offsets = [0, 0], sizes = [2, 32], strides = [1, 1]} : vector<2x128xf32> to vector<2x32xf32>
    %213 = vector.extract_strided_slice %210 {offsets = [0, 32], sizes = [2, 32], strides = [1, 1]} : vector<2x128xf32> to vector<2x32xf32>
    %214 = vector.extract_strided_slice %211 {offsets = [0, 64], sizes = [2, 32], strides = [1, 1]} : vector<2x128xf32> to vector<2x32xf32>
    %215 = vector.extract_strided_slice %210 {offsets = [0, 96], sizes = [2, 32], strides = [1, 1]} : vector<2x128xf32> to vector<2x32xf32>
    %216 = arith.mulf %213, %202 : vector<2x32xf32>
    %217 = arith.mulf %212, %214 : vector<2x32xf32>
    %218 = arith.addf %216, %217 : vector<2x32xf32>
    %219 = math.tanh %218 : vector<2x32xf32>
    %220 = arith.mulf %215, %219 : vector<2x32xf32>
    %221 = vector.shape_cast %220 : vector<2x32xf32> to vector<2x1x32xf32>
    %c0_68 = arith.constant 0 : index
    %c0_69 = arith.constant 0 : index
    %c0_70 = arith.constant 0 : index
    %222 = vector.load %arg26[%c0_68, %c0_69, %c0_70] : memref<2x8x32xf32, #tpu.memory_space<vmem>>, vector<2x1x32xf32>
    tpu.vector_store %arg26[%c0_68, %c0_69, %c0_70], %221 {strides = array<i32>} : memref<2x8x32xf32, #tpu.memory_space<vmem>>, vector<2x1x32xf32>,
    %223 = vector.extract_strided_slice %197 {offsets = [2, 0], sizes = [2, 128], strides = [1, 1]} : vector<16x128xf32> to vector<2x128xf32>
    %cst_71 = arith.constant dense<0.000000e+00> : vector<2x128xf32>
    %224 = tpu.matmul %220, %198, %cst_71 {dimension_numbers = #tpu.dot_dimension_numbers<[1], [0], [0], [1], [0, 0, 1, 1], [], []>} : vector<2x32xf32>, vector<32x128xf32>, vector<2x128xf32> -> vector<2x128xf32>
    %225 = arith.addf %223, %224 : vector<2x128xf32>
    %226 = arith.negf %225 : vector<2x128xf32>
    %227 = math.exp %226 : vector<2x128xf32>
    %cst_72 = arith.constant 1.000000e+00 : f32
    %228 = vector.broadcast %cst_72 : f32 to vector<2x128xf32>
    %229 = arith.addf %228, %227 : vector<2x128xf32>
    %230 = arith.divf %228, %229 : vector<2x128xf32>
    %231 = math.tanh %225 : vector<2x128xf32>
    %232 = vector.extract_strided_slice %230 {offsets = [0, 0], sizes = [2, 32], strides = [1, 1]} : vector<2x128xf32> to vector<2x32xf32>
    %233 = vector.extract_strided_slice %230 {offsets = [0, 32], sizes = [2, 32], strides = [1, 1]} : vector<2x128xf32> to vector<2x32xf32>
    %234 = vector.extract_strided_slice %231 {offsets = [0, 64], sizes = [2, 32], strides = [1, 1]} : vector<2x128xf32> to vector<2x32xf32>
    %235 = vector.extract_strided_slice %230 {offsets = [0, 96], sizes = [2, 32], strides = [1, 1]} : vector<2x128xf32> to vector<2x32xf32>
    %236 = arith.mulf %233, %218 : vector<2x32xf32>
    %237 = arith.mulf %232, %234 : vector<2x32xf32>
    %238 = arith.addf %236, %237 : vector<2x32xf32>
    %239 = math.tanh %238 : vector<2x32xf32>
    %240 = arith.mulf %235, %239 : vector<2x32xf32>
    %241 = vector.shape_cast %240 : vector<2x32xf32> to vector<2x1x32xf32>
    %c0_73 = arith.constant 0 : index
    %c1_74 = arith.constant 1 : index
    %c0_75 = arith.constant 0 : index
    %242 = vector.load %arg26[%c0_73, %c1_74, %c0_75] : memref<2x8x32xf32, #tpu.memory_space<vmem>>, vector<2x1x32xf32>
    tpu.vector_store %arg26[%c0_73, %c1_74, %c0_75], %241 {strides = array<i32>} : memref<2x8x32xf32, #tpu.memory_space<vmem>>, vector<2x1x32xf32>,
    %243 = vector.extract_strided_slice %197 {offsets = [4, 0], sizes = [2, 128], strides = [1, 1]} : vector<16x128xf32> to vector<2x128xf32>
    %cst_76 = arith.constant dense<0.000000e+00> : vector<2x128xf32>
    %244 = tpu.matmul %240, %198, %cst_76 {dimension_numbers = #tpu.dot_dimension_numbers<[1], [0], [0], [1], [0, 0, 1, 1], [], []>} : vector<2x32xf32>, vector<32x128xf32>, vector<2x128xf32> -> vector<2x128xf32>
    %245 = arith.addf %243, %244 : vector<2x128xf32>
    %246 = arith.negf %245 : vector<2x128xf32>
    %247 = math.exp %246 : vector<2x128xf32>
    %cst_77 = arith.constant 1.000000e+00 : f32
    %248 = vector.broadcast %cst_77 : f32 to vector<2x128xf32>
    %249 = arith.addf %248, %247 : vector<2x128xf32>
    %250 = arith.divf %248, %249 : vector<2x128xf32>
    %251 = math.tanh %245 : vector<2x128xf32>
    %252 = vector.extract_strided_slice %250 {offsets = [0, 0], sizes = [2, 32], strides = [1, 1]} : vector<2x128xf32> to vector<2x32xf32>
    %253 = vector.extract_strided_slice %250 {offsets = [0, 32], sizes = [2, 32], strides = [1, 1]} : vector<2x128xf32> to vector<2x32xf32>
    %254 = vector.extract_strided_slice %251 {offsets = [0, 64], sizes = [2, 32], strides = [1, 1]} : vector<2x128xf32> to vector<2x32xf32>
    %255 = vector.extract_strided_slice %250 {offsets = [0, 96], sizes = [2, 32], strides = [1, 1]} : vector<2x128xf32> to vector<2x32xf32>
    %256 = arith.mulf %253, %238 : vector<2x32xf32>
    %257 = arith.mulf %252, %254 : vector<2x32xf32>
    %258 = arith.addf %256, %257 : vector<2x32xf32>
    %259 = math.tanh %258 : vector<2x32xf32>
    %260 = arith.mulf %255, %259 : vector<2x32xf32>
    %261 = vector.shape_cast %260 : vector<2x32xf32> to vector<2x1x32xf32>
    %c0_78 = arith.constant 0 : index
    %c2_79 = arith.constant 2 : index
    %c0_80 = arith.constant 0 : index
    %262 = vector.load %arg26[%c0_78, %c2_79, %c0_80] : memref<2x8x32xf32, #tpu.memory_space<vmem>>, vector<2x1x32xf32>
    tpu.vector_store %arg26[%c0_78, %c2_79, %c0_80], %261 {strides = array<i32>} : memref<2x8x32xf32, #tpu.memory_space<vmem>>, vector<2x1x32xf32>,
    %263 = vector.extract_strided_slice %197 {offsets = [6, 0], sizes = [2, 128], strides = [1, 1]} : vector<16x128xf32> to vector<2x128xf32>
    %cst_81 = arith.constant dense<0.000000e+00> : vector<2x128xf32>
    %264 = tpu.matmul %260, %198, %cst_81 {dimension_numbers = #tpu.dot_dimension_numbers<[1], [0], [0], [1], [0, 0, 1, 1], [], []>} : vector<2x32xf32>, vector<32x128xf32>, vector<2x128xf32> -> vector<2x128xf32>
    %265 = arith.addf %263, %264 : vector<2x128xf32>
    %266 = arith.negf %265 : vector<2x128xf32>
    %267 = math.exp %266 : vector<2x128xf32>
    %cst_82 = arith.constant 1.000000e+00 : f32
    %268 = vector.broadcast %cst_82 : f32 to vector<2x128xf32>
    %269 = arith.addf %268, %267 : vector<2x128xf32>
    %270 = arith.divf %268, %269 : vector<2x128xf32>
    %271 = math.tanh %265 : vector<2x128xf32>
    %272 = vector.extract_strided_slice %270 {offsets = [0, 0], sizes = [2, 32], strides = [1, 1]} : vector<2x128xf32> to vector<2x32xf32>
    %273 = vector.extract_strided_slice %270 {offsets = [0, 32], sizes = [2, 32], strides = [1, 1]} : vector<2x128xf32> to vector<2x32xf32>
    %274 = vector.extract_strided_slice %271 {offsets = [0, 64], sizes = [2, 32], strides = [1, 1]} : vector<2x128xf32> to vector<2x32xf32>
    %275 = vector.extract_strided_slice %270 {offsets = [0, 96], sizes = [2, 32], strides = [1, 1]} : vector<2x128xf32> to vector<2x32xf32>
    %276 = arith.mulf %273, %258 : vector<2x32xf32>
    %277 = arith.mulf %272, %274 : vector<2x32xf32>
    %278 = arith.addf %276, %277 : vector<2x32xf32>
    %279 = math.tanh %278 : vector<2x32xf32>
    %280 = arith.mulf %275, %279 : vector<2x32xf32>
    %281 = vector.shape_cast %280 : vector<2x32xf32> to vector<2x1x32xf32>
    %c0_83 = arith.constant 0 : index
    %c3 = arith.constant 3 : index
    %c0_84 = arith.constant 0 : index
    %282 = vector.load %arg26[%c0_83, %c3, %c0_84] : memref<2x8x32xf32, #tpu.memory_space<vmem>>, vector<2x1x32xf32>
    tpu.vector_store %arg26[%c0_83, %c3, %c0_84], %281 {strides = array<i32>} : memref<2x8x32xf32, #tpu.memory_space<vmem>>, vector<2x1x32xf32>,
    %283 = vector.extract_strided_slice %197 {offsets = [8, 0], sizes = [2, 128], strides = [1, 1]} : vector<16x128xf32> to vector<2x128xf32>
    %cst_85 = arith.constant dense<0.000000e+00> : vector<2x128xf32>
    %284 = tpu.matmul %280, %198, %cst_85 {dimension_numbers = #tpu.dot_dimension_numbers<[1], [0], [0], [1], [0, 0, 1, 1], [], []>} : vector<2x32xf32>, vector<32x128xf32>, vector<2x128xf32> -> vector<2x128xf32>
    %285 = arith.addf %283, %284 : vector<2x128xf32>
    %286 = arith.negf %285 : vector<2x128xf32>
    %287 = math.exp %286 : vector<2x128xf32>
    %cst_86 = arith.constant 1.000000e+00 : f32
    %288 = vector.broadcast %cst_86 : f32 to vector<2x128xf32>
    %289 = arith.addf %288, %287 : vector<2x128xf32>
    %290 = arith.divf %288, %289 : vector<2x128xf32>
    %291 = math.tanh %285 : vector<2x128xf32>
    %292 = vector.extract_strided_slice %290 {offsets = [0, 0], sizes = [2, 32], strides = [1, 1]} : vector<2x128xf32> to vector<2x32xf32>
    %293 = vector.extract_strided_slice %290 {offsets = [0, 32], sizes = [2, 32], strides = [1, 1]} : vector<2x128xf32> to vector<2x32xf32>
    %294 = vector.extract_strided_slice %291 {offsets = [0, 64], sizes = [2, 32], strides = [1, 1]} : vector<2x128xf32> to vector<2x32xf32>
    %295 = vector.extract_strided_slice %290 {offsets = [0, 96], sizes = [2, 32], strides = [1, 1]} : vector<2x128xf32> to vector<2x32xf32>
    %296 = arith.mulf %293, %278 : vector<2x32xf32>
    %297 = arith.mulf %292, %294 : vector<2x32xf32>
    %298 = arith.addf %296, %297 : vector<2x32xf32>
    %299 = math.tanh %298 : vector<2x32xf32>
    %300 = arith.mulf %295, %299 : vector<2x32xf32>
    %301 = vector.shape_cast %300 : vector<2x32xf32> to vector<2x1x32xf32>
    %c0_87 = arith.constant 0 : index
    %c4_88 = arith.constant 4 : index
    %c0_89 = arith.constant 0 : index
    %302 = vector.load %arg26[%c0_87, %c4_88, %c0_89] : memref<2x8x32xf32, #tpu.memory_space<vmem>>, vector<2x1x32xf32>
    tpu.vector_store %arg26[%c0_87, %c4_88, %c0_89], %301 {strides = array<i32>} : memref<2x8x32xf32, #tpu.memory_space<vmem>>, vector<2x1x32xf32>,
    %303 = vector.extract_strided_slice %197 {offsets = [10, 0], sizes = [2, 128], strides = [1, 1]} : vector<16x128xf32> to vector<2x128xf32>
    %cst_90 = arith.constant dense<0.000000e+00> : vector<2x128xf32>
    %304 = tpu.matmul %300, %198, %cst_90 {dimension_numbers = #tpu.dot_dimension_numbers<[1], [0], [0], [1], [0, 0, 1, 1], [], []>} : vector<2x32xf32>, vector<32x128xf32>, vector<2x128xf32> -> vector<2x128xf32>
    %305 = arith.addf %303, %304 : vector<2x128xf32>
    %306 = arith.negf %305 : vector<2x128xf32>
    %307 = math.exp %306 : vector<2x128xf32>
    %cst_91 = arith.constant 1.000000e+00 : f32
    %308 = vector.broadcast %cst_91 : f32 to vector<2x128xf32>
    %309 = arith.addf %308, %307 : vector<2x128xf32>
    %310 = arith.divf %308, %309 : vector<2x128xf32>
    %311 = math.tanh %305 : vector<2x128xf32>
    %312 = vector.extract_strided_slice %310 {offsets = [0, 0], sizes = [2, 32], strides = [1, 1]} : vector<2x128xf32> to vector<2x32xf32>
    %313 = vector.extract_strided_slice %310 {offsets = [0, 32], sizes = [2, 32], strides = [1, 1]} : vector<2x128xf32> to vector<2x32xf32>
    %314 = vector.extract_strided_slice %311 {offsets = [0, 64], sizes = [2, 32], strides = [1, 1]} : vector<2x128xf32> to vector<2x32xf32>
    %315 = vector.extract_strided_slice %310 {offsets = [0, 96], sizes = [2, 32], strides = [1, 1]} : vector<2x128xf32> to vector<2x32xf32>
    %316 = arith.mulf %313, %298 : vector<2x32xf32>
    %317 = arith.mulf %312, %314 : vector<2x32xf32>
    %318 = arith.addf %316, %317 : vector<2x32xf32>
    %319 = math.tanh %318 : vector<2x32xf32>
    %320 = arith.mulf %315, %319 : vector<2x32xf32>
    %321 = vector.shape_cast %320 : vector<2x32xf32> to vector<2x1x32xf32>
    %c0_92 = arith.constant 0 : index
    %c5 = arith.constant 5 : index
    %c0_93 = arith.constant 0 : index
    %322 = vector.load %arg26[%c0_92, %c5, %c0_93] : memref<2x8x32xf32, #tpu.memory_space<vmem>>, vector<2x1x32xf32>
    tpu.vector_store %arg26[%c0_92, %c5, %c0_93], %321 {strides = array<i32>} : memref<2x8x32xf32, #tpu.memory_space<vmem>>, vector<2x1x32xf32>,
    %323 = vector.extract_strided_slice %197 {offsets = [12, 0], sizes = [2, 128], strides = [1, 1]} : vector<16x128xf32> to vector<2x128xf32>
    %cst_94 = arith.constant dense<0.000000e+00> : vector<2x128xf32>
    %324 = tpu.matmul %320, %198, %cst_94 {dimension_numbers = #tpu.dot_dimension_numbers<[1], [0], [0], [1], [0, 0, 1, 1], [], []>} : vector<2x32xf32>, vector<32x128xf32>, vector<2x128xf32> -> vector<2x128xf32>
    %325 = arith.addf %323, %324 : vector<2x128xf32>
    %326 = arith.negf %325 : vector<2x128xf32>
    %327 = math.exp %326 : vector<2x128xf32>
    %cst_95 = arith.constant 1.000000e+00 : f32
    %328 = vector.broadcast %cst_95 : f32 to vector<2x128xf32>
    %329 = arith.addf %328, %327 : vector<2x128xf32>
    %330 = arith.divf %328, %329 : vector<2x128xf32>
    %331 = math.tanh %325 : vector<2x128xf32>
    %332 = vector.extract_strided_slice %330 {offsets = [0, 0], sizes = [2, 32], strides = [1, 1]} : vector<2x128xf32> to vector<2x32xf32>
    %333 = vector.extract_strided_slice %330 {offsets = [0, 32], sizes = [2, 32], strides = [1, 1]} : vector<2x128xf32> to vector<2x32xf32>
    %334 = vector.extract_strided_slice %331 {offsets = [0, 64], sizes = [2, 32], strides = [1, 1]} : vector<2x128xf32> to vector<2x32xf32>
    %335 = vector.extract_strided_slice %330 {offsets = [0, 96], sizes = [2, 32], strides = [1, 1]} : vector<2x128xf32> to vector<2x32xf32>
    %336 = arith.mulf %333, %318 : vector<2x32xf32>
    %337 = arith.mulf %332, %334 : vector<2x32xf32>
    %338 = arith.addf %336, %337 : vector<2x32xf32>
    %339 = math.tanh %338 : vector<2x32xf32>
    %340 = arith.mulf %335, %339 : vector<2x32xf32>
    %341 = vector.shape_cast %340 : vector<2x32xf32> to vector<2x1x32xf32>
    %c0_96 = arith.constant 0 : index
    %c6_97 = arith.constant 6 : index
    %c0_98 = arith.constant 0 : index
    %342 = vector.load %arg26[%c0_96, %c6_97, %c0_98] : memref<2x8x32xf32, #tpu.memory_space<vmem>>, vector<2x1x32xf32>
    tpu.vector_store %arg26[%c0_96, %c6_97, %c0_98], %341 {strides = array<i32>} : memref<2x8x32xf32, #tpu.memory_space<vmem>>, vector<2x1x32xf32>,
    %343 = vector.extract_strided_slice %197 {offsets = [14, 0], sizes = [2, 128], strides = [1, 1]} : vector<16x128xf32> to vector<2x128xf32>
    %cst_99 = arith.constant dense<0.000000e+00> : vector<2x128xf32>
    %344 = tpu.matmul %340, %198, %cst_99 {dimension_numbers = #tpu.dot_dimension_numbers<[1], [0], [0], [1], [0, 0, 1, 1], [], []>} : vector<2x32xf32>, vector<32x128xf32>, vector<2x128xf32> -> vector<2x128xf32>
    %345 = arith.addf %343, %344 : vector<2x128xf32>
    %346 = arith.negf %345 : vector<2x128xf32>
    %347 = math.exp %346 : vector<2x128xf32>
    %cst_100 = arith.constant 1.000000e+00 : f32
    %348 = vector.broadcast %cst_100 : f32 to vector<2x128xf32>
    %349 = arith.addf %348, %347 : vector<2x128xf32>
    %350 = arith.divf %348, %349 : vector<2x128xf32>
    %351 = math.tanh %345 : vector<2x128xf32>
    %352 = vector.extract_strided_slice %350 {offsets = [0, 0], sizes = [2, 32], strides = [1, 1]} : vector<2x128xf32> to vector<2x32xf32>
    %353 = vector.extract_strided_slice %350 {offsets = [0, 32], sizes = [2, 32], strides = [1, 1]} : vector<2x128xf32> to vector<2x32xf32>
    %354 = vector.extract_strided_slice %351 {offsets = [0, 64], sizes = [2, 32], strides = [1, 1]} : vector<2x128xf32> to vector<2x32xf32>
    %355 = vector.extract_strided_slice %350 {offsets = [0, 96], sizes = [2, 32], strides = [1, 1]} : vector<2x128xf32> to vector<2x32xf32>
    %356 = arith.mulf %353, %338 : vector<2x32xf32>
    %357 = arith.mulf %352, %354 : vector<2x32xf32>
    %358 = arith.addf %356, %357 : vector<2x32xf32>
    %359 = math.tanh %358 : vector<2x32xf32>
    %360 = arith.mulf %355, %359 : vector<2x32xf32>
    %361 = vector.shape_cast %360 : vector<2x32xf32> to vector<2x1x32xf32>
    %c0_101 = arith.constant 0 : index
    %c7 = arith.constant 7 : index
    %c0_102 = arith.constant 0 : index
    %362 = vector.load %arg26[%c0_101, %c7, %c0_102] : memref<2x8x32xf32, #tpu.memory_space<vmem>>, vector<2x1x32xf32>
    tpu.vector_store %arg26[%c0_101, %c7, %c0_102], %361 {strides = array<i32>} : memref<2x8x32xf32, #tpu.memory_space<vmem>>, vector<2x1x32xf32>,
    %c0_103 = arith.constant 0 : index
    %c0_104 = arith.constant 0 : index
    %c0_105 = arith.constant 0 : index
    %363 = vector.load %arg23[%c0_103, %c0_104, %c0_105] : memref<2x2x32xf32, #tpu.memory_space<vmem>>, vector<1x2x32xf32>
    %364 = vector.shape_cast %363 : vector<1x2x32xf32> to vector<2x32xf32>
    %365 = vector.shape_cast %190 : vector<2x32xf32> to vector<1x2x32xf32>
    tpu.vector_store %arg23[%c0_103, %c0_104, %c0_105], %365 {strides = array<i32>} : memref<2x2x32xf32, #tpu.memory_space<vmem>>, vector<1x2x32xf32>,
    %c1_106 = arith.constant 1 : index
    %c0_107 = arith.constant 0 : index
    %c0_108 = arith.constant 0 : index
    %366 = vector.load %arg23[%c1_106, %c0_107, %c0_108] : memref<2x2x32xf32, #tpu.memory_space<vmem>>, vector<1x2x32xf32>
    %367 = vector.shape_cast %366 : vector<1x2x32xf32> to vector<2x32xf32>
    %368 = vector.shape_cast %360 : vector<2x32xf32> to vector<1x2x32xf32>
    tpu.vector_store %arg23[%c1_106, %c0_107, %c0_108], %368 {strides = array<i32>} : memref<2x2x32xf32, #tpu.memory_space<vmem>>, vector<1x2x32xf32>,
    %c0_109 = arith.constant 0 : index
    %c0_110 = arith.constant 0 : index
    %c0_111 = arith.constant 0 : index
    %369 = vector.load %arg24[%c0_109, %c0_110, %c0_111] : memref<2x2x32xf32, #tpu.memory_space<vmem>>, vector<1x2x32xf32>
    %370 = vector.shape_cast %369 : vector<1x2x32xf32> to vector<2x32xf32>
    %371 = vector.shape_cast %188 : vector<2x32xf32> to vector<1x2x32xf32>
    tpu.vector_store %arg24[%c0_109, %c0_110, %c0_111], %371 {strides = array<i32>} : memref<2x2x32xf32, #tpu.memory_space<vmem>>, vector<1x2x32xf32>,
    %c1_112 = arith.constant 1 : index
    %c0_113 = arith.constant 0 : index
    %c0_114 = arith.constant 0 : index
    %372 = vector.load %arg24[%c1_112, %c0_113, %c0_114] : memref<2x2x32xf32, #tpu.memory_space<vmem>>, vector<1x2x32xf32>
    %373 = vector.shape_cast %372 : vector<1x2x32xf32> to vector<2x32xf32>
    %374 = vector.shape_cast %358 : vector<2x32xf32> to vector<1x2x32xf32>
    tpu.vector_store %arg24[%c1_112, %c0_113, %c0_114], %374 {strides = array<i32>} : memref<2x2x32xf32, #tpu.memory_space<vmem>>, vector<1x2x32xf32>,
    %c0_115 = arith.constant 0 : index
    %c0_116 = arith.constant 0 : index
    %c0_117 = arith.constant 0 : index
    %375 = vector.load %arg26[%c0_115, %c0_116, %c0_117] : memref<2x8x32xf32, #tpu.memory_space<vmem>>, vector<2x8x32xf32>
    %376 = vector.shape_cast %375 : vector<2x8x32xf32> to vector<16x32xf32>
    %c0_118 = arith.constant 0 : index
    %c0_119 = arith.constant 0 : index
    %c0_120 = arith.constant 0 : index
    %377 = vector.load %arg2[%c0_118, %c0_119, %c0_120] : memref<2x8x32xf32, #tpu.memory_space<vmem>>, vector<2x8x32xf32>
    %378 = vector.shape_cast %377 : vector<2x8x32xf32> to vector<16x32xf32>
    %379 = tpu.concatenate %376, %378 in 0 : vector<16x32xf32>, vector<16x32xf32> -> vector<32x32xf32>
    %c0_121 = arith.constant 0 : index
    %c0_122 = arith.constant 0 : index
    %380 = vector.load %arg15[%c0_121, %c0_122] : memref<32x96xf32, #tpu.memory_space<vmem>>, vector<32x96xf32>
    %cst_123 = arith.constant dense<0.000000e+00> : vector<32x96xf32>
    %381 = tpu.matmul %379, %380, %cst_123 {dimension_numbers = #tpu.dot_dimension_numbers<[1], [0], [0], [1], [0, 0, 1, 1], [], []>} : vector<32x32xf32>, vector<32x96xf32>, vector<32x96xf32> -> vector<32x96xf32>
    %c0_124 = arith.constant 0 : index
    %c0_125 = arith.constant 0 : index
    %382 = vector.load %arg16[%c0_124, %c0_125] : memref<1x96xf32, #tpu.memory_space<vmem>>, vector<1x96xf32>
    %383 = vector.broadcast %382 : vector<1x96xf32> to vector<32x96xf32>
    %384 = arith.addf %381, %383 : vector<32x96xf32>
    %385 = vector.extract_strided_slice %384 {offsets = [0, 0], sizes = [16, 32], strides = [1, 1]} : vector<32x96xf32> to vector<16x32xf32>
    %386 = vector.shape_cast %385 : vector<16x32xf32> to vector<2x8x32xf32>
    %387 = vector.extract_strided_slice %384 {offsets = [16, 32], sizes = [16, 32], strides = [1, 1]} : vector<32x96xf32> to vector<16x32xf32>
    %388 = vector.shape_cast %387 : vector<16x32xf32> to vector<2x8x32xf32>
    %389 = vector.extract_strided_slice %384 {offsets = [16, 64], sizes = [16, 32], strides = [1, 1]} : vector<32x96xf32> to vector<16x32xf32>
    %390 = vector.shape_cast %389 : vector<16x32xf32> to vector<2x8x32xf32>
    "tpu.trace_start"() <{level = 10 : i32, message = "bte,bse->bts"}> : () -> ()
    %cst_126 = arith.constant dense<0.000000e+00> : vector<2x8x8xf32>
    %391 = tpu.matmul %386, %388, %cst_126 {dimension_numbers = #tpu.dot_dimension_numbers<[2], [2], [1], [1], [0, 0, 0, 1, 1, 1], [0], [0]>} : vector<2x8x32xf32>, vector<2x8x32xf32>, vector<2x8x8xf32> -> vector<2x8x8xf32>
    "tpu.trace_stop"() : () -> ()
    %cst_127 = arith.constant 0.176776692 : f32
    %392 = vector.broadcast %cst_127 : f32 to vector<2x8x8xf32>
    %393 = arith.mulf %391, %392 : vector<2x8x8xf32>
    %cst_128 = arith.constant dense<0xFF800000> : vector<2x8xf32>
    %394 = vector.multi_reduction <maximumf>, %393, %cst_128 [2] : vector<2x8x8xf32> to vector<2x8xf32>
    %395 = vector.shape_cast %394 : vector<2x8xf32> to vector<2x8x1xf32>
    %396 = vector.broadcast %395 : vector<2x8x1xf32> to vector<2x8x8xf32>
    %397 = arith.subf %393, %396 : vector<2x8x8xf32>
    %398 = math.exp %397 : vector<2x8x8xf32>
    %cst_129 = arith.constant dense<0.000000e+00> : vector<2x8xf32>
    %399 = vector.multi_reduction <add>, %398, %cst_129 [2] : vector<2x8x8xf32> to vector<2x8xf32>
    %400 = vector.shape_cast %399 : vector<2x8xf32> to vector<2x8x1xf32>
    %401 = vector.broadcast %400 : vector<2x8x1xf32> to vector<2x8x8xf32>
    %402 = arith.divf %398, %401 : vector<2x8x8xf32>
    "tpu.trace_start"() <{level = 10 : i32, message = "bts,bse->bte"}> : () -> ()
    %cst_130 = arith.constant dense<0.000000e+00> : vector<2x8x32xf32>
    %403 = tpu.matmul %402, %390, %cst_130 {dimension_numbers = #tpu.dot_dimension_numbers<[2], [1], [1], [2], [0, 0, 0, 1, 1, 2], [0], [0]>} : vector<2x8x8xf32>, vector<2x8x32xf32>, vector<2x8x32xf32> -> vector<2x8x32xf32>
    "tpu.trace_stop"() : () -> ()
    %404 = vector.shape_cast %403 : vector<2x8x32xf32> to vector<16x32xf32>
    %c0_131 = arith.constant 0 : index
    %c0_132 = arith.constant 0 : index
    %405 = vector.load %arg17[%c0_131, %c0_132] : memref<32x32xf32, #tpu.memory_space<vmem>>, vector<32x32xf32>
    %cst_133 = arith.constant dense<0.000000e+00> : vector<16x32xf32>
    %406 = tpu.matmul %404, %405, %cst_133 {dimension_numbers = #tpu.dot_dimension_numbers<[1], [0], [0], [1], [0, 0, 1, 1], [], []>} : vector<16x32xf32>, vector<32x32xf32>, vector<16x32xf32> -> vector<16x32xf32>
    %c0_134 = arith.constant 0 : index
    %c0_135 = arith.constant 0 : index
    %407 = vector.load %arg18[%c0_134, %c0_135] : memref<1x32xf32, #tpu.memory_space<vmem>>, vector<1x32xf32>
    %408 = vector.broadcast %407 : vector<1x32xf32> to vector<16x32xf32>
    %409 = arith.addf %406, %408 : vector<16x32xf32>
    %c0_136 = arith.constant 0 : index
    %c0_137 = arith.constant 0 : index
    %410 = vector.load %arg19[%c0_136, %c0_137] : memref<32x64xf32, #tpu.memory_space<vmem>>, vector<32x64xf32>
    %cst_138 = arith.constant dense<0.000000e+00> : vector<16x64xf32>
    %411 = tpu.matmul %409, %410, %cst_138 {dimension_numbers = #tpu.dot_dimension_numbers<[1], [0], [0], [1], [0, 0, 1, 1], [], []>} : vector<16x32xf32>, vector<32x64xf32>, vector<16x64xf32> -> vector<16x64xf32>
    %c0_139 = arith.constant 0 : index
    %c0_140 = arith.constant 0 : index
    %412 = vector.load %arg20[%c0_139, %c0_140] : memref<1x64xf32, #tpu.memory_space<vmem>>, vector<1x64xf32>
    %413 = vector.broadcast %412 : vector<1x64xf32> to vector<16x64xf32>
    %414 = arith.addf %411, %413 : vector<16x64xf32>
    %c0_141 = arith.constant 0 : index
    %c0_142 = arith.constant 0 : index
    %415 = vector.load %arg21[%c0_141, %c0_142] : memref<16x32xf32, #tpu.memory_space<vmem>>, vector<16x32xf32>
    tpu.vector_store %arg21[%c0_141, %c0_142], %409 {strides = array<i32>} : memref<16x32xf32, #tpu.memory_space<vmem>>, vector<16x32xf32>,
    %416 = vector.shape_cast %414 : vector<16x64xf32> to vector<2x8x64xf32>
    %c0_143 = arith.constant 0 : index
    %c0_144 = arith.constant 0 : index
    %c0_145 = arith.constant 0 : index
    %417 = vector.load %arg22[%c0_143, %c0_144, %c0_145] : memref<2x8x64xf32, #tpu.memory_space<vmem>>, vector<2x8x64xf32>
    tpu.vector_store %arg22[%c0_143, %c0_144, %c0_145], %416 {strides = array<i32>} : memref<2x8x64xf32, #tpu.memory_space<vmem>>, vector<2x8x64xf32>,
    return
  }
  func.func @transform_0(%arg0: i32) -> (i32, i32) {
    %c0_i32 = arith.constant 0 : i32
    %c0_i32_0 = arith.constant 0 : i32
    %c0_i32_1 = arith.constant 0 : i32
    return %c0_i32, %c0_i32_0 : i32, i32
  }
  func.func @transform_1(%arg0: i32) -> (i32, i32, i32) {
    %c0_i32 = arith.constant 0 : i32
    %c0_i32_0 = arith.constant 0 : i32
    %c0_i32_1 = arith.constant 0 : i32
    %c0_i32_2 = arith.constant 0 : i32
    return %c0_i32, %c0_i32_0, %c0_i32_1 : i32, i32, i32
  }
  func.func @transform_2(%arg0: i32) -> (i32, i32, i32) {
    %c0_i32 = arith.constant 0 : i32
    %c0_i32_0 = arith.constant 0 : i32
    %c0_i32_1 = arith.constant 0 : i32
    %c0_i32_2 = arith.constant 0 : i32
    return %c0_i32, %c0_i32_0, %c0_i32_1 : i32, i32, i32
  }
  func.func @transform_3(%arg0: i32) -> (i32, i32, i32) {
    %c0_i32 = arith.constant 0 : i32
    %c0_i32_0 = arith.constant 0 : i32
    %c0_i32_1 = arith.constant 0 : i32
    %c0_i32_2 = arith.constant 0 : i32
    return %c0_i32, %c0_i32_0, %c0_i32_1 : i32, i32, i32
  }
  func.func @transform_4(%arg0: i32) -> (i32, i32) {
    %c0_i32 = arith.constant 0 : i32
    %c0_i32_0 = arith.constant 0 : i32
    %c0_i32_1 = arith.constant 0 : i32
    return %c0_i32, %c0_i32_0 : i32, i32
  }
  func.func @transform_5(%arg0: i32) -> (i32, i32) {
    %c0_i32 = arith.constant 0 : i32
    %c0_i32_0 = arith.constant 0 : i32
    %c0_i32_1 = arith.constant 0 : i32
    return %c0_i32, %c0_i32_0 : i32, i32
  }
  func.func @transform_6(%arg0: i32) -> (i32, i32) {
    %c0_i32 = arith.constant 0 : i32
    %c0_i32_0 = arith.constant 0 : i32
    %c0_i32_1 = arith.constant 0 : i32
    return %c0_i32, %c0_i32_0 : i32, i32
  }
  func.func @transform_7(%arg0: i32) -> (i32, i32) {
    %c0_i32 = arith.constant 0 : i32
    %c0_i32_0 = arith.constant 0 : i32
    %c0_i32_1 = arith.constant 0 : i32
    return %c0_i32, %c0_i32_0 : i32, i32
  }
  func.func @transform_8(%arg0: i32) -> (i32, i32) {
    %c0_i32 = arith.constant 0 : i32
    %c0_i32_0 = arith.constant 0 : i32
    %c0_i32_1 = arith.constant 0 : i32
    return %c0_i32, %c0_i32_0 : i32, i32
  }
  func.func @transform_9(%arg0: i32) -> (i32, i32) {
    %c0_i32 = arith.constant 0 : i32
    %c0_i32_0 = arith.constant 0 : i32
    %c0_i32_1 = arith.constant 0 : i32
    return %c0_i32, %c0_i32_0 : i32, i32
  }
  func.func @transform_10(%arg0: i32) -> (i32, i32) {
    %c0_i32 = arith.constant 0 : i32
    %c0_i32_0 = arith.constant 0 : i32
    %c0_i32_1 = arith.constant 0 : i32
    return %c0_i32, %c0_i32_0 : i32, i32
  }
  func.func @transform_11(%arg0: i32) -> (i32, i32) {
    %c0_i32 = arith.constant 0 : i32
    %c0_i32_0 = arith.constant 0 : i32
    %c0_i32_1 = arith.constant 0 : i32
    return %c0_i32, %c0_i32_0 : i32, i32
  }
  func.func @transform_12(%arg0: i32) -> (i32, i32) {
    %c0_i32 = arith.constant 0 : i32
    %c0_i32_0 = arith.constant 0 : i32
    %c0_i32_1 = arith.constant 0 : i32
    return %c0_i32, %c0_i32_0 : i32, i32
  }
  func.func @transform_13(%arg0: i32) -> (i32, i32) {
    %c0_i32 = arith.constant 0 : i32
    %c0_i32_0 = arith.constant 0 : i32
    %c0_i32_1 = arith.constant 0 : i32
    return %c0_i32, %c0_i32_0 : i32, i32
  }
  func.func @transform_14(%arg0: i32) -> (i32, i32) {
    %c0_i32 = arith.constant 0 : i32
    %c0_i32_0 = arith.constant 0 : i32
    %c0_i32_1 = arith.constant 0 : i32
    return %c0_i32, %c0_i32_0 : i32, i32
  }
  func.func @transform_15(%arg0: i32) -> (i32, i32) {
    %c0_i32 = arith.constant 0 : i32
    %c0_i32_0 = arith.constant 0 : i32
    %c0_i32_1 = arith.constant 0 : i32
    return %c0_i32, %c0_i32_0 : i32, i32
  }
  func.func @transform_16(%arg0: i32) -> (i32, i32) {
    %c0_i32 = arith.constant 0 : i32
    %c0_i32_0 = arith.constant 0 : i32
    %c0_i32_1 = arith.constant 0 : i32
    return %c0_i32, %c0_i32_0 : i32, i32
  }
  func.func @transform_17(%arg0: i32) -> (i32, i32) {
    %c0_i32 = arith.constant 0 : i32
    %c0_i32_0 = arith.constant 0 : i32
    %c0_i32_1 = arith.constant 0 : i32
    return %c0_i32, %c0_i32_0 : i32, i32
  }
  func.func @transform_18(%arg0: i32) -> (i32, i32) {
    %c0_i32 = arith.constant 0 : i32
    %c0_i32_0 = arith.constant 0 : i32
    %c0_i32_1 = arith.constant 0 : i32
    return %c0_i32, %c0_i32_0 : i32, i32
  }
  func.func @transform_19(%arg0: i32) -> (i32, i32) {
    %c0_i32 = arith.constant 0 : i32
    %c0_i32_0 = arith.constant 0 : i32
    %c0_i32_1 = arith.constant 0 : i32
    return %c0_i32, %c0_i32_0 : i32, i32
  }
  func.func @transform_20(%arg0: i32) -> (i32, i32) {
    %c0_i32 = arith.constant 0 : i32
    %c0_i32_0 = arith.constant 0 : i32
    %c0_i32_1 = arith.constant 0 : i32
    return %c0_i32, %c0_i32_0 : i32, i32
  }
  func.func @transform_21(%arg0: i32) -> (i32, i32, i32) {
    %c0_i32 = arith.constant 0 : i32
    %c0_i32_0 = arith.constant 0 : i32
    %c0_i32_1 = arith.constant 0 : i32
    %c0_i32_2 = arith.constant 0 : i32
    return %c0_i32, %c0_i32_0, %c0_i32_1 : i32, i32, i32
  }
  func.func @transform_22(%arg0: i32) -> (i32, i32, i32) {
    %c0_i32 = arith.constant 0 : i32
    %c0_i32_0 = arith.constant 0 : i32
    %c0_i32_1 = arith.constant 0 : i32
    %c0_i32_2 = arith.constant 0 : i32
    return %c0_i32, %c0_i32_0, %c0_i32_1 : i32, i32, i32
  }
  func.func @transform_23(%arg0: i32) -> (i32, i32, i32) {
    %c0_i32 = arith.constant 0 : i32
    %c0_i32_0 = arith.constant 0 : i32
    %c0_i32_1 = arith.constant 0 : i32
    %c0_i32_2 = arith.constant 0 : i32
    return %c0_i32, %c0_i32_0, %c0_i32_1 : i32, i32, i32
  }
}

</mosaic_0001>

<llo_original>
// kernel: decoder_train_forward.2
$region0: #{decoder_train_forward.2}
  #allocation0 [shape = 'u32[]', space=smem, size = 0x4, offset = 0x4, fixed_abs, tag = 'smem constant byte address 0x4 - core index']
  #allocation1 [shape = 'u32[144,128]{1,0:T(1,128)}', space=vmem, size = 0x12000, scoped, tag = 'internal scratch']
  #allocation2 [shape = 'f32[16,32]{1,0:T(8,128)}', space=vmem, size = 0x2000, scoped, tag = 'scratch operand']
  #allocation3 [shape = 'f32[2,8,32]{2,1,0:T(8,128)}', space=vmem, size = 0x2000, scoped, tag = 'scratch operand']
  %s0 = inlined_call_operand.vmem [shape: f32[16,32], index: 0, kind: input, shape index: {}]
  %s1 = inlined_call_operand.vmem [shape: f32[2,8,32], index: 1, kind: input, shape index: {}]
  %s2 = inlined_call_operand.vmem [shape: f32[2,2,32], index: 2, kind: input, shape index: {}]
  %s3 = inlined_call_operand.vmem [shape: f32[2,2,32], index: 3, kind: input, shape index: {}]
  %s4 = inlined_call_operand.vmem [shape: f32[32,32], index: 4, kind: input, shape index: {}]
  %s5 = inlined_call_operand.vmem [shape: f32[1,32], index: 5, kind: input, shape index: {}]
  %s6 = inlined_call_operand.vmem [shape: f32[1,32], index: 6, kind: input, shape index: {}]
  %s7 = inlined_call_operand.vmem [shape: f32[1,32], index: 7, kind: input, shape index: {}]
  %s8 = inlined_call_operand.vmem [shape: f32[32,128], index: 8, kind: input, shape index: {}]
  %s9 = inlined_call_operand.vmem [shape: f32[32,128], index: 9, kind: input, shape index: {}]
  %s10 = inlined_call_operand.vmem [shape: f32[1,128], index: 10, kind: input, shape index: {}]
  %s11 = inlined_call_operand.vmem [shape: f32[32,128], index: 11, kind: input, shape index: {}]
  %s12 = inlined_call_operand.vmem [shape: f32[32,128], index: 12, kind: input, shape index: {}]
  %s13 = inlined_call_operand.vmem [shape: f32[1,128], index: 13, kind: input, shape index: {}]
  %s14 = inlined_call_operand.vmem [shape: f32[32,96], index: 14, kind: input, shape index: {}]
  %s15 = inlined_call_operand.vmem [shape: f32[1,96], index: 15, kind: input, shape index: {}]
  %s16 = inlined_call_operand.vmem [shape: f32[32,32], index: 16, kind: input, shape index: {}]
  %s17 = inlined_call_operand.vmem [shape: f32[1,32], index: 17, kind: input, shape index: {}]
  %s18 = inlined_call_operand.vmem [shape: f32[32,64], index: 18, kind: input, shape index: {}]
  %s19 = inlined_call_operand.vmem [shape: f32[1,64], index: 19, kind: input, shape index: {}]
  %s20 = inlined_call_operand.vmem [shape: f32[16,32], index: 20, kind: output, shape index: {0}]
  %s21 = inlined_call_operand.hbm [shape: f32[2,8,64], index: 21, kind: output, shape index: {1}]
  %s22 = inlined_call_operand.hbm [shape: f32[2,2,32], index: 22, kind: output, shape index: {2}]
  %s23 = inlined_call_operand.hbm [shape: f32[2,2,32], index: 23, kind: output, shape index: {3}]
  %24 = xla_tuple %s20, %s21, %s22, %s23
  %s25 = sld [smem:[#allocation0]]
  $region114: #{decoder_train_forward.2} parent=0
    _
  %s27 = ssub.s32 1, %s25
  %s28 = scalar_select 0, %s27, %s25
  $region1: #{decoder_train_forward.2} parent=0
    #allocation4 [shape = 'u8[8192]{0}', space=vmem, size = 0x2000, scoped, tag = 'output window, operand 1, single buffered']
    #allocation5 [shape = 's32[1]{0}', space=sflag, size = 0x4, scoped, tag = 'scoped memory for decoder_train_forward.2']
    #allocation6 [shape = 'u8[2048]{0}', space=vmem, size = 0x800, scoped, tag = 'output window, operand 2, single buffered']
    #allocation7 [shape = 's32[1]{0}', space=sflag, size = 0x4, scoped, tag = 'scoped memory for decoder_train_forward.2']
    #allocation8 [shape = 'u8[2048]{0}', space=vmem, size = 0x800, scoped, tag = 'output window, operand 3, single buffered']
    %29 = vsyncpa [#allocation5], 0
    %30 = vsyncpa [#allocation7], 0
    // Predicated region
    $region2: #{decoder_train_forward.2} parent=1 // pred_check
      _
    $region3: #{decoder_train_forward.2} parent=1 // pred_check_branch
      %32 = sbr.rel (0) target = $region5
    $region4: #{decoder_train_forward.2} parent=1 // pred_region
      _
    $region5: #{decoder_train_forward.2} parent=1 // pred_fallthru
      _
    // Predicated region
    $region6: #{decoder_train_forward.2} parent=1 // pred_check
      _
    $region7: #{decoder_train_forward.2} parent=1 // pred_check_branch
      %34 = sbr.rel (0) target = $region9
    $region8: #{decoder_train_forward.2} parent=1 // pred_region
      _
    $region9: #{decoder_train_forward.2} parent=1 // pred_fallthru
      _
    // Predicated region
    $region10: #{decoder_train_forward.2} parent=1 // pred_check
      _
    $region11: #{decoder_train_forward.2} parent=1 // pred_check_branch
      %36 = sbr.rel (0) target = $region13
    $region12: #{decoder_train_forward.2} parent=1 // pred_region
      _
    $region13: #{decoder_train_forward.2} parent=1 // pred_fallthru
      _
    // Predicated region
    $region14: #{decoder_train_forward.2} parent=1 // pred_check
      _
    $region15: #{decoder_train_forward.2} parent=1 // pred_check_branch
      %38 = sbr.rel (0) target = $region17
    $region16: #{decoder_train_forward.2} parent=1 // pred_region
      _
    $region17: #{decoder_train_forward.2} parent=1 // pred_fallthru
      _
    // Predicated region
    $region18: #{decoder_train_forward.2} parent=1 // pred_check
      _
    $region19: #{decoder_train_forward.2} parent=1 // pred_check_branch
      %40 = sbr.rel (0) target = $region21
    $region20: #{decoder_train_forward.2} parent=1 // pred_region
      _
    $region21: #{decoder_train_forward.2} parent=1 // pred_fallthru
      _
    // Predicated region
    $region22: #{decoder_train_forward.2} parent=1 // pred_check
      _
    $region23: #{decoder_train_forward.2} parent=1 // pred_check_branch
      %42 = sbr.rel (0) target = $region25
    $region24: #{decoder_train_forward.2} parent=1 // pred_region
      _
    $region25: #{decoder_train_forward.2} parent=1 // pred_fallthru
      _
    // Predicated region
    $region26: #{decoder_train_forward.2} parent=1 // pred_check
      _
    $region27: #{decoder_train_forward.2} parent=1 // pred_check_branch
      %44 = sbr.rel (0) target = $region29
    $region28: #{decoder_train_forward.2} parent=1 // pred_region
      _
    $region29: #{decoder_train_forward.2} parent=1 // pred_fallthru
      _
    // Predicated region
    $region30: #{decoder_train_forward.2} parent=1 // pred_check
      _
    $region31: #{decoder_train_forward.2} parent=1 // pred_check_branch
      %46 = sbr.rel (0) target = $region33
    $region32: #{decoder_train_forward.2} parent=1 // pred_region
      _
    $region33: #{decoder_train_forward.2} parent=1 // pred_fallthru
      _
    // Predicated region
    $region34: #{decoder_train_forward.2} parent=1 // pred_check
      _
    $region35: #{decoder_train_forward.2} parent=1 // pred_check_branch
      %48 = sbr.rel (0) target = $region37
    $region36: #{decoder_train_forward.2} parent=1 // pred_region
      _
    $region37: #{decoder_train_forward.2} parent=1 // pred_fallthru
      _
    // Predicated region
    $region38: #{decoder_train_forward.2} parent=1 // pred_check
      _
    $region39: #{decoder_train_forward.2} parent=1 // pred_check_branch
      %50 = sbr.rel (0) target = $region41
    $region40: #{decoder_train_forward.2} parent=1 // pred_region
      _
    $region41: #{decoder_train_forward.2} parent=1 // pred_fallthru
      _
    // Predicated region
    $region42: #{decoder_train_forward.2} parent=1 // pred_check
      _
    $region43: #{decoder_train_forward.2} parent=1 // pred_check_branch
      %52 = sbr.rel (0) target = $region45
    $region44: #{decoder_train_forward.2} parent=1 // pred_region
      _
    $region45: #{decoder_train_forward.2} parent=1 // pred_fallthru
      _
    // Predicated region
    $region46: #{decoder_train_forward.2} parent=1 // pred_check
      _
    $region47: #{decoder_train_forward.2} parent=1 // pred_check_branch
      %54 = sbr.rel (0) target = $region49
    $region48: #{decoder_train_forward.2} parent=1 // pred_region
      _
    $region49: #{decoder_train_forward.2} parent=1 // pred_fallthru
      _
    // Predicated region
    $region50: #{decoder_train_forward.2} parent=1 // pred_check
      _
    $region51: #{decoder_train_forward.2} parent=1 // pred_check_branch
      %56 = sbr.rel (0) target = $region53
    $region52: #{decoder_train_forward.2} parent=1 // pred_region
      _
    $region53: #{decoder_train_forward.2} parent=1 // pred_fallthru
      _
    // Predicated region
    $region54: #{decoder_train_forward.2} parent=1 // pred_check
      _
    $region55: #{decoder_train_forward.2} parent=1 // pred_check_branch
      %58 = sbr.rel (0) target = $region57
    $region56: #{decoder_train_forward.2} parent=1 // pred_region
      _
    $region57: #{decoder_train_forward.2} parent=1 // pred_fallthru
      _
    // Predicated region
    $region58: #{decoder_train_forward.2} parent=1 // pred_check
      _
    $region59: #{decoder_train_forward.2} parent=1 // pred_check_branch
      %60 = sbr.rel (0) target = $region61
    $region60: #{decoder_train_forward.2} parent=1 // pred_region
      _
    $region61: #{decoder_train_forward.2} parent=1 // pred_fallthru
      _
    // Predicated region
    $region62: #{decoder_train_forward.2} parent=1 // pred_check
      _
    $region63: #{decoder_train_forward.2} parent=1 // pred_check_branch
      %62 = sbr.rel (0) target = $region65
    $region64: #{decoder_train_forward.2} parent=1 // pred_region
      _
    $region65: #{decoder_train_forward.2} parent=1 // pred_fallthru
      _
    // Predicated region
    $region66: #{decoder_train_forward.2} parent=1 // pred_check
      _
    $region67: #{decoder_train_forward.2} parent=1 // pred_check_branch
      %64 = sbr.rel (0) target = $region69
    $region68: #{decoder_train_forward.2} parent=1 // pred_region
      _
    $region69: #{decoder_train_forward.2} parent=1 // pred_fallthru
      _
    // Predicated region
    $region70: #{decoder_train_forward.2} parent=1 // pred_check
      _
    $region71: #{decoder_train_forward.2} parent=1 // pred_check_branch
      %66 = sbr.rel (0) target = $region73
    $region72: #{decoder_train_forward.2} parent=1 // pred_region
      _
    $region73: #{decoder_train_forward.2} parent=1 // pred_fallthru
      _
    // Predicated region
    $region74: #{decoder_train_forward.2} parent=1 // pred_check
      _
    $region75: #{decoder_train_forward.2} parent=1 // pred_check_branch
      %68 = sbr.rel (0) target = $region77
    $region76: #{decoder_train_forward.2} parent=1 // pred_region
      _
    $region77: #{decoder_train_forward.2} parent=1 // pred_fallthru
      _
    // Predicated region
    $region78: #{decoder_train_forward.2} parent=1 // pred_check
      _
    $region79: #{decoder_train_forward.2} parent=1 // pred_check_branch
      %70 = sbr.rel (0) target = $region81
    $region80: #{decoder_train_forward.2} parent=1 // pred_region
      _
    $region81: #{decoder_train_forward.2} parent=1 // pred_fallthru
      _
    %v71 = vld [vmem:[%s0] sm:$0xff]
    %v72 = vld [vmem:[%s0 + $0x8] sm:$0xff]
    %v73 = vld [vmem:[%s4] sm:$0xff]
    %v74 = vld [vmem:[%s4 + $0x8] sm:$0xff]
    %v75 = vld [vmem:[%s4 + $0x10] sm:$0xff]
    %v76 = vld [vmem:[%s4 + $0x18] sm:$0xff]
    %v77 = vld [vmem:[%s5] sm:$0x1]
    %v79 = vlaneseq
    %v80 = vshrl.u32 %v79, 7
    %v81 = vsub.s32 0, %v80
    %v82 = vrot.slane %v77, %v81
    %vm84 = vcmask 261120
    %v86 = vsel %vm84, %v71, 0
    %v89 = vsel %vm84, %v72, 0
    %91 = vmatprep.subr.mxu0 0.0
    %92 = vmatpush1.msra.mxu0 0.0
    %93 = vmatprep.subr.mxu0 0.0
    %94 = vmatpush1.msra.mxu0 0.0
    %95 = vmatprep.subr.mxu0 0.0
    %96 = vmatpush1.msra.mxu0 0.0
    %97 = vmatprep.subr.mxu0 0.0
    %98 = vmatpush1.msra.mxu0 0.0
    %99 = vmatprep.subr.mxu0 0.0
    %100 = vmatpush1.msra.mxu0 0.0
    %101 = vmatprep.subr.mxu0 0.0
    %102 = vmatpush1.msra.mxu0 0.0
    %103 = vmatprep.subr.mxu0 0.0
    %104 = vmatpush1.msra.mxu0 0.0
    %105 = vmatprep.subr.mxu0 0.0
    %106 = vmatpush1.msra.mxu0 0.0
    %107 = vmatprep.subr.mxu0 0.0
    %108 = vmatpush1.msra.mxu0 0.0
    %109 = vmatprep.subr.mxu0 0.0
    %110 = vmatpush1.msra.mxu0 0.0
    %111 = vmatprep.subr.mxu0 0.0
    %112 = vmatpush1.msra.mxu0 0.0
    %113 = vmatprep.subr.mxu0 0.0
    %114 = vmatpush1.msra.mxu0 0.0
    %115 = vmatprep.subr.mxu0 0.0
    %116 = vmatpush1.msra.mxu0 %v76
    %117 = vmatprep.subr.mxu0 0.0
    %118 = vmatpush1.msra.mxu0 %v75
    %119 = vmatprep.subr.mxu0 0.0
    %120 = vmatpush1.msra.mxu0 %v74
    %121 = vmatprep.subr.mxu0 0.0
    %122 = vmatpush1.msra.mxu0 %v73
    %123 = vmatprep.subr.mxu0 0.0
    %124 = vmatpush2.msra.mxu0 0.0
    %125 = vmatprep.subr.mxu0 0.0
    %126 = vmatpush2.msra.mxu0 0.0
    %127 = vmatprep.subr.mxu0 0.0
    %128 = vmatpush2.msra.mxu0 0.0
    %129 = vmatprep.subr.mxu0 0.0
    %130 = vmatpush2.msra.mxu0 0.0
    %131 = vmatprep.subr.mxu0 0.0
    %132 = vmatpush2.msra.mxu0 0.0
    %133 = vmatprep.subr.mxu0 0.0
    %134 = vmatpush2.msra.mxu0 0.0
    %135 = vmatprep.subr.mxu0 0.0
    %136 = vmatpush2.msra.mxu0 0.0
    %137 = vmatprep.subr.mxu0 0.0
    %138 = vmatpush2.msra.mxu0 0.0
    %139 = vmatprep.subr.mxu0 0.0
    %140 = vmatpush2.msra.mxu0 0.0
    %141 = vmatprep.subr.mxu0 0.0
    %142 = vmatpush2.msra.mxu0 0.0
    %143 = vmatprep.subr.mxu0 0.0
    %144 = vmatpush2.msra.mxu0 0.0
    %145 = vmatprep.subr.mxu0 0.0
    %146 = vmatpush2.msra.mxu0 0.0
    %147 = vmatprep.subr.mxu0 0.0
    %148 = vmatpush2.msra.mxu0 0.0
    %149 = vmatprep.subr.mxu0 0.0
    %150 = vmatpush2.msra.mxu0 0.0
    %151 = vmatprep.subr.mxu0 0.0
    %152 = vmatpush2.msra.mxu0 0.0
    %153 = vmatprep.subr.mxu0 0.0
    %154 = vmatpush2.msra.mxu0 0.0
    %155 = vmatprep.mubr.f32.mxu0 0.0
    %156 = vmatmul.mubr.f32.gmra.mxu0 %v86
    %v157 = vpop.f32.mrf.mxu0
    %v158 = vadd.f32 %v82, %v157
    %v159 = vpop.f32.mrf.mxu0
    %160 = vmatprep.mubr.f32.mxu0 0.0
    %161 = vmatmul.mubr.f32.gmra.mxu0 %v89
    %v162 = vpop.f32.mrf.mxu0
    %v163 = vadd.f32 %v82, %v162
    %v164 = vpop.f32.mrf.mxu0
    %165 = vdwg.mxu0
    %v166 = vsel %vm84, %v158, 0.0
    %167 = vadd.xlane.f32.xlu0 %v166
    %v168 = vpop.xlane.xlu0 %167
    %v169 = vsel %vm84, %v163, 0.0
    %170 = vadd.xlane.f32.xlu0 %v169
    %v171 = vpop.xlane.xlu0 %170
    %v172 = vrcp.pop 32.0
    %v173 = vmul.f32 %v168, %v172
    %v174 = vmul.f32 %v171, %v172
    %v175 = vsub.f32 %v158, %v173
    %v176 = vsub.f32 %v163, %v174
    %v177 = vmul.f32 %v175, %v175
    %v178 = vmul.f32 %v176, %v176
    %v179 = vsel %vm84, %v177, 0.0
    %180 = vadd.xlane.f32.xlu0 %v179
    %v181 = vpop.xlane.xlu0 %180
    %v182 = vsel %vm84, %v178, 0.0
    %183 = vadd.xlane.f32.xlu0 %v182
    %v184 = vpop.xlane.xlu0 %183
    %v185 = vmul.f32 %v181, %v172
    %v186 = vmul.f32 %v184, %v172
    %v187 = vadd.f32 %v185, 1e-05
    %v188 = vadd.f32 %v186, 1e-05
    %v189 = vrsqrt.pop %v187
    %v190 = vrsqrt.pop %v188
    %v191 = vmul.f32 %v175, %v189
    %v192 = vmul.f32 %v176, %v190
    %v193 = vld [vmem:[%s6] sm:$0x1]
    %v195 = vlaneseq
    %v196 = vshrl.u32 %v195, 7
    %v197 = vsub.s32 0, %v196
    %v198 = vrot.slane %v193, %v197
    %v200 = vmul.f32 %v191, %v198
    %v201 = vmul.f32 %v192, %v198
    %v202 = vld [vmem:[%s7] sm:$0x1]
    %v204 = vlaneseq
    %v205 = vshrl.u32 %v204, 7
    %v206 = vsub.s32 0, %v205
    %v207 = vrot.slane %v202, %v206
    %v209 = vadd.f32 %v200, %v207
    %v210 = vadd.f32 %v201, %v207
    %v211 = vld [vmem:[%s8] sm:$0xff]
    %v212 = vld [vmem:[%s8 + $0x8] sm:$0xff]
    %v213 = vld [vmem:[%s8 + $0x10] sm:$0xff]
    %v214 = vld [vmem:[%s8 + $0x18] sm:$0xff]
    %v215 = vld [vmem:[%s10] sm:$0x1]
    %v217 = vlaneseq
    %v218 = vshrl.u32 %v217, 7
    %v219 = vsub.s32 0, %v218
    %v220 = vrot.slane %v215, %v219
    %v223 = vsel %vm84, %v209, 0
    %v226 = vsel %vm84, %v210, 0
    %228 = vmatprep.subr.mxu0 0.0
    %229 = vmatpush1.msra.mxu0 0.0
    %230 = vmatprep.subr.mxu0 0.0
    %231 = vmatpush1.msra.mxu0 0.0
    %232 = vmatprep.subr.mxu0 0.0
    %233 = vmatpush1.msra.mxu0 0.0
    %234 = vmatprep.subr.mxu0 0.0
    %235 = vmatpush1.msra.mxu0 0.0
    %236 = vmatprep.subr.mxu0 0.0
    %237 = vmatpush1.msra.mxu0 0.0
    %238 = vmatprep.subr.mxu0 0.0
    %239 = vmatpush1.msra.mxu0 0.0
    %240 = vmatprep.subr.mxu0 0.0
    %241 = vmatpush1.msra.mxu0 0.0
    %242 = vmatprep.subr.mxu0 0.0
    %243 = vmatpush1.msra.mxu0 0.0
    %244 = vmatprep.subr.mxu0 0.0
    %245 = vmatpush1.msra.mxu0 0.0
    %246 = vmatprep.subr.mxu0 0.0
    %247 = vmatpush1.msra.mxu0 0.0
    %248 = vmatprep.subr.mxu0 0.0
    %249 = vmatpush1.msra.mxu0 0.0
    %250 = vmatprep.subr.mxu0 0.0
    %251 = vmatpush1.msra.mxu0 0.0
    %252 = vmatprep.subr.mxu0 0.0
    %253 = vmatpush1.msra.mxu0 %v214
    %254 = vmatprep.subr.mxu0 0.0
    %255 = vmatpush1.msra.mxu0 %v213
    %256 = vmatprep.subr.mxu0 0.0
    %257 = vmatpush1.msra.mxu0 %v212
    %258 = vmatprep.subr.mxu0 0.0
    %259 = vmatpush1.msra.mxu0 %v211
    %260 = vmatprep.subr.mxu0 0.0
    %261 = vmatpush2.msra.mxu0 0.0
    %262 = vmatprep.subr.mxu0 0.0
    %263 = vmatpush2.msra.mxu0 0.0
    %264 = vmatprep.subr.mxu0 0.0
    %265 = vmatpush2.msra.mxu0 0.0
    %266 = vmatprep.subr.mxu0 0.0
    %267 = vmatpush2.msra.mxu0 0.0
    %268 = vmatprep.subr.mxu0 0.0
    %269 = vmatpush2.msra.mxu0 0.0
    %270 = vmatprep.subr.mxu0 0.0
    %271 = vmatpush2.msra.mxu0 0.0
    %272 = vmatprep.subr.mxu0 0.0
    %273 = vmatpush2.msra.mxu0 0.0
    %274 = vmatprep.subr.mxu0 0.0
    %275 = vmatpush2.msra.mxu0 0.0
    %276 = vmatprep.subr.mxu0 0.0
    %277 = vmatpush2.msra.mxu0 0.0
    %278 = vmatprep.subr.mxu0 0.0
    %279 = vmatpush2.msra.mxu0 0.0
    %280 = vmatprep.subr.mxu0 0.0
    %281 = vmatpush2.msra.mxu0 0.0
    %282 = vmatprep.subr.mxu0 0.0
    %283 = vmatpush2.msra.mxu0 0.0
    %284 = vmatprep.subr.mxu0 0.0
    %285 = vmatpush2.msra.mxu0 0.0
    %286 = vmatprep.subr.mxu0 0.0
    %287 = vmatpush2.msra.mxu0 0.0
    %288 = vmatprep.subr.mxu0 0.0
    %289 = vmatpush2.msra.mxu0 0.0
    %290 = vmatprep.subr.mxu0 0.0
    %291 = vmatpush2.msra.mxu0 0.0
    %292 = vmatprep.mubr.f32.mxu0 0.0
    %293 = vmatmul.mubr.f32.gmra.mxu0 %v223
    %v294 = vpop.f32.mrf.mxu0
    %v295 = vadd.f32 %v220, %v294
    %v296 = vpop.f32.mrf.mxu0
    %297 = vmatprep.mubr.f32.mxu0 0.0
    %298 = vmatmul.mubr.f32.gmra.mxu0 %v226
    %v299 = vpop.f32.mrf.mxu0
    %v300 = vadd.f32 %v220, %v299
    %v301 = vpop.f32.mrf.mxu0
    %302 = vdwg.mxu0
    %v303 = vld [vmem:[%s9] sm:$0xff]
    %v304 = vld [vmem:[%s9 + $0x8] sm:$0xff]
    %v305 = vld [vmem:[%s9 + $0x10] sm:$0xff]
    %v306 = vld [vmem:[%s9 + $0x18] sm:$0xff]
    %v307 = vld [vmem:[%s2] sm:$0x3]
    %v308 = vld [vmem:[%s3] sm:$0x3]
    %v310 = vsel %vm84, %v307, 0
    %312 = vmatprep.subr.mxu0 0.0
    %313 = vmatpush1.msra.mxu0 0.0
    %314 = vmatprep.subr.mxu0 0.0
    %315 = vmatpush1.msra.mxu0 0.0
    %316 = vmatprep.subr.mxu0 0.0
    %317 = vmatpush1.msra.mxu0 0.0
    %318 = vmatprep.subr.mxu0 0.0
    %319 = vmatpush1.msra.mxu0 0.0
    %320 = vmatprep.subr.mxu0 0.0
    %321 = vmatpush1.msra.mxu0 0.0
    %322 = vmatprep.subr.mxu0 0.0
    %323 = vmatpush1.msra.mxu0 0.0
    %324 = vmatprep.subr.mxu0 0.0
    %325 = vmatpush1.msra.mxu0 0.0
    %326 = vmatprep.subr.mxu0 0.0
    %327 = vmatpush1.msra.mxu0 0.0
    %328 = vmatprep.subr.mxu0 0.0
    %329 = vmatpush1.msra.mxu0 0.0
    %330 = vmatprep.subr.mxu0 0.0
    %331 = vmatpush1.msra.mxu0 0.0
    %332 = vmatprep.subr.mxu0 0.0
    %333 = vmatpush1.msra.mxu0 0.0
    %334 = vmatprep.subr.mxu0 0.0
    %335 = vmatpush1.msra.mxu0 0.0
    %336 = vmatprep.subr.mxu0 0.0
    %337 = vmatpush1.msra.mxu0 %v306
    %338 = vmatprep.subr.mxu0 0.0
    %339 = vmatpush1.msra.mxu0 %v305
    %340 = vmatprep.subr.mxu0 0.0
    %341 = vmatpush1.msra.mxu0 %v304
    %342 = vmatprep.subr.mxu0 0.0
    %343 = vmatpush1.msra.mxu0 %v303
    %344 = vmatprep.subr.mxu0 0.0
    %345 = vmatpush2.msra.mxu0 0.0
    %346 = vmatprep.subr.mxu0 0.0
    %347 = vmatpush2.msra.mxu0 0.0
    %348 = vmatprep.subr.mxu0 0.0
    %349 = vmatpush2.msra.mxu0 0.0
    %350 = vmatprep.subr.mxu0 0.0
    %351 = vmatpush2.msra.mxu0 0.0
    %352 = vmatprep.subr.mxu0 0.0
    %353 = vmatpush2.msra.mxu0 0.0
    %354 = vmatprep.subr.mxu0 0.0
    %355 = vmatpush2.msra.mxu0 0.0
    %356 = vmatprep.subr.mxu0 0.0
    %357 = vmatpush2.msra.mxu0 0.0
    %358 = vmatprep.subr.mxu0 0.0
    %359 = vmatpush2.msra.mxu0 0.0
    %360 = vmatprep.subr.mxu0 0.0
    %361 = vmatpush2.msra.mxu0 0.0
    %362 = vmatprep.subr.mxu0 0.0
    %363 = vmatpush2.msra.mxu0 0.0
    %364 = vmatprep.subr.mxu0 0.0
    %365 = vmatpush2.msra.mxu0 0.0
    %366 = vmatprep.subr.mxu0 0.0
    %367 = vmatpush2.msra.mxu0 0.0
    %368 = vmatprep.subr.mxu0 0.0
    %369 = vmatpush2.msra.mxu0 0.0
    %370 = vmatprep.subr.mxu0 0.0
    %371 = vmatpush2.msra.mxu0 0.0
    %372 = vmatprep.subr.mxu0 0.0
    %373 = vmatpush2.msra.mxu0 0.0
    %374 = vmatprep.subr.mxu0 0.0
    %375 = vmatpush2.msra.mxu0 0.0
    %376 = vmatprep.mubr.f32.mxu0 0.0
    %377 = vmatmul.mubr.f32.gmra.mxu0 %v310
    %v378 = vpop.f32.mrf.mxu0
    %v379 = vadd.f32 0.0, %v378
    %v380 = vpop.f32.mrf.mxu0
    %381 = vdwg.mxu0
    %v382 = vadd.f32 %v295, %v379
    %v383 = vxor.u32 %v382, 2147483648
    %v384 = vmul.f32 %v383, 1.442695
    %v385 = vpow.pop %v384
    %v386 = vadd.f32 %v385, 1.0
    %v387 = vrcp.pop %v386
    %v388 = vmul.f32 1.0, %v387
    %v389 = vtanh.pop %v382
    %391 = vrot.lane.b32.xlu0 %v308, 32
    %v392 = vpop.permute.xlu0 %391
    %v394 = vmul.f32 %v388, %v392
    %396 = vrot.lane.b32.xlu0 %v389, 64
    %v397 = vpop.permute.xlu0 %396
    %v399 = vmul.f32 %v388, %v397
    %401 = vrot.lane.b32.xlu0 %v399, 32
    %v402 = vpop.permute.xlu0 %401
    %v404 = vadd.f32 %v394, %v402
    %v405 = vtanh.pop %v404
    %407 = vrot.lane.b32.xlu0 %v405, 64
    %v408 = vpop.permute.xlu0 %407
    %v410 = vmul.f32 %v388, %v408
    %412 = vrot.lane.b32.xlu0 %v410, 32
    %v413 = vpop.permute.xlu0 %412
    %vm415 = vcmask 254976
    %416 = vst.msk [vmem:[#allocation2] sm:$0x3] %vm415, %v413
    %v417 = vsel %vm84, %v413, 0
    %419 = vmatprep.subr.mxu0 0.0
    %420 = vmatpush1.msra.mxu0 0.0
    %421 = vmatprep.subr.mxu0 0.0
    %422 = vmatpush1.msra.mxu0 0.0
    %423 = vmatprep.subr.mxu0 0.0
    %424 = vmatpush1.msra.mxu0 0.0
    %425 = vmatprep.subr.mxu0 0.0
    %426 = vmatpush1.msra.mxu0 0.0
    %427 = vmatprep.subr.mxu0 0.0
    %428 = vmatpush1.msra.mxu0 0.0
    %429 = vmatprep.subr.mxu0 0.0
    %430 = vmatpush1.msra.mxu0 0.0
    %431 = vmatprep.subr.mxu0 0.0
    %432 = vmatpush1.msra.mxu0 0.0
    %433 = vmatprep.subr.mxu0 0.0
    %434 = vmatpush1.msra.mxu0 0.0
    %435 = vmatprep.subr.mxu0 0.0
    %436 = vmatpush1.msra.mxu0 0.0
    %437 = vmatprep.subr.mxu0 0.0
    %438 = vmatpush1.msra.mxu0 0.0
    %439 = vmatprep.subr.mxu0 0.0
    %440 = vmatpush1.msra.mxu0 0.0
    %441 = vmatprep.subr.mxu0 0.0
    %442 = vmatpush1.msra.mxu0 0.0
    %443 = vmatprep.subr.mxu0 0.0
    %444 = vmatpush1.msra.mxu0 %v306
    %445 = vmatprep.subr.mxu0 0.0
    %446 = vmatpush1.msra.mxu0 %v305
    %447 = vmatprep.subr.mxu0 0.0
    %448 = vmatpush1.msra.mxu0 %v304
    %449 = vmatprep.subr.mxu0 0.0
    %450 = vmatpush1.msra.mxu0 %v303
    %451 = vmatprep.subr.mxu0 0.0
    %452 = vmatpush2.msra.mxu0 0.0
    %453 = vmatprep.subr.mxu0 0.0
    %454 = vmatpush2.msra.mxu0 0.0
    %455 = vmatprep.subr.mxu0 0.0
    %456 = vmatpush2.msra.mxu0 0.0
    %457 = vmatprep.subr.mxu0 0.0
    %458 = vmatpush2.msra.mxu0 0.0
    %459 = vmatprep.subr.mxu0 0.0
    %460 = vmatpush2.msra.mxu0 0.0
    %461 = vmatprep.subr.mxu0 0.0
    %462 = vmatpush2.msra.mxu0 0.0
    %463 = vmatprep.subr.mxu0 0.0
    %464 = vmatpush2.msra.mxu0 0.0
    %465 = vmatprep.subr.mxu0 0.0
    %466 = vmatpush2.msra.mxu0 0.0
    %467 = vmatprep.subr.mxu0 0.0
    %468 = vmatpush2.msra.mxu0 0.0
    %469 = vmatprep.subr.mxu0 0.0
    %470 = vmatpush2.msra.mxu0 0.0
    %471 = vmatprep.subr.mxu0 0.0
    %472 = vmatpush2.msra.mxu0 0.0
    %473 = vmatprep.subr.mxu0 0.0
    %474 = vmatpush2.msra.mxu0 0.0
    %475 = vmatprep.subr.mxu0 0.0
    %476 = vmatpush2.msra.mxu0 0.0
    %477 = vmatprep.subr.mxu0 0.0
    %478 = vmatpush2.msra.mxu0 0.0
    %479 = vmatprep.subr.mxu0 0.0
    %480 = vmatpush2.msra.mxu0 0.0
    %481 = vmatprep.subr.mxu0 0.0
    %482 = vmatpush2.msra.mxu0 0.0
    %483 = vmatprep.mubr.f32.mxu0 0.0
    %484 = vmatmul.mubr.f32.gmra.mxu0 %v417
    %v485 = vpop.f32.mrf.mxu0
    %v486 = vadd.f32 0.0, %v485
    %v487 = vpop.f32.mrf.mxu0
    %488 = vdwg.mxu0
    %v490 = vrot.slane %v486, 6
    %v492 = vadd.f32 %v295, %v490
    %v493 = vxor.u32 %v492, 2147483648
    %v494 = vmul.f32 %v493, 1.442695
    %v495 = vpow.pop %v494
    %v496 = vadd.f32 %v495, 1.0
    %v497 = vrcp.pop %v496
    %v498 = vmul.f32 1.0, %v497
    %v499 = vtanh.pop %v492
    %v501 = vrot.slane %v404, 6
    %v503 = vmul.f32 %v498, %v501
    %505 = vrot.lane.b32.xlu0 %v499, 64
    %v506 = vpop.permute.xlu0 %505
    %v508 = vmul.f32 %v498, %v506
    %510 = vrot.lane.b32.xlu0 %v508, 32
    %v511 = vpop.permute.xlu0 %510
    %v513 = vadd.f32 %v503, %v511
    %v514 = vtanh.pop %v513
    %516 = vrot.lane.b32.xlu0 %v514, 64
    %v517 = vpop.permute.xlu0 %516
    %v519 = vmul.f32 %v498, %v517
    %521 = vrot.lane.b32.xlu0 %v519, 32
    %v522 = vpop.permute.xlu0 %521
    %vm524 = vcmask 257026
    %525 = vst.msk [vmem:[#allocation2] sm:$0xc] %vm524, %v522
    %v526 = vrot.slane %v519, 2
    %527 = vrot.lane.b32.xlu0 %v526, 32
    %v528 = vpop.permute.xlu0 %527
    %v529 = vsel %vm84, %v528, 0
    %531 = vmatprep.subr.mxu0 0.0
    %532 = vmatpush1.msra.mxu0 0.0
    %533 = vmatprep.subr.mxu0 0.0
    %534 = vmatpush1.msra.mxu0 0.0
    %535 = vmatprep.subr.mxu0 0.0
    %536 = vmatpush1.msra.mxu0 0.0
    %537 = vmatprep.subr.mxu0 0.0
    %538 = vmatpush1.msra.mxu0 0.0
    %539 = vmatprep.subr.mxu0 0.0
    %540 = vmatpush1.msra.mxu0 0.0
    %541 = vmatprep.subr.mxu0 0.0
    %542 = vmatpush1.msra.mxu0 0.0
    %543 = vmatprep.subr.mxu0 0.0
    %544 = vmatpush1.msra.mxu0 0.0
    %545 = vmatprep.subr.mxu0 0.0
    %546 = vmatpush1.msra.mxu0 0.0
    %547 = vmatprep.subr.mxu0 0.0
    %548 = vmatpush1.msra.mxu0 0.0
    %549 = vmatprep.subr.mxu0 0.0
    %550 = vmatpush1.msra.mxu0 0.0
    %551 = vmatprep.subr.mxu0 0.0
    %552 = vmatpush1.msra.mxu0 0.0
    %553 = vmatprep.subr.mxu0 0.0
    %554 = vmatpush1.msra.mxu0 0.0
    %555 = vmatprep.subr.mxu0 0.0
    %556 = vmatpush1.msra.mxu0 %v306
    %557 = vmatprep.subr.mxu0 0.0
    %558 = vmatpush1.msra.mxu0 %v305
    %559 = vmatprep.subr.mxu0 0.0
    %560 = vmatpush1.msra.mxu0 %v304
    %561 = vmatprep.subr.mxu0 0.0
    %562 = vmatpush1.msra.mxu0 %v303
    %563 = vmatprep.subr.mxu0 0.0
    %564 = vmatpush2.msra.mxu0 0.0
    %565 = vmatprep.subr.mxu0 0.0
    %566 = vmatpush2.msra.mxu0 0.0
    %567 = vmatprep.subr.mxu0 0.0
    %568 = vmatpush2.msra.mxu0 0.0
    %569 = vmatprep.subr.mxu0 0.0
    %570 = vmatpush2.msra.mxu0 0.0
    %571 = vmatprep.subr.mxu0 0.0
    %572 = vmatpush2.msra.mxu0 0.0
    %573 = vmatprep.subr.mxu0 0.0
    %574 = vmatpush2.msra.mxu0 0.0
    %575 = vmatprep.subr.mxu0 0.0
    %576 = vmatpush2.msra.mxu0 0.0
    %577 = vmatprep.subr.mxu0 0.0
    %578 = vmatpush2.msra.mxu0 0.0
    %579 = vmatprep.subr.mxu0 0.0
    %580 = vmatpush2.msra.mxu0 0.0
    %581 = vmatprep.subr.mxu0 0.0
    %582 = vmatpush2.msra.mxu0 0.0
    %583 = vmatprep.subr.mxu0 0.0
    %584 = vmatpush2.msra.mxu0 0.0
    %585 = vmatprep.subr.mxu0 0.0
    %586 = vmatpush2.msra.mxu0 0.0
    %587 = vmatprep.subr.mxu0 0.0
    %588 = vmatpush2.msra.mxu0 0.0
    %589 = vmatprep.subr.mxu0 0.0
    %590 = vmatpush2.msra.mxu0 0.0
    %591 = vmatprep.subr.mxu0 0.0
    %592 = vmatpush2.msra.mxu0 0.0
    %593 = vmatprep.subr.mxu0 0.0
    %594 = vmatpush2.msra.mxu0 0.0
    %595 = vmatprep.mubr.f32.mxu0 0.0
    %596 = vmatmul.mubr.f32.gmra.mxu0 %v529
    %v597 = vpop.f32.mrf.mxu0
    %v598 = vadd.f32 0.0, %v597
    %v599 = vpop.f32.mrf.mxu0
    %600 = vdwg.mxu0
    %v602 = vrot.slane %v598, 4
    %v604 = vadd.f32 %v295, %v602
    %v605 = vxor.u32 %v604, 2147483648
    %v606 = vmul.f32 %v605, 1.442695
    %v607 = vpow.pop %v606
    %v608 = vadd.f32 %v607, 1.0
    %v609 = vrcp.pop %v608
    %v610 = vmul.f32 1.0, %v609
    %v611 = vtanh.pop %v604
    %v613 = vrot.slane %v513, 6
    %v615 = vmul.f32 %v610, %v613
    %617 = vrot.lane.b32.xlu0 %v611, 64
    %v618 = vpop.permute.xlu0 %617
    %v620 = vmul.f32 %v610, %v618
    %622 = vrot.lane.b32.xlu0 %v620, 32
    %v623 = vpop.permute.xlu0 %622
    %v625 = vadd.f32 %v615, %v623
    %v626 = vtanh.pop %v625
    %628 = vrot.lane.b32.xlu0 %v626, 64
    %v629 = vpop.permute.xlu0 %628
    %v631 = vmul.f32 %v610, %v629
    %633 = vrot.lane.b32.xlu0 %v631, 32
    %v634 = vpop.permute.xlu0 %633
    %vm636 = vcmask 259076
    %637 = vst.msk [vmem:[#allocation2] sm:$0x30] %vm636, %v634
    %v638 = vrot.slane %v631, 4
    %639 = vrot.lane.b32.xlu0 %v638, 32
    %v640 = vpop.permute.xlu0 %639
    %v641 = vsel %vm84, %v640, 0
    %643 = vmatprep.subr.mxu0 0.0
    %644 = vmatpush1.msra.mxu0 0.0
    %645 = vmatprep.subr.mxu0 0.0
    %646 = vmatpush1.msra.mxu0 0.0
    %647 = vmatprep.subr.mxu0 0.0
    %648 = vmatpush1.msra.mxu0 0.0
    %649 = vmatprep.subr.mxu0 0.0
    %650 = vmatpush1.msra.mxu0 0.0
    %651 = vmatprep.subr.mxu0 0.0
    %652 = vmatpush1.msra.mxu0 0.0
    %653 = vmatprep.subr.mxu0 0.0
    %654 = vmatpush1.msra.mxu0 0.0
    %655 = vmatprep.subr.mxu0 0.0
    %656 = vmatpush1.msra.mxu0 0.0
    %657 = vmatprep.subr.mxu0 0.0
    %658 = vmatpush1.msra.mxu0 0.0
    %659 = vmatprep.subr.mxu0 0.0
    %660 = vmatpush1.msra.mxu0 0.0
    %661 = vmatprep.subr.mxu0 0.0
    %662 = vmatpush1.msra.mxu0 0.0
    %663 = vmatprep.subr.mxu0 0.0
    %664 = vmatpush1.msra.mxu0 0.0
    %665 = vmatprep.subr.mxu0 0.0
    %666 = vmatpush1.msra.mxu0 0.0
    %667 = vmatprep.subr.mxu0 0.0
    %668 = vmatpush1.msra.mxu0 %v306
    %669 = vmatprep.subr.mxu0 0.0
    %670 = vmatpush1.msra.mxu0 %v305
    %671 = vmatprep.subr.mxu0 0.0
    %672 = vmatpush1.msra.mxu0 %v304
    %673 = vmatprep.subr.mxu0 0.0
    %674 = vmatpush1.msra.mxu0 %v303
    %675 = vmatprep.subr.mxu0 0.0
    %676 = vmatpush2.msra.mxu0 0.0
    %677 = vmatprep.subr.mxu0 0.0
    %678 = vmatpush2.msra.mxu0 0.0
    %679 = vmatprep.subr.mxu0 0.0
    %680 = vmatpush2.msra.mxu0 0.0
    %681 = vmatprep.subr.mxu0 0.0
    %682 = vmatpush2.msra.mxu0 0.0
    %683 = vmatprep.subr.mxu0 0.0
    %684 = vmatpush2.msra.mxu0 0.0
    %685 = vmatprep.subr.mxu0 0.0
    %686 = vmatpush2.msra.mxu0 0.0
    %687 = vmatprep.subr.mxu0 0.0
    %688 = vmatpush2.msra.mxu0 0.0
    %689 = vmatprep.subr.mxu0 0.0
    %690 = vmatpush2.msra.mxu0 0.0
    %691 = vmatprep.subr.mxu0 0.0
    %692 = vmatpush2.msra.mxu0 0.0
    %693 = vmatprep.subr.mxu0 0.0
    %694 = vmatpush2.msra.mxu0 0.0
    %695 = vmatprep.subr.mxu0 0.0
    %696 = vmatpush2.msra.mxu0 0.0
    %697 = vmatprep.subr.mxu0 0.0
    %698 = vmatpush2.msra.mxu0 0.0
    %699 = vmatprep.subr.mxu0 0.0
    %700 = vmatpush2.msra.mxu0 0.0
    %701 = vmatprep.subr.mxu0 0.0
    %702 = vmatpush2.msra.mxu0 0.0
    %703 = vmatprep.subr.mxu0 0.0
    %704 = vmatpush2.msra.mxu0 0.0
    %705 = vmatprep.subr.mxu0 0.0
    %706 = vmatpush2.msra.mxu0 0.0
    %707 = vmatprep.mubr.f32.mxu0 0.0
    %708 = vmatmul.mubr.f32.gmra.mxu0 %v641
    %v709 = vpop.f32.mrf.mxu0
    %v710 = vadd.f32 0.0, %v709
    %v711 = vpop.f32.mrf.mxu0
    %712 = vdwg.mxu0
    %v714 = vrot.slane %v710, 2
    %v716 = vadd.f32 %v295, %v714
    %v717 = vxor.u32 %v716, 2147483648
    %v718 = vmul.f32 %v717, 1.442695
    %v719 = vpow.pop %v718
    %v720 = vadd.f32 %v719, 1.0
    %v721 = vrcp.pop %v720
    %v722 = vmul.f32 1.0, %v721
    %v723 = vtanh.pop %v716
    %v725 = vrot.slane %v625, 6
    %v727 = vmul.f32 %v722, %v725
    %729 = vrot.lane.b32.xlu0 %v723, 64
    %v730 = vpop.permute.xlu0 %729
    %v732 = vmul.f32 %v722, %v730
    %734 = vrot.lane.b32.xlu0 %v732, 32
    %v735 = vpop.permute.xlu0 %734
    %v737 = vadd.f32 %v727, %v735
    %v738 = vtanh.pop %v737
    %740 = vrot.lane.b32.xlu0 %v738, 64
    %v741 = vpop.permute.xlu0 %740
    %v743 = vmul.f32 %v722, %v741
    %745 = vrot.lane.b32.xlu0 %v743, 32
    %v746 = vpop.permute.xlu0 %745
    %vm748 = vcmask 261126
    %749 = vst.msk [vmem:[#allocation2] sm:$0xc0] %vm748, %v746
    %v750 = vrot.slane %v743, 6
    %751 = vrot.lane.b32.xlu0 %v750, 32
    %v752 = vpop.permute.xlu0 %751
    %v753 = vsel %vm84, %v752, 0
    %755 = vmatprep.subr.mxu0 0.0
    %756 = vmatpush1.msra.mxu0 0.0
    %757 = vmatprep.subr.mxu0 0.0
    %758 = vmatpush1.msra.mxu0 0.0
    %759 = vmatprep.subr.mxu0 0.0
    %760 = vmatpush1.msra.mxu0 0.0
    %761 = vmatprep.subr.mxu0 0.0
    %762 = vmatpush1.msra.mxu0 0.0
    %763 = vmatprep.subr.mxu0 0.0
    %764 = vmatpush1.msra.mxu0 0.0
    %765 = vmatprep.subr.mxu0 0.0
    %766 = vmatpush1.msra.mxu0 0.0
    %767 = vmatprep.subr.mxu0 0.0
    %768 = vmatpush1.msra.mxu0 0.0
    %769 = vmatprep.subr.mxu0 0.0
    %770 = vmatpush1.msra.mxu0 0.0
    %771 = vmatprep.subr.mxu0 0.0
    %772 = vmatpush1.msra.mxu0 0.0
    %773 = vmatprep.subr.mxu0 0.0
    %774 = vmatpush1.msra.mxu0 0.0
    %775 = vmatprep.subr.mxu0 0.0
    %776 = vmatpush1.msra.mxu0 0.0
    %777 = vmatprep.subr.mxu0 0.0
    %778 = vmatpush1.msra.mxu0 0.0
    %779 = vmatprep.subr.mxu0 0.0
    %780 = vmatpush1.msra.mxu0 %v306
    %781 = vmatprep.subr.mxu0 0.0
    %782 = vmatpush1.msra.mxu0 %v305
    %783 = vmatprep.subr.mxu0 0.0
    %784 = vmatpush1.msra.mxu0 %v304
    %785 = vmatprep.subr.mxu0 0.0
    %786 = vmatpush1.msra.mxu0 %v303
    %787 = vmatprep.subr.mxu0 0.0
    %788 = vmatpush2.msra.mxu0 0.0
    %789 = vmatprep.subr.mxu0 0.0
    %790 = vmatpush2.msra.mxu0 0.0
    %791 = vmatprep.subr.mxu0 0.0
    %792 = vmatpush2.msra.mxu0 0.0
    %793 = vmatprep.subr.mxu0 0.0
    %794 = vmatpush2.msra.mxu0 0.0
    %795 = vmatprep.subr.mxu0 0.0
    %796 = vmatpush2.msra.mxu0 0.0
    %797 = vmatprep.subr.mxu0 0.0
    %798 = vmatpush2.msra.mxu0 0.0
    %799 = vmatprep.subr.mxu0 0.0
    %800 = vmatpush2.msra.mxu0 0.0
    %801 = vmatprep.subr.mxu0 0.0
    %802 = vmatpush2.msra.mxu0 0.0
    %803 = vmatprep.subr.mxu0 0.0
    %804 = vmatpush2.msra.mxu0 0.0
    %805 = vmatprep.subr.mxu0 0.0
    %806 = vmatpush2.msra.mxu0 0.0
    %807 = vmatprep.subr.mxu0 0.0
    %808 = vmatpush2.msra.mxu0 0.0
    %809 = vmatprep.subr.mxu0 0.0
    %810 = vmatpush2.msra.mxu0 0.0
    %811 = vmatprep.subr.mxu0 0.0
    %812 = vmatpush2.msra.mxu0 0.0
    %813 = vmatprep.subr.mxu0 0.0
    %814 = vmatpush2.msra.mxu0 0.0
    %815 = vmatprep.subr.mxu0 0.0
    %816 = vmatpush2.msra.mxu0 0.0
    %817 = vmatprep.subr.mxu0 0.0
    %818 = vmatpush2.msra.mxu0 0.0
    %819 = vmatprep.mubr.f32.mxu0 0.0
    %820 = vmatmul.mubr.f32.gmra.mxu0 %v753
    %v821 = vpop.f32.mrf.mxu0
    %v822 = vadd.f32 0.0, %v821
    %v823 = vpop.f32.mrf.mxu0
    %824 = vdwg.mxu0
    %v825 = vadd.f32 %v300, %v822
    %v826 = vxor.u32 %v825, 2147483648
    %v827 = vmul.f32 %v826, 1.442695
    %v828 = vpow.pop %v827
    %v829 = vadd.f32 %v828, 1.0
    %v830 = vrcp.pop %v829
    %v831 = vmul.f32 1.0, %v830
    %v832 = vtanh.pop %v825
    %v834 = vrot.slane %v737, 6
    %v836 = vmul.f32 %v831, %v834
    %838 = vrot.lane.b32.xlu0 %v832, 64
    %v839 = vpop.permute.xlu0 %838
    %v841 = vmul.f32 %v831, %v839
    %843 = vrot.lane.b32.xlu0 %v841, 32
    %v844 = vpop.permute.xlu0 %843
    %v846 = vadd.f32 %v836, %v844
    %v847 = vtanh.pop %v846
    %849 = vrot.lane.b32.xlu0 %v847, 64
    %v850 = vpop.permute.xlu0 %849
    %v852 = vmul.f32 %v831, %v850
    %854 = vrot.lane.b32.xlu0 %v852, 32
    %v855 = vpop.permute.xlu0 %854
    %857 = vst.msk [vmem:[#allocation2 + $0x8] sm:$0x3] %vm415, %v855
    %v858 = vsel %vm84, %v855, 0
    %860 = vmatprep.subr.mxu0 0.0
    %861 = vmatpush1.msra.mxu0 0.0
    %862 = vmatprep.subr.mxu0 0.0
    %863 = vmatpush1.msra.mxu0 0.0
    %864 = vmatprep.subr.mxu0 0.0
    %865 = vmatpush1.msra.mxu0 0.0
    %866 = vmatprep.subr.mxu0 0.0
    %867 = vmatpush1.msra.mxu0 0.0
    %868 = vmatprep.subr.mxu0 0.0
    %869 = vmatpush1.msra.mxu0 0.0
    %870 = vmatprep.subr.mxu0 0.0
    %871 = vmatpush1.msra.mxu0 0.0
    %872 = vmatprep.subr.mxu0 0.0
    %873 = vmatpush1.msra.mxu0 0.0
    %874 = vmatprep.subr.mxu0 0.0
    %875 = vmatpush1.msra.mxu0 0.0
    %876 = vmatprep.subr.mxu0 0.0
    %877 = vmatpush1.msra.mxu0 0.0
    %878 = vmatprep.subr.mxu0 0.0
    %879 = vmatpush1.msra.mxu0 0.0
    %880 = vmatprep.subr.mxu0 0.0
    %881 = vmatpush1.msra.mxu0 0.0
    %882 = vmatprep.subr.mxu0 0.0
    %883 = vmatpush1.msra.mxu0 0.0
    %884 = vmatprep.subr.mxu0 0.0
    %885 = vmatpush1.msra.mxu0 %v306
    %886 = vmatprep.subr.mxu0 0.0
    %887 = vmatpush1.msra.mxu0 %v305
    %888 = vmatprep.subr.mxu0 0.0
    %889 = vmatpush1.msra.mxu0 %v304
    %890 = vmatprep.subr.mxu0 0.0
    %891 = vmatpush1.msra.mxu0 %v303
    %892 = vmatprep.subr.mxu0 0.0
    %893 = vmatpush2.msra.mxu0 0.0
    %894 = vmatprep.subr.mxu0 0.0
    %895 = vmatpush2.msra.mxu0 0.0
    %896 = vmatprep.subr.mxu0 0.0
    %897 = vmatpush2.msra.mxu0 0.0
    %898 = vmatprep.subr.mxu0 0.0
    %899 = vmatpush2.msra.mxu0 0.0
    %900 = vmatprep.subr.mxu0 0.0
    %901 = vmatpush2.msra.mxu0 0.0
    %902 = vmatprep.subr.mxu0 0.0
    %903 = vmatpush2.msra.mxu0 0.0
    %904 = vmatprep.subr.mxu0 0.0
    %905 = vmatpush2.msra.mxu0 0.0
    %906 = vmatprep.subr.mxu0 0.0
    %907 = vmatpush2.msra.mxu0 0.0
    %908 = vmatprep.subr.mxu0 0.0
    %909 = vmatpush2.msra.mxu0 0.0
    %910 = vmatprep.subr.mxu0 0.0
    %911 = vmatpush2.msra.mxu0 0.0
    %912 = vmatprep.subr.mxu0 0.0
    %913 = vmatpush2.msra.mxu0 0.0
    %914 = vmatprep.subr.mxu0 0.0
    %915 = vmatpush2.msra.mxu0 0.0
    %916 = vmatprep.subr.mxu0 0.0
    %917 = vmatpush2.msra.mxu0 0.0
    %918 = vmatprep.subr.mxu0 0.0
    %919 = vmatpush2.msra.mxu0 0.0
    %920 = vmatprep.subr.mxu0 0.0
    %921 = vmatpush2.msra.mxu0 0.0
    %922 = vmatprep.subr.mxu0 0.0
    %923 = vmatpush2.msra.mxu0 0.0
    %924 = vmatprep.mubr.f32.mxu0 0.0
    %925 = vmatmul.mubr.f32.gmra.mxu0 %v858
    %v926 = vpop.f32.mrf.mxu0
    %v927 = vadd.f32 0.0, %v926
    %v928 = vpop.f32.mrf.mxu0
    %929 = vdwg.mxu0
    %v931 = vrot.slane %v927, 6
    %v933 = vadd.f32 %v300, %v931
    %v934 = vxor.u32 %v933, 2147483648
    %v935 = vmul.f32 %v934, 1.442695
    %v936 = vpow.pop %v935
    %v937 = vadd.f32 %v936, 1.0
    %v938 = vrcp.pop %v937
    %v939 = vmul.f32 1.0, %v938
    %v940 = vtanh.pop %v933
    %v942 = vrot.slane %v846, 6
    %v944 = vmul.f32 %v939, %v942
    %946 = vrot.lane.b32.xlu0 %v940, 64
    %v947 = vpop.permute.xlu0 %946
    %v949 = vmul.f32 %v939, %v947
    %951 = vrot.lane.b32.xlu0 %v949, 32
    %v952 = vpop.permute.xlu0 %951
    %v954 = vadd.f32 %v944, %v952
    %v955 = vtanh.pop %v954
    %957 = vrot.lane.b32.xlu0 %v955, 64
    %v958 = vpop.permute.xlu0 %957
    %v960 = vmul.f32 %v939, %v958
    %962 = vrot.lane.b32.xlu0 %v960, 32
    %v963 = vpop.permute.xlu0 %962
    %965 = vst.msk [vmem:[#allocation2 + $0x8] sm:$0xc] %vm524, %v963
    %v966 = vrot.slane %v960, 2
    %967 = vrot.lane.b32.xlu0 %v966, 32
    %v968 = vpop.permute.xlu0 %967
    %v969 = vsel %vm84, %v968, 0
    %971 = vmatprep.subr.mxu0 0.0
    %972 = vmatpush1.msra.mxu0 0.0
    %973 = vmatprep.subr.mxu0 0.0
    %974 = vmatpush1.msra.mxu0 0.0
    %975 = vmatprep.subr.mxu0 0.0
    %976 = vmatpush1.msra.mxu0 0.0
    %977 = vmatprep.subr.mxu0 0.0
    %978 = vmatpush1.msra.mxu0 0.0
    %979 = vmatprep.subr.mxu0 0.0
    %980 = vmatpush1.msra.mxu0 0.0
    %981 = vmatprep.subr.mxu0 0.0
    %982 = vmatpush1.msra.mxu0 0.0
    %983 = vmatprep.subr.mxu0 0.0
    %984 = vmatpush1.msra.mxu0 0.0
    %985 = vmatprep.subr.mxu0 0.0
    %986 = vmatpush1.msra.mxu0 0.0
    %987 = vmatprep.subr.mxu0 0.0
    %988 = vmatpush1.msra.mxu0 0.0
    %989 = vmatprep.subr.mxu0 0.0
    %990 = vmatpush1.msra.mxu0 0.0
    %991 = vmatprep.subr.mxu0 0.0
    %992 = vmatpush1.msra.mxu0 0.0
    %993 = vmatprep.subr.mxu0 0.0
    %994 = vmatpush1.msra.mxu0 0.0
    %995 = vmatprep.subr.mxu0 0.0
    %996 = vmatpush1.msra.mxu0 %v306
    %997 = vmatprep.subr.mxu0 0.0
    %998 = vmatpush1.msra.mxu0 %v305
    %999 = vmatprep.subr.mxu0 0.0
    %1000 = vmatpush1.msra.mxu0 %v304
    %1001 = vmatprep.subr.mxu0 0.0
    %1002 = vmatpush1.msra.mxu0 %v303
    %1003 = vmatprep.subr.mxu0 0.0
    %1004 = vmatpush2.msra.mxu0 0.0
    %1005 = vmatprep.subr.mxu0 0.0
    %1006 = vmatpush2.msra.mxu0 0.0
    %1007 = vmatprep.subr.mxu0 0.0
    %1008 = vmatpush2.msra.mxu0 0.0
    %1009 = vmatprep.subr.mxu0 0.0
    %1010 = vmatpush2.msra.mxu0 0.0
    %1011 = vmatprep.subr.mxu0 0.0
    %1012 = vmatpush2.msra.mxu0 0.0
    %1013 = vmatprep.subr.mxu0 0.0
    %1014 = vmatpush2.msra.mxu0 0.0
    %1015 = vmatprep.subr.mxu0 0.0
    %1016 = vmatpush2.msra.mxu0 0.0
    %1017 = vmatprep.subr.mxu0 0.0
    %1018 = vmatpush2.msra.mxu0 0.0
    %1019 = vmatprep.subr.mxu0 0.0
    %1020 = vmatpush2.msra.mxu0 0.0
    %1021 = vmatprep.subr.mxu0 0.0
    %1022 = vmatpush2.msra.mxu0 0.0
    %1023 = vmatprep.subr.mxu0 0.0
    %1024 = vmatpush2.msra.mxu0 0.0
    %1025 = vmatprep.subr.mxu0 0.0
    %1026 = vmatpush2.msra.mxu0 0.0
    %1027 = vmatprep.subr.mxu0 0.0
    %1028 = vmatpush2.msra.mxu0 0.0
    %1029 = vmatprep.subr.mxu0 0.0
    %1030 = vmatpush2.msra.mxu0 0.0
    %1031 = vmatprep.subr.mxu0 0.0
    %1032 = vmatpush2.msra.mxu0 0.0
    %1033 = vmatprep.subr.mxu0 0.0
    %1034 = vmatpush2.msra.mxu0 0.0
    %1035 = vmatprep.mubr.f32.mxu0 0.0
    %1036 = vmatmul.mubr.f32.gmra.mxu0 %v969
    %v1037 = vpop.f32.mrf.mxu0
    %v1038 = vadd.f32 0.0, %v1037
    %v1039 = vpop.f32.mrf.mxu0
    %1040 = vdwg.mxu0
    %v1042 = vrot.slane %v1038, 4
    %v1044 = vadd.f32 %v300, %v1042
    %v1045 = vxor.u32 %v1044, 2147483648
    %v1046 = vmul.f32 %v1045, 1.442695
    %v1047 = vpow.pop %v1046
    %v1048 = vadd.f32 %v1047, 1.0
    %v1049 = vrcp.pop %v1048
    %v1050 = vmul.f32 1.0, %v1049
    %v1051 = vtanh.pop %v1044
    %v1053 = vrot.slane %v954, 6
    %v1055 = vmul.f32 %v1050, %v1053
    %1057 = vrot.lane.b32.xlu0 %v1051, 64
    %v1058 = vpop.permute.xlu0 %1057
    %v1060 = vmul.f32 %v1050, %v1058
    %1062 = vrot.lane.b32.xlu0 %v1060, 32
    %v1063 = vpop.permute.xlu0 %1062
    %v1065 = vadd.f32 %v1055, %v1063
    %v1066 = vtanh.pop %v1065
    %1068 = vrot.lane.b32.xlu0 %v1066, 64
    %v1069 = vpop.permute.xlu0 %1068
    %v1071 = vmul.f32 %v1050, %v1069
    %1073 = vrot.lane.b32.xlu0 %v1071, 32
    %v1074 = vpop.permute.xlu0 %1073
    %1076 = vst.msk [vmem:[#allocation2 + $0x8] sm:$0x30] %vm636, %v1074
    %v1077 = vrot.slane %v1071, 4
    %1078 = vrot.lane.b32.xlu0 %v1077, 32
    %v1079 = vpop.permute.xlu0 %1078
    %v1080 = vsel %vm84, %v1079, 0
    %1082 = vmatprep.subr.mxu0 0.0
    %1083 = vmatpush1.msra.mxu0 0.0
    %1084 = vmatprep.subr.mxu0 0.0
    %1085 = vmatpush1.msra.mxu0 0.0
    %1086 = vmatprep.subr.mxu0 0.0
    %1087 = vmatpush1.msra.mxu0 0.0
    %1088 = vmatprep.subr.mxu0 0.0
    %1089 = vmatpush1.msra.mxu0 0.0
    %1090 = vmatprep.subr.mxu0 0.0
    %1091 = vmatpush1.msra.mxu0 0.0
    %1092 = vmatprep.subr.mxu0 0.0
    %1093 = vmatpush1.msra.mxu0 0.0
    %1094 = vmatprep.subr.mxu0 0.0
    %1095 = vmatpush1.msra.mxu0 0.0
    %1096 = vmatprep.subr.mxu0 0.0
    %1097 = vmatpush1.msra.mxu0 0.0
    %1098 = vmatprep.subr.mxu0 0.0
    %1099 = vmatpush1.msra.mxu0 0.0
    %1100 = vmatprep.subr.mxu0 0.0
    %1101 = vmatpush1.msra.mxu0 0.0
    %1102 = vmatprep.subr.mxu0 0.0
    %1103 = vmatpush1.msra.mxu0 0.0
    %1104 = vmatprep.subr.mxu0 0.0
    %1105 = vmatpush1.msra.mxu0 0.0
    %1106 = vmatprep.subr.mxu0 0.0
    %1107 = vmatpush1.msra.mxu0 %v306
    %1108 = vmatprep.subr.mxu0 0.0
    %1109 = vmatpush1.msra.mxu0 %v305
    %1110 = vmatprep.subr.mxu0 0.0
    %1111 = vmatpush1.msra.mxu0 %v304
    %1112 = vmatprep.subr.mxu0 0.0
    %1113 = vmatpush1.msra.mxu0 %v303
    %1114 = vmatprep.subr.mxu0 0.0
    %1115 = vmatpush2.msra.mxu0 0.0
    %1116 = vmatprep.subr.mxu0 0.0
    %1117 = vmatpush2.msra.mxu0 0.0
    %1118 = vmatprep.subr.mxu0 0.0
    %1119 = vmatpush2.msra.mxu0 0.0
    %1120 = vmatprep.subr.mxu0 0.0
    %1121 = vmatpush2.msra.mxu0 0.0
    %1122 = vmatprep.subr.mxu0 0.0
    %1123 = vmatpush2.msra.mxu0 0.0
    %1124 = vmatprep.subr.mxu0 0.0
    %1125 = vmatpush2.msra.mxu0 0.0
    %1126 = vmatprep.subr.mxu0 0.0
    %1127 = vmatpush2.msra.mxu0 0.0
    %1128 = vmatprep.subr.mxu0 0.0
    %1129 = vmatpush2.msra.mxu0 0.0
    %1130 = vmatprep.subr.mxu0 0.0
    %1131 = vmatpush2.msra.mxu0 0.0
    %1132 = vmatprep.subr.mxu0 0.0
    %1133 = vmatpush2.msra.mxu0 0.0
    %1134 = vmatprep.subr.mxu0 0.0
    %1135 = vmatpush2.msra.mxu0 0.0
    %1136 = vmatprep.subr.mxu0 0.0
    %1137 = vmatpush2.msra.mxu0 0.0
    %1138 = vmatprep.subr.mxu0 0.0
    %1139 = vmatpush2.msra.mxu0 0.0
    %1140 = vmatprep.subr.mxu0 0.0
    %1141 = vmatpush2.msra.mxu0 0.0
    %1142 = vmatprep.subr.mxu0 0.0
    %1143 = vmatpush2.msra.mxu0 0.0
    %1144 = vmatprep.subr.mxu0 0.0
    %1145 = vmatpush2.msra.mxu0 0.0
    %1146 = vmatprep.mubr.f32.mxu0 0.0
    %1147 = vmatmul.mubr.f32.gmra.mxu0 %v1080
    %v1148 = vpop.f32.mrf.mxu0
    %v1149 = vadd.f32 0.0, %v1148
    %v1150 = vpop.f32.mrf.mxu0
    %1151 = vdwg.mxu0
    %v1153 = vrot.slane %v1149, 2
    %v1155 = vadd.f32 %v300, %v1153
    %v1156 = vxor.u32 %v1155, 2147483648
    %v1157 = vmul.f32 %v1156, 1.442695
    %v1158 = vpow.pop %v1157
    %v1159 = vadd.f32 %v1158, 1.0
    %v1160 = vrcp.pop %v1159
    %v1161 = vmul.f32 1.0, %v1160
    %v1162 = vtanh.pop %v1155
    %v1164 = vrot.slane %v1065, 6
    %v1166 = vmul.f32 %v1161, %v1164
    %1168 = vrot.lane.b32.xlu0 %v1162, 64
    %v1169 = vpop.permute.xlu0 %1168
    %v1171 = vmul.f32 %v1161, %v1169
    %1173 = vrot.lane.b32.xlu0 %v1171, 32
    %v1174 = vpop.permute.xlu0 %1173
    %v1176 = vadd.f32 %v1166, %v1174
    %v1177 = vtanh.pop %v1176
    %1179 = vrot.lane.b32.xlu0 %v1177, 64
    %v1180 = vpop.permute.xlu0 %1179
    %v1182 = vmul.f32 %v1161, %v1180
    %1184 = vrot.lane.b32.xlu0 %v1182, 32
    %v1185 = vpop.permute.xlu0 %1184
    %1187 = vst.msk [vmem:[#allocation2 + $0x8] sm:$0xc0] %vm748, %v1185
    %v1188 = vld [vmem:[#allocation2] sm:$0xff]
    %v1189 = vld [vmem:[#allocation2 + $0x8] sm:$0xff]
    %v1190 = vld [vmem:[%s11] sm:$0xff]
    %v1191 = vld [vmem:[%s11 + $0x8] sm:$0xff]
    %v1192 = vld [vmem:[%s11 + $0x10] sm:$0xff]
    %v1193 = vld [vmem:[%s11 + $0x18] sm:$0xff]
    %v1194 = vld [vmem:[%s13] sm:$0x1]
    %v1196 = vlaneseq
    %v1197 = vshrl.u32 %v1196, 7
    %v1198 = vsub.s32 0, %v1197
    %v1199 = vrot.slane %v1194, %v1198
    %v1202 = vsel %vm84, %v1188, 0
    %v1205 = vsel %vm84, %v1189, 0
    %1207 = vmatprep.subr.mxu0 0.0
    %1208 = vmatpush1.msra.mxu0 0.0
    %1209 = vmatprep.subr.mxu0 0.0
    %1210 = vmatpush1.msra.mxu0 0.0
    %1211 = vmatprep.subr.mxu0 0.0
    %1212 = vmatpush1.msra.mxu0 0.0
    %1213 = vmatprep.subr.mxu0 0.0
    %1214 = vmatpush1.msra.mxu0 0.0
    %1215 = vmatprep.subr.mxu0 0.0
    %1216 = vmatpush1.msra.mxu0 0.0
    %1217 = vmatprep.subr.mxu0 0.0
    %1218 = vmatpush1.msra.mxu0 0.0
    %1219 = vmatprep.subr.mxu0 0.0
    %1220 = vmatpush1.msra.mxu0 0.0
    %1221 = vmatprep.subr.mxu0 0.0
    %1222 = vmatpush1.msra.mxu0 0.0
    %1223 = vmatprep.subr.mxu0 0.0
    %1224 = vmatpush1.msra.mxu0 0.0
    %1225 = vmatprep.subr.mxu0 0.0
    %1226 = vmatpush1.msra.mxu0 0.0
    %1227 = vmatprep.subr.mxu0 0.0
    %1228 = vmatpush1.msra.mxu0 0.0
    %1229 = vmatprep.subr.mxu0 0.0
    %1230 = vmatpush1.msra.mxu0 0.0
    %1231 = vmatprep.subr.mxu0 0.0
    %1232 = vmatpush1.msra.mxu0 %v1193
    %1233 = vmatprep.subr.mxu0 0.0
    %1234 = vmatpush1.msra.mxu0 %v1192
    %1235 = vmatprep.subr.mxu0 0.0
    %1236 = vmatpush1.msra.mxu0 %v1191
    %1237 = vmatprep.subr.mxu0 0.0
    %1238 = vmatpush1.msra.mxu0 %v1190
    %1239 = vmatprep.subr.mxu0 0.0
    %1240 = vmatpush2.msra.mxu0 0.0
    %1241 = vmatprep.subr.mxu0 0.0
    %1242 = vmatpush2.msra.mxu0 0.0
    %1243 = vmatprep.subr.mxu0 0.0
    %1244 = vmatpush2.msra.mxu0 0.0
    %1245 = vmatprep.subr.mxu0 0.0
    %1246 = vmatpush2.msra.mxu0 0.0
    %1247 = vmatprep.subr.mxu0 0.0
    %1248 = vmatpush2.msra.mxu0 0.0
    %1249 = vmatprep.subr.mxu0 0.0
    %1250 = vmatpush2.msra.mxu0 0.0
    %1251 = vmatprep.subr.mxu0 0.0
    %1252 = vmatpush2.msra.mxu0 0.0
    %1253 = vmatprep.subr.mxu0 0.0
    %1254 = vmatpush2.msra.mxu0 0.0
    %1255 = vmatprep.subr.mxu0 0.0
    %1256 = vmatpush2.msra.mxu0 0.0
    %1257 = vmatprep.subr.mxu0 0.0
    %1258 = vmatpush2.msra.mxu0 0.0
    %1259 = vmatprep.subr.mxu0 0.0
    %1260 = vmatpush2.msra.mxu0 0.0
    %1261 = vmatprep.subr.mxu0 0.0
    %1262 = vmatpush2.msra.mxu0 0.0
    %1263 = vmatprep.subr.mxu0 0.0
    %1264 = vmatpush2.msra.mxu0 0.0
    %1265 = vmatprep.subr.mxu0 0.0
    %1266 = vmatpush2.msra.mxu0 0.0
    %1267 = vmatprep.subr.mxu0 0.0
    %1268 = vmatpush2.msra.mxu0 0.0
    %1269 = vmatprep.subr.mxu0 0.0
    %1270 = vmatpush2.msra.mxu0 0.0
    %1271 = vmatprep.mubr.f32.mxu0 0.0
    %1272 = vmatmul.mubr.f32.gmra.mxu0 %v1202
    %v1273 = vpop.f32.mrf.mxu0
    %v1274 = vadd.f32 %v1199, %v1273
    %v1275 = vpop.f32.mrf.mxu0
    %1276 = vmatprep.mubr.f32.mxu0 0.0
    %1277 = vmatmul.mubr.f32.gmra.mxu0 %v1205
    %v1278 = vpop.f32.mrf.mxu0
    %v1279 = vadd.f32 %v1199, %v1278
    %v1280 = vpop.f32.mrf.mxu0
    %1281 = vdwg.mxu0
    %v1282 = vld [vmem:[%s12] sm:$0xff]
    %v1283 = vld [vmem:[%s12 + $0x8] sm:$0xff]
    %v1284 = vld [vmem:[%s12 + $0x10] sm:$0xff]
    %v1285 = vld [vmem:[%s12 + $0x18] sm:$0xff]
    %s1286 = scalar_lea.vmem %s2, 2
    %v1287 = vld [vmem:[%s1286] sm:$0x3]
    %s1288 = scalar_lea.vmem %s3, 2
    %v1289 = vld [vmem:[%s1288] sm:$0x3]
    %v1291 = vsel %vm84, %v1287, 0
    %1293 = vmatprep.subr.mxu0 0.0
    %1294 = vmatpush1.msra.mxu0 0.0
    %1295 = vmatprep.subr.mxu0 0.0
    %1296 = vmatpush1.msra.mxu0 0.0
    %1297 = vmatprep.subr.mxu0 0.0
    %1298 = vmatpush1.msra.mxu0 0.0
    %1299 = vmatprep.subr.mxu0 0.0
    %1300 = vmatpush1.msra.mxu0 0.0
    %1301 = vmatprep.subr.mxu0 0.0
    %1302 = vmatpush1.msra.mxu0 0.0
    %1303 = vmatprep.subr.mxu0 0.0
    %1304 = vmatpush1.msra.mxu0 0.0
    %1305 = vmatprep.subr.mxu0 0.0
    %1306 = vmatpush1.msra.mxu0 0.0
    %1307 = vmatprep.subr.mxu0 0.0
    %1308 = vmatpush1.msra.mxu0 0.0
    %1309 = vmatprep.subr.mxu0 0.0
    %1310 = vmatpush1.msra.mxu0 0.0
    %1311 = vmatprep.subr.mxu0 0.0
    %1312 = vmatpush1.msra.mxu0 0.0
    %1313 = vmatprep.subr.mxu0 0.0
    %1314 = vmatpush1.msra.mxu0 0.0
    %1315 = vmatprep.subr.mxu0 0.0
    %1316 = vmatpush1.msra.mxu0 0.0
    %1317 = vmatprep.subr.mxu0 0.0
    %1318 = vmatpush1.msra.mxu0 %v1285
    %1319 = vmatprep.subr.mxu0 0.0
    %1320 = vmatpush1.msra.mxu0 %v1284
    %1321 = vmatprep.subr.mxu0 0.0
    %1322 = vmatpush1.msra.mxu0 %v1283
    %1323 = vmatprep.subr.mxu0 0.0
    %1324 = vmatpush1.msra.mxu0 %v1282
    %1325 = vmatprep.subr.mxu0 0.0
    %1326 = vmatpush2.msra.mxu0 0.0
    %1327 = vmatprep.subr.mxu0 0.0
    %1328 = vmatpush2.msra.mxu0 0.0
    %1329 = vmatprep.subr.mxu0 0.0
    %1330 = vmatpush2.msra.mxu0 0.0
    %1331 = vmatprep.subr.mxu0 0.0
    %1332 = vmatpush2.msra.mxu0 0.0
    %1333 = vmatprep.subr.mxu0 0.0
    %1334 = vmatpush2.msra.mxu0 0.0
    %1335 = vmatprep.subr.mxu0 0.0
    %1336 = vmatpush2.msra.mxu0 0.0
    %1337 = vmatprep.subr.mxu0 0.0
    %1338 = vmatpush2.msra.mxu0 0.0
    %1339 = vmatprep.subr.mxu0 0.0
    %1340 = vmatpush2.msra.mxu0 0.0
    %1341 = vmatprep.subr.mxu0 0.0
    %1342 = vmatpush2.msra.mxu0 0.0
    %1343 = vmatprep.subr.mxu0 0.0
    %1344 = vmatpush2.msra.mxu0 0.0
    %1345 = vmatprep.subr.mxu0 0.0
    %1346 = vmatpush2.msra.mxu0 0.0
    %1347 = vmatprep.subr.mxu0 0.0
    %1348 = vmatpush2.msra.mxu0 0.0
    %1349 = vmatprep.subr.mxu0 0.0
    %1350 = vmatpush2.msra.mxu0 0.0
    %1351 = vmatprep.subr.mxu0 0.0
    %1352 = vmatpush2.msra.mxu0 0.0
    %1353 = vmatprep.subr.mxu0 0.0
    %1354 = vmatpush2.msra.mxu0 0.0
    %1355 = vmatprep.subr.mxu0 0.0
    %1356 = vmatpush2.msra.mxu0 0.0
    %1357 = vmatprep.mubr.f32.mxu0 0.0
    %1358 = vmatmul.mubr.f32.gmra.mxu0 %v1291
    %v1359 = vpop.f32.mrf.mxu0
    %v1360 = vadd.f32 0.0, %v1359
    %v1361 = vpop.f32.mrf.mxu0
    %1362 = vdwg.mxu0
    %v1363 = vadd.f32 %v1274, %v1360
    %v1364 = vxor.u32 %v1363, 2147483648
    %v1365 = vmul.f32 %v1364, 1.442695
    %v1366 = vpow.pop %v1365
    %v1367 = vadd.f32 %v1366, 1.0
    %v1368 = vrcp.pop %v1367
    %v1369 = vmul.f32 1.0, %v1368
    %v1370 = vtanh.pop %v1363
    %1372 = vrot.lane.b32.xlu0 %v1289, 32
    %v1373 = vpop.permute.xlu0 %1372
    %v1375 = vmul.f32 %v1369, %v1373
    %1377 = vrot.lane.b32.xlu0 %v1370, 64
    %v1378 = vpop.permute.xlu0 %1377
    %v1380 = vmul.f32 %v1369, %v1378
    %1382 = vrot.lane.b32.xlu0 %v1380, 32
    %v1383 = vpop.permute.xlu0 %1382
    %v1385 = vadd.f32 %v1375, %v1383
    %v1386 = vtanh.pop %v1385
    %1388 = vrot.lane.b32.xlu0 %v1386, 64
    %v1389 = vpop.permute.xlu0 %1388
    %v1391 = vmul.f32 %v1369, %v1389
    %v1394 = vunpack.c.l.s4 1966171168
    %v1395 = vunpack.c.0.s8 %v1394
    %v1396 = vlaneseq
    %v1397 = vshrl.u32 %v1396, 7
    %v1398 = vsub.s32 %v1395, %v1397
    %v1399 = vrot.slane %v1391, %v1398
    %v1400 = vcombine.high %v1399, %v1399
    %v1402 = vunpack.c.l.s4 1966171168
    %v1403 = vunpack.c.0.s8 %v1402
    %v1404 = vlaneseq
    %v1405 = vshrl.u32 %v1404, 7
    %v1406 = vsub.s32 %v1403, %v1405
    %v1407 = vrot.slane %v1399, %v1406
    %v1409 = vunpack.c.l.s4 1966171168
    %v1410 = vunpack.c.0.s8 %v1409
    %v1411 = vlaneseq
    %v1412 = vshrl.u32 %v1411, 7
    %v1413 = vsub.s32 %v1410, %v1412
    %v1414 = vrot.slane %v1400, %v1413
    %v1415 = vlaneseq
    %v1416 = vshrl.u32 %v1415, 7
    %v1417 = vsub.s32 0, %v1416
    %v1418 = vrot.slane %v1407, %v1417
    %v1419 = vlaneseq
    %v1420 = vshrl.u32 %v1419, 7
    %v1421 = vsub.s32 0, %v1420
    %v1422 = vrot.slane %v1414, %v1421
    %1423 = vrot.lane.b32.xlu0 %v1418, 32
    %v1424 = vpop.permute.xlu0 %1423
    %1425 = vrot.lane.b32.xlu0 %v1422, 32
    %v1426 = vpop.permute.xlu0 %1425
    %vm1429 = vcmask 253952
    %1430 = vst.msk [vmem:[#allocation3] sm:$0x1] %vm1429, %v1424
    %1431 = vst.msk [vmem:[#allocation3 + $0x8] sm:$0x1] %vm1429, %v1426
    %1432 = vrot.lane.b32.xlu0 %v1391, 32
    %v1433 = vpop.permute.xlu0 %1432
    %v1434 = vsel %vm84, %v1433, 0
    %1436 = vmatprep.subr.mxu0 0.0
    %1437 = vmatpush1.msra.mxu0 0.0
    %1438 = vmatprep.subr.mxu0 0.0
    %1439 = vmatpush1.msra.mxu0 0.0
    %1440 = vmatprep.subr.mxu0 0.0
    %1441 = vmatpush1.msra.mxu0 0.0
    %1442 = vmatprep.subr.mxu0 0.0
    %1443 = vmatpush1.msra.mxu0 0.0
    %1444 = vmatprep.subr.mxu0 0.0
    %1445 = vmatpush1.msra.mxu0 0.0
    %1446 = vmatprep.subr.mxu0 0.0
    %1447 = vmatpush1.msra.mxu0 0.0
    %1448 = vmatprep.subr.mxu0 0.0
    %1449 = vmatpush1.msra.mxu0 0.0
    %1450 = vmatprep.subr.mxu0 0.0
    %1451 = vmatpush1.msra.mxu0 0.0
    %1452 = vmatprep.subr.mxu0 0.0
    %1453 = vmatpush1.msra.mxu0 0.0
    %1454 = vmatprep.subr.mxu0 0.0
    %1455 = vmatpush1.msra.mxu0 0.0
    %1456 = vmatprep.subr.mxu0 0.0
    %1457 = vmatpush1.msra.mxu0 0.0
    %1458 = vmatprep.subr.mxu0 0.0
    %1459 = vmatpush1.msra.mxu0 0.0
    %1460 = vmatprep.subr.mxu0 0.0
    %1461 = vmatpush1.msra.mxu0 %v1285
    %1462 = vmatprep.subr.mxu0 0.0
    %1463 = vmatpush1.msra.mxu0 %v1284
    %1464 = vmatprep.subr.mxu0 0.0
    %1465 = vmatpush1.msra.mxu0 %v1283
    %1466 = vmatprep.subr.mxu0 0.0
    %1467 = vmatpush1.msra.mxu0 %v1282
    %1468 = vmatprep.subr.mxu0 0.0
    %1469 = vmatpush2.msra.mxu0 0.0
    %1470 = vmatprep.subr.mxu0 0.0
    %1471 = vmatpush2.msra.mxu0 0.0
    %1472 = vmatprep.subr.mxu0 0.0
    %1473 = vmatpush2.msra.mxu0 0.0
    %1474 = vmatprep.subr.mxu0 0.0
    %1475 = vmatpush2.msra.mxu0 0.0
    %1476 = vmatprep.subr.mxu0 0.0
    %1477 = vmatpush2.msra.mxu0 0.0
    %1478 = vmatprep.subr.mxu0 0.0
    %1479 = vmatpush2.msra.mxu0 0.0
    %1480 = vmatprep.subr.mxu0 0.0
    %1481 = vmatpush2.msra.mxu0 0.0
    %1482 = vmatprep.subr.mxu0 0.0
    %1483 = vmatpush2.msra.mxu0 0.0
    %1484 = vmatprep.subr.mxu0 0.0
    %1485 = vmatpush2.msra.mxu0 0.0
    %1486 = vmatprep.subr.mxu0 0.0
    %1487 = vmatpush2.msra.mxu0 0.0
    %1488 = vmatprep.subr.mxu0 0.0
    %1489 = vmatpush2.msra.mxu0 0.0
    %1490 = vmatprep.subr.mxu0 0.0
    %1491 = vmatpush2.msra.mxu0 0.0
    %1492 = vmatprep.subr.mxu0 0.0
    %1493 = vmatpush2.msra.mxu0 0.0
    %1494 = vmatprep.subr.mxu0 0.0
    %1495 = vmatpush2.msra.mxu0 0.0
    %1496 = vmatprep.subr.mxu0 0.0
    %1497 = vmatpush2.msra.mxu0 0.0
    %1498 = vmatprep.subr.mxu0 0.0
    %1499 = vmatpush2.msra.mxu0 0.0
    %1500 = vmatprep.mubr.f32.mxu0 0.0
    %1501 = vmatmul.mubr.f32.gmra.mxu0 %v1434
    %v1502 = vpop.f32.mrf.mxu0
    %v1503 = vadd.f32 0.0, %v1502
    %v1504 = vpop.f32.mrf.mxu0
    %1505 = vdwg.mxu0
    %v1507 = vrot.slane %v1503, 6
    %v1509 = vadd.f32 %v1274, %v1507
    %v1510 = vxor.u32 %v1509, 2147483648
    %v1511 = vmul.f32 %v1510, 1.442695
    %v1512 = vpow.pop %v1511
    %v1513 = vadd.f32 %v1512, 1.0
    %v1514 = vrcp.pop %v1513
    %v1515 = vmul.f32 1.0, %v1514
    %v1516 = vtanh.pop %v1509
    %v1518 = vrot.slane %v1385, 6
    %v1520 = vmul.f32 %v1515, %v1518
    %1522 = vrot.lane.b32.xlu0 %v1516, 64
    %v1523 = vpop.permute.xlu0 %1522
    %v1525 = vmul.f32 %v1515, %v1523
    %1527 = vrot.lane.b32.xlu0 %v1525, 32
    %v1528 = vpop.permute.xlu0 %1527
    %v1530 = vadd.f32 %v1520, %v1528
    %v1531 = vtanh.pop %v1530
    %1533 = vrot.lane.b32.xlu0 %v1531, 64
    %v1534 = vpop.permute.xlu0 %1533
    %v1536 = vmul.f32 %v1515, %v1534
    %v1539 = vunpack.c.l.s4 1966171168
    %v1540 = vunpack.c.0.s8 %v1539
    %v1541 = vlaneseq
    %v1542 = vshrl.u32 %v1541, 7
    %v1543 = vsub.s32 %v1540, %v1542
    %v1544 = vrot.slane %v1536, %v1543
    %v1545 = vcombine.high %v1544, %v1544
    %v1547 = vunpack.c.l.s4 1966171168
    %v1548 = vunpack.c.0.s8 %v1547
    %v1549 = vlaneseq
    %v1550 = vshrl.u32 %v1549, 7
    %v1551 = vsub.s32 %v1548, %v1550
    %v1552 = vrot.slane %v1544, %v1551
    %v1554 = vunpack.c.l.s4 1966171168
    %v1555 = vunpack.c.0.s8 %v1554
    %v1556 = vlaneseq
    %v1557 = vshrl.u32 %v1556, 7
    %v1558 = vsub.s32 %v1555, %v1557
    %v1559 = vrot.slane %v1545, %v1558
    %v1560 = vcombine.high %v1552, %v1552
    %v1561 = vcombine.high %v1559, %v1559
    %v1562 = vlaneseq
    %v1563 = vshrl.u32 %v1562, 7
    %v1564 = vsub.s32 0, %v1563
    %v1565 = vrot.slane %v1560, %v1564
    %v1566 = vlaneseq
    %v1567 = vshrl.u32 %v1566, 7
    %v1568 = vsub.s32 0, %v1567
    %v1569 = vrot.slane %v1561, %v1568
    %1570 = vrot.lane.b32.xlu0 %v1565, 32
    %v1571 = vpop.permute.xlu0 %1570
    %1572 = vrot.lane.b32.xlu0 %v1569, 32
    %v1573 = vpop.permute.xlu0 %1572
    %1576 = vst.msk [vmem:[#allocation3 + $0x1] sm:$0x1] %vm1429, %v1571
    %1577 = vst.msk [vmem:[#allocation3 + $0x9] sm:$0x1] %vm1429, %v1573
    %v1578 = vrot.slane %v1536, 2
    %1579 = vrot.lane.b32.xlu0 %v1578, 32
    %v1580 = vpop.permute.xlu0 %1579
    %v1581 = vsel %vm84, %v1580, 0
    %1583 = vmatprep.subr.mxu0 0.0
    %1584 = vmatpush1.msra.mxu0 0.0
    %1585 = vmatprep.subr.mxu0 0.0
    %1586 = vmatpush1.msra.mxu0 0.0
    %1587 = vmatprep.subr.mxu0 0.0
    %1588 = vmatpush1.msra.mxu0 0.0
    %1589 = vmatprep.subr.mxu0 0.0
    %1590 = vmatpush1.msra.mxu0 0.0
    %1591 = vmatprep.subr.mxu0 0.0
    %1592 = vmatpush1.msra.mxu0 0.0
    %1593 = vmatprep.subr.mxu0 0.0
    %1594 = vmatpush1.msra.mxu0 0.0
    %1595 = vmatprep.subr.mxu0 0.0
    %1596 = vmatpush1.msra.mxu0 0.0
    %1597 = vmatprep.subr.mxu0 0.0
    %1598 = vmatpush1.msra.mxu0 0.0
    %1599 = vmatprep.subr.mxu0 0.0
    %1600 = vmatpush1.msra.mxu0 0.0
    %1601 = vmatprep.subr.mxu0 0.0
    %1602 = vmatpush1.msra.mxu0 0.0
    %1603 = vmatprep.subr.mxu0 0.0
    %1604 = vmatpush1.msra.mxu0 0.0
    %1605 = vmatprep.subr.mxu0 0.0
    %1606 = vmatpush1.msra.mxu0 0.0
    %1607 = vmatprep.subr.mxu0 0.0
    %1608 = vmatpush1.msra.mxu0 %v1285
    %1609 = vmatprep.subr.mxu0 0.0
    %1610 = vmatpush1.msra.mxu0 %v1284
    %1611 = vmatprep.subr.mxu0 0.0
    %1612 = vmatpush1.msra.mxu0 %v1283
    %1613 = vmatprep.subr.mxu0 0.0
    %1614 = vmatpush1.msra.mxu0 %v1282
    %1615 = vmatprep.subr.mxu0 0.0
    %1616 = vmatpush2.msra.mxu0 0.0
    %1617 = vmatprep.subr.mxu0 0.0
    %1618 = vmatpush2.msra.mxu0 0.0
    %1619 = vmatprep.subr.mxu0 0.0
    %1620 = vmatpush2.msra.mxu0 0.0
    %1621 = vmatprep.subr.mxu0 0.0
    %1622 = vmatpush2.msra.mxu0 0.0
    %1623 = vmatprep.subr.mxu0 0.0
    %1624 = vmatpush2.msra.mxu0 0.0
    %1625 = vmatprep.subr.mxu0 0.0
    %1626 = vmatpush2.msra.mxu0 0.0
    %1627 = vmatprep.subr.mxu0 0.0
    %1628 = vmatpush2.msra.mxu0 0.0
    %1629 = vmatprep.subr.mxu0 0.0
    %1630 = vmatpush2.msra.mxu0 0.0
    %1631 = vmatprep.subr.mxu0 0.0
    %1632 = vmatpush2.msra.mxu0 0.0
    %1633 = vmatprep.subr.mxu0 0.0
    %1634 = vmatpush2.msra.mxu0 0.0
    %1635 = vmatprep.subr.mxu0 0.0
    %1636 = vmatpush2.msra.mxu0 0.0
    %1637 = vmatprep.subr.mxu0 0.0
    %1638 = vmatpush2.msra.mxu0 0.0
    %1639 = vmatprep.subr.mxu0 0.0
    %1640 = vmatpush2.msra.mxu0 0.0
    %1641 = vmatprep.subr.mxu0 0.0
    %1642 = vmatpush2.msra.mxu0 0.0
    %1643 = vmatprep.subr.mxu0 0.0
    %1644 = vmatpush2.msra.mxu0 0.0
    %1645 = vmatprep.subr.mxu0 0.0
    %1646 = vmatpush2.msra.mxu0 0.0
    %1647 = vmatprep.mubr.f32.mxu0 0.0
    %1648 = vmatmul.mubr.f32.gmra.mxu0 %v1581
    %v1649 = vpop.f32.mrf.mxu0
    %v1650 = vadd.f32 0.0, %v1649
    %v1651 = vpop.f32.mrf.mxu0
    %1652 = vdwg.mxu0
    %v1654 = vrot.slane %v1650, 4
    %v1656 = vadd.f32 %v1274, %v1654
    %v1657 = vxor.u32 %v1656, 2147483648
    %v1658 = vmul.f32 %v1657, 1.442695
    %v1659 = vpow.pop %v1658
    %v1660 = vadd.f32 %v1659, 1.0
    %v1661 = vrcp.pop %v1660
    %v1662 = vmul.f32 1.0, %v1661
    %v1663 = vtanh.pop %v1656
    %v1665 = vrot.slane %v1530, 6
    %v1667 = vmul.f32 %v1662, %v1665
    %1669 = vrot.lane.b32.xlu0 %v1663, 64
    %v1670 = vpop.permute.xlu0 %1669
    %v1672 = vmul.f32 %v1662, %v1670
    %1674 = vrot.lane.b32.xlu0 %v1672, 32
    %v1675 = vpop.permute.xlu0 %1674
    %v1677 = vadd.f32 %v1667, %v1675
    %v1678 = vtanh.pop %v1677
    %1680 = vrot.lane.b32.xlu0 %v1678, 64
    %v1681 = vpop.permute.xlu0 %1680
    %v1683 = vmul.f32 %v1662, %v1681
    %v1685 = vcombine.high %v1683, %v1683
    %v1687 = vunpack.c.l.s4 1966171168
    %v1688 = vunpack.c.0.s8 %v1687
    %v1689 = vlaneseq
    %v1690 = vshrl.u32 %v1689, 7
    %v1691 = vsub.s32 %v1688, %v1690
    %v1692 = vrot.slane %v1685, %v1691
    %v1693 = vcombine.high %v1692, %v1692
    %v1695 = vunpack.c.l.s4 1966171168
    %v1696 = vunpack.c.0.s8 %v1695
    %v1697 = vlaneseq
    %v1698 = vshrl.u32 %v1697, 7
    %v1699 = vsub.s32 %v1696, %v1698
    %v1700 = vrot.slane %v1692, %v1699
    %v1702 = vunpack.c.l.s4 1966171168
    %v1703 = vunpack.c.0.s8 %v1702
    %v1704 = vlaneseq
    %v1705 = vshrl.u32 %v1704, 7
    %v1706 = vsub.s32 %v1703, %v1705
    %v1707 = vrot.slane %v1693, %v1706
    %v1708 = vlaneseq
    %v1709 = vshrl.u32 %v1708, 7
    %v1710 = vsub.s32 0, %v1709
    %v1711 = vrot.slane %v1700, %v1710
    %v1712 = vlaneseq
    %v1713 = vshrl.u32 %v1712, 7
    %v1714 = vsub.s32 0, %v1713
    %v1715 = vrot.slane %v1707, %v1714
    %1716 = vrot.lane.b32.xlu0 %v1711, 32
    %v1717 = vpop.permute.xlu0 %1716
    %1718 = vrot.lane.b32.xlu0 %v1715, 32
    %v1719 = vpop.permute.xlu0 %1718
    %1722 = vst.msk [vmem:[#allocation3 + $0x2] sm:$0x1] %vm1429, %v1717
    %1723 = vst.msk [vmem:[#allocation3 + $0xa] sm:$0x1] %vm1429, %v1719
    %v1724 = vrot.slane %v1683, 4
    %1725 = vrot.lane.b32.xlu0 %v1724, 32
    %v1726 = vpop.permute.xlu0 %1725
    %v1727 = vsel %vm84, %v1726, 0
    %1729 = vmatprep.subr.mxu0 0.0
    %1730 = vmatpush1.msra.mxu0 0.0
    %1731 = vmatprep.subr.mxu0 0.0
    %1732 = vmatpush1.msra.mxu0 0.0
    %1733 = vmatprep.subr.mxu0 0.0
    %1734 = vmatpush1.msra.mxu0 0.0
    %1735 = vmatprep.subr.mxu0 0.0
    %1736 = vmatpush1.msra.mxu0 0.0
    %1737 = vmatprep.subr.mxu0 0.0
    %1738 = vmatpush1.msra.mxu0 0.0
    %1739 = vmatprep.subr.mxu0 0.0
    %1740 = vmatpush1.msra.mxu0 0.0
    %1741 = vmatprep.subr.mxu0 0.0
    %1742 = vmatpush1.msra.mxu0 0.0
    %1743 = vmatprep.subr.mxu0 0.0
    %1744 = vmatpush1.msra.mxu0 0.0
    %1745 = vmatprep.subr.mxu0 0.0
    %1746 = vmatpush1.msra.mxu0 0.0
    %1747 = vmatprep.subr.mxu0 0.0
    %1748 = vmatpush1.msra.mxu0 0.0
    %1749 = vmatprep.subr.mxu0 0.0
    %1750 = vmatpush1.msra.mxu0 0.0
    %1751 = vmatprep.subr.mxu0 0.0
    %1752 = vmatpush1.msra.mxu0 0.0
    %1753 = vmatprep.subr.mxu0 0.0
    %1754 = vmatpush1.msra.mxu0 %v1285
    %1755 = vmatprep.subr.mxu0 0.0
    %1756 = vmatpush1.msra.mxu0 %v1284
    %1757 = vmatprep.subr.mxu0 0.0
    %1758 = vmatpush1.msra.mxu0 %v1283
    %1759 = vmatprep.subr.mxu0 0.0
    %1760 = vmatpush1.msra.mxu0 %v1282
    %1761 = vmatprep.subr.mxu0 0.0
    %1762 = vmatpush2.msra.mxu0 0.0
    %1763 = vmatprep.subr.mxu0 0.0
    %1764 = vmatpush2.msra.mxu0 0.0
    %1765 = vmatprep.subr.mxu0 0.0
    %1766 = vmatpush2.msra.mxu0 0.0
    %1767 = vmatprep.subr.mxu0 0.0
    %1768 = vmatpush2.msra.mxu0 0.0
    %1769 = vmatprep.subr.mxu0 0.0
    %1770 = vmatpush2.msra.mxu0 0.0
    %1771 = vmatprep.subr.mxu0 0.0
    %1772 = vmatpush2.msra.mxu0 0.0
    %1773 = vmatprep.subr.mxu0 0.0
    %1774 = vmatpush2.msra.mxu0 0.0
    %1775 = vmatprep.subr.mxu0 0.0
    %1776 = vmatpush2.msra.mxu0 0.0
    %1777 = vmatprep.subr.mxu0 0.0
    %1778 = vmatpush2.msra.mxu0 0.0
    %1779 = vmatprep.subr.mxu0 0.0
    %1780 = vmatpush2.msra.mxu0 0.0
    %1781 = vmatprep.subr.mxu0 0.0
    %1782 = vmatpush2.msra.mxu0 0.0
    %1783 = vmatprep.subr.mxu0 0.0
    %1784 = vmatpush2.msra.mxu0 0.0
    %1785 = vmatprep.subr.mxu0 0.0
    %1786 = vmatpush2.msra.mxu0 0.0
    %1787 = vmatprep.subr.mxu0 0.0
    %1788 = vmatpush2.msra.mxu0 0.0
    %1789 = vmatprep.subr.mxu0 0.0
    %1790 = vmatpush2.msra.mxu0 0.0
    %1791 = vmatprep.subr.mxu0 0.0
    %1792 = vmatpush2.msra.mxu0 0.0
    %1793 = vmatprep.mubr.f32.mxu0 0.0
    %1794 = vmatmul.mubr.f32.gmra.mxu0 %v1727
    %v1795 = vpop.f32.mrf.mxu0
    %v1796 = vadd.f32 0.0, %v1795
    %v1797 = vpop.f32.mrf.mxu0
    %1798 = vdwg.mxu0
    %v1800 = vrot.slane %v1796, 2
    %v1802 = vadd.f32 %v1274, %v1800
    %v1803 = vxor.u32 %v1802, 2147483648
    %v1804 = vmul.f32 %v1803, 1.442695
    %v1805 = vpow.pop %v1804
    %v1806 = vadd.f32 %v1805, 1.0
    %v1807 = vrcp.pop %v1806
    %v1808 = vmul.f32 1.0, %v1807
    %v1809 = vtanh.pop %v1802
    %v1811 = vrot.slane %v1677, 6
    %v1813 = vmul.f32 %v1808, %v1811
    %1815 = vrot.lane.b32.xlu0 %v1809, 64
    %v1816 = vpop.permute.xlu0 %1815
    %v1818 = vmul.f32 %v1808, %v1816
    %1820 = vrot.lane.b32.xlu0 %v1818, 32
    %v1821 = vpop.permute.xlu0 %1820
    %v1823 = vadd.f32 %v1813, %v1821
    %v1824 = vtanh.pop %v1823
    %1826 = vrot.lane.b32.xlu0 %v1824, 64
    %v1827 = vpop.permute.xlu0 %1826
    %v1829 = vmul.f32 %v1808, %v1827
    %v1831 = vcombine.high %v1829, %v1829
    %v1833 = vunpack.c.l.s4 1966171168
    %v1834 = vunpack.c.0.s8 %v1833
    %v1835 = vlaneseq
    %v1836 = vshrl.u32 %v1835, 7
    %v1837 = vsub.s32 %v1834, %v1836
    %v1838 = vrot.slane %v1831, %v1837
    %v1839 = vcombine.high %v1838, %v1838
    %v1841 = vunpack.c.l.s4 1966171168
    %v1842 = vunpack.c.0.s8 %v1841
    %v1843 = vlaneseq
    %v1844 = vshrl.u32 %v1843, 7
    %v1845 = vsub.s32 %v1842, %v1844
    %v1846 = vrot.slane %v1838, %v1845
    %v1848 = vunpack.c.l.s4 1966171168
    %v1849 = vunpack.c.0.s8 %v1848
    %v1850 = vlaneseq
    %v1851 = vshrl.u32 %v1850, 7
    %v1852 = vsub.s32 %v1849, %v1851
    %v1853 = vrot.slane %v1839, %v1852
    %v1854 = vcombine.high %v1846, %v1846
    %v1855 = vcombine.high %v1853, %v1853
    %v1856 = vlaneseq
    %v1857 = vshrl.u32 %v1856, 7
    %v1858 = vsub.s32 0, %v1857
    %v1859 = vrot.slane %v1854, %v1858
    %v1860 = vlaneseq
    %v1861 = vshrl.u32 %v1860, 7
    %v1862 = vsub.s32 0, %v1861
    %v1863 = vrot.slane %v1855, %v1862
    %1864 = vrot.lane.b32.xlu0 %v1859, 32
    %v1865 = vpop.permute.xlu0 %1864
    %1866 = vrot.lane.b32.xlu0 %v1863, 32
    %v1867 = vpop.permute.xlu0 %1866
    %1870 = vst.msk [vmem:[#allocation3 + $0x3] sm:$0x1] %vm1429, %v1865
    %1871 = vst.msk [vmem:[#allocation3 + $0xb] sm:$0x1] %vm1429, %v1867
    %v1872 = vrot.slane %v1829, 6
    %1873 = vrot.lane.b32.xlu0 %v1872, 32
    %v1874 = vpop.permute.xlu0 %1873
    %v1875 = vsel %vm84, %v1874, 0
    %1877 = vmatprep.subr.mxu0 0.0
    %1878 = vmatpush1.msra.mxu0 0.0
    %1879 = vmatprep.subr.mxu0 0.0
    %1880 = vmatpush1.msra.mxu0 0.0
    %1881 = vmatprep.subr.mxu0 0.0
    %1882 = vmatpush1.msra.mxu0 0.0
    %1883 = vmatprep.subr.mxu0 0.0
    %1884 = vmatpush1.msra.mxu0 0.0
    %1885 = vmatprep.subr.mxu0 0.0
    %1886 = vmatpush1.msra.mxu0 0.0
    %1887 = vmatprep.subr.mxu0 0.0
    %1888 = vmatpush1.msra.mxu0 0.0
    %1889 = vmatprep.subr.mxu0 0.0
    %1890 = vmatpush1.msra.mxu0 0.0
    %1891 = vmatprep.subr.mxu0 0.0
    %1892 = vmatpush1.msra.mxu0 0.0
    %1893 = vmatprep.subr.mxu0 0.0
    %1894 = vmatpush1.msra.mxu0 0.0
    %1895 = vmatprep.subr.mxu0 0.0
    %1896 = vmatpush1.msra.mxu0 0.0
    %1897 = vmatprep.subr.mxu0 0.0
    %1898 = vmatpush1.msra.mxu0 0.0
    %1899 = vmatprep.subr.mxu0 0.0
    %1900 = vmatpush1.msra.mxu0 0.0
    %1901 = vmatprep.subr.mxu0 0.0
    %1902 = vmatpush1.msra.mxu0 %v1285
    %1903 = vmatprep.subr.mxu0 0.0
    %1904 = vmatpush1.msra.mxu0 %v1284
    %1905 = vmatprep.subr.mxu0 0.0
    %1906 = vmatpush1.msra.mxu0 %v1283
    %1907 = vmatprep.subr.mxu0 0.0
    %1908 = vmatpush1.msra.mxu0 %v1282
    %1909 = vmatprep.subr.mxu0 0.0
    %1910 = vmatpush2.msra.mxu0 0.0
    %1911 = vmatprep.subr.mxu0 0.0
    %1912 = vmatpush2.msra.mxu0 0.0
    %1913 = vmatprep.subr.mxu0 0.0
    %1914 = vmatpush2.msra.mxu0 0.0
    %1915 = vmatprep.subr.mxu0 0.0
    %1916 = vmatpush2.msra.mxu0 0.0
    %1917 = vmatprep.subr.mxu0 0.0
    %1918 = vmatpush2.msra.mxu0 0.0
    %1919 = vmatprep.subr.mxu0 0.0
    %1920 = vmatpush2.msra.mxu0 0.0
    %1921 = vmatprep.subr.mxu0 0.0
    %1922 = vmatpush2.msra.mxu0 0.0
    %1923 = vmatprep.subr.mxu0 0.0
    %1924 = vmatpush2.msra.mxu0 0.0
    %1925 = vmatprep.subr.mxu0 0.0
    %1926 = vmatpush2.msra.mxu0 0.0
    %1927 = vmatprep.subr.mxu0 0.0
    %1928 = vmatpush2.msra.mxu0 0.0
    %1929 = vmatprep.subr.mxu0 0.0
    %1930 = vmatpush2.msra.mxu0 0.0
    %1931 = vmatprep.subr.mxu0 0.0
    %1932 = vmatpush2.msra.mxu0 0.0
    %1933 = vmatprep.subr.mxu0 0.0
    %1934 = vmatpush2.msra.mxu0 0.0
    %1935 = vmatprep.subr.mxu0 0.0
    %1936 = vmatpush2.msra.mxu0 0.0
    %1937 = vmatprep.subr.mxu0 0.0
    %1938 = vmatpush2.msra.mxu0 0.0
    %1939 = vmatprep.subr.mxu0 0.0
    %1940 = vmatpush2.msra.mxu0 0.0
    %1941 = vmatprep.mubr.f32.mxu0 0.0
    %1942 = vmatmul.mubr.f32.gmra.mxu0 %v1875
    %v1943 = vpop.f32.mrf.mxu0
    %v1944 = vadd.f32 0.0, %v1943
    %v1945 = vpop.f32.mrf.mxu0
    %1946 = vdwg.mxu0
    %v1947 = vadd.f32 %v1279, %v1944
    %v1948 = vxor.u32 %v1947, 2147483648
    %v1949 = vmul.f32 %v1948, 1.442695
    %v1950 = vpow.pop %v1949
    %v1951 = vadd.f32 %v1950, 1.0
    %v1952 = vrcp.pop %v1951
    %v1953 = vmul.f32 1.0, %v1952
    %v1954 = vtanh.pop %v1947
    %v1956 = vrot.slane %v1823, 6
    %v1958 = vmul.f32 %v1953, %v1956
    %1960 = vrot.lane.b32.xlu0 %v1954, 64
    %v1961 = vpop.permute.xlu0 %1960
    %v1963 = vmul.f32 %v1953, %v1961
    %1965 = vrot.lane.b32.xlu0 %v1963, 32
    %v1966 = vpop.permute.xlu0 %1965
    %v1968 = vadd.f32 %v1958, %v1966
    %v1969 = vtanh.pop %v1968
    %1971 = vrot.lane.b32.xlu0 %v1969, 64
    %v1972 = vpop.permute.xlu0 %1971
    %v1974 = vmul.f32 %v1953, %v1972
    %v1977 = vunpack.c.l.s4 1966171168
    %v1978 = vunpack.c.0.s8 %v1977
    %v1979 = vlaneseq
    %v1980 = vshrl.u32 %v1979, 7
    %v1981 = vsub.s32 %v1978, %v1980
    %v1982 = vrot.slane %v1974, %v1981
    %v1983 = vcombine.high %v1982, %v1982
    %v1985 = vunpack.c.l.s4 1966171168
    %v1986 = vunpack.c.0.s8 %v1985
    %v1987 = vlaneseq
    %v1988 = vshrl.u32 %v1987, 7
    %v1989 = vsub.s32 %v1986, %v1988
    %v1990 = vrot.slane %v1982, %v1989
    %v1992 = vunpack.c.l.s4 1966171168
    %v1993 = vunpack.c.0.s8 %v1992
    %v1994 = vlaneseq
    %v1995 = vshrl.u32 %v1994, 7
    %v1996 = vsub.s32 %v1993, %v1995
    %v1997 = vrot.slane %v1983, %v1996
    %v1998 = vlaneseq
    %v1999 = vshrl.u32 %v1998, 7
    %v2000 = vsub.s32 0, %v1999
    %v2001 = vrot.slane %v1990, %v2000
    %v2002 = vlaneseq
    %v2003 = vshrl.u32 %v2002, 7
    %v2004 = vsub.s32 0, %v2003
    %v2005 = vrot.slane %v1997, %v2004
    %2006 = vrot.lane.b32.xlu0 %v2001, 32
    %v2007 = vpop.permute.xlu0 %2006
    %2008 = vrot.lane.b32.xlu0 %v2005, 32
    %v2009 = vpop.permute.xlu0 %2008
    %2012 = vst.msk [vmem:[#allocation3 + $0x4] sm:$0x1] %vm1429, %v2007
    %2013 = vst.msk [vmem:[#allocation3 + $0xc] sm:$0x1] %vm1429, %v2009
    %2014 = vrot.lane.b32.xlu0 %v1974, 32
    %v2015 = vpop.permute.xlu0 %2014
    %v2016 = vsel %vm84, %v2015, 0
    %2018 = vmatprep.subr.mxu0 0.0
    %2019 = vmatpush1.msra.mxu0 0.0
    %2020 = vmatprep.subr.mxu0 0.0
    %2021 = vmatpush1.msra.mxu0 0.0
    %2022 = vmatprep.subr.mxu0 0.0
    %2023 = vmatpush1.msra.mxu0 0.0
    %2024 = vmatprep.subr.mxu0 0.0
    %2025 = vmatpush1.msra.mxu0 0.0
    %2026 = vmatprep.subr.mxu0 0.0
    %2027 = vmatpush1.msra.mxu0 0.0
    %2028 = vmatprep.subr.mxu0 0.0
    %2029 = vmatpush1.msra.mxu0 0.0
    %2030 = vmatprep.subr.mxu0 0.0
    %2031 = vmatpush1.msra.mxu0 0.0
    %2032 = vmatprep.subr.mxu0 0.0
    %2033 = vmatpush1.msra.mxu0 0.0
    %2034 = vmatprep.subr.mxu0 0.0
    %2035 = vmatpush1.msra.mxu0 0.0
    %2036 = vmatprep.subr.mxu0 0.0
    %2037 = vmatpush1.msra.mxu0 0.0
    %2038 = vmatprep.subr.mxu0 0.0
    %2039 = vmatpush1.msra.mxu0 0.0
    %2040 = vmatprep.subr.mxu0 0.0
    %2041 = vmatpush1.msra.mxu0 0.0
    %2042 = vmatprep.subr.mxu0 0.0
    %2043 = vmatpush1.msra.mxu0 %v1285
    %2044 = vmatprep.subr.mxu0 0.0
    %2045 = vmatpush1.msra.mxu0 %v1284
    %2046 = vmatprep.subr.mxu0 0.0
    %2047 = vmatpush1.msra.mxu0 %v1283
    %2048 = vmatprep.subr.mxu0 0.0
    %2049 = vmatpush1.msra.mxu0 %v1282
    %2050 = vmatprep.subr.mxu0 0.0
    %2051 = vmatpush2.msra.mxu0 0.0
    %2052 = vmatprep.subr.mxu0 0.0
    %2053 = vmatpush2.msra.mxu0 0.0
    %2054 = vmatprep.subr.mxu0 0.0
    %2055 = vmatpush2.msra.mxu0 0.0
    %2056 = vmatprep.subr.mxu0 0.0
    %2057 = vmatpush2.msra.mxu0 0.0
    %2058 = vmatprep.subr.mxu0 0.0
    %2059 = vmatpush2.msra.mxu0 0.0
    %2060 = vmatprep.subr.mxu0 0.0
    %2061 = vmatpush2.msra.mxu0 0.0
    %2062 = vmatprep.subr.mxu0 0.0
    %2063 = vmatpush2.msra.mxu0 0.0
    %2064 = vmatprep.subr.mxu0 0.0
    %2065 = vmatpush2.msra.mxu0 0.0
    %2066 = vmatprep.subr.mxu0 0.0
    %2067 = vmatpush2.msra.mxu0 0.0
    %2068 = vmatprep.subr.mxu0 0.0
    %2069 = vmatpush2.msra.mxu0 0.0
    %2070 = vmatprep.subr.mxu0 0.0
    %2071 = vmatpush2.msra.mxu0 0.0
    %2072 = vmatprep.subr.mxu0 0.0
    %2073 = vmatpush2.msra.mxu0 0.0
    %2074 = vmatprep.subr.mxu0 0.0
    %2075 = vmatpush2.msra.mxu0 0.0
    %2076 = vmatprep.subr.mxu0 0.0
    %2077 = vmatpush2.msra.mxu0 0.0
    %2078 = vmatprep.subr.mxu0 0.0
    %2079 = vmatpush2.msra.mxu0 0.0
    %2080 = vmatprep.subr.mxu0 0.0
    %2081 = vmatpush2.msra.mxu0 0.0
    %2082 = vmatprep.mubr.f32.mxu0 0.0
    %2083 = vmatmul.mubr.f32.gmra.mxu0 %v2016
    %v2084 = vpop.f32.mrf.mxu0
    %v2085 = vadd.f32 0.0, %v2084
    %v2086 = vpop.f32.mrf.mxu0
    %2087 = vdwg.mxu0
    %v2089 = vrot.slane %v2085, 6
    %v2091 = vadd.f32 %v1279, %v2089
    %v2092 = vxor.u32 %v2091, 2147483648
    %v2093 = vmul.f32 %v2092, 1.442695
    %v2094 = vpow.pop %v2093
    %v2095 = vadd.f32 %v2094, 1.0
    %v2096 = vrcp.pop %v2095
    %v2097 = vmul.f32 1.0, %v2096
    %v2098 = vtanh.pop %v2091
    %v2100 = vrot.slane %v1968, 6
    %v2102 = vmul.f32 %v2097, %v2100
    %2104 = vrot.lane.b32.xlu0 %v2098, 64
    %v2105 = vpop.permute.xlu0 %2104
    %v2107 = vmul.f32 %v2097, %v2105
    %2109 = vrot.lane.b32.xlu0 %v2107, 32
    %v2110 = vpop.permute.xlu0 %2109
    %v2112 = vadd.f32 %v2102, %v2110
    %v2113 = vtanh.pop %v2112
    %2115 = vrot.lane.b32.xlu0 %v2113, 64
    %v2116 = vpop.permute.xlu0 %2115
    %v2118 = vmul.f32 %v2097, %v2116
    %v2121 = vunpack.c.l.s4 1966171168
    %v2122 = vunpack.c.0.s8 %v2121
    %v2123 = vlaneseq
    %v2124 = vshrl.u32 %v2123, 7
    %v2125 = vsub.s32 %v2122, %v2124
    %v2126 = vrot.slane %v2118, %v2125
    %v2127 = vcombine.high %v2126, %v2126
    %v2129 = vunpack.c.l.s4 1966171168
    %v2130 = vunpack.c.0.s8 %v2129
    %v2131 = vlaneseq
    %v2132 = vshrl.u32 %v2131, 7
    %v2133 = vsub.s32 %v2130, %v2132
    %v2134 = vrot.slane %v2126, %v2133
    %v2136 = vunpack.c.l.s4 1966171168
    %v2137 = vunpack.c.0.s8 %v2136
    %v2138 = vlaneseq
    %v2139 = vshrl.u32 %v2138, 7
    %v2140 = vsub.s32 %v2137, %v2139
    %v2141 = vrot.slane %v2127, %v2140
    %v2142 = vcombine.high %v2134, %v2134
    %v2143 = vcombine.high %v2141, %v2141
    %v2144 = vlaneseq
    %v2145 = vshrl.u32 %v2144, 7
    %v2146 = vsub.s32 0, %v2145
    %v2147 = vrot.slane %v2142, %v2146
    %v2148 = vlaneseq
    %v2149 = vshrl.u32 %v2148, 7
    %v2150 = vsub.s32 0, %v2149
    %v2151 = vrot.slane %v2143, %v2150
    %2152 = vrot.lane.b32.xlu0 %v2147, 32
    %v2153 = vpop.permute.xlu0 %2152
    %2154 = vrot.lane.b32.xlu0 %v2151, 32
    %v2155 = vpop.permute.xlu0 %2154
    %2158 = vst.msk [vmem:[#allocation3 + $0x5] sm:$0x1] %vm1429, %v2153
    %2159 = vst.msk [vmem:[#allocation3 + $0xd] sm:$0x1] %vm1429, %v2155
    %v2160 = vrot.slane %v2118, 2
    %2161 = vrot.lane.b32.xlu0 %v2160, 32
    %v2162 = vpop.permute.xlu0 %2161
    %v2163 = vsel %vm84, %v2162, 0
    %2165 = vmatprep.subr.mxu0 0.0
    %2166 = vmatpush1.msra.mxu0 0.0
    %2167 = vmatprep.subr.mxu0 0.0
    %2168 = vmatpush1.msra.mxu0 0.0
    %2169 = vmatprep.subr.mxu0 0.0
    %2170 = vmatpush1.msra.mxu0 0.0
    %2171 = vmatprep.subr.mxu0 0.0
    %2172 = vmatpush1.msra.mxu0 0.0
    %2173 = vmatprep.subr.mxu0 0.0
    %2174 = vmatpush1.msra.mxu0 0.0
    %2175 = vmatprep.subr.mxu0 0.0
    %2176 = vmatpush1.msra.mxu0 0.0
    %2177 = vmatprep.subr.mxu0 0.0
    %2178 = vmatpush1.msra.mxu0 0.0
    %2179 = vmatprep.subr.mxu0 0.0
    %2180 = vmatpush1.msra.mxu0 0.0
    %2181 = vmatprep.subr.mxu0 0.0
    %2182 = vmatpush1.msra.mxu0 0.0
    %2183 = vmatprep.subr.mxu0 0.0
    %2184 = vmatpush1.msra.mxu0 0.0
    %2185 = vmatprep.subr.mxu0 0.0
    %2186 = vmatpush1.msra.mxu0 0.0
    %2187 = vmatprep.subr.mxu0 0.0
    %2188 = vmatpush1.msra.mxu0 0.0
    %2189 = vmatprep.subr.mxu0 0.0
    %2190 = vmatpush1.msra.mxu0 %v1285
    %2191 = vmatprep.subr.mxu0 0.0
    %2192 = vmatpush1.msra.mxu0 %v1284
    %2193 = vmatprep.subr.mxu0 0.0
    %2194 = vmatpush1.msra.mxu0 %v1283
    %2195 = vmatprep.subr.mxu0 0.0
    %2196 = vmatpush1.msra.mxu0 %v1282
    %2197 = vmatprep.subr.mxu0 0.0
    %2198 = vmatpush2.msra.mxu0 0.0
    %2199 = vmatprep.subr.mxu0 0.0
    %2200 = vmatpush2.msra.mxu0 0.0
    %2201 = vmatprep.subr.mxu0 0.0
    %2202 = vmatpush2.msra.mxu0 0.0
    %2203 = vmatprep.subr.mxu0 0.0
    %2204 = vmatpush2.msra.mxu0 0.0
    %2205 = vmatprep.subr.mxu0 0.0
    %2206 = vmatpush2.msra.mxu0 0.0
    %2207 = vmatprep.subr.mxu0 0.0
    %2208 = vmatpush2.msra.mxu0 0.0
    %2209 = vmatprep.subr.mxu0 0.0
    %2210 = vmatpush2.msra.mxu0 0.0
    %2211 = vmatprep.subr.mxu0 0.0
    %2212 = vmatpush2.msra.mxu0 0.0
    %2213 = vmatprep.subr.mxu0 0.0
    %2214 = vmatpush2.msra.mxu0 0.0
    %2215 = vmatprep.subr.mxu0 0.0
    %2216 = vmatpush2.msra.mxu0 0.0
    %2217 = vmatprep.subr.mxu0 0.0
    %2218 = vmatpush2.msra.mxu0 0.0
    %2219 = vmatprep.subr.mxu0 0.0
    %2220 = vmatpush2.msra.mxu0 0.0
    %2221 = vmatprep.subr.mxu0 0.0
    %2222 = vmatpush2.msra.mxu0 0.0
    %2223 = vmatprep.subr.mxu0 0.0
    %2224 = vmatpush2.msra.mxu0 0.0
    %2225 = vmatprep.subr.mxu0 0.0
    %2226 = vmatpush2.msra.mxu0 0.0
    %2227 = vmatprep.subr.mxu0 0.0
    %2228 = vmatpush2.msra.mxu0 0.0
    %2229 = vmatprep.mubr.f32.mxu0 0.0
    %2230 = vmatmul.mubr.f32.gmra.mxu0 %v2163
    %v2231 = vpop.f32.mrf.mxu0
    %v2232 = vadd.f32 0.0, %v2231
    %v2233 = vpop.f32.mrf.mxu0
    %2234 = vdwg.mxu0
    %v2236 = vrot.slane %v2232, 4
    %v2238 = vadd.f32 %v1279, %v2236
    %v2239 = vxor.u32 %v2238, 2147483648
    %v2240 = vmul.f32 %v2239, 1.442695
    %v2241 = vpow.pop %v2240
    %v2242 = vadd.f32 %v2241, 1.0
    %v2243 = vrcp.pop %v2242
    %v2244 = vmul.f32 1.0, %v2243
    %v2245 = vtanh.pop %v2238
    %v2247 = vrot.slane %v2112, 6
    %v2249 = vmul.f32 %v2244, %v2247
    %2251 = vrot.lane.b32.xlu0 %v2245, 64
    %v2252 = vpop.permute.xlu0 %2251
    %v2254 = vmul.f32 %v2244, %v2252
    %2256 = vrot.lane.b32.xlu0 %v2254, 32
    %v2257 = vpop.permute.xlu0 %2256
    %v2259 = vadd.f32 %v2249, %v2257
    %v2260 = vtanh.pop %v2259
    %2262 = vrot.lane.b32.xlu0 %v2260, 64
    %v2263 = vpop.permute.xlu0 %2262
    %v2265 = vmul.f32 %v2244, %v2263
    %v2267 = vcombine.high %v2265, %v2265
    %v2269 = vunpack.c.l.s4 1966171168
    %v2270 = vunpack.c.0.s8 %v2269
    %v2271 = vlaneseq
    %v2272 = vshrl.u32 %v2271, 7
    %v2273 = vsub.s32 %v2270, %v2272
    %v2274 = vrot.slane %v2267, %v2273
    %v2275 = vcombine.high %v2274, %v2274
    %v2277 = vunpack.c.l.s4 1966171168
    %v2278 = vunpack.c.0.s8 %v2277
    %v2279 = vlaneseq
    %v2280 = vshrl.u32 %v2279, 7
    %v2281 = vsub.s32 %v2278, %v2280
    %v2282 = vrot.slane %v2274, %v2281
    %v2284 = vunpack.c.l.s4 1966171168
    %v2285 = vunpack.c.0.s8 %v2284
    %v2286 = vlaneseq
    %v2287 = vshrl.u32 %v2286, 7
    %v2288 = vsub.s32 %v2285, %v2287
    %v2289 = vrot.slane %v2275, %v2288
    %v2290 = vlaneseq
    %v2291 = vshrl.u32 %v2290, 7
    %v2292 = vsub.s32 0, %v2291
    %v2293 = vrot.slane %v2282, %v2292
    %v2294 = vlaneseq
    %v2295 = vshrl.u32 %v2294, 7
    %v2296 = vsub.s32 0, %v2295
    %v2297 = vrot.slane %v2289, %v2296
    %2298 = vrot.lane.b32.xlu0 %v2293, 32
    %v2299 = vpop.permute.xlu0 %2298
    %2300 = vrot.lane.b32.xlu0 %v2297, 32
    %v2301 = vpop.permute.xlu0 %2300
    %2304 = vst.msk [vmem:[#allocation3 + $0x6] sm:$0x1] %vm1429, %v2299
    %2305 = vst.msk [vmem:[#allocation3 + $0xe] sm:$0x1] %vm1429, %v2301
    %v2306 = vrot.slane %v2265, 4
    %2307 = vrot.lane.b32.xlu0 %v2306, 32
    %v2308 = vpop.permute.xlu0 %2307
    %v2309 = vsel %vm84, %v2308, 0
    %2311 = vmatprep.subr.mxu0 0.0
    %2312 = vmatpush1.msra.mxu0 0.0
    %2313 = vmatprep.subr.mxu0 0.0
    %2314 = vmatpush1.msra.mxu0 0.0
    %2315 = vmatprep.subr.mxu0 0.0
    %2316 = vmatpush1.msra.mxu0 0.0
    %2317 = vmatprep.subr.mxu0 0.0
    %2318 = vmatpush1.msra.mxu0 0.0
    %2319 = vmatprep.subr.mxu0 0.0
    %2320 = vmatpush1.msra.mxu0 0.0
    %2321 = vmatprep.subr.mxu0 0.0
    %2322 = vmatpush1.msra.mxu0 0.0
    %2323 = vmatprep.subr.mxu0 0.0
    %2324 = vmatpush1.msra.mxu0 0.0
    %2325 = vmatprep.subr.mxu0 0.0
    %2326 = vmatpush1.msra.mxu0 0.0
    %2327 = vmatprep.subr.mxu0 0.0
    %2328 = vmatpush1.msra.mxu0 0.0
    %2329 = vmatprep.subr.mxu0 0.0
    %2330 = vmatpush1.msra.mxu0 0.0
    %2331 = vmatprep.subr.mxu0 0.0
    %2332 = vmatpush1.msra.mxu0 0.0
    %2333 = vmatprep.subr.mxu0 0.0
    %2334 = vmatpush1.msra.mxu0 0.0
    %2335 = vmatprep.subr.mxu0 0.0
    %2336 = vmatpush1.msra.mxu0 %v1285
    %2337 = vmatprep.subr.mxu0 0.0
    %2338 = vmatpush1.msra.mxu0 %v1284
    %2339 = vmatprep.subr.mxu0 0.0
    %2340 = vmatpush1.msra.mxu0 %v1283
    %2341 = vmatprep.subr.mxu0 0.0
    %2342 = vmatpush1.msra.mxu0 %v1282
    %2343 = vmatprep.subr.mxu0 0.0
    %2344 = vmatpush2.msra.mxu0 0.0
    %2345 = vmatprep.subr.mxu0 0.0
    %2346 = vmatpush2.msra.mxu0 0.0
    %2347 = vmatprep.subr.mxu0 0.0
    %2348 = vmatpush2.msra.mxu0 0.0
    %2349 = vmatprep.subr.mxu0 0.0
    %2350 = vmatpush2.msra.mxu0 0.0
    %2351 = vmatprep.subr.mxu0 0.0
    %2352 = vmatpush2.msra.mxu0 0.0
    %2353 = vmatprep.subr.mxu0 0.0
    %2354 = vmatpush2.msra.mxu0 0.0
    %2355 = vmatprep.subr.mxu0 0.0
    %2356 = vmatpush2.msra.mxu0 0.0
    %2357 = vmatprep.subr.mxu0 0.0
    %2358 = vmatpush2.msra.mxu0 0.0
    %2359 = vmatprep.subr.mxu0 0.0
    %2360 = vmatpush2.msra.mxu0 0.0
    %2361 = vmatprep.subr.mxu0 0.0
    %2362 = vmatpush2.msra.mxu0 0.0
    %2363 = vmatprep.subr.mxu0 0.0
    %2364 = vmatpush2.msra.mxu0 0.0
    %2365 = vmatprep.subr.mxu0 0.0
    %2366 = vmatpush2.msra.mxu0 0.0
    %2367 = vmatprep.subr.mxu0 0.0
    %2368 = vmatpush2.msra.mxu0 0.0
    %2369 = vmatprep.subr.mxu0 0.0
    %2370 = vmatpush2.msra.mxu0 0.0
    %2371 = vmatprep.subr.mxu0 0.0
    %2372 = vmatpush2.msra.mxu0 0.0
    %2373 = vmatprep.subr.mxu0 0.0
    %2374 = vmatpush2.msra.mxu0 0.0
    %2375 = vmatprep.mubr.f32.mxu0 0.0
    %2376 = vmatmul.mubr.f32.gmra.mxu0 %v2309
    %v2377 = vpop.f32.mrf.mxu0
    %v2378 = vadd.f32 0.0, %v2377
    %v2379 = vpop.f32.mrf.mxu0
    %2380 = vdwg.mxu0
    %v2382 = vrot.slane %v2378, 2
    %v2384 = vadd.f32 %v1279, %v2382
    %v2385 = vxor.u32 %v2384, 2147483648
    %v2386 = vmul.f32 %v2385, 1.442695
    %v2387 = vpow.pop %v2386
    %v2388 = vadd.f32 %v2387, 1.0
    %v2389 = vrcp.pop %v2388
    %v2390 = vmul.f32 1.0, %v2389
    %v2391 = vtanh.pop %v2384
    %v2393 = vrot.slane %v2259, 6
    %v2395 = vmul.f32 %v2390, %v2393
    %2397 = vrot.lane.b32.xlu0 %v2391, 64
    %v2398 = vpop.permute.xlu0 %2397
    %v2400 = vmul.f32 %v2390, %v2398
    %2402 = vrot.lane.b32.xlu0 %v2400, 32
    %v2403 = vpop.permute.xlu0 %2402
    %v2405 = vadd.f32 %v2395, %v2403
    %v2406 = vtanh.pop %v2405
    %2408 = vrot.lane.b32.xlu0 %v2406, 64
    %v2409 = vpop.permute.xlu0 %2408
    %v2411 = vmul.f32 %v2390, %v2409
    %v2413 = vcombine.high %v2411, %v2411
    %v2415 = vunpack.c.l.s4 1966171168
    %v2416 = vunpack.c.0.s8 %v2415
    %v2417 = vlaneseq
    %v2418 = vshrl.u32 %v2417, 7
    %v2419 = vsub.s32 %v2416, %v2418
    %v2420 = vrot.slane %v2413, %v2419
    %v2421 = vcombine.high %v2420, %v2420
    %v2423 = vunpack.c.l.s4 1966171168
    %v2424 = vunpack.c.0.s8 %v2423
    %v2425 = vlaneseq
    %v2426 = vshrl.u32 %v2425, 7
    %v2427 = vsub.s32 %v2424, %v2426
    %v2428 = vrot.slane %v2420, %v2427
    %v2430 = vunpack.c.l.s4 1966171168
    %v2431 = vunpack.c.0.s8 %v2430
    %v2432 = vlaneseq
    %v2433 = vshrl.u32 %v2432, 7
    %v2434 = vsub.s32 %v2431, %v2433
    %v2435 = vrot.slane %v2421, %v2434
    %v2436 = vcombine.high %v2428, %v2428
    %v2437 = vcombine.high %v2435, %v2435
    %v2438 = vlaneseq
    %v2439 = vshrl.u32 %v2438, 7
    %v2440 = vsub.s32 0, %v2439
    %v2441 = vrot.slane %v2436, %v2440
    %v2442 = vlaneseq
    %v2443 = vshrl.u32 %v2442, 7
    %v2444 = vsub.s32 0, %v2443
    %v2445 = vrot.slane %v2437, %v2444
    %2446 = vrot.lane.b32.xlu0 %v2441, 32
    %v2447 = vpop.permute.xlu0 %2446
    %2448 = vrot.lane.b32.xlu0 %v2445, 32
    %v2449 = vpop.permute.xlu0 %2448
    %2452 = vst.msk [vmem:[#allocation3 + $0x7] sm:$0x1] %vm1429, %v2447
    %2453 = vst.msk [vmem:[#allocation3 + $0xf] sm:$0x1] %vm1429, %v2449
    %2454 = vst.msk [vmem:[#allocation6 - $0x6] sm:$0xc0] %vm748, %v1185
    %2455 = vrot.lane.b32.xlu0 %v2411, 32
    %v2456 = vpop.permute.xlu0 %2455
    %s2458 = scalar_lea.vmem [#allocation6], 2
    %2459 = vst.msk [vmem:[%s2458 - $0x6] sm:$0xc0] %vm748, %v2456
    %2461 = vrot.lane.b32.xlu0 %v1176, 96
    %v2462 = vpop.permute.xlu0 %2461
    %2464 = vst.msk [vmem:[#allocation8 - $0x6] sm:$0xc0] %vm748, %v2462
    %2466 = vrot.lane.b32.xlu0 %v2405, 96
    %v2467 = vpop.permute.xlu0 %2466
    %s2469 = scalar_lea.vmem [#allocation8], 2
    %2470 = vst.msk [vmem:[%s2469 - $0x6] sm:$0xc0] %vm748, %v2467
    %v2471 = vld [vmem:[#allocation3] sm:$0xff]
    %v2472 = vld [vmem:[#allocation3 + $0x8] sm:$0xff]
    %v2473 = vld [vmem:[%s1] sm:$0xff]
    %v2474 = vld [vmem:[%s1 + $0x8] sm:$0xff]
    %v2475 = vld [vmem:[%s14] sm:$0xff]
    %v2476 = vld [vmem:[%s14 + $0x8] sm:$0xff]
    %v2477 = vld [vmem:[%s14 + $0x10] sm:$0xff]
    %v2478 = vld [vmem:[%s14 + $0x18] sm:$0xff]
    %v2479 = vld [vmem:[%s15] sm:$0x1]
    %v2481 = vlaneseq
    %v2482 = vshrl.u32 %v2481, 7
    %v2483 = vsub.s32 0, %v2482
    %v2484 = vrot.slane %v2479, %v2483
    %v2487 = vsel %vm84, %v2471, 0
    %v2490 = vsel %vm84, %v2472, 0
    %v2493 = vsel %vm84, %v2473, 0
    %v2496 = vsel %vm84, %v2474, 0
    %2498 = vmatprep.subr.mxu0 0.0
    %2499 = vmatpush1.msra.mxu0 0.0
    %2500 = vmatprep.subr.mxu0 0.0
    %2501 = vmatpush1.msra.mxu0 0.0
    %2502 = vmatprep.subr.mxu0 0.0
    %2503 = vmatpush1.msra.mxu0 0.0
    %2504 = vmatprep.subr.mxu0 0.0
    %2505 = vmatpush1.msra.mxu0 0.0
    %2506 = vmatprep.subr.mxu0 0.0
    %2507 = vmatpush1.msra.mxu0 0.0
    %2508 = vmatprep.subr.mxu0 0.0
    %2509 = vmatpush1.msra.mxu0 0.0
    %2510 = vmatprep.subr.mxu0 0.0
    %2511 = vmatpush1.msra.mxu0 0.0
    %2512 = vmatprep.subr.mxu0 0.0
    %2513 = vmatpush1.msra.mxu0 0.0
    %2514 = vmatprep.subr.mxu0 0.0
    %2515 = vmatpush1.msra.mxu0 0.0
    %2516 = vmatprep.subr.mxu0 0.0
    %2517 = vmatpush1.msra.mxu0 0.0
    %2518 = vmatprep.subr.mxu0 0.0
    %2519 = vmatpush1.msra.mxu0 0.0
    %2520 = vmatprep.subr.mxu0 0.0
    %2521 = vmatpush1.msra.mxu0 0.0
    %2522 = vmatprep.subr.mxu0 0.0
    %2523 = vmatpush1.msra.mxu0 %v2478
    %2524 = vmatprep.subr.mxu0 0.0
    %2525 = vmatpush1.msra.mxu0 %v2477
    %2526 = vmatprep.subr.mxu0 0.0
    %2527 = vmatpush1.msra.mxu0 %v2476
    %2528 = vmatprep.subr.mxu0 0.0
    %2529 = vmatpush1.msra.mxu0 %v2475
    %2530 = vmatprep.subr.mxu0 0.0
    %2531 = vmatpush2.msra.mxu0 0.0
    %2532 = vmatprep.subr.mxu0 0.0
    %2533 = vmatpush2.msra.mxu0 0.0
    %2534 = vmatprep.subr.mxu0 0.0
    %2535 = vmatpush2.msra.mxu0 0.0
    %2536 = vmatprep.subr.mxu0 0.0
    %2537 = vmatpush2.msra.mxu0 0.0
    %2538 = vmatprep.subr.mxu0 0.0
    %2539 = vmatpush2.msra.mxu0 0.0
    %2540 = vmatprep.subr.mxu0 0.0
    %2541 = vmatpush2.msra.mxu0 0.0
    %2542 = vmatprep.subr.mxu0 0.0
    %2543 = vmatpush2.msra.mxu0 0.0
    %2544 = vmatprep.subr.mxu0 0.0
    %2545 = vmatpush2.msra.mxu0 0.0
    %2546 = vmatprep.subr.mxu0 0.0
    %2547 = vmatpush2.msra.mxu0 0.0
    %2548 = vmatprep.subr.mxu0 0.0
    %2549 = vmatpush2.msra.mxu0 0.0
    %2550 = vmatprep.subr.mxu0 0.0
    %2551 = vmatpush2.msra.mxu0 0.0
    %2552 = vmatprep.subr.mxu0 0.0
    %2553 = vmatpush2.msra.mxu0 0.0
    %2554 = vmatprep.subr.mxu0 0.0
    %2555 = vmatpush2.msra.mxu0 0.0
    %2556 = vmatprep.subr.mxu0 0.0
    %2557 = vmatpush2.msra.mxu0 0.0
    %2558 = vmatprep.subr.mxu0 0.0
    %2559 = vmatpush2.msra.mxu0 0.0
    %2560 = vmatprep.subr.mxu0 0.0
    %2561 = vmatpush2.msra.mxu0 0.0
    %2562 = vmatprep.mubr.f32.mxu0 0.0
    %2563 = vmatmul.mubr.f32.gmra.mxu0 %v2487
    %v2564 = vpop.f32.mrf.mxu0
    %v2565 = vadd.f32 %v2484, %v2564
    %v2566 = vpop.f32.mrf.mxu0
    %2567 = vmatprep.mubr.f32.mxu0 0.0
    %2568 = vmatmul.mubr.f32.gmra.mxu0 %v2490
    %v2569 = vpop.f32.mrf.mxu0
    %v2570 = vadd.f32 %v2484, %v2569
    %v2571 = vpop.f32.mrf.mxu0
    %2572 = vmatprep.mubr.f32.mxu0 0.0
    %2573 = vmatmul.mubr.f32.gmra.mxu0 %v2493
    %v2574 = vpop.f32.mrf.mxu0
    %v2575 = vadd.f32 %v2484, %v2574
    %v2576 = vpop.f32.mrf.mxu0
    %2577 = vmatprep.mubr.f32.mxu0 0.0
    %2578 = vmatmul.mubr.f32.gmra.mxu0 %v2496
    %v2579 = vpop.f32.mrf.mxu0
    %v2580 = vadd.f32 %v2484, %v2579
    %v2581 = vpop.f32.mrf.mxu0
    %2582 = vdwg.mxu0
    %2584 = vrot.lane.b32.xlu0 %v2575, 96
    %v2585 = vpop.permute.xlu0 %2584
    %v2587 = vsel %vm84, %v2565, 0
    %v2589 = vsel %vm84, %v2585, 0
    %2591 = vmatprep.subr.mxu0 0.0
    %2592 = vmatpush1.xpose.msra.mxu0 0.0
    %2593 = vmatprep.subr.mxu0 0.0
    %2594 = vmatpush1.xpose.msra.mxu0 0.0
    %2595 = vmatprep.subr.mxu0 0.0
    %2596 = vmatpush1.xpose.msra.mxu0 0.0
    %2597 = vmatprep.subr.mxu0 0.0
    %2598 = vmatpush1.xpose.msra.mxu0 0.0
    %2599 = vmatprep.subr.mxu0 0.0
    %2600 = vmatpush1.xpose.msra.mxu0 0.0
    %2601 = vmatprep.subr.mxu0 0.0
    %2602 = vmatpush1.xpose.msra.mxu0 0.0
    %2603 = vmatprep.subr.mxu0 0.0
    %2604 = vmatpush1.xpose.msra.mxu0 0.0
    %2605 = vmatprep.subr.mxu0 0.0
    %2606 = vmatpush1.xpose.msra.mxu0 0.0
    %2607 = vmatprep.subr.mxu0 0.0
    %2608 = vmatpush1.xpose.msra.mxu0 0.0
    %2609 = vmatprep.subr.mxu0 0.0
    %2610 = vmatpush1.xpose.msra.mxu0 0.0
    %2611 = vmatprep.subr.mxu0 0.0
    %2612 = vmatpush1.xpose.msra.mxu0 0.0
    %2613 = vmatprep.subr.mxu0 0.0
    %2614 = vmatpush1.xpose.msra.mxu0 0.0
    %2615 = vmatprep.subr.mxu0 0.0
    %2616 = vmatpush1.xpose.msra.mxu0 0.0
    %2617 = vmatprep.subr.mxu0 0.0
    %2618 = vmatpush1.xpose.msra.mxu0 0.0
    %2619 = vmatprep.subr.mxu0 0.0
    %2620 = vmatpush1.xpose.msra.mxu0 0.0
    %2621 = vmatprep.subr.mxu0 0.0
    %2622 = vmatpush1.xpose.msra.mxu0 %v2589
    %2623 = vmatprep.subr.mxu0 0.0
    %2624 = vmatpush2.xpose.msra.mxu0 0.0
    %2625 = vmatprep.subr.mxu0 0.0
    %2626 = vmatpush2.xpose.msra.mxu0 0.0
    %2627 = vmatprep.subr.mxu0 0.0
    %2628 = vmatpush2.xpose.msra.mxu0 0.0
    %2629 = vmatprep.subr.mxu0 0.0
    %2630 = vmatpush2.xpose.msra.mxu0 0.0
    %2631 = vmatprep.subr.mxu0 0.0
    %2632 = vmatpush2.xpose.msra.mxu0 0.0
    %2633 = vmatprep.subr.mxu0 0.0
    %2634 = vmatpush2.xpose.msra.mxu0 0.0
    %2635 = vmatprep.subr.mxu0 0.0
    %2636 = vmatpush2.xpose.msra.mxu0 0.0
    %2637 = vmatprep.subr.mxu0 0.0
    %2638 = vmatpush2.xpose.msra.mxu0 0.0
    %2639 = vmatprep.subr.mxu0 0.0
    %2640 = vmatpush2.xpose.msra.mxu0 0.0
    %2641 = vmatprep.subr.mxu0 0.0
    %2642 = vmatpush2.xpose.msra.mxu0 0.0
    %2643 = vmatprep.subr.mxu0 0.0
    %2644 = vmatpush2.xpose.msra.mxu0 0.0
    %2645 = vmatprep.subr.mxu0 0.0
    %2646 = vmatpush2.xpose.msra.mxu0 0.0
    %2647 = vmatprep.subr.mxu0 0.0
    %2648 = vmatpush2.xpose.msra.mxu0 0.0
    %2649 = vmatprep.subr.mxu0 0.0
    %2650 = vmatpush2.xpose.msra.mxu0 0.0
    %2651 = vmatprep.subr.mxu0 0.0
    %2652 = vmatpush2.xpose.msra.mxu0 0.0
    %2653 = vmatprep.subr.mxu0 0.0
    %2654 = vmatpush2.xpose.msra.mxu0 0.0
    %2655 = vmatprep.mubr.f32.mxu0 0.0
    %2656 = vmatmul.mubr.f32.gmra.mxu0 %v2587
    %v2657 = vpop.f32.mrf.mxu0
    %v2658 = vadd.f32 0.0, %v2657
    %v2659 = vpop.f32.mrf.mxu0
    %2660 = vdwg.mxu0
    %2662 = vrot.lane.b32.xlu0 %v2580, 96
    %v2663 = vpop.permute.xlu0 %2662
    %v2665 = vsel %vm84, %v2570, 0
    %v2667 = vsel %vm84, %v2663, 0
    %2669 = vmatprep.subr.mxu0 0.0
    %2670 = vmatpush1.xpose.msra.mxu0 0.0
    %2671 = vmatprep.subr.mxu0 0.0
    %2672 = vmatpush1.xpose.msra.mxu0 0.0
    %2673 = vmatprep.subr.mxu0 0.0
    %2674 = vmatpush1.xpose.msra.mxu0 0.0
    %2675 = vmatprep.subr.mxu0 0.0
    %2676 = vmatpush1.xpose.msra.mxu0 0.0
    %2677 = vmatprep.subr.mxu0 0.0
    %2678 = vmatpush1.xpose.msra.mxu0 0.0
    %2679 = vmatprep.subr.mxu0 0.0
    %2680 = vmatpush1.xpose.msra.mxu0 0.0
    %2681 = vmatprep.subr.mxu0 0.0
    %2682 = vmatpush1.xpose.msra.mxu0 0.0
    %2683 = vmatprep.subr.mxu0 0.0
    %2684 = vmatpush1.xpose.msra.mxu0 0.0
    %2685 = vmatprep.subr.mxu0 0.0
    %2686 = vmatpush1.xpose.msra.mxu0 0.0
    %2687 = vmatprep.subr.mxu0 0.0
    %2688 = vmatpush1.xpose.msra.mxu0 0.0
    %2689 = vmatprep.subr.mxu0 0.0
    %2690 = vmatpush1.xpose.msra.mxu0 0.0
    %2691 = vmatprep.subr.mxu0 0.0
    %2692 = vmatpush1.xpose.msra.mxu0 0.0
    %2693 = vmatprep.subr.mxu0 0.0
    %2694 = vmatpush1.xpose.msra.mxu0 0.0
    %2695 = vmatprep.subr.mxu0 0.0
    %2696 = vmatpush1.xpose.msra.mxu0 0.0
    %2697 = vmatprep.subr.mxu0 0.0
    %2698 = vmatpush1.xpose.msra.mxu0 0.0
    %2699 = vmatprep.subr.mxu0 0.0
    %2700 = vmatpush1.xpose.msra.mxu0 %v2667
    %2701 = vmatprep.subr.mxu0 0.0
    %2702 = vmatpush2.xpose.msra.mxu0 0.0
    %2703 = vmatprep.subr.mxu0 0.0
    %2704 = vmatpush2.xpose.msra.mxu0 0.0
    %2705 = vmatprep.subr.mxu0 0.0
    %2706 = vmatpush2.xpose.msra.mxu0 0.0
    %2707 = vmatprep.subr.mxu0 0.0
    %2708 = vmatpush2.xpose.msra.mxu0 0.0
    %2709 = vmatprep.subr.mxu0 0.0
    %2710 = vmatpush2.xpose.msra.mxu0 0.0
    %2711 = vmatprep.subr.mxu0 0.0
    %2712 = vmatpush2.xpose.msra.mxu0 0.0
    %2713 = vmatprep.subr.mxu0 0.0
    %2714 = vmatpush2.xpose.msra.mxu0 0.0
    %2715 = vmatprep.subr.mxu0 0.0
    %2716 = vmatpush2.xpose.msra.mxu0 0.0
    %2717 = vmatprep.subr.mxu0 0.0
    %2718 = vmatpush2.xpose.msra.mxu0 0.0
    %2719 = vmatprep.subr.mxu0 0.0
    %2720 = vmatpush2.xpose.msra.mxu0 0.0
    %2721 = vmatprep.subr.mxu0 0.0
    %2722 = vmatpush2.xpose.msra.mxu0 0.0
    %2723 = vmatprep.subr.mxu0 0.0
    %2724 = vmatpush2.xpose.msra.mxu0 0.0
    %2725 = vmatprep.subr.mxu0 0.0
    %2726 = vmatpush2.xpose.msra.mxu0 0.0
    %2727 = vmatprep.subr.mxu0 0.0
    %2728 = vmatpush2.xpose.msra.mxu0 0.0
    %2729 = vmatprep.subr.mxu0 0.0
    %2730 = vmatpush2.xpose.msra.mxu0 0.0
    %2731 = vmatprep.subr.mxu0 0.0
    %2732 = vmatpush2.xpose.msra.mxu0 0.0
    %2733 = vmatprep.mubr.f32.mxu0 0.0
    %2734 = vmatmul.mubr.f32.gmra.mxu0 %v2665
    %v2735 = vpop.f32.mrf.mxu0
    %v2736 = vadd.f32 0.0, %v2735
    %v2737 = vpop.f32.mrf.mxu0
    %2738 = vdwg.mxu0
    %v2739 = vmul.f32 %v2658, 0.17677669
    %v2740 = vmul.f32 %v2736, 0.17677669
    %vm2741 = vcmask 64512
    %v2742 = vsel %vm2741, %v2739, -inf
    %2743 = vmax.xlane.f32.xlu0 %v2742
    %v2744 = vpop.xlane.xlu0 %2743
    %v2745 = vsel %vm2741, %v2740, -inf
    %2746 = vmax.xlane.f32.xlu0 %v2745
    %v2747 = vpop.xlane.xlu0 %2746
    %v2748 = vsub.f32 %v2739, %v2744
    %v2749 = vsub.f32 %v2740, %v2747
    %v2750 = vmul.f32 %v2748, 1.442695
    %v2751 = vpow.pop %v2750
    %v2752 = vmul.f32 %v2749, 1.442695
    %v2753 = vpow.pop %v2752
    %v2754 = vsel %vm2741, %v2751, 0.0
    %2755 = vadd.xlane.f32.xlu0 %v2754
    %v2756 = vpop.xlane.xlu0 %2755
    %v2757 = vsel %vm2741, %v2753, 0.0
    %2758 = vadd.xlane.f32.xlu0 %v2757
    %v2759 = vpop.xlane.xlu0 %2758
    %v2760 = vrcp.pop %v2756
    %v2761 = vmul.f32 %v2751, %v2760
    %v2762 = vrcp.pop %v2759
    %v2763 = vmul.f32 %v2753, %v2762
    %2764 = vrot.lane.b32.xlu0 %v2575, 64
    %v2765 = vpop.permute.xlu0 %2764
    %v2768 = vsel %vm2741, %v2761, 0
    %2770 = vmatprep.subr.mxu0 0.0
    %2771 = vmatpush1.msra.mxu0 0.0
    %2772 = vmatprep.subr.mxu0 0.0
    %2773 = vmatpush1.msra.mxu0 0.0
    %2774 = vmatprep.subr.mxu0 0.0
    %2775 = vmatpush1.msra.mxu0 0.0
    %2776 = vmatprep.subr.mxu0 0.0
    %2777 = vmatpush1.msra.mxu0 0.0
    %2778 = vmatprep.subr.mxu0 0.0
    %2779 = vmatpush1.msra.mxu0 0.0
    %2780 = vmatprep.subr.mxu0 0.0
    %2781 = vmatpush1.msra.mxu0 0.0
    %2782 = vmatprep.subr.mxu0 0.0
    %2783 = vmatpush1.msra.mxu0 0.0
    %2784 = vmatprep.subr.mxu0 0.0
    %2785 = vmatpush1.msra.mxu0 0.0
    %2786 = vmatprep.subr.mxu0 0.0
    %2787 = vmatpush1.msra.mxu0 0.0
    %2788 = vmatprep.subr.mxu0 0.0
    %2789 = vmatpush1.msra.mxu0 0.0
    %2790 = vmatprep.subr.mxu0 0.0
    %2791 = vmatpush1.msra.mxu0 0.0
    %2792 = vmatprep.subr.mxu0 0.0
    %2793 = vmatpush1.msra.mxu0 0.0
    %2794 = vmatprep.subr.mxu0 0.0
    %2795 = vmatpush1.msra.mxu0 0.0
    %2796 = vmatprep.subr.mxu0 0.0
    %2797 = vmatpush1.msra.mxu0 0.0
    %2798 = vmatprep.subr.mxu0 0.0
    %2799 = vmatpush1.msra.mxu0 0.0
    %2800 = vmatprep.subr.mxu0 0.0
    %2801 = vmatpush1.msra.mxu0 %v2765
    %2802 = vmatprep.subr.mxu0 0.0
    %2803 = vmatpush2.msra.mxu0 0.0
    %2804 = vmatprep.subr.mxu0 0.0
    %2805 = vmatpush2.msra.mxu0 0.0
    %2806 = vmatprep.subr.mxu0 0.0
    %2807 = vmatpush2.msra.mxu0 0.0
    %2808 = vmatprep.subr.mxu0 0.0
    %2809 = vmatpush2.msra.mxu0 0.0
    %2810 = vmatprep.subr.mxu0 0.0
    %2811 = vmatpush2.msra.mxu0 0.0
    %2812 = vmatprep.subr.mxu0 0.0
    %2813 = vmatpush2.msra.mxu0 0.0
    %2814 = vmatprep.subr.mxu0 0.0
    %2815 = vmatpush2.msra.mxu0 0.0
    %2816 = vmatprep.subr.mxu0 0.0
    %2817 = vmatpush2.msra.mxu0 0.0
    %2818 = vmatprep.subr.mxu0 0.0
    %2819 = vmatpush2.msra.mxu0 0.0
    %2820 = vmatprep.subr.mxu0 0.0
    %2821 = vmatpush2.msra.mxu0 0.0
    %2822 = vmatprep.subr.mxu0 0.0
    %2823 = vmatpush2.msra.mxu0 0.0
    %2824 = vmatprep.subr.mxu0 0.0
    %2825 = vmatpush2.msra.mxu0 0.0
    %2826 = vmatprep.subr.mxu0 0.0
    %2827 = vmatpush2.msra.mxu0 0.0
    %2828 = vmatprep.subr.mxu0 0.0
    %2829 = vmatpush2.msra.mxu0 0.0
    %2830 = vmatprep.subr.mxu0 0.0
    %2831 = vmatpush2.msra.mxu0 0.0
    %2832 = vmatprep.subr.mxu0 0.0
    %2833 = vmatpush2.msra.mxu0 0.0
    %2834 = vmatprep.mubr.f32.mxu0 0.0
    %2835 = vmatmul.mubr.f32.gmra.mxu0 %v2768
    %v2836 = vpop.f32.mrf.mxu0
    %v2837 = vadd.f32 0.0, %v2836
    %v2838 = vpop.f32.mrf.mxu0
    %2839 = vdwg.mxu0
    %2840 = vrot.lane.b32.xlu0 %v2580, 64
    %v2841 = vpop.permute.xlu0 %2840
    %v2844 = vsel %vm2741, %v2763, 0
    %2846 = vmatprep.subr.mxu0 0.0
    %2847 = vmatpush1.msra.mxu0 0.0
    %2848 = vmatprep.subr.mxu0 0.0
    %2849 = vmatpush1.msra.mxu0 0.0
    %2850 = vmatprep.subr.mxu0 0.0
    %2851 = vmatpush1.msra.mxu0 0.0
    %2852 = vmatprep.subr.mxu0 0.0
    %2853 = vmatpush1.msra.mxu0 0.0
    %2854 = vmatprep.subr.mxu0 0.0
    %2855 = vmatpush1.msra.mxu0 0.0
    %2856 = vmatprep.subr.mxu0 0.0
    %2857 = vmatpush1.msra.mxu0 0.0
    %2858 = vmatprep.subr.mxu0 0.0
    %2859 = vmatpush1.msra.mxu0 0.0
    %2860 = vmatprep.subr.mxu0 0.0
    %2861 = vmatpush1.msra.mxu0 0.0
    %2862 = vmatprep.subr.mxu0 0.0
    %2863 = vmatpush1.msra.mxu0 0.0
    %2864 = vmatprep.subr.mxu0 0.0
    %2865 = vmatpush1.msra.mxu0 0.0
    %2866 = vmatprep.subr.mxu0 0.0
    %2867 = vmatpush1.msra.mxu0 0.0
    %2868 = vmatprep.subr.mxu0 0.0
    %2869 = vmatpush1.msra.mxu0 0.0
    %2870 = vmatprep.subr.mxu0 0.0
    %2871 = vmatpush1.msra.mxu0 0.0
    %2872 = vmatprep.subr.mxu0 0.0
    %2873 = vmatpush1.msra.mxu0 0.0
    %2874 = vmatprep.subr.mxu0 0.0
    %2875 = vmatpush1.msra.mxu0 0.0
    %2876 = vmatprep.subr.mxu0 0.0
    %2877 = vmatpush1.msra.mxu0 %v2841
    %2878 = vmatprep.subr.mxu0 0.0
    %2879 = vmatpush2.msra.mxu0 0.0
    %2880 = vmatprep.subr.mxu0 0.0
    %2881 = vmatpush2.msra.mxu0 0.0
    %2882 = vmatprep.subr.mxu0 0.0
    %2883 = vmatpush2.msra.mxu0 0.0
    %2884 = vmatprep.subr.mxu0 0.0
    %2885 = vmatpush2.msra.mxu0 0.0
    %2886 = vmatprep.subr.mxu0 0.0
    %2887 = vmatpush2.msra.mxu0 0.0
    %2888 = vmatprep.subr.mxu0 0.0
    %2889 = vmatpush2.msra.mxu0 0.0
    %2890 = vmatprep.subr.mxu0 0.0
    %2891 = vmatpush2.msra.mxu0 0.0
    %2892 = vmatprep.subr.mxu0 0.0
    %2893 = vmatpush2.msra.mxu0 0.0
    %2894 = vmatprep.subr.mxu0 0.0
    %2895 = vmatpush2.msra.mxu0 0.0
    %2896 = vmatprep.subr.mxu0 0.0
    %2897 = vmatpush2.msra.mxu0 0.0
    %2898 = vmatprep.subr.mxu0 0.0
    %2899 = vmatpush2.msra.mxu0 0.0
    %2900 = vmatprep.subr.mxu0 0.0
    %2901 = vmatpush2.msra.mxu0 0.0
    %2902 = vmatprep.subr.mxu0 0.0
    %2903 = vmatpush2.msra.mxu0 0.0
    %2904 = vmatprep.subr.mxu0 0.0
    %2905 = vmatpush2.msra.mxu0 0.0
    %2906 = vmatprep.subr.mxu0 0.0
    %2907 = vmatpush2.msra.mxu0 0.0
    %2908 = vmatprep.subr.mxu0 0.0
    %2909 = vmatpush2.msra.mxu0 0.0
    %2910 = vmatprep.mubr.f32.mxu0 0.0
    %2911 = vmatmul.mubr.f32.gmra.mxu0 %v2844
    %v2912 = vpop.f32.mrf.mxu0
    %v2913 = vadd.f32 0.0, %v2912
    %v2914 = vpop.f32.mrf.mxu0
    %2915 = vdwg.mxu0
    %v2916 = vld [vmem:[%s16] sm:$0xff]
    %v2917 = vld [vmem:[%s16 + $0x8] sm:$0xff]
    %v2918 = vld [vmem:[%s16 + $0x10] sm:$0xff]
    %v2919 = vld [vmem:[%s16 + $0x18] sm:$0xff]
    %v2920 = vld [vmem:[%s17] sm:$0x1]
    %v2922 = vlaneseq
    %v2923 = vshrl.u32 %v2922, 7
    %v2924 = vsub.s32 0, %v2923
    %v2925 = vrot.slane %v2920, %v2924
    %v2928 = vsel %vm84, %v2837, 0
    %v2931 = vsel %vm84, %v2913, 0
    %2933 = vmatprep.subr.mxu0 0.0
    %2934 = vmatpush1.msra.mxu0 0.0
    %2935 = vmatprep.subr.mxu0 0.0
    %2936 = vmatpush1.msra.mxu0 0.0
    %2937 = vmatprep.subr.mxu0 0.0
    %2938 = vmatpush1.msra.mxu0 0.0
    %2939 = vmatprep.subr.mxu0 0.0
    %2940 = vmatpush1.msra.mxu0 0.0
    %2941 = vmatprep.subr.mxu0 0.0
    %2942 = vmatpush1.msra.mxu0 0.0
    %2943 = vmatprep.subr.mxu0 0.0
    %2944 = vmatpush1.msra.mxu0 0.0
    %2945 = vmatprep.subr.mxu0 0.0
    %2946 = vmatpush1.msra.mxu0 0.0
    %2947 = vmatprep.subr.mxu0 0.0
    %2948 = vmatpush1.msra.mxu0 0.0
    %2949 = vmatprep.subr.mxu0 0.0
    %2950 = vmatpush1.msra.mxu0 0.0
    %2951 = vmatprep.subr.mxu0 0.0
    %2952 = vmatpush1.msra.mxu0 0.0
    %2953 = vmatprep.subr.mxu0 0.0
    %2954 = vmatpush1.msra.mxu0 0.0
    %2955 = vmatprep.subr.mxu0 0.0
    %2956 = vmatpush1.msra.mxu0 0.0
    %2957 = vmatprep.subr.mxu0 0.0
    %2958 = vmatpush1.msra.mxu0 %v2919
    %2959 = vmatprep.subr.mxu0 0.0
    %2960 = vmatpush1.msra.mxu0 %v2918
    %2961 = vmatprep.subr.mxu0 0.0
    %2962 = vmatpush1.msra.mxu0 %v2917
    %2963 = vmatprep.subr.mxu0 0.0
    %2964 = vmatpush1.msra.mxu0 %v2916
    %2965 = vmatprep.subr.mxu0 0.0
    %2966 = vmatpush2.msra.mxu0 0.0
    %2967 = vmatprep.subr.mxu0 0.0
    %2968 = vmatpush2.msra.mxu0 0.0
    %2969 = vmatprep.subr.mxu0 0.0
    %2970 = vmatpush2.msra.mxu0 0.0
    %2971 = vmatprep.subr.mxu0 0.0
    %2972 = vmatpush2.msra.mxu0 0.0
    %2973 = vmatprep.subr.mxu0 0.0
    %2974 = vmatpush2.msra.mxu0 0.0
    %2975 = vmatprep.subr.mxu0 0.0
    %2976 = vmatpush2.msra.mxu0 0.0
    %2977 = vmatprep.subr.mxu0 0.0
    %2978 = vmatpush2.msra.mxu0 0.0
    %2979 = vmatprep.subr.mxu0 0.0
    %2980 = vmatpush2.msra.mxu0 0.0
    %2981 = vmatprep.subr.mxu0 0.0
    %2982 = vmatpush2.msra.mxu0 0.0
    %2983 = vmatprep.subr.mxu0 0.0
    %2984 = vmatpush2.msra.mxu0 0.0
    %2985 = vmatprep.subr.mxu0 0.0
    %2986 = vmatpush2.msra.mxu0 0.0
    %2987 = vmatprep.subr.mxu0 0.0
    %2988 = vmatpush2.msra.mxu0 0.0
    %2989 = vmatprep.subr.mxu0 0.0
    %2990 = vmatpush2.msra.mxu0 0.0
    %2991 = vmatprep.subr.mxu0 0.0
    %2992 = vmatpush2.msra.mxu0 0.0
    %2993 = vmatprep.subr.mxu0 0.0
    %2994 = vmatpush2.msra.mxu0 0.0
    %2995 = vmatprep.subr.mxu0 0.0
    %2996 = vmatpush2.msra.mxu0 0.0
    %2997 = vmatprep.mubr.f32.mxu0 0.0
    %2998 = vmatmul.mubr.f32.gmra.mxu0 %v2928
    %v2999 = vpop.f32.mrf.mxu0
    %v3000 = vadd.f32 %v2925, %v2999
    %v3001 = vpop.f32.mrf.mxu0
    %3002 = vmatprep.mubr.f32.mxu0 0.0
    %3003 = vmatmul.mubr.f32.gmra.mxu0 %v2931
    %v3004 = vpop.f32.mrf.mxu0
    %v3005 = vadd.f32 %v2925, %v3004
    %v3006 = vpop.f32.mrf.mxu0
    %3007 = vdwg.mxu0
    %v3008 = vld [vmem:[%s18] sm:$0xff]
    %v3009 = vld [vmem:[%s18 + $0x8] sm:$0xff]
    %v3010 = vld [vmem:[%s18 + $0x10] sm:$0xff]
    %v3011 = vld [vmem:[%s18 + $0x18] sm:$0xff]
    %v3012 = vld [vmem:[%s19] sm:$0x1]
    %v3014 = vlaneseq
    %v3015 = vshrl.u32 %v3014, 7
    %v3016 = vsub.s32 0, %v3015
    %v3017 = vrot.slane %v3012, %v3016
    %v3020 = vsel %vm84, %v3000, 0
    %v3023 = vsel %vm84, %v3005, 0
    %3025 = vmatprep.subr.mxu0 0.0
    %3026 = vmatpush1.msra.mxu0 0.0
    %3027 = vmatprep.subr.mxu0 0.0
    %3028 = vmatpush1.msra.mxu0 0.0
    %3029 = vmatprep.subr.mxu0 0.0
    %3030 = vmatpush1.msra.mxu0 0.0
    %3031 = vmatprep.subr.mxu0 0.0
    %3032 = vmatpush1.msra.mxu0 0.0
    %3033 = vmatprep.subr.mxu0 0.0
    %3034 = vmatpush1.msra.mxu0 0.0
    %3035 = vmatprep.subr.mxu0 0.0
    %3036 = vmatpush1.msra.mxu0 0.0
    %3037 = vmatprep.subr.mxu0 0.0
    %3038 = vmatpush1.msra.mxu0 0.0
    %3039 = vmatprep.subr.mxu0 0.0
    %3040 = vmatpush1.msra.mxu0 0.0
    %3041 = vmatprep.subr.mxu0 0.0
    %3042 = vmatpush1.msra.mxu0 0.0
    %3043 = vmatprep.subr.mxu0 0.0
    %3044 = vmatpush1.msra.mxu0 0.0
    %3045 = vmatprep.subr.mxu0 0.0
    %3046 = vmatpush1.msra.mxu0 0.0
    %3047 = vmatprep.subr.mxu0 0.0
    %3048 = vmatpush1.msra.mxu0 0.0
    %3049 = vmatprep.subr.mxu0 0.0
    %3050 = vmatpush1.msra.mxu0 %v3011
    %3051 = vmatprep.subr.mxu0 0.0
    %3052 = vmatpush1.msra.mxu0 %v3010
    %3053 = vmatprep.subr.mxu0 0.0
    %3054 = vmatpush1.msra.mxu0 %v3009
    %3055 = vmatprep.subr.mxu0 0.0
    %3056 = vmatpush1.msra.mxu0 %v3008
    %3057 = vmatprep.subr.mxu0 0.0
    %3058 = vmatpush2.msra.mxu0 0.0
    %3059 = vmatprep.subr.mxu0 0.0
    %3060 = vmatpush2.msra.mxu0 0.0
    %3061 = vmatprep.subr.mxu0 0.0
    %3062 = vmatpush2.msra.mxu0 0.0
    %3063 = vmatprep.subr.mxu0 0.0
    %3064 = vmatpush2.msra.mxu0 0.0
    %3065 = vmatprep.subr.mxu0 0.0
    %3066 = vmatpush2.msra.mxu0 0.0
    %3067 = vmatprep.subr.mxu0 0.0
    %3068 = vmatpush2.msra.mxu0 0.0
    %3069 = vmatprep.subr.mxu0 0.0
    %3070 = vmatpush2.msra.mxu0 0.0
    %3071 = vmatprep.subr.mxu0 0.0
    %3072 = vmatpush2.msra.mxu0 0.0
    %3073 = vmatprep.subr.mxu0 0.0
    %3074 = vmatpush2.msra.mxu0 0.0
    %3075 = vmatprep.subr.mxu0 0.0
    %3076 = vmatpush2.msra.mxu0 0.0
    %3077 = vmatprep.subr.mxu0 0.0
    %3078 = vmatpush2.msra.mxu0 0.0
    %3079 = vmatprep.subr.mxu0 0.0
    %3080 = vmatpush2.msra.mxu0 0.0
    %3081 = vmatprep.subr.mxu0 0.0
    %3082 = vmatpush2.msra.mxu0 0.0
    %3083 = vmatprep.subr.mxu0 0.0
    %3084 = vmatpush2.msra.mxu0 0.0
    %3085 = vmatprep.subr.mxu0 0.0
    %3086 = vmatpush2.msra.mxu0 0.0
    %3087 = vmatprep.subr.mxu0 0.0
    %3088 = vmatpush2.msra.mxu0 0.0
    %3089 = vmatprep.mubr.f32.mxu0 0.0
    %3090 = vmatmul.mubr.f32.gmra.mxu0 %v3020
    %v3091 = vpop.f32.mrf.mxu0
    %v3092 = vadd.f32 %v3017, %v3091
    %v3093 = vpop.f32.mrf.mxu0
    %3094 = vmatprep.mubr.f32.mxu0 0.0
    %3095 = vmatmul.mubr.f32.gmra.mxu0 %v3023
    %v3096 = vpop.f32.mrf.mxu0
    %v3097 = vadd.f32 %v3017, %v3096
    %v3098 = vpop.f32.mrf.mxu0
    %3099 = vdwg.mxu0
    %3100 = vst.msk [vmem:[%s20] sm:$0xff] %vm84, %v3000
    %3101 = vst.msk [vmem:[%s20 + $0x8] sm:$0xff] %vm84, %v3005
    %vm3102 = vcmask 523264
    %3103 = vst.msk [vmem:[#allocation4] sm:$0xff] %vm3102, %v3092
    %3104 = vst.msk [vmem:[#allocation4 + $0x8] sm:$0xff] %vm3102, %v3097
    // Predicated region
    $region82: #{decoder_train_forward.2} parent=1 // pred_check
      _
    $region83: #{decoder_train_forward.2} parent=1 // pred_check_branch
      %3106 = sbr.rel (0) target = $region85
    $region84: #{decoder_train_forward.2} parent=1 // pred_region
      _
    $region85: #{decoder_train_forward.2} parent=1 // pred_fallthru
      _
    // Predicated region
    $region86: #{decoder_train_forward.2} parent=1 // pred_check
      _
    $region87: #{decoder_train_forward.2} parent=1 // pred_check_branch
      %3108 = sbr.rel (0) target = $region89
    $region88: #{decoder_train_forward.2} parent=1 // pred_region
      %s3110 = ssub.s32 256, 256
      %3111 = vsyncadd [#allocation5], %s3110
      %s3112 = sshll.u32 [#allocation4], 4
      %s3113 = int_to_ptr.vmem [resolvable:$true] %s3112
      %3118 = dma.vmem_to_hbm [thread:$0]  %s3113, 256, %s21, [#allocation5], 128, 128, 8
    $region89: #{decoder_train_forward.2} parent=1 // pred_fallthru
      _
    // Predicated region
    $region90: #{decoder_train_forward.2} parent=1 // pred_check
      _
    $region91: #{decoder_train_forward.2} parent=1 // pred_check_branch
      %3120 = sbr.rel (0) target = $region93
    $region92: #{decoder_train_forward.2} parent=1 // pred_region
      %s3122 = ssub.s32 64, 64
      %3123 = vsyncadd [#allocation7], %s3122
      %s3124 = sshll.u32 [#allocation6], 4
      %s3125 = int_to_ptr.vmem [resolvable:$true] %s3124
      %3130 = dma.vmem_to_hbm [thread:$0]  %s3125, 64, %s22, [#allocation7], 32, 32, 2
    $region93: #{decoder_train_forward.2} parent=1 // pred_fallthru
      _
    // Predicated region
    $region94: #{decoder_train_forward.2} parent=1 // pred_check
      _
    $region95: #{decoder_train_forward.2} parent=1 // pred_check_branch
      %3132 = sbr.rel (0) target = $region97
    $region96: #{decoder_train_forward.2} parent=1 // pred_region
      %s3134 = ssub.s32 64, 64
      %3135 = vsyncadd [#allocation7], %s3134
      %s3136 = sshll.u32 [#allocation8], 4
      %s3137 = int_to_ptr.vmem [resolvable:$true] %s3136
      %3142 = dma.vmem_to_hbm [thread:$0]  %s3137, 64, %s23, [#allocation7], 32, 32, 2
    $region97: #{decoder_train_forward.2} parent=1 // pred_fallthru
      _
    // Predicated region
    $region98: #{decoder_train_forward.2} parent=1 // pred_check
      _
    $region99: #{decoder_train_forward.2} parent=1 // pred_check_branch
      %3144 = sbr.rel (0) target = $region101
    $region100: #{decoder_train_forward.2} parent=1 // pred_region
      _
    $region101: #{decoder_train_forward.2} parent=1 // pred_fallthru
      _
    // Predicated region
    $region102: #{decoder_train_forward.2} parent=1 // pred_check
      _
    $region103: #{decoder_train_forward.2} parent=1 // pred_check_branch
      %3146 = sbr.rel (0) target = $region105
    $region104: #{decoder_train_forward.2} parent=1 // pred_region
      %3147 = dma.done [#allocation5], 256
    $region105: #{decoder_train_forward.2} parent=1 // pred_fallthru
      _
    // Predicated region
    $region106: #{decoder_train_forward.2} parent=1 // pred_check
      _
    $region107: #{decoder_train_forward.2} parent=1 // pred_check_branch
      %3149 = sbr.rel (0) target = $region109
    $region108: #{decoder_train_forward.2} parent=1 // pred_region
      %3150 = dma.done [#allocation7], 64
    $region109: #{decoder_train_forward.2} parent=1 // pred_fallthru
      _
    // Predicated region
    $region110: #{decoder_train_forward.2} parent=1 // pred_check
      _
    $region111: #{decoder_train_forward.2} parent=1 // pred_check_branch
      %3152 = sbr.rel (0) target = $region113
    $region112: #{decoder_train_forward.2} parent=1 // pred_region
      %3153 = dma.done [#allocation7], 64
    $region113: #{decoder_train_forward.2} parent=1 // pred_fallthru
      _
    %3154 = vsyncpa [#allocation5], 1
    %3155 = vsyncpa [#allocation7], 1

// kernel: decoder_train_forward.3
$region0: #{decoder_train_forward.3}
  #allocation0 [shape = 'u32[]', space=smem, size = 0x4, offset = 0x4, fixed_abs, tag = 'smem constant byte address 0x4 - core index']
  #allocation1 [shape = 'u32[144,128]{1,0:T(1,128)}', space=vmem, size = 0x12000, scoped, tag = 'internal scratch']
  %s0 = inlined_call_operand.vmem [shape: f32[16,32], index: 0, kind: input, shape index: {}]
  %s1 = inlined_call_operand.vmem [shape: bf16[32,32768], index: 1, kind: input, shape index: {}]
  %s2 = inlined_call_operand.vmem [shape: f32[1,32768], index: 2, kind: input, shape index: {}]
  %s3 = inlined_call_operand.hbm [shape: f32[16,32006], index: 3, kind: output, shape index: {}]
  %s4 = sld [smem:[#allocation0]]
  $region68: #{decoder_train_forward.3} parent=0
    _
  %s6 = ssub.s32 1, %s4
  %s7 = scalar_select 0, %s6, %s4
  $region1: #{decoder_train_forward.3} parent=0
    #allocation2 [shape = 'u8[2097152]{0}', space=vmem, size = 0x200000, scoped, tag = 'input window, operand 1']
    #allocation3 [shape = 'u8[2097152]{0}', space=vmem, size = 0x200000, scoped, tag = 'output window, operand 0']
    #allocation4 [shape = 's32[2]{0}', space=sflag, size = 0x8, scoped, tag = 'scoped memory for decoder_train_forward.3']
    %8 = vsyncpa [#allocation4], 0
    %s9 = scalar_lea.sflag [#allocation4], 1
    %10 = vsyncpa %s9, 0
    loop: start=0, step=1, limit=4
    $region2: #{decoder_train_forward.3} parent=1 // loop_pre_header
      _
    $region3: #{decoder_train_forward.3} parent=1 // loop_header
      %s12 = sphi 0, %s16
      %p13 = scmp.ge.s32.totalorder %s12, 4
      %s20 = sphi 0, %s20
      %s22 = sphi 0, %s20
      %s23 = sphi 0, %s22
      %s37 = sphi 0, %s23
      %s43 = sphi 0, %s45
      %s46 = sphi 0, %s43
      %s47 = sphi 0, %s46
      %s63 = sphi 0, %s47
      %s69 = sphi 0, %s71
      %s72 = sphi 0, %s69
      %s73 = sphi 0, %s72
      %s89 = sphi 0, %s73
      %s95 = sphi 0, %s97
      %s98 = sphi 0, %s95
      %s99 = sphi 0, %s98
      %s115 = sphi 0, %s99
    $region4: #{decoder_train_forward.3} parent=1 // loop_header_branch
      %15 = sbr.rel (%p13) target = $region8
    $region5: #{decoder_train_forward.3} parent=1 // loop_body
      %s17 = ssub.s32 %s12, 1
      %s18 = ssub.s32 %s12, 2
      %s19 = sadd.s32 %s12, 1
      %s21 = sadd.s32 %s20, 1
      %p24 = scmp.eq.s32.totalorder %s12, 1
      %p25 = scmp.ne.s32.totalorder %s20, %s22
      %p26 = scmp.eq.s32.totalorder %s12, 0
      %p27 = por %p25, %p26
      %p28 = scmp.ne.s32.totalorder %s20, %s22
      %p29 = scmp.eq.s32.totalorder %s17, 1
      %p30 = por %p28, %p29
      %p31 = scmp.ne.s32.totalorder %s22, %s23
      %p32 = scmp.eq.s32.totalorder %s17, 0
      %p33 = por %p31, %p32
      %p34 = scmp.ne.s32.totalorder %s22, %s23
      %p35 = scmp.eq.s32.totalorder %s18, 1
      %p36 = por %p34, %p35
      %p38 = scmp.ne.s32.totalorder %s23, %s37
      %p39 = scmp.eq.s32.totalorder %s18, 0
      %p40 = por %p38, %p39
      %s41 = ssub.s32 %s12, %s19
      %p42 = scmp.eq.s32.totalorder %s41, 0
      %s44 = sadd.s32 %s43, 1
      %s45 = scalar_select %p42, %s43, %s44
      %p48 = pneg %p42
      %p49 = scmp.eq.s32.totalorder %s12, 1
      %p50 = por %p48, %p49
      %p51 = scmp.ne.s32.totalorder %s43, %s46
      %p52 = scmp.eq.s32.totalorder %s12, 0
      %p53 = por %p51, %p52
      %p54 = scmp.ne.s32.totalorder %s43, %s46
      %p55 = scmp.eq.s32.totalorder %s17, 1
      %p56 = por %p54, %p55
      %p57 = scmp.ne.s32.totalorder %s46, %s47
      %p58 = scmp.eq.s32.totalorder %s17, 0
      %p59 = por %p57, %p58
      %p60 = scmp.ne.s32.totalorder %s46, %s47
      %p61 = scmp.eq.s32.totalorder %s18, 1
      %p62 = por %p60, %p61
      %p64 = scmp.ne.s32.totalorder %s47, %s63
      %p65 = scmp.eq.s32.totalorder %s18, 0
      %p66 = por %p64, %p65
      %s67 = ssub.s32 %s12, %s19
      %p68 = scmp.eq.s32.totalorder %s67, 0
      %s70 = sadd.s32 %s69, 1
      %s71 = scalar_select %p68, %s69, %s70
      %p74 = pneg %p68
      %p75 = scmp.eq.s32.totalorder %s12, 1
      %p76 = por %p74, %p75
      %p77 = scmp.ne.s32.totalorder %s69, %s72
      %p78 = scmp.eq.s32.totalorder %s12, 0
      %p79 = por %p77, %p78
      %p80 = scmp.ne.s32.totalorder %s69, %s72
      %p81 = scmp.eq.s32.totalorder %s17, 1
      %p82 = por %p80, %p81
      %p83 = scmp.ne.s32.totalorder %s72, %s73
      %p84 = scmp.eq.s32.totalorder %s17, 0
      %p85 = por %p83, %p84
      %p86 = scmp.ne.s32.totalorder %s72, %s73
      %p87 = scmp.eq.s32.totalorder %s18, 1
      %p88 = por %p86, %p87
      %p90 = scmp.ne.s32.totalorder %s73, %s89
      %p91 = scmp.eq.s32.totalorder %s18, 0
      %p92 = por %p90, %p91
      %s93 = ssub.s32 %s12, %s19
      %p94 = scmp.eq.s32.totalorder %s93, 0
      %s96 = sadd.s32 %s95, 1
      %s97 = scalar_select %p94, %s95, %s96
      %p100 = pneg %p94
      %p101 = scmp.eq.s32.totalorder %s12, 1
      %p102 = por %p100, %p101
      %p103 = scmp.ne.s32.totalorder %s95, %s98
      %p104 = scmp.eq.s32.totalorder %s12, 0
      %p105 = por %p103, %p104
      %p106 = scmp.ne.s32.totalorder %s95, %s98
      %p107 = scmp.eq.s32.totalorder %s17, 1
      %p108 = por %p106, %p107
      %p109 = scmp.ne.s32.totalorder %s98, %s99
      %p110 = scmp.eq.s32.totalorder %s17, 0
      %p111 = por %p109, %p110
      %p112 = scmp.ne.s32.totalorder %s98, %s99
      %p113 = scmp.eq.s32.totalorder %s18, 1
      %p114 = por %p112, %p113
      %p116 = scmp.ne.s32.totalorder %s99, %s115
      %p117 = scmp.eq.s32.totalorder %s18, 0
      %p118 = por %p116, %p117
      %p119 = scmp.le.s32.totalorder 1, %s12
      %p120 = scmp.lt.s32.totalorder %s12, 3
      %p121 = pnand %p119, %p120
      %p122 = pneg %p121
      // Predicated region
      $region9: #{decoder_train_forward.3} parent=5 // pred_check
        _
      $region10: #{decoder_train_forward.3} parent=5 // pred_check_branch
        %124 = sbr.rel (%p121) target = $region12
      $region11: #{decoder_train_forward.3} parent=5 // pred_region
        %s125 = ssub.s32 %s12, 1
        // Predicated region
        $region13: #{decoder_train_forward.3} parent=11 // pred_check
          %p126 = pneg %p33
        $region14: #{decoder_train_forward.3} parent=11 // pred_check_branch
          %128 = sbr.rel (%p126) target = $region16
        $region15: #{decoder_train_forward.3} parent=11 // pred_region
          _
        $region16: #{decoder_train_forward.3} parent=11 // pred_fallthru
          _
      $region12: #{decoder_train_forward.3} parent=5 // pred_fallthru
        _
      %p129 = scmp.lt.s32.totalorder %s12, 2
      // Predicated region
      $region17: #{decoder_train_forward.3} parent=5 // pred_check
        %p130 = pneg %p129
      $region18: #{decoder_train_forward.3} parent=5 // pred_check_branch
        %132 = sbr.rel (%p130) target = $region20
      $region19: #{decoder_train_forward.3} parent=5 // pred_region
        // Predicated region
        $region21: #{decoder_train_forward.3} parent=19 // pred_check
          %p133 = pneg %p53
        $region22: #{decoder_train_forward.3} parent=19 // pred_check_branch
          %135 = sbr.rel (%p133) target = $region24
        $region23: #{decoder_train_forward.3} parent=19 // pred_region
          %s136 = sand.u32 %s43, 1
          %s137 = sand.u32 %s43, 1
          %s138 = smul.addr %s137, 2048
          %s139 = scalar_lea.vmem [#allocation2], %s138
          %s140 = smul.u32 128, %s12
          %s141 = smul.addr %s140, 4
          %s142 = scalar_lea.vmem %s1, %s141
          // Predicated region
          $region25: #{decoder_train_forward.3} parent=23 // pred_check
            _
          $region26: #{decoder_train_forward.3} parent=23 // pred_check_branch
            %144 = sbr.rel (0) target = $region28
          $region27: #{decoder_train_forward.3} parent=23 // pred_region
            // Predicated region
            $region29: #{decoder_train_forward.3} parent=27 // pred_check
              _
            $region30: #{decoder_train_forward.3} parent=27 // pred_check_branch
              %146 = sbr.rel (0) target = $region32
            $region31: #{decoder_train_forward.3} parent=27 // pred_region
              loop: start=0, step=1, limit=1
              $region33: #{decoder_train_forward.3} parent=31 // loop_pre_header
                _
              $region34: #{decoder_train_forward.3} parent=31 // loop_header
                %s148 = sphi 0, %s152
                %p149 = scmp.ge.s32.totalorder %s148, 1
                %s153 = sphi %s142, %s142
                %s154 = sphi %s139, %s139
              $region35: #{decoder_train_forward.3} parent=31 // loop_header_branch
                %151 = sbr.rel (%p149) target = $region39
              $region36: #{decoder_train_forward.3} parent=31 // loop_body
                %v155 = vld [vmem:[%s153] sm:$0xff]
                %156 = vst [vmem:[%s154] sm:$0xff] %v155
                %v157 = vld [vmem:[%s153 + $0x8] sm:$0xff]
                %158 = vst [vmem:[%s154 + $0x8] sm:$0xff] %v157
                %v159 = vld [vmem:[%s153 + $0x10] sm:$0xff]
                %160 = vst [vmem:[%s154 + $0x10] sm:$0xff] %v159
                %v161 = vld [vmem:[%s153 + $0x18] sm:$0xff]
                %162 = vst [vmem:[%s154 + $0x18] sm:$0xff] %v161
                %v163 = vld [vmem:[%s153 + $0x20] sm:$0xff]
                %164 = vst [vmem:[%s154 + $0x20] sm:$0xff] %v163
                %v165 = vld [vmem:[%s153 + $0x28] sm:$0xff]
                %166 = vst [vmem:[%s154 + $0x28] sm:$0xff] %v165
                %v167 = vld [vmem:[%s153 + $0x30] sm:$0xff]
                %168 = vst [vmem:[%s154 + $0x30] sm:$0xff] %v167
                %v169 = vld [vmem:[%s153 + $0x38] sm:$0xff]
                %170 = vst [vmem:[%s154 + $0x38] sm:$0xff] %v169
                %v171 = vld [vmem:[%s153 + $0x40] sm:$0xff]
                %172 = vst [vmem:[%s154 + $0x40] sm:$0xff] %v171
                %v173 = vld [vmem:[%s153 + $0x48] sm:$0xff]
                %174 = vst [vmem:[%s154 + $0x48] sm:$0xff] %v173
                %v175 = vld [vmem:[%s153 + $0x50] sm:$0xff]
                %176 = vst [vmem:[%s154 + $0x50] sm:$0xff] %v175
                %v177 = vld [vmem:[%s153 + $0x58] sm:$0xff]
                %178 = vst [vmem:[%s154 + $0x58] sm:$0xff] %v177
                %v179 = vld [vmem:[%s153 + $0x60] sm:$0xff]
                %180 = vst [vmem:[%s154 + $0x60] sm:$0xff] %v179
                %v181 = vld [vmem:[%s153 + $0x68] sm:$0xff]
                %182 = vst [vmem:[%s154 + $0x68] sm:$0xff] %v181
                %v183 = vld [vmem:[%s153 + $0x70] sm:$0xff]
                %184 = vst [vmem:[%s154 + $0x70] sm:$0xff] %v183
                %v185 = vld [vmem:[%s153 + $0x78] sm:$0xff]
                %186 = vst [vmem:[%s154 + $0x78] sm:$0xff] %v185
                %v187 = vld [vmem:[%s153 + $0x80] sm:$0xff]
                %188 = vst [vmem:[%s154 + $0x80] sm:$0xff] %v187
                %v189 = vld [vmem:[%s153 + $0x88] sm:$0xff]
                %190 = vst [vmem:[%s154 + $0x88] sm:$0xff] %v189
                %v191 = vld [vmem:[%s153 + $0x90] sm:$0xff]
                %192 = vst [vmem:[%s154 + $0x90] sm:$0xff] %v191
                %v193 = vld [vmem:[%s153 + $0x98] sm:$0xff]
                %194 = vst [vmem:[%s154 + $0x98] sm:$0xff] %v193
                %v195 = vld [vmem:[%s153 + $0xa0] sm:$0xff]
                %196 = vst [vmem:[%s154 + $0xa0] sm:$0xff] %v195
                %v197 = vld [vmem:[%s153 + $0xa8] sm:$0xff]
                %198 = vst [vmem:[%s154 + $0xa8] sm:$0xff] %v197
                %v199 = vld [vmem:[%s153 + $0xb0] sm:$0xff]
                %200 = vst [vmem:[%s154 + $0xb0] sm:$0xff] %v199
                %v201 = vld [vmem:[%s153 + $0xb8] sm:$0xff]
                %202 = vst [vmem:[%s154 + $0xb8] sm:$0xff] %v201
                %v203 = vld [vmem:[%s153 + $0xc0] sm:$0xff]
                %204 = vst [vmem:[%s154 + $0xc0] sm:$0xff] %v203
                %v205 = vld [vmem:[%s153 + $0xc8] sm:$0xff]
                %206 = vst [vmem:[%s154 + $0xc8] sm:$0xff] %v205
                %v207 = vld [vmem:[%s153 + $0xd0] sm:$0xff]
                %208 = vst [vmem:[%s154 + $0xd0] sm:$0xff] %v207
                %v209 = vld [vmem:[%s153 + $0xd8] sm:$0xff]
                %210 = vst [vmem:[%s154 + $0xd8] sm:$0xff] %v209
                %v211 = vld [vmem:[%s153 + $0xe0] sm:$0xff]
                %212 = vst [vmem:[%s154 + $0xe0] sm:$0xff] %v211
                %v213 = vld [vmem:[%s153 + $0xe8] sm:$0xff]
                %214 = vst [vmem:[%s154 + $0xe8] sm:$0xff] %v213
                %v215 = vld [vmem:[%s153 + $0xf0] sm:$0xff]
                %216 = vst [vmem:[%s154 + $0xf0] sm:$0xff] %v215
                %v217 = vld [vmem:[%s153 + $0xf8] sm:$0xff]
                %218 = vst [vmem:[%s154 + $0xf8] sm:$0xff] %v217
                %v219 = vld [vmem:[%s153 + $0x100] sm:$0xff]
                %220 = vst [vmem:[%s154 + $0x100] sm:$0xff] %v219
                %v221 = vld [vmem:[%s153 + $0x108] sm:$0xff]
                %222 = vst [vmem:[%s154 + $0x108] sm:$0xff] %v221
                %v223 = vld [vmem:[%s153 + $0x110] sm:$0xff]
                %224 = vst [vmem:[%s154 + $0x110] sm:$0xff] %v223
                %v225 = vld [vmem:[%s153 + $0x118] sm:$0xff]
                %226 = vst [vmem:[%s154 + $0x118] sm:$0xff] %v225
                %v227 = vld [vmem:[%s153 + $0x120] sm:$0xff]
                %228 = vst [vmem:[%s154 + $0x120] sm:$0xff] %v227
                %v229 = vld [vmem:[%s153 + $0x128] sm:$0xff]
                %230 = vst [vmem:[%s154 + $0x128] sm:$0xff] %v229
                %v231 = vld [vmem:[%s153 + $0x130] sm:$0xff]
                %232 = vst [vmem:[%s154 + $0x130] sm:$0xff] %v231
                %v233 = vld [vmem:[%s153 + $0x138] sm:$0xff]
                %234 = vst [vmem:[%s154 + $0x138] sm:$0xff] %v233
                %v235 = vld [vmem:[%s153 + $0x140] sm:$0xff]
                %236 = vst [vmem:[%s154 + $0x140] sm:$0xff] %v235
                %v237 = vld [vmem:[%s153 + $0x148] sm:$0xff]
                %238 = vst [vmem:[%s154 + $0x148] sm:$0xff] %v237
                %v239 = vld [vmem:[%s153 + $0x150] sm:$0xff]
                %240 = vst [vmem:[%s154 + $0x150] sm:$0xff] %v239
                %v241 = vld [vmem:[%s153 + $0x158] sm:$0xff]
                %242 = vst [vmem:[%s154 + $0x158] sm:$0xff] %v241
                %v243 = vld [vmem:[%s153 + $0x160] sm:$0xff]
                %244 = vst [vmem:[%s154 + $0x160] sm:$0xff] %v243
                %v245 = vld [vmem:[%s153 + $0x168] sm:$0xff]
                %246 = vst [vmem:[%s154 + $0x168] sm:$0xff] %v245
                %v247 = vld [vmem:[%s153 + $0x170] sm:$0xff]
                %248 = vst [vmem:[%s154 + $0x170] sm:$0xff] %v247
                %v249 = vld [vmem:[%s153 + $0x178] sm:$0xff]
                %250 = vst [vmem:[%s154 + $0x178] sm:$0xff] %v249
                %v251 = vld [vmem:[%s153 + $0x180] sm:$0xff]
                %252 = vst [vmem:[%s154 + $0x180] sm:$0xff] %v251
                %v253 = vld [vmem:[%s153 + $0x188] sm:$0xff]
                %254 = vst [vmem:[%s154 + $0x188] sm:$0xff] %v253
                %v255 = vld [vmem:[%s153 + $0x190] sm:$0xff]
                %256 = vst [vmem:[%s154 + $0x190] sm:$0xff] %v255
                %v257 = vld [vmem:[%s153 + $0x198] sm:$0xff]
                %258 = vst [vmem:[%s154 + $0x198] sm:$0xff] %v257
                %v259 = vld [vmem:[%s153 + $0x1a0] sm:$0xff]
                %260 = vst [vmem:[%s154 + $0x1a0] sm:$0xff] %v259
                %v261 = vld [vmem:[%s153 + $0x1a8] sm:$0xff]
                %262 = vst [vmem:[%s154 + $0x1a8] sm:$0xff] %v261
                %v263 = vld [vmem:[%s153 + $0x1b0] sm:$0xff]
                %264 = vst [vmem:[%s154 + $0x1b0] sm:$0xff] %v263
                %v265 = vld [vmem:[%s153 + $0x1b8] sm:$0xff]
                %266 = vst [vmem:[%s154 + $0x1b8] sm:$0xff] %v265
                %v267 = vld [vmem:[%s153 + $0x1c0] sm:$0xff]
                %268 = vst [vmem:[%s154 + $0x1c0] sm:$0xff] %v267
                %v269 = vld [vmem:[%s153 + $0x1c8] sm:$0xff]
                %270 = vst [vmem:[%s154 + $0x1c8] sm:$0xff] %v269
                %v271 = vld [vmem:[%s153 + $0x1d0] sm:$0xff]
                %272 = vst [vmem:[%s154 + $0x1d0] sm:$0xff] %v271
                %v273 = vld [vmem:[%s153 + $0x1d8] sm:$0xff]
                %274 = vst [vmem:[%s154 + $0x1d8] sm:$0xff] %v273
                %v275 = vld [vmem:[%s153 + $0x1e0] sm:$0xff]
                %276 = vst [vmem:[%s154 + $0x1e0] sm:$0xff] %v275
                %v277 = vld [vmem:[%s153 + $0x1e8] sm:$0xff]
                %278 = vst [vmem:[%s154 + $0x1e8] sm:$0xff] %v277
                %v279 = vld [vmem:[%s153 + $0x1f0] sm:$0xff]
                %280 = vst [vmem:[%s154 + $0x1f0] sm:$0xff] %v279
                %v281 = vld [vmem:[%s153 + $0x1f8] sm:$0xff]
                %282 = vst [vmem:[%s154 + $0x1f8] sm:$0xff] %v281
                %v283 = vld [vmem:[%s153 + $0x400] sm:$0xff]
                %284 = vst [vmem:[%s154 + $0x200] sm:$0xff] %v283
                %v285 = vld [vmem:[%s153 + $0x408] sm:$0xff]
                %286 = vst [vmem:[%s154 + $0x208] sm:$0xff] %v285
                %v287 = vld [vmem:[%s153 + $0x410] sm:$0xff]
                %288 = vst [vmem:[%s154 + $0x210] sm:$0xff] %v287
                %v289 = vld [vmem:[%s153 + $0x418] sm:$0xff]
                %290 = vst [vmem:[%s154 + $0x218] sm:$0xff] %v289
                %v291 = vld [vmem:[%s153 + $0x420] sm:$0xff]
                %292 = vst [vmem:[%s154 + $0x220] sm:$0xff] %v291
                %v293 = vld [vmem:[%s153 + $0x428] sm:$0xff]
                %294 = vst [vmem:[%s154 + $0x228] sm:$0xff] %v293
                %v295 = vld [vmem:[%s153 + $0x430] sm:$0xff]
                %296 = vst [vmem:[%s154 + $0x230] sm:$0xff] %v295
                %v297 = vld [vmem:[%s153 + $0x438] sm:$0xff]
                %298 = vst [vmem:[%s154 + $0x238] sm:$0xff] %v297
                %v299 = vld [vmem:[%s153 + $0x440] sm:$0xff]
                %300 = vst [vmem:[%s154 + $0x240] sm:$0xff] %v299
                %v301 = vld [vmem:[%s153 + $0x448] sm:$0xff]
                %302 = vst [vmem:[%s154 + $0x248] sm:$0xff] %v301
                %v303 = vld [vmem:[%s153 + $0x450] sm:$0xff]
                %304 = vst [vmem:[%s154 + $0x250] sm:$0xff] %v303
                %v305 = vld [vmem:[%s153 + $0x458] sm:$0xff]
                %306 = vst [vmem:[%s154 + $0x258] sm:$0xff] %v305
                %v307 = vld [vmem:[%s153 + $0x460] sm:$0xff]
                %308 = vst [vmem:[%s154 + $0x260] sm:$0xff] %v307
                %v309 = vld [vmem:[%s153 + $0x468] sm:$0xff]
                %310 = vst [vmem:[%s154 + $0x268] sm:$0xff] %v309
                %v311 = vld [vmem:[%s153 + $0x470] sm:$0xff]
                %312 = vst [vmem:[%s154 + $0x270] sm:$0xff] %v311
                %v313 = vld [vmem:[%s153 + $0x478] sm:$0xff]
                %314 = vst [vmem:[%s154 + $0x278] sm:$0xff] %v313
                %v315 = vld [vmem:[%s153 + $0x480] sm:$0xff]
                %316 = vst [vmem:[%s154 + $0x280] sm:$0xff] %v315
                %v317 = vld [vmem:[%s153 + $0x488] sm:$0xff]
                %318 = vst [vmem:[%s154 + $0x288] sm:$0xff] %v317
                %v319 = vld [vmem:[%s153 + $0x490] sm:$0xff]
                %320 = vst [vmem:[%s154 + $0x290] sm:$0xff] %v319
                %v321 = vld [vmem:[%s153 + $0x498] sm:$0xff]
                %322 = vst [vmem:[%s154 + $0x298] sm:$0xff] %v321
                %v323 = vld [vmem:[%s153 + $0x4a0] sm:$0xff]
                %324 = vst [vmem:[%s154 + $0x2a0] sm:$0xff] %v323
                %v325 = vld [vmem:[%s153 + $0x4a8] sm:$0xff]
                %326 = vst [vmem:[%s154 + $0x2a8] sm:$0xff] %v325
                %v327 = vld [vmem:[%s153 + $0x4b0] sm:$0xff]
                %328 = vst [vmem:[%s154 + $0x2b0] sm:$0xff] %v327
                %v329 = vld [vmem:[%s153 + $0x4b8] sm:$0xff]
                %330 = vst [vmem:[%s154 + $0x2b8] sm:$0xff] %v329
                %v331 = vld [vmem:[%s153 + $0x4c0] sm:$0xff]
                %332 = vst [vmem:[%s154 + $0x2c0] sm:$0xff] %v331
                %v333 = vld [vmem:[%s153 + $0x4c8] sm:$0xff]
                %334 = vst [vmem:[%s154 + $0x2c8] sm:$0xff] %v333
                %v335 = vld [vmem:[%s153 + $0x4d0] sm:$0xff]
                %336 = vst [vmem:[%s154 + $0x2d0] sm:$0xff] %v335
                %v337 = vld [vmem:[%s153 + $0x4d8] sm:$0xff]
                %338 = vst [vmem:[%s154 + $0x2d8] sm:$0xff] %v337
                %v339 = vld [vmem:[%s153 + $0x4e0] sm:$0xff]
                %340 = vst [vmem:[%s154 + $0x2e0] sm:$0xff] %v339
                %v341 = vld [vmem:[%s153 + $0x4e8] sm:$0xff]
                %342 = vst [vmem:[%s154 + $0x2e8] sm:$0xff] %v341
                %v343 = vld [vmem:[%s153 + $0x4f0] sm:$0xff]
                %344 = vst [vmem:[%s154 + $0x2f0] sm:$0xff] %v343
                %v345 = vld [vmem:[%s153 + $0x4f8] sm:$0xff]
                %346 = vst [vmem:[%s154 + $0x2f8] sm:$0xff] %v345
                %v347 = vld [vmem:[%s153 + $0x500] sm:$0xff]
                %348 = vst [vmem:[%s154 + $0x300] sm:$0xff] %v347
                %v349 = vld [vmem:[%s153 + $0x508] sm:$0xff]
                %350 = vst [vmem:[%s154 + $0x308] sm:$0xff] %v349
                %v351 = vld [vmem:[%s153 + $0x510] sm:$0xff]
                %352 = vst [vmem:[%s154 + $0x310] sm:$0xff] %v351
                %v353 = vld [vmem:[%s153 + $0x518] sm:$0xff]
                %354 = vst [vmem:[%s154 + $0x318] sm:$0xff] %v353
                %v355 = vld [vmem:[%s153 + $0x520] sm:$0xff]
                %356 = vst [vmem:[%s154 + $0x320] sm:$0xff] %v355
                %v357 = vld [vmem:[%s153 + $0x528] sm:$0xff]
                %358 = vst [vmem:[%s154 + $0x328] sm:$0xff] %v357
                %v359 = vld [vmem:[%s153 + $0x530] sm:$0xff]
                %360 = vst [vmem:[%s154 + $0x330] sm:$0xff] %v359
                %v361 = vld [vmem:[%s153 + $0x538] sm:$0xff]
                %362 = vst [vmem:[%s154 + $0x338] sm:$0xff] %v361
                %v363 = vld [vmem:[%s153 + $0x540] sm:$0xff]
                %364 = vst [vmem:[%s154 + $0x340] sm:$0xff] %v363
                %v365 = vld [vmem:[%s153 + $0x548] sm:$0xff]
                %366 = vst [vmem:[%s154 + $0x348] sm:$0xff] %v365
                %v367 = vld [vmem:[%s153 + $0x550] sm:$0xff]
                %368 = vst [vmem:[%s154 + $0x350] sm:$0xff] %v367
                %v369 = vld [vmem:[%s153 + $0x558] sm:$0xff]
                %370 = vst [vmem:[%s154 + $0x358] sm:$0xff] %v369
                %v371 = vld [vmem:[%s153 + $0x560] sm:$0xff]
                %372 = vst [vmem:[%s154 + $0x360] sm:$0xff] %v371
                %v373 = vld [vmem:[%s153 + $0x568] sm:$0xff]
                %374 = vst [vmem:[%s154 + $0x368] sm:$0xff] %v373
                %v375 = vld [vmem:[%s153 + $0x570] sm:$0xff]
                %376 = vst [vmem:[%s154 + $0x370] sm:$0xff] %v375
                %v377 = vld [vmem:[%s153 + $0x578] sm:$0xff]
                %378 = vst [vmem:[%s154 + $0x378] sm:$0xff] %v377
                %v379 = vld [vmem:[%s153 + $0x580] sm:$0xff]
                %380 = vst [vmem:[%s154 + $0x380] sm:$0xff] %v379
                %v381 = vld [vmem:[%s153 + $0x588] sm:$0xff]
                %382 = vst [vmem:[%s154 + $0x388] sm:$0xff] %v381
                %v383 = vld [vmem:[%s153 + $0x590] sm:$0xff]
                %384 = vst [vmem:[%s154 + $0x390] sm:$0xff] %v383
                %v385 = vld [vmem:[%s153 + $0x598] sm:$0xff]
                %386 = vst [vmem:[%s154 + $0x398] sm:$0xff] %v385
                %v387 = vld [vmem:[%s153 + $0x5a0] sm:$0xff]
                %388 = vst [vmem:[%s154 + $0x3a0] sm:$0xff] %v387
                %v389 = vld [vmem:[%s153 + $0x5a8] sm:$0xff]
                %390 = vst [vmem:[%s154 + $0x3a8] sm:$0xff] %v389
                %v391 = vld [vmem:[%s153 + $0x5b0] sm:$0xff]
                %392 = vst [vmem:[%s154 + $0x3b0] sm:$0xff] %v391
                %v393 = vld [vmem:[%s153 + $0x5b8] sm:$0xff]
                %394 = vst [vmem:[%s154 + $0x3b8] sm:$0xff] %v393
                %v395 = vld [vmem:[%s153 + $0x5c0] sm:$0xff]
                %396 = vst [vmem:[%s154 + $0x3c0] sm:$0xff] %v395
                %v397 = vld [vmem:[%s153 + $0x5c8] sm:$0xff]
                %398 = vst [vmem:[%s154 + $0x3c8] sm:$0xff] %v397
                %v399 = vld [vmem:[%s153 + $0x5d0] sm:$0xff]
                %400 = vst [vmem:[%s154 + $0x3d0] sm:$0xff] %v399
                %v401 = vld [vmem:[%s153 + $0x5d8] sm:$0xff]
                %402 = vst [vmem:[%s154 + $0x3d8] sm:$0xff] %v401
                %v403 = vld [vmem:[%s153 + $0x5e0] sm:$0xff]
                %404 = vst [vmem:[%s154 + $0x3e0] sm:$0xff] %v403
                %v405 = vld [vmem:[%s153 + $0x5e8] sm:$0xff]
                %406 = vst [vmem:[%s154 + $0x3e8] sm:$0xff] %v405
                %v407 = vld [vmem:[%s153 + $0x5f0] sm:$0xff]
                %408 = vst [vmem:[%s154 + $0x3f0] sm:$0xff] %v407
                %v409 = vld [vmem:[%s153 + $0x5f8] sm:$0xff]
                %410 = vst [vmem:[%s154 + $0x3f8] sm:$0xff] %v409
                %v411 = vld [vmem:[%s153 + $0x800] sm:$0xff]
                %412 = vst [vmem:[%s154 + $0x400] sm:$0xff] %v411
                %v413 = vld [vmem:[%s153 + $0x808] sm:$0xff]
                %414 = vst [vmem:[%s154 + $0x408] sm:$0xff] %v413
                %v415 = vld [vmem:[%s153 + $0x810] sm:$0xff]
                %416 = vst [vmem:[%s154 + $0x410] sm:$0xff] %v415
                %v417 = vld [vmem:[%s153 + $0x818] sm:$0xff]
                %418 = vst [vmem:[%s154 + $0x418] sm:$0xff] %v417
                %v419 = vld [vmem:[%s153 + $0x820] sm:$0xff]
                %420 = vst [vmem:[%s154 + $0x420] sm:$0xff] %v419
                %v421 = vld [vmem:[%s153 + $0x828] sm:$0xff]
                %422 = vst [vmem:[%s154 + $0x428] sm:$0xff] %v421
                %v423 = vld [vmem:[%s153 + $0x830] sm:$0xff]
                %424 = vst [vmem:[%s154 + $0x430] sm:$0xff] %v423
                %v425 = vld [vmem:[%s153 + $0x838] sm:$0xff]
                %426 = vst [vmem:[%s154 + $0x438] sm:$0xff] %v425
                %v427 = vld [vmem:[%s153 + $0x840] sm:$0xff]
                %428 = vst [vmem:[%s154 + $0x440] sm:$0xff] %v427
                %v429 = vld [vmem:[%s153 + $0x848] sm:$0xff]
                %430 = vst [vmem:[%s154 + $0x448] sm:$0xff] %v429
                %v431 = vld [vmem:[%s153 + $0x850] sm:$0xff]
                %432 = vst [vmem:[%s154 + $0x450] sm:$0xff] %v431
                %v433 = vld [vmem:[%s153 + $0x858] sm:$0xff]
                %434 = vst [vmem:[%s154 + $0x458] sm:$0xff] %v433
                %v435 = vld [vmem:[%s153 + $0x860] sm:$0xff]
                %436 = vst [vmem:[%s154 + $0x460] sm:$0xff] %v435
                %v437 = vld [vmem:[%s153 + $0x868] sm:$0xff]
                %438 = vst [vmem:[%s154 + $0x468] sm:$0xff] %v437
                %v439 = vld [vmem:[%s153 + $0x870] sm:$0xff]
                %440 = vst [vmem:[%s154 + $0x470] sm:$0xff] %v439
                %v441 = vld [vmem:[%s153 + $0x878] sm:$0xff]
                %442 = vst [vmem:[%s154 + $0x478] sm:$0xff] %v441
                %v443 = vld [vmem:[%s153 + $0x880] sm:$0xff]
                %444 = vst [vmem:[%s154 + $0x480] sm:$0xff] %v443
                %v445 = vld [vmem:[%s153 + $0x888] sm:$0xff]
                %446 = vst [vmem:[%s154 + $0x488] sm:$0xff] %v445
                %v447 = vld [vmem:[%s153 + $0x890] sm:$0xff]
                %448 = vst [vmem:[%s154 + $0x490] sm:$0xff] %v447
                %v449 = vld [vmem:[%s153 + $0x898] sm:$0xff]
                %450 = vst [vmem:[%s154 + $0x498] sm:$0xff] %v449
                %v451 = vld [vmem:[%s153 + $0x8a0] sm:$0xff]
                %452 = vst [vmem:[%s154 + $0x4a0] sm:$0xff] %v451
                %v453 = vld [vmem:[%s153 + $0x8a8] sm:$0xff]
                %454 = vst [vmem:[%s154 + $0x4a8] sm:$0xff] %v453
                %v455 = vld [vmem:[%s153 + $0x8b0] sm:$0xff]
                %456 = vst [vmem:[%s154 + $0x4b0] sm:$0xff] %v455
                %v457 = vld [vmem:[%s153 + $0x8b8] sm:$0xff]
                %458 = vst [vmem:[%s154 + $0x4b8] sm:$0xff] %v457
                %v459 = vld [vmem:[%s153 + $0x8c0] sm:$0xff]
                %460 = vst [vmem:[%s154 + $0x4c0] sm:$0xff] %v459
                %v461 = vld [vmem:[%s153 + $0x8c8] sm:$0xff]
                %462 = vst [vmem:[%s154 + $0x4c8] sm:$0xff] %v461
                %v463 = vld [vmem:[%s153 + $0x8d0] sm:$0xff]
                %464 = vst [vmem:[%s154 + $0x4d0] sm:$0xff] %v463
                %v465 = vld [vmem:[%s153 + $0x8d8] sm:$0xff]
                %466 = vst [vmem:[%s154 + $0x4d8] sm:$0xff] %v465
                %v467 = vld [vmem:[%s153 + $0x8e0] sm:$0xff]
                %468 = vst [vmem:[%s154 + $0x4e0] sm:$0xff] %v467
                %v469 = vld [vmem:[%s153 + $0x8e8] sm:$0xff]
                %470 = vst [vmem:[%s154 + $0x4e8] sm:$0xff] %v469
                %v471 = vld [vmem:[%s153 + $0x8f0] sm:$0xff]
                %472 = vst [vmem:[%s154 + $0x4f0] sm:$0xff] %v471
                %v473 = vld [vmem:[%s153 + $0x8f8] sm:$0xff]
                %474 = vst [vmem:[%s154 + $0x4f8] sm:$0xff] %v473
                %v475 = vld [vmem:[%s153 + $0x900] sm:$0xff]
                %476 = vst [vmem:[%s154 + $0x500] sm:$0xff] %v475
                %v477 = vld [vmem:[%s153 + $0x908] sm:$0xff]
                %478 = vst [vmem:[%s154 + $0x508] sm:$0xff] %v477
                %v479 = vld [vmem:[%s153 + $0x910] sm:$0xff]
                %480 = vst [vmem:[%s154 + $0x510] sm:$0xff] %v479
                %v481 = vld [vmem:[%s153 + $0x918] sm:$0xff]
                %482 = vst [vmem:[%s154 + $0x518] sm:$0xff] %v481
                %v483 = vld [vmem:[%s153 + $0x920] sm:$0xff]
                %484 = vst [vmem:[%s154 + $0x520] sm:$0xff] %v483
                %v485 = vld [vmem:[%s153 + $0x928] sm:$0xff]
                %486 = vst [vmem:[%s154 + $0x528] sm:$0xff] %v485
                %v487 = vld [vmem:[%s153 + $0x930] sm:$0xff]
                %488 = vst [vmem:[%s154 + $0x530] sm:$0xff] %v487
                %v489 = vld [vmem:[%s153 + $0x938] sm:$0xff]
                %490 = vst [vmem:[%s154 + $0x538] sm:$0xff] %v489
                %v491 = vld [vmem:[%s153 + $0x940] sm:$0xff]
                %492 = vst [vmem:[%s154 + $0x540] sm:$0xff] %v491
                %v493 = vld [vmem:[%s153 + $0x948] sm:$0xff]
                %494 = vst [vmem:[%s154 + $0x548] sm:$0xff] %v493
                %v495 = vld [vmem:[%s153 + $0x950] sm:$0xff]
                %496 = vst [vmem:[%s154 + $0x550] sm:$0xff] %v495
                %v497 = vld [vmem:[%s153 + $0x958] sm:$0xff]
                %498 = vst [vmem:[%s154 + $0x558] sm:$0xff] %v497
                %v499 = vld [vmem:[%s153 + $0x960] sm:$0xff]
                %500 = vst [vmem:[%s154 + $0x560] sm:$0xff] %v499
                %v501 = vld [vmem:[%s153 + $0x968] sm:$0xff]
                %502 = vst [vmem:[%s154 + $0x568] sm:$0xff] %v501
                %v503 = vld [vmem:[%s153 + $0x970] sm:$0xff]
                %504 = vst [vmem:[%s154 + $0x570] sm:$0xff] %v503
                %v505 = vld [vmem:[%s153 + $0x978] sm:$0xff]
                %506 = vst [vmem:[%s154 + $0x578] sm:$0xff] %v505
                %v507 = vld [vmem:[%s153 + $0x980] sm:$0xff]
                %508 = vst [vmem:[%s154 + $0x580] sm:$0xff] %v507
                %v509 = vld [vmem:[%s153 + $0x988] sm:$0xff]
                %510 = vst [vmem:[%s154 + $0x588] sm:$0xff] %v509
                %v511 = vld [vmem:[%s153 + $0x990] sm:$0xff]
                %512 = vst [vmem:[%s154 + $0x590] sm:$0xff] %v511
                %v513 = vld [vmem:[%s153 + $0x998] sm:$0xff]
                %514 = vst [vmem:[%s154 + $0x598] sm:$0xff] %v513
                %v515 = vld [vmem:[%s153 + $0x9a0] sm:$0xff]
                %516 = vst [vmem:[%s154 + $0x5a0] sm:$0xff] %v515
                %v517 = vld [vmem:[%s153 + $0x9a8] sm:$0xff]
                %518 = vst [vmem:[%s154 + $0x5a8] sm:$0xff] %v517
                %v519 = vld [vmem:[%s153 + $0x9b0] sm:$0xff]
                %520 = vst [vmem:[%s154 + $0x5b0] sm:$0xff] %v519
                %v521 = vld [vmem:[%s153 + $0x9b8] sm:$0xff]
                %522 = vst [vmem:[%s154 + $0x5b8] sm:$0xff] %v521
                %v523 = vld [vmem:[%s153 + $0x9c0] sm:$0xff]
                %524 = vst [vmem:[%s154 + $0x5c0] sm:$0xff] %v523
                %v525 = vld [vmem:[%s153 + $0x9c8] sm:$0xff]
                %526 = vst [vmem:[%s154 + $0x5c8] sm:$0xff] %v525
                %v527 = vld [vmem:[%s153 + $0x9d0] sm:$0xff]
                %528 = vst [vmem:[%s154 + $0x5d0] sm:$0xff] %v527
                %v529 = vld [vmem:[%s153 + $0x9d8] sm:$0xff]
                %530 = vst [vmem:[%s154 + $0x5d8] sm:$0xff] %v529
                %v531 = vld [vmem:[%s153 + $0x9e0] sm:$0xff]
                %532 = vst [vmem:[%s154 + $0x5e0] sm:$0xff] %v531
                %v533 = vld [vmem:[%s153 + $0x9e8] sm:$0xff]
                %534 = vst [vmem:[%s154 + $0x5e8] sm:$0xff] %v533
                %v535 = vld [vmem:[%s153 + $0x9f0] sm:$0xff]
                %536 = vst [vmem:[%s154 + $0x5f0] sm:$0xff] %v535
                %v537 = vld [vmem:[%s153 + $0x9f8] sm:$0xff]
                %538 = vst [vmem:[%s154 + $0x5f8] sm:$0xff] %v537
                %v539 = vld [vmem:[%s153 + $0xc00] sm:$0xff]
                %540 = vst [vmem:[%s154 + $0x600] sm:$0xff] %v539
                %v541 = vld [vmem:[%s153 + $0xc08] sm:$0xff]
                %542 = vst [vmem:[%s154 + $0x608] sm:$0xff] %v541
                %v543 = vld [vmem:[%s153 + $0xc10] sm:$0xff]
                %544 = vst [vmem:[%s154 + $0x610] sm:$0xff] %v543
                %v545 = vld [vmem:[%s153 + $0xc18] sm:$0xff]
                %546 = vst [vmem:[%s154 + $0x618] sm:$0xff] %v545
                %v547 = vld [vmem:[%s153 + $0xc20] sm:$0xff]
                %548 = vst [vmem:[%s154 + $0x620] sm:$0xff] %v547
                %v549 = vld [vmem:[%s153 + $0xc28] sm:$0xff]
                %550 = vst [vmem:[%s154 + $0x628] sm:$0xff] %v549
                %v551 = vld [vmem:[%s153 + $0xc30] sm:$0xff]
                %552 = vst [vmem:[%s154 + $0x630] sm:$0xff] %v551
                %v553 = vld [vmem:[%s153 + $0xc38] sm:$0xff]
                %554 = vst [vmem:[%s154 + $0x638] sm:$0xff] %v553
                %v555 = vld [vmem:[%s153 + $0xc40] sm:$0xff]
                %556 = vst [vmem:[%s154 + $0x640] sm:$0xff] %v555
                %v557 = vld [vmem:[%s153 + $0xc48] sm:$0xff]
                %558 = vst [vmem:[%s154 + $0x648] sm:$0xff] %v557
                %v559 = vld [vmem:[%s153 + $0xc50] sm:$0xff]
                %560 = vst [vmem:[%s154 + $0x650] sm:$0xff] %v559
                %v561 = vld [vmem:[%s153 + $0xc58] sm:$0xff]
                %562 = vst [vmem:[%s154 + $0x658] sm:$0xff] %v561
                %v563 = vld [vmem:[%s153 + $0xc60] sm:$0xff]
                %564 = vst [vmem:[%s154 + $0x660] sm:$0xff] %v563
                %v565 = vld [vmem:[%s153 + $0xc68] sm:$0xff]
                %566 = vst [vmem:[%s154 + $0x668] sm:$0xff] %v565
                %v567 = vld [vmem:[%s153 + $0xc70] sm:$0xff]
                %568 = vst [vmem:[%s154 + $0x670] sm:$0xff] %v567
                %v569 = vld [vmem:[%s153 + $0xc78] sm:$0xff]
                %570 = vst [vmem:[%s154 + $0x678] sm:$0xff] %v569
                %v571 = vld [vmem:[%s153 + $0xc80] sm:$0xff]
                %572 = vst [vmem:[%s154 + $0x680] sm:$0xff] %v571
                %v573 = vld [vmem:[%s153 + $0xc88] sm:$0xff]
                %574 = vst [vmem:[%s154 + $0x688] sm:$0xff] %v573
                %v575 = vld [vmem:[%s153 + $0xc90] sm:$0xff]
                %576 = vst [vmem:[%s154 + $0x690] sm:$0xff] %v575
                %v577 = vld [vmem:[%s153 + $0xc98] sm:$0xff]
                %578 = vst [vmem:[%s154 + $0x698] sm:$0xff] %v577
                %v579 = vld [vmem:[%s153 + $0xca0] sm:$0xff]
                %580 = vst [vmem:[%s154 + $0x6a0] sm:$0xff] %v579
                %v581 = vld [vmem:[%s153 + $0xca8] sm:$0xff]
                %582 = vst [vmem:[%s154 + $0x6a8] sm:$0xff] %v581
                %v583 = vld [vmem:[%s153 + $0xcb0] sm:$0xff]
                %584 = vst [vmem:[%s154 + $0x6b0] sm:$0xff] %v583
                %v585 = vld [vmem:[%s153 + $0xcb8] sm:$0xff]
                %586 = vst [vmem:[%s154 + $0x6b8] sm:$0xff] %v585
                %v587 = vld [vmem:[%s153 + $0xcc0] sm:$0xff]
                %588 = vst [vmem:[%s154 + $0x6c0] sm:$0xff] %v587
                %v589 = vld [vmem:[%s153 + $0xcc8] sm:$0xff]
                %590 = vst [vmem:[%s154 + $0x6c8] sm:$0xff] %v589
                %v591 = vld [vmem:[%s153 + $0xcd0] sm:$0xff]
                %592 = vst [vmem:[%s154 + $0x6d0] sm:$0xff] %v591
                %v593 = vld [vmem:[%s153 + $0xcd8] sm:$0xff]
                %594 = vst [vmem:[%s154 + $0x6d8] sm:$0xff] %v593
                %v595 = vld [vmem:[%s153 + $0xce0] sm:$0xff]
                %596 = vst [vmem:[%s154 + $0x6e0] sm:$0xff] %v595
                %v597 = vld [vmem:[%s153 + $0xce8] sm:$0xff]
                %598 = vst [vmem:[%s154 + $0x6e8] sm:$0xff] %v597
                %v599 = vld [vmem:[%s153 + $0xcf0] sm:$0xff]
                %600 = vst [vmem:[%s154 + $0x6f0] sm:$0xff] %v599
                %v601 = vld [vmem:[%s153 + $0xcf8] sm:$0xff]
                %602 = vst [vmem:[%s154 + $0x6f8] sm:$0xff] %v601
                %v603 = vld [vmem:[%s153 + $0xd00] sm:$0xff]
                %604 = vst [vmem:[%s154 + $0x700] sm:$0xff] %v603
                %v605 = vld [vmem:[%s153 + $0xd08] sm:$0xff]
                %606 = vst [vmem:[%s154 + $0x708] sm:$0xff] %v605
                %v607 = vld [vmem:[%s153 + $0xd10] sm:$0xff]
                %608 = vst [vmem:[%s154 + $0x710] sm:$0xff] %v607
                %v609 = vld [vmem:[%s153 + $0xd18] sm:$0xff]
                %610 = vst [vmem:[%s154 + $0x718] sm:$0xff] %v609
                %v611 = vld [vmem:[%s153 + $0xd20] sm:$0xff]
                %612 = vst [vmem:[%s154 + $0x720] sm:$0xff] %v611
                %v613 = vld [vmem:[%s153 + $0xd28] sm:$0xff]
                %614 = vst [vmem:[%s154 + $0x728] sm:$0xff] %v613
                %v615 = vld [vmem:[%s153 + $0xd30] sm:$0xff]
                %616 = vst [vmem:[%s154 + $0x730] sm:$0xff] %v615
                %v617 = vld [vmem:[%s153 + $0xd38] sm:$0xff]
                %618 = vst [vmem:[%s154 + $0x738] sm:$0xff] %v617
                %v619 = vld [vmem:[%s153 + $0xd40] sm:$0xff]
                %620 = vst [vmem:[%s154 + $0x740] sm:$0xff] %v619
                %v621 = vld [vmem:[%s153 + $0xd48] sm:$0xff]
                %622 = vst [vmem:[%s154 + $0x748] sm:$0xff] %v621
                %v623 = vld [vmem:[%s153 + $0xd50] sm:$0xff]
                %624 = vst [vmem:[%s154 + $0x750] sm:$0xff] %v623
                %v625 = vld [vmem:[%s153 + $0xd58] sm:$0xff]
                %626 = vst [vmem:[%s154 + $0x758] sm:$0xff] %v625
                %v627 = vld [vmem:[%s153 + $0xd60] sm:$0xff]
                %628 = vst [vmem:[%s154 + $0x760] sm:$0xff] %v627
                %v629 = vld [vmem:[%s153 + $0xd68] sm:$0xff]
                %630 = vst [vmem:[%s154 + $0x768] sm:$0xff] %v629
                %v631 = vld [vmem:[%s153 + $0xd70] sm:$0xff]
                %632 = vst [vmem:[%s154 + $0x770] sm:$0xff] %v631
                %v633 = vld [vmem:[%s153 + $0xd78] sm:$0xff]
                %634 = vst [vmem:[%s154 + $0x778] sm:$0xff] %v633
                %v635 = vld [vmem:[%s153 + $0xd80] sm:$0xff]
                %636 = vst [vmem:[%s154 + $0x780] sm:$0xff] %v635
                %v637 = vld [vmem:[%s153 + $0xd88] sm:$0xff]
                %638 = vst [vmem:[%s154 + $0x788] sm:$0xff] %v637
                %v639 = vld [vmem:[%s153 + $0xd90] sm:$0xff]
                %640 = vst [vmem:[%s154 + $0x790] sm:$0xff] %v639
                %v641 = vld [vmem:[%s153 + $0xd98] sm:$0xff]
                %642 = vst [vmem:[%s154 + $0x798] sm:$0xff] %v641
                %v643 = vld [vmem:[%s153 + $0xda0] sm:$0xff]
                %644 = vst [vmem:[%s154 + $0x7a0] sm:$0xff] %v643
                %v645 = vld [vmem:[%s153 + $0xda8] sm:$0xff]
                %646 = vst [vmem:[%s154 + $0x7a8] sm:$0xff] %v645
                %v647 = vld [vmem:[%s153 + $0xdb0] sm:$0xff]
                %648 = vst [vmem:[%s154 + $0x7b0] sm:$0xff] %v647
                %v649 = vld [vmem:[%s153 + $0xdb8] sm:$0xff]
                %650 = vst [vmem:[%s154 + $0x7b8] sm:$0xff] %v649
                %v651 = vld [vmem:[%s153 + $0xdc0] sm:$0xff]
                %652 = vst [vmem:[%s154 + $0x7c0] sm:$0xff] %v651
                %v653 = vld [vmem:[%s153 + $0xdc8] sm:$0xff]
                %654 = vst [vmem:[%s154 + $0x7c8] sm:$0xff] %v653
                %v655 = vld [vmem:[%s153 + $0xdd0] sm:$0xff]
                %656 = vst [vmem:[%s154 + $0x7d0] sm:$0xff] %v655
                %v657 = vld [vmem:[%s153 + $0xdd8] sm:$0xff]
                %658 = vst [vmem:[%s154 + $0x7d8] sm:$0xff] %v657
                %v659 = vld [vmem:[%s153 + $0xde0] sm:$0xff]
                %660 = vst [vmem:[%s154 + $0x7e0] sm:$0xff] %v659
                %v661 = vld [vmem:[%s153 + $0xde8] sm:$0xff]
                %662 = vst [vmem:[%s154 + $0x7e8] sm:$0xff] %v661
                %v663 = vld [vmem:[%s153 + $0xdf0] sm:$0xff]
                %664 = vst [vmem:[%s154 + $0x7f0] sm:$0xff] %v663
                %v665 = vld [vmem:[%s153 + $0xdf8] sm:$0xff]
                %666 = vst [vmem:[%s154 + $0x7f8] sm:$0xff] %v665
              $region37: #{decoder_train_forward.3} parent=31 // loop_footer
                %s152 = sadd.s32 1, %s148
              $region38: #{decoder_train_forward.3} parent=31 // loop_footer_branch
                %147 = sbr.rel target = $region34
              $region39: #{decoder_train_forward.3} parent=31 // loop_exit
                _
            $region32: #{decoder_train_forward.3} parent=27 // pred_fallthru
              _
            // Predicated region
            $region40: #{decoder_train_forward.3} parent=27 // pred_check
              _
            $region41: #{decoder_train_forward.3} parent=27 // pred_check_branch
              %668 = sbr.rel target = $region43
            $region42: #{decoder_train_forward.3} parent=27 // pred_region
              _
            $region43: #{decoder_train_forward.3} parent=27 // pred_fallthru
              _
          $region28: #{decoder_train_forward.3} parent=23 // pred_fallthru
            _
          %669 = vnop
        $region24: #{decoder_train_forward.3} parent=19 // pred_fallthru
          _
        // Predicated region
        $region44: #{decoder_train_forward.3} parent=19 // pred_check
          %p670 = pneg %p79
        $region45: #{decoder_train_forward.3} parent=19 // pred_check_branch
          %672 = sbr.rel (%p670) target = $region47
        $region46: #{decoder_train_forward.3} parent=19 // pred_region
          %s673 = smul.u32 128, %s12
          %p674 = scmp.lt.s32.totalorder %s673, 255
          %s675 = scalar_select %p674, %s673, 255
          %s676 = scalar_lea.vmem %s2, %s675
          %s677 = smul.u32 128, %s12
        $region47: #{decoder_train_forward.3} parent=19 // pred_fallthru
          _
      $region20: #{decoder_train_forward.3} parent=5 // pred_fallthru
        _
      %p678 = scmp.le.s32.totalorder 1, %s12
      %p679 = scmp.lt.s32.totalorder %s12, 3
      %p680 = pnand %p678, %p679
      %p681 = pneg %p680
      // Predicated region
      $region48: #{decoder_train_forward.3} parent=5 // pred_check
        _
      $region49: #{decoder_train_forward.3} parent=5 // pred_check_branch
        %683 = sbr.rel (%p680) target = $region51
      $region50: #{decoder_train_forward.3} parent=5 // pred_region
        %s684 = ssub.s32 %s12, 1
        %s685 = sand.u32 %s46, 1
        %s686 = sand.u32 %s46, 1
        %s687 = smul.addr %s686, 2048
        %s688 = scalar_lea.vmem [#allocation2], %s687
        // Predicated region
        $region52: #{decoder_train_forward.3} parent=50 // pred_check
          %p689 = pneg %p59
        $region53: #{decoder_train_forward.3} parent=50 // pred_check_branch
          %691 = sbr.rel (%p689) target = $region55
        $region54: #{decoder_train_forward.3} parent=50 // pred_region
          _
        $region55: #{decoder_train_forward.3} parent=50 // pred_fallthru
          _
        %p692 = pneg %p33
        %p693 = pneg %p30
        %s694 = sand.u32 %s46, 1
        %s695 = sand.u32 %s46, 1
        %s696 = smul.addr %s695, 2048
        %s697 = scalar_lea.vmem [#allocation2], %s696
        %p698 = pneg %p59
        %p699 = pneg %p56
        %s700 = smul.u32 128, %s17
        %p701 = scmp.lt.s32.totalorder %s700, 255
        %s702 = scalar_select %p701, %s700, 255
        %s703 = scalar_lea.vmem %s2, %s702
        %p704 = pneg %p85
        %p705 = pneg %p82
        %p706 = pneg %p111
        %p707 = pneg %p108
        %s708 = sand.u32 %s98, 1
        %s709 = scalar_lea.sflag [#allocation4], %s708
        %s710 = sand.u32 %s98, 1
        %s711 = smul.addr %s710, 2048
        %s712 = scalar_lea.vmem [#allocation3], %s711
        %s713 = smul.u32 128, %s17
        %s714 = smul.u32 128, %s17
        %p715 = scmp.lt.s32.totalorder %s714, 255
        %s716 = scalar_select %p715, %s714, 255
        %s717 = scalar_lea.vmem %s2, %s716
        %s718 = smul.u32 128, %s17
        %s719 = smul.u32 128, %s17
        %s720 = ssub.s32 251, %s719
        %p721 = scmp.lt.s32.totalorder %s720, 128
        %s722 = scalar_select %p721, %s720, 128
        %s723 = smul.u32 256, %s722
        %v725 = vld [vmem:[%s0] sm:$0xff]
        %v726 = vld [vmem:[%s0 + $0x8] sm:$0xff]
        %v727 = vpack.c.bf16 %v726, %v725
        %v728 = vld [vmem:[%s688] sm:$0xff]
        %v729 = vld [vmem:[%s688 + $0x8] sm:$0xff]
        %v730 = vld [vmem:[%s688 + $0x10] sm:$0xff]
        %v731 = vld [vmem:[%s688 + $0x18] sm:$0xff]
        %v732 = vld [vmem:[%s688 + $0x20] sm:$0xff]
        %v733 = vld [vmem:[%s688 + $0x28] sm:$0xff]
        %v734 = vld [vmem:[%s688 + $0x30] sm:$0xff]
        %v735 = vld [vmem:[%s688 + $0x38] sm:$0xff]
        %v736 = vld [vmem:[%s688 + $0x40] sm:$0xff]
        %v737 = vld [vmem:[%s688 + $0x48] sm:$0xff]
        %v738 = vld [vmem:[%s688 + $0x50] sm:$0xff]
        %v739 = vld [vmem:[%s688 + $0x58] sm:$0xff]
        %v740 = vld [vmem:[%s688 + $0x60] sm:$0xff]
        %v741 = vld [vmem:[%s688 + $0x68] sm:$0xff]
        %v742 = vld [vmem:[%s688 + $0x70] sm:$0xff]
        %v743 = vld [vmem:[%s688 + $0x78] sm:$0xff]
        %v744 = vld [vmem:[%s688 + $0x80] sm:$0xff]
        %v745 = vld [vmem:[%s688 + $0x88] sm:$0xff]
        %v746 = vld [vmem:[%s688 + $0x90] sm:$0xff]
        %v747 = vld [vmem:[%s688 + $0x98] sm:$0xff]
        %v748 = vld [vmem:[%s688 + $0xa0] sm:$0xff]
        %v749 = vld [vmem:[%s688 + $0xa8] sm:$0xff]
        %v750 = vld [vmem:[%s688 + $0xb0] sm:$0xff]
        %v751 = vld [vmem:[%s688 + $0xb8] sm:$0xff]
        %v752 = vld [vmem:[%s688 + $0xc0] sm:$0xff]
        %v753 = vld [vmem:[%s688 + $0xc8] sm:$0xff]
        %v754 = vld [vmem:[%s688 + $0xd0] sm:$0xff]
        %v755 = vld [vmem:[%s688 + $0xd8] sm:$0xff]
        %v756 = vld [vmem:[%s688 + $0xe0] sm:$0xff]
        %v757 = vld [vmem:[%s688 + $0xe8] sm:$0xff]
        %v758 = vld [vmem:[%s688 + $0xf0] sm:$0xff]
        %v759 = vld [vmem:[%s688 + $0xf8] sm:$0xff]
        %v760 = vld [vmem:[%s688 + $0x100] sm:$0xff]
        %v761 = vld [vmem:[%s688 + $0x108] sm:$0xff]
        %v762 = vld [vmem:[%s688 + $0x110] sm:$0xff]
        %v763 = vld [vmem:[%s688 + $0x118] sm:$0xff]
        %v764 = vld [vmem:[%s688 + $0x120] sm:$0xff]
        %v765 = vld [vmem:[%s688 + $0x128] sm:$0xff]
        %v766 = vld [vmem:[%s688 + $0x130] sm:$0xff]
        %v767 = vld [vmem:[%s688 + $0x138] sm:$0xff]
        %v768 = vld [vmem:[%s688 + $0x140] sm:$0xff]
        %v769 = vld [vmem:[%s688 + $0x148] sm:$0xff]
        %v770 = vld [vmem:[%s688 + $0x150] sm:$0xff]
        %v771 = vld [vmem:[%s688 + $0x158] sm:$0xff]
        %v772 = vld [vmem:[%s688 + $0x160] sm:$0xff]
        %v773 = vld [vmem:[%s688 + $0x168] sm:$0xff]
        %v774 = vld [vmem:[%s688 + $0x170] sm:$0xff]
        %v775 = vld [vmem:[%s688 + $0x178] sm:$0xff]
        %v776 = vld [vmem:[%s688 + $0x180] sm:$0xff]
        %v777 = vld [vmem:[%s688 + $0x188] sm:$0xff]
        %v778 = vld [vmem:[%s688 + $0x190] sm:$0xff]
        %v779 = vld [vmem:[%s688 + $0x198] sm:$0xff]
        %v780 = vld [vmem:[%s688 + $0x1a0] sm:$0xff]
        %v781 = vld [vmem:[%s688 + $0x1a8] sm:$0xff]
        %v782 = vld [vmem:[%s688 + $0x1b0] sm:$0xff]
        %v783 = vld [vmem:[%s688 + $0x1b8] sm:$0xff]
        %v784 = vld [vmem:[%s688 + $0x1c0] sm:$0xff]
        %v785 = vld [vmem:[%s688 + $0x1c8] sm:$0xff]
        %v786 = vld [vmem:[%s688 + $0x1d0] sm:$0xff]
        %v787 = vld [vmem:[%s688 + $0x1d8] sm:$0xff]
        %v788 = vld [vmem:[%s688 + $0x1e0] sm:$0xff]
        %v789 = vld [vmem:[%s688 + $0x1e8] sm:$0xff]
        %v790 = vld [vmem:[%s688 + $0x1f0] sm:$0xff]
        %v791 = vld [vmem:[%s688 + $0x1f8] sm:$0xff]
        %v792 = vld [vmem:[%s688 + $0x200] sm:$0xff]
        %v793 = vld [vmem:[%s688 + $0x208] sm:$0xff]
        %v794 = vld [vmem:[%s688 + $0x210] sm:$0xff]
        %v795 = vld [vmem:[%s688 + $0x218] sm:$0xff]
        %v796 = vld [vmem:[%s688 + $0x220] sm:$0xff]
        %v797 = vld [vmem:[%s688 + $0x228] sm:$0xff]
        %v798 = vld [vmem:[%s688 + $0x230] sm:$0xff]
        %v799 = vld [vmem:[%s688 + $0x238] sm:$0xff]
        %v800 = vld [vmem:[%s688 + $0x240] sm:$0xff]
        %v801 = vld [vmem:[%s688 + $0x248] sm:$0xff]
        %v802 = vld [vmem:[%s688 + $0x250] sm:$0xff]
        %v803 = vld [vmem:[%s688 + $0x258] sm:$0xff]
        %v804 = vld [vmem:[%s688 + $0x260] sm:$0xff]
        %v805 = vld [vmem:[%s688 + $0x268] sm:$0xff]
        %v806 = vld [vmem:[%s688 + $0x270] sm:$0xff]
        %v807 = vld [vmem:[%s688 + $0x278] sm:$0xff]
        %v808 = vld [vmem:[%s688 + $0x280] sm:$0xff]
        %v809 = vld [vmem:[%s688 + $0x288] sm:$0xff]
        %v810 = vld [vmem:[%s688 + $0x290] sm:$0xff]
        %v811 = vld [vmem:[%s688 + $0x298] sm:$0xff]
        %v812 = vld [vmem:[%s688 + $0x2a0] sm:$0xff]
        %v813 = vld [vmem:[%s688 + $0x2a8] sm:$0xff]
        %v814 = vld [vmem:[%s688 + $0x2b0] sm:$0xff]
        %v815 = vld [vmem:[%s688 + $0x2b8] sm:$0xff]
        %v816 = vld [vmem:[%s688 + $0x2c0] sm:$0xff]
        %v817 = vld [vmem:[%s688 + $0x2c8] sm:$0xff]
        %v818 = vld [vmem:[%s688 + $0x2d0] sm:$0xff]
        %v819 = vld [vmem:[%s688 + $0x2d8] sm:$0xff]
        %v820 = vld [vmem:[%s688 + $0x2e0] sm:$0xff]
        %v821 = vld [vmem:[%s688 + $0x2e8] sm:$0xff]
        %v822 = vld [vmem:[%s688 + $0x2f0] sm:$0xff]
        %v823 = vld [vmem:[%s688 + $0x2f8] sm:$0xff]
        %v824 = vld [vmem:[%s688 + $0x300] sm:$0xff]
        %v825 = vld [vmem:[%s688 + $0x308] sm:$0xff]
        %v826 = vld [vmem:[%s688 + $0x310] sm:$0xff]
        %v827 = vld [vmem:[%s688 + $0x318] sm:$0xff]
        %v828 = vld [vmem:[%s688 + $0x320] sm:$0xff]
        %v829 = vld [vmem:[%s688 + $0x328] sm:$0xff]
        %v830 = vld [vmem:[%s688 + $0x330] sm:$0xff]
        %v831 = vld [vmem:[%s688 + $0x338] sm:$0xff]
        %v832 = vld [vmem:[%s688 + $0x340] sm:$0xff]
        %v833 = vld [vmem:[%s688 + $0x348] sm:$0xff]
        %v834 = vld [vmem:[%s688 + $0x350] sm:$0xff]
        %v835 = vld [vmem:[%s688 + $0x358] sm:$0xff]
        %v836 = vld [vmem:[%s688 + $0x360] sm:$0xff]
        %v837 = vld [vmem:[%s688 + $0x368] sm:$0xff]
        %v838 = vld [vmem:[%s688 + $0x370] sm:$0xff]
        %v839 = vld [vmem:[%s688 + $0x378] sm:$0xff]
        %v840 = vld [vmem:[%s688 + $0x380] sm:$0xff]
        %v841 = vld [vmem:[%s688 + $0x388] sm:$0xff]
        %v842 = vld [vmem:[%s688 + $0x390] sm:$0xff]
        %v843 = vld [vmem:[%s688 + $0x398] sm:$0xff]
        %v844 = vld [vmem:[%s688 + $0x3a0] sm:$0xff]
        %v845 = vld [vmem:[%s688 + $0x3a8] sm:$0xff]
        %v846 = vld [vmem:[%s688 + $0x3b0] sm:$0xff]
        %v847 = vld [vmem:[%s688 + $0x3b8] sm:$0xff]
        %v848 = vld [vmem:[%s688 + $0x3c0] sm:$0xff]
        %v849 = vld [vmem:[%s688 + $0x3c8] sm:$0xff]
        %v850 = vld [vmem:[%s688 + $0x3d0] sm:$0xff]
        %v851 = vld [vmem:[%s688 + $0x3d8] sm:$0xff]
        %v852 = vld [vmem:[%s688 + $0x3e0] sm:$0xff]
        %v853 = vld [vmem:[%s688 + $0x3e8] sm:$0xff]
        %v854 = vld [vmem:[%s688 + $0x3f0] sm:$0xff]
        %v855 = vld [vmem:[%s688 + $0x3f8] sm:$0xff]
        %v856 = vld [vmem:[%s688 + $0x400] sm:$0xff]
        %v857 = vld [vmem:[%s688 + $0x408] sm:$0xff]
        %v858 = vld [vmem:[%s688 + $0x410] sm:$0xff]
        %v859 = vld [vmem:[%s688 + $0x418] sm:$0xff]
        %v860 = vld [vmem:[%s688 + $0x420] sm:$0xff]
        %v861 = vld [vmem:[%s688 + $0x428] sm:$0xff]
        %v862 = vld [vmem:[%s688 + $0x430] sm:$0xff]
        %v863 = vld [vmem:[%s688 + $0x438] sm:$0xff]
        %v864 = vld [vmem:[%s688 + $0x440] sm:$0xff]
        %v865 = vld [vmem:[%s688 + $0x448] sm:$0xff]
        %v866 = vld [vmem:[%s688 + $0x450] sm:$0xff]
        %v867 = vld [vmem:[%s688 + $0x458] sm:$0xff]
        %v868 = vld [vmem:[%s688 + $0x460] sm:$0xff]
        %v869 = vld [vmem:[%s688 + $0x468] sm:$0xff]
        %v870 = vld [vmem:[%s688 + $0x470] sm:$0xff]
        %v871 = vld [vmem:[%s688 + $0x478] sm:$0xff]
        %v872 = vld [vmem:[%s688 + $0x480] sm:$0xff]
        %v873 = vld [vmem:[%s688 + $0x488] sm:$0xff]
        %v874 = vld [vmem:[%s688 + $0x490] sm:$0xff]
        %v875 = vld [vmem:[%s688 + $0x498] sm:$0xff]
        %v876 = vld [vmem:[%s688 + $0x4a0] sm:$0xff]
        %v877 = vld [vmem:[%s688 + $0x4a8] sm:$0xff]
        %v878 = vld [vmem:[%s688 + $0x4b0] sm:$0xff]
        %v879 = vld [vmem:[%s688 + $0x4b8] sm:$0xff]
        %v880 = vld [vmem:[%s688 + $0x4c0] sm:$0xff]
        %v881 = vld [vmem:[%s688 + $0x4c8] sm:$0xff]
        %v882 = vld [vmem:[%s688 + $0x4d0] sm:$0xff]
        %v883 = vld [vmem:[%s688 + $0x4d8] sm:$0xff]
        %v884 = vld [vmem:[%s688 + $0x4e0] sm:$0xff]
        %v885 = vld [vmem:[%s688 + $0x4e8] sm:$0xff]
        %v886 = vld [vmem:[%s688 + $0x4f0] sm:$0xff]
        %v887 = vld [vmem:[%s688 + $0x4f8] sm:$0xff]
        %v888 = vld [vmem:[%s688 + $0x500] sm:$0xff]
        %v889 = vld [vmem:[%s688 + $0x508] sm:$0xff]
        %v890 = vld [vmem:[%s688 + $0x510] sm:$0xff]
        %v891 = vld [vmem:[%s688 + $0x518] sm:$0xff]
        %v892 = vld [vmem:[%s688 + $0x520] sm:$0xff]
        %v893 = vld [vmem:[%s688 + $0x528] sm:$0xff]
        %v894 = vld [vmem:[%s688 + $0x530] sm:$0xff]
        %v895 = vld [vmem:[%s688 + $0x538] sm:$0xff]
        %v896 = vld [vmem:[%s688 + $0x540] sm:$0xff]
        %v897 = vld [vmem:[%s688 + $0x548] sm:$0xff]
        %v898 = vld [vmem:[%s688 + $0x550] sm:$0xff]
        %v899 = vld [vmem:[%s688 + $0x558] sm:$0xff]
        %v900 = vld [vmem:[%s688 + $0x560] sm:$0xff]
        %v901 = vld [vmem:[%s688 + $0x568] sm:$0xff]
        %v902 = vld [vmem:[%s688 + $0x570] sm:$0xff]
        %v903 = vld [vmem:[%s688 + $0x578] sm:$0xff]
        %v904 = vld [vmem:[%s688 + $0x580] sm:$0xff]
        %v905 = vld [vmem:[%s688 + $0x588] sm:$0xff]
        %v906 = vld [vmem:[%s688 + $0x590] sm:$0xff]
        %v907 = vld [vmem:[%s688 + $0x598] sm:$0xff]
        %v908 = vld [vmem:[%s688 + $0x5a0] sm:$0xff]
        %v909 = vld [vmem:[%s688 + $0x5a8] sm:$0xff]
        %v910 = vld [vmem:[%s688 + $0x5b0] sm:$0xff]
        %v911 = vld [vmem:[%s688 + $0x5b8] sm:$0xff]
        %v912 = vld [vmem:[%s688 + $0x5c0] sm:$0xff]
        %v913 = vld [vmem:[%s688 + $0x5c8] sm:$0xff]
        %v914 = vld [vmem:[%s688 + $0x5d0] sm:$0xff]
        %v915 = vld [vmem:[%s688 + $0x5d8] sm:$0xff]
        %v916 = vld [vmem:[%s688 + $0x5e0] sm:$0xff]
        %v917 = vld [vmem:[%s688 + $0x5e8] sm:$0xff]
        %v918 = vld [vmem:[%s688 + $0x5f0] sm:$0xff]
        %v919 = vld [vmem:[%s688 + $0x5f8] sm:$0xff]
        %v920 = vld [vmem:[%s688 + $0x600] sm:$0xff]
        %v921 = vld [vmem:[%s688 + $0x608] sm:$0xff]
        %v922 = vld [vmem:[%s688 + $0x610] sm:$0xff]
        %v923 = vld [vmem:[%s688 + $0x618] sm:$0xff]
        %v924 = vld [vmem:[%s688 + $0x620] sm:$0xff]
        %v925 = vld [vmem:[%s688 + $0x628] sm:$0xff]
        %v926 = vld [vmem:[%s688 + $0x630] sm:$0xff]
        %v927 = vld [vmem:[%s688 + $0x638] sm:$0xff]
        %v928 = vld [vmem:[%s688 + $0x640] sm:$0xff]
        %v929 = vld [vmem:[%s688 + $0x648] sm:$0xff]
        %v930 = vld [vmem:[%s688 + $0x650] sm:$0xff]
        %v931 = vld [vmem:[%s688 + $0x658] sm:$0xff]
        %v932 = vld [vmem:[%s688 + $0x660] sm:$0xff]
        %v933 = vld [vmem:[%s688 + $0x668] sm:$0xff]
        %v934 = vld [vmem:[%s688 + $0x670] sm:$0xff]
        %v935 = vld [vmem:[%s688 + $0x678] sm:$0xff]
        %v936 = vld [vmem:[%s688 + $0x680] sm:$0xff]
        %v937 = vld [vmem:[%s688 + $0x688] sm:$0xff]
        %v938 = vld [vmem:[%s688 + $0x690] sm:$0xff]
        %v939 = vld [vmem:[%s688 + $0x698] sm:$0xff]
        %v940 = vld [vmem:[%s688 + $0x6a0] sm:$0xff]
        %v941 = vld [vmem:[%s688 + $0x6a8] sm:$0xff]
        %v942 = vld [vmem:[%s688 + $0x6b0] sm:$0xff]
        %v943 = vld [vmem:[%s688 + $0x6b8] sm:$0xff]
        %v944 = vld [vmem:[%s688 + $0x6c0] sm:$0xff]
        %v945 = vld [vmem:[%s688 + $0x6c8] sm:$0xff]
        %v946 = vld [vmem:[%s688 + $0x6d0] sm:$0xff]
        %v947 = vld [vmem:[%s688 + $0x6d8] sm:$0xff]
        %v948 = vld [vmem:[%s688 + $0x6e0] sm:$0xff]
        %v949 = vld [vmem:[%s688 + $0x6e8] sm:$0xff]
        %v950 = vld [vmem:[%s688 + $0x6f0] sm:$0xff]
        %v951 = vld [vmem:[%s688 + $0x6f8] sm:$0xff]
        %v952 = vld [vmem:[%s688 + $0x700] sm:$0xff]
        %v953 = vld [vmem:[%s688 + $0x708] sm:$0xff]
        %v954 = vld [vmem:[%s688 + $0x710] sm:$0xff]
        %v955 = vld [vmem:[%s688 + $0x718] sm:$0xff]
        %v956 = vld [vmem:[%s688 + $0x720] sm:$0xff]
        %v957 = vld [vmem:[%s688 + $0x728] sm:$0xff]
        %v958 = vld [vmem:[%s688 + $0x730] sm:$0xff]
        %v959 = vld [vmem:[%s688 + $0x738] sm:$0xff]
        %v960 = vld [vmem:[%s688 + $0x740] sm:$0xff]
        %v961 = vld [vmem:[%s688 + $0x748] sm:$0xff]
        %v962 = vld [vmem:[%s688 + $0x750] sm:$0xff]
        %v963 = vld [vmem:[%s688 + $0x758] sm:$0xff]
        %v964 = vld [vmem:[%s688 + $0x760] sm:$0xff]
        %v965 = vld [vmem:[%s688 + $0x768] sm:$0xff]
        %v966 = vld [vmem:[%s688 + $0x770] sm:$0xff]
        %v967 = vld [vmem:[%s688 + $0x778] sm:$0xff]
        %v968 = vld [vmem:[%s688 + $0x780] sm:$0xff]
        %v969 = vld [vmem:[%s688 + $0x788] sm:$0xff]
        %v970 = vld [vmem:[%s688 + $0x790] sm:$0xff]
        %v971 = vld [vmem:[%s688 + $0x798] sm:$0xff]
        %v972 = vld [vmem:[%s688 + $0x7a0] sm:$0xff]
        %v973 = vld [vmem:[%s688 + $0x7a8] sm:$0xff]
        %v974 = vld [vmem:[%s688 + $0x7b0] sm:$0xff]
        %v975 = vld [vmem:[%s688 + $0x7b8] sm:$0xff]
        %v976 = vld [vmem:[%s688 + $0x7c0] sm:$0xff]
        %v977 = vld [vmem:[%s688 + $0x7c8] sm:$0xff]
        %v978 = vld [vmem:[%s688 + $0x7d0] sm:$0xff]
        %v979 = vld [vmem:[%s688 + $0x7d8] sm:$0xff]
        %v980 = vld [vmem:[%s688 + $0x7e0] sm:$0xff]
        %v981 = vld [vmem:[%s688 + $0x7e8] sm:$0xff]
        %v982 = vld [vmem:[%s688 + $0x7f0] sm:$0xff]
        %v983 = vld [vmem:[%s688 + $0x7f8] sm:$0xff]
        %v984 = vld [vmem:[%s717] sm:$0xff]
        %v985 = vld [vmem:[%s717 + $0x8] sm:$0xff]
        %v986 = vld [vmem:[%s717 + $0x10] sm:$0xff]
        %v987 = vld [vmem:[%s717 + $0x18] sm:$0xff]
        %v988 = vld [vmem:[%s717 + $0x20] sm:$0xff]
        %v989 = vld [vmem:[%s717 + $0x28] sm:$0xff]
        %v990 = vld [vmem:[%s717 + $0x30] sm:$0xff]
        %v991 = vld [vmem:[%s717 + $0x38] sm:$0xff]
        %v992 = vld [vmem:[%s717 + $0x40] sm:$0xff]
        %v993 = vld [vmem:[%s717 + $0x48] sm:$0xff]
        %v994 = vld [vmem:[%s717 + $0x50] sm:$0xff]
        %v995 = vld [vmem:[%s717 + $0x58] sm:$0xff]
        %v996 = vld [vmem:[%s717 + $0x60] sm:$0xff]
        %v997 = vld [vmem:[%s717 + $0x68] sm:$0xff]
        %v998 = vld [vmem:[%s717 + $0x70] sm:$0xff]
        %v999 = vld [vmem:[%s717 + $0x78] sm:$0xff]
        %v1016 = vlaneseq
        %v1017 = vshrl.u32 %v1016, 7
        %v1018 = vsub.s32 0, %v1017
        %v1019 = vrot.slane %v984, %v1018
        %v1020 = vlaneseq
        %v1021 = vshrl.u32 %v1020, 7
        %v1022 = vsub.s32 1, %v1021
        %v1023 = vrot.slane %v984, %v1022
        %v1024 = vlaneseq
        %v1025 = vshrl.u32 %v1024, 7
        %v1026 = vsub.s32 2, %v1025
        %v1027 = vrot.slane %v984, %v1026
        %v1028 = vlaneseq
        %v1029 = vshrl.u32 %v1028, 7
        %v1030 = vsub.s32 3, %v1029
        %v1031 = vrot.slane %v984, %v1030
        %v1032 = vlaneseq
        %v1033 = vshrl.u32 %v1032, 7
        %v1034 = vsub.s32 4, %v1033
        %v1035 = vrot.slane %v984, %v1034
        %v1036 = vlaneseq
        %v1037 = vshrl.u32 %v1036, 7
        %v1038 = vsub.s32 5, %v1037
        %v1039 = vrot.slane %v984, %v1038
        %v1040 = vlaneseq
        %v1041 = vshrl.u32 %v1040, 7
        %v1042 = vsub.s32 6, %v1041
        %v1043 = vrot.slane %v984, %v1042
        %v1044 = vlaneseq
        %v1045 = vshrl.u32 %v1044, 7
        %v1046 = vsub.s32 7, %v1045
        %v1047 = vrot.slane %v984, %v1046
        %v1048 = vlaneseq
        %v1049 = vshrl.u32 %v1048, 7
        %v1050 = vsub.s32 0, %v1049
        %v1051 = vrot.slane %v985, %v1050
        %v1052 = vlaneseq
        %v1053 = vshrl.u32 %v1052, 7
        %v1054 = vsub.s32 1, %v1053
        %v1055 = vrot.slane %v985, %v1054
        %v1056 = vlaneseq
        %v1057 = vshrl.u32 %v1056, 7
        %v1058 = vsub.s32 2, %v1057
        %v1059 = vrot.slane %v985, %v1058
        %v1060 = vlaneseq
        %v1061 = vshrl.u32 %v1060, 7
        %v1062 = vsub.s32 3, %v1061
        %v1063 = vrot.slane %v985, %v1062
        %v1064 = vlaneseq
        %v1065 = vshrl.u32 %v1064, 7
        %v1066 = vsub.s32 4, %v1065
        %v1067 = vrot.slane %v985, %v1066
        %v1068 = vlaneseq
        %v1069 = vshrl.u32 %v1068, 7
        %v1070 = vsub.s32 5, %v1069
        %v1071 = vrot.slane %v985, %v1070
        %v1072 = vlaneseq
        %v1073 = vshrl.u32 %v1072, 7
        %v1074 = vsub.s32 6, %v1073
        %v1075 = vrot.slane %v985, %v1074
        %v1076 = vlaneseq
        %v1077 = vshrl.u32 %v1076, 7
        %v1078 = vsub.s32 7, %v1077
        %v1079 = vrot.slane %v985, %v1078
        %v1080 = vlaneseq
        %v1081 = vshrl.u32 %v1080, 7
        %v1082 = vsub.s32 0, %v1081
        %v1083 = vrot.slane %v986, %v1082
        %v1084 = vlaneseq
        %v1085 = vshrl.u32 %v1084, 7
        %v1086 = vsub.s32 1, %v1085
        %v1087 = vrot.slane %v986, %v1086
        %v1088 = vlaneseq
        %v1089 = vshrl.u32 %v1088, 7
        %v1090 = vsub.s32 2, %v1089
        %v1091 = vrot.slane %v986, %v1090
        %v1092 = vlaneseq
        %v1093 = vshrl.u32 %v1092, 7
        %v1094 = vsub.s32 3, %v1093
        %v1095 = vrot.slane %v986, %v1094
        %v1096 = vlaneseq
        %v1097 = vshrl.u32 %v1096, 7
        %v1098 = vsub.s32 4, %v1097
        %v1099 = vrot.slane %v986, %v1098
        %v1100 = vlaneseq
        %v1101 = vshrl.u32 %v1100, 7
        %v1102 = vsub.s32 5, %v1101
        %v1103 = vrot.slane %v986, %v1102
        %v1104 = vlaneseq
        %v1105 = vshrl.u32 %v1104, 7
        %v1106 = vsub.s32 6, %v1105
        %v1107 = vrot.slane %v986, %v1106
        %v1108 = vlaneseq
        %v1109 = vshrl.u32 %v1108, 7
        %v1110 = vsub.s32 7, %v1109
        %v1111 = vrot.slane %v986, %v1110
        %v1112 = vlaneseq
        %v1113 = vshrl.u32 %v1112, 7
        %v1114 = vsub.s32 0, %v1113
        %v1115 = vrot.slane %v987, %v1114
        %v1116 = vlaneseq
        %v1117 = vshrl.u32 %v1116, 7
        %v1118 = vsub.s32 1, %v1117
        %v1119 = vrot.slane %v987, %v1118
        %v1120 = vlaneseq
        %v1121 = vshrl.u32 %v1120, 7
        %v1122 = vsub.s32 2, %v1121
        %v1123 = vrot.slane %v987, %v1122
        %v1124 = vlaneseq
        %v1125 = vshrl.u32 %v1124, 7
        %v1126 = vsub.s32 3, %v1125
        %v1127 = vrot.slane %v987, %v1126
        %v1128 = vlaneseq
        %v1129 = vshrl.u32 %v1128, 7
        %v1130 = vsub.s32 4, %v1129
        %v1131 = vrot.slane %v987, %v1130
        %v1132 = vlaneseq
        %v1133 = vshrl.u32 %v1132, 7
        %v1134 = vsub.s32 5, %v1133
        %v1135 = vrot.slane %v987, %v1134
        %v1136 = vlaneseq
        %v1137 = vshrl.u32 %v1136, 7
        %v1138 = vsub.s32 6, %v1137
        %v1139 = vrot.slane %v987, %v1138
        %v1140 = vlaneseq
        %v1141 = vshrl.u32 %v1140, 7
        %v1142 = vsub.s32 7, %v1141
        %v1143 = vrot.slane %v987, %v1142
        %v1144 = vlaneseq
        %v1145 = vshrl.u32 %v1144, 7
        %v1146 = vsub.s32 0, %v1145
        %v1147 = vrot.slane %v988, %v1146
        %v1148 = vlaneseq
        %v1149 = vshrl.u32 %v1148, 7
        %v1150 = vsub.s32 1, %v1149
        %v1151 = vrot.slane %v988, %v1150
        %v1152 = vlaneseq
        %v1153 = vshrl.u32 %v1152, 7
        %v1154 = vsub.s32 2, %v1153
        %v1155 = vrot.slane %v988, %v1154
        %v1156 = vlaneseq
        %v1157 = vshrl.u32 %v1156, 7
        %v1158 = vsub.s32 3, %v1157
        %v1159 = vrot.slane %v988, %v1158
        %v1160 = vlaneseq
        %v1161 = vshrl.u32 %v1160, 7
        %v1162 = vsub.s32 4, %v1161
        %v1163 = vrot.slane %v988, %v1162
        %v1164 = vlaneseq
        %v1165 = vshrl.u32 %v1164, 7
        %v1166 = vsub.s32 5, %v1165
        %v1167 = vrot.slane %v988, %v1166
        %v1168 = vlaneseq
        %v1169 = vshrl.u32 %v1168, 7
        %v1170 = vsub.s32 6, %v1169
        %v1171 = vrot.slane %v988, %v1170
        %v1172 = vlaneseq
        %v1173 = vshrl.u32 %v1172, 7
        %v1174 = vsub.s32 7, %v1173
        %v1175 = vrot.slane %v988, %v1174
        %v1176 = vlaneseq
        %v1177 = vshrl.u32 %v1176, 7
        %v1178 = vsub.s32 0, %v1177
        %v1179 = vrot.slane %v989, %v1178
        %v1180 = vlaneseq
        %v1181 = vshrl.u32 %v1180, 7
        %v1182 = vsub.s32 1, %v1181
        %v1183 = vrot.slane %v989, %v1182
        %v1184 = vlaneseq
        %v1185 = vshrl.u32 %v1184, 7
        %v1186 = vsub.s32 2, %v1185
        %v1187 = vrot.slane %v989, %v1186
        %v1188 = vlaneseq
        %v1189 = vshrl.u32 %v1188, 7
        %v1190 = vsub.s32 3, %v1189
        %v1191 = vrot.slane %v989, %v1190
        %v1192 = vlaneseq
        %v1193 = vshrl.u32 %v1192, 7
        %v1194 = vsub.s32 4, %v1193
        %v1195 = vrot.slane %v989, %v1194
        %v1196 = vlaneseq
        %v1197 = vshrl.u32 %v1196, 7
        %v1198 = vsub.s32 5, %v1197
        %v1199 = vrot.slane %v989, %v1198
        %v1200 = vlaneseq
        %v1201 = vshrl.u32 %v1200, 7
        %v1202 = vsub.s32 6, %v1201
        %v1203 = vrot.slane %v989, %v1202
        %v1204 = vlaneseq
        %v1205 = vshrl.u32 %v1204, 7
        %v1206 = vsub.s32 7, %v1205
        %v1207 = vrot.slane %v989, %v1206
        %v1208 = vlaneseq
        %v1209 = vshrl.u32 %v1208, 7
        %v1210 = vsub.s32 0, %v1209
        %v1211 = vrot.slane %v990, %v1210
        %v1212 = vlaneseq
        %v1213 = vshrl.u32 %v1212, 7
        %v1214 = vsub.s32 1, %v1213
        %v1215 = vrot.slane %v990, %v1214
        %v1216 = vlaneseq
        %v1217 = vshrl.u32 %v1216, 7
        %v1218 = vsub.s32 2, %v1217
        %v1219 = vrot.slane %v990, %v1218
        %v1220 = vlaneseq
        %v1221 = vshrl.u32 %v1220, 7
        %v1222 = vsub.s32 3, %v1221
        %v1223 = vrot.slane %v990, %v1222
        %v1224 = vlaneseq
        %v1225 = vshrl.u32 %v1224, 7
        %v1226 = vsub.s32 4, %v1225
        %v1227 = vrot.slane %v990, %v1226
        %v1228 = vlaneseq
        %v1229 = vshrl.u32 %v1228, 7
        %v1230 = vsub.s32 5, %v1229
        %v1231 = vrot.slane %v990, %v1230
        %v1232 = vlaneseq
        %v1233 = vshrl.u32 %v1232, 7
        %v1234 = vsub.s32 6, %v1233
        %v1235 = vrot.slane %v990, %v1234
        %v1236 = vlaneseq
        %v1237 = vshrl.u32 %v1236, 7
        %v1238 = vsub.s32 7, %v1237
        %v1239 = vrot.slane %v990, %v1238
        %v1240 = vlaneseq
        %v1241 = vshrl.u32 %v1240, 7
        %v1242 = vsub.s32 0, %v1241
        %v1243 = vrot.slane %v991, %v1242
        %v1244 = vlaneseq
        %v1245 = vshrl.u32 %v1244, 7
        %v1246 = vsub.s32 1, %v1245
        %v1247 = vrot.slane %v991, %v1246
        %v1248 = vlaneseq
        %v1249 = vshrl.u32 %v1248, 7
        %v1250 = vsub.s32 2, %v1249
        %v1251 = vrot.slane %v991, %v1250
        %v1252 = vlaneseq
        %v1253 = vshrl.u32 %v1252, 7
        %v1254 = vsub.s32 3, %v1253
        %v1255 = vrot.slane %v991, %v1254
        %v1256 = vlaneseq
        %v1257 = vshrl.u32 %v1256, 7
        %v1258 = vsub.s32 4, %v1257
        %v1259 = vrot.slane %v991, %v1258
        %v1260 = vlaneseq
        %v1261 = vshrl.u32 %v1260, 7
        %v1262 = vsub.s32 5, %v1261
        %v1263 = vrot.slane %v991, %v1262
        %v1264 = vlaneseq
        %v1265 = vshrl.u32 %v1264, 7
        %v1266 = vsub.s32 6, %v1265
        %v1267 = vrot.slane %v991, %v1266
        %v1268 = vlaneseq
        %v1269 = vshrl.u32 %v1268, 7
        %v1270 = vsub.s32 7, %v1269
        %v1271 = vrot.slane %v991, %v1270
        %v1272 = vlaneseq
        %v1273 = vshrl.u32 %v1272, 7
        %v1274 = vsub.s32 0, %v1273
        %v1275 = vrot.slane %v992, %v1274
        %v1276 = vlaneseq
        %v1277 = vshrl.u32 %v1276, 7
        %v1278 = vsub.s32 1, %v1277
        %v1279 = vrot.slane %v992, %v1278
        %v1280 = vlaneseq
        %v1281 = vshrl.u32 %v1280, 7
        %v1282 = vsub.s32 2, %v1281
        %v1283 = vrot.slane %v992, %v1282
        %v1284 = vlaneseq
        %v1285 = vshrl.u32 %v1284, 7
        %v1286 = vsub.s32 3, %v1285
        %v1287 = vrot.slane %v992, %v1286
        %v1288 = vlaneseq
        %v1289 = vshrl.u32 %v1288, 7
        %v1290 = vsub.s32 4, %v1289
        %v1291 = vrot.slane %v992, %v1290
        %v1292 = vlaneseq
        %v1293 = vshrl.u32 %v1292, 7
        %v1294 = vsub.s32 5, %v1293
        %v1295 = vrot.slane %v992, %v1294
        %v1296 = vlaneseq
        %v1297 = vshrl.u32 %v1296, 7
        %v1298 = vsub.s32 6, %v1297
        %v1299 = vrot.slane %v992, %v1298
        %v1300 = vlaneseq
        %v1301 = vshrl.u32 %v1300, 7
        %v1302 = vsub.s32 7, %v1301
        %v1303 = vrot.slane %v992, %v1302
        %v1304 = vlaneseq
        %v1305 = vshrl.u32 %v1304, 7
        %v1306 = vsub.s32 0, %v1305
        %v1307 = vrot.slane %v993, %v1306
        %v1308 = vlaneseq
        %v1309 = vshrl.u32 %v1308, 7
        %v1310 = vsub.s32 1, %v1309
        %v1311 = vrot.slane %v993, %v1310
        %v1312 = vlaneseq
        %v1313 = vshrl.u32 %v1312, 7
        %v1314 = vsub.s32 2, %v1313
        %v1315 = vrot.slane %v993, %v1314
        %v1316 = vlaneseq
        %v1317 = vshrl.u32 %v1316, 7
        %v1318 = vsub.s32 3, %v1317
        %v1319 = vrot.slane %v993, %v1318
        %v1320 = vlaneseq
        %v1321 = vshrl.u32 %v1320, 7
        %v1322 = vsub.s32 4, %v1321
        %v1323 = vrot.slane %v993, %v1322
        %v1324 = vlaneseq
        %v1325 = vshrl.u32 %v1324, 7
        %v1326 = vsub.s32 5, %v1325
        %v1327 = vrot.slane %v993, %v1326
        %v1328 = vlaneseq
        %v1329 = vshrl.u32 %v1328, 7
        %v1330 = vsub.s32 6, %v1329
        %v1331 = vrot.slane %v993, %v1330
        %v1332 = vlaneseq
        %v1333 = vshrl.u32 %v1332, 7
        %v1334 = vsub.s32 7, %v1333
        %v1335 = vrot.slane %v993, %v1334
        %v1336 = vlaneseq
        %v1337 = vshrl.u32 %v1336, 7
        %v1338 = vsub.s32 0, %v1337
        %v1339 = vrot.slane %v994, %v1338
        %v1340 = vlaneseq
        %v1341 = vshrl.u32 %v1340, 7
        %v1342 = vsub.s32 1, %v1341
        %v1343 = vrot.slane %v994, %v1342
        %v1344 = vlaneseq
        %v1345 = vshrl.u32 %v1344, 7
        %v1346 = vsub.s32 2, %v1345
        %v1347 = vrot.slane %v994, %v1346
        %v1348 = vlaneseq
        %v1349 = vshrl.u32 %v1348, 7
        %v1350 = vsub.s32 3, %v1349
        %v1351 = vrot.slane %v994, %v1350
        %v1352 = vlaneseq
        %v1353 = vshrl.u32 %v1352, 7
        %v1354 = vsub.s32 4, %v1353
        %v1355 = vrot.slane %v994, %v1354
        %v1356 = vlaneseq
        %v1357 = vshrl.u32 %v1356, 7
        %v1358 = vsub.s32 5, %v1357
        %v1359 = vrot.slane %v994, %v1358
        %v1360 = vlaneseq
        %v1361 = vshrl.u32 %v1360, 7
        %v1362 = vsub.s32 6, %v1361
        %v1363 = vrot.slane %v994, %v1362
        %v1364 = vlaneseq
        %v1365 = vshrl.u32 %v1364, 7
        %v1366 = vsub.s32 7, %v1365
        %v1367 = vrot.slane %v994, %v1366
        %v1368 = vlaneseq
        %v1369 = vshrl.u32 %v1368, 7
        %v1370 = vsub.s32 0, %v1369
        %v1371 = vrot.slane %v995, %v1370
        %v1372 = vlaneseq
        %v1373 = vshrl.u32 %v1372, 7
        %v1374 = vsub.s32 1, %v1373
        %v1375 = vrot.slane %v995, %v1374
        %v1376 = vlaneseq
        %v1377 = vshrl.u32 %v1376, 7
        %v1378 = vsub.s32 2, %v1377
        %v1379 = vrot.slane %v995, %v1378
        %v1380 = vlaneseq
        %v1381 = vshrl.u32 %v1380, 7
        %v1382 = vsub.s32 3, %v1381
        %v1383 = vrot.slane %v995, %v1382
        %v1384 = vlaneseq
        %v1385 = vshrl.u32 %v1384, 7
        %v1386 = vsub.s32 4, %v1385
        %v1387 = vrot.slane %v995, %v1386
        %v1388 = vlaneseq
        %v1389 = vshrl.u32 %v1388, 7
        %v1390 = vsub.s32 5, %v1389
        %v1391 = vrot.slane %v995, %v1390
        %v1392 = vlaneseq
        %v1393 = vshrl.u32 %v1392, 7
        %v1394 = vsub.s32 6, %v1393
        %v1395 = vrot.slane %v995, %v1394
        %v1396 = vlaneseq
        %v1397 = vshrl.u32 %v1396, 7
        %v1398 = vsub.s32 7, %v1397
        %v1399 = vrot.slane %v995, %v1398
        %v1400 = vlaneseq
        %v1401 = vshrl.u32 %v1400, 7
        %v1402 = vsub.s32 0, %v1401
        %v1403 = vrot.slane %v996, %v1402
        %v1404 = vlaneseq
        %v1405 = vshrl.u32 %v1404, 7
        %v1406 = vsub.s32 1, %v1405
        %v1407 = vrot.slane %v996, %v1406
        %v1408 = vlaneseq
        %v1409 = vshrl.u32 %v1408, 7
        %v1410 = vsub.s32 2, %v1409
        %v1411 = vrot.slane %v996, %v1410
        %v1412 = vlaneseq
        %v1413 = vshrl.u32 %v1412, 7
        %v1414 = vsub.s32 3, %v1413
        %v1415 = vrot.slane %v996, %v1414
        %v1416 = vlaneseq
        %v1417 = vshrl.u32 %v1416, 7
        %v1418 = vsub.s32 4, %v1417
        %v1419 = vrot.slane %v996, %v1418
        %v1420 = vlaneseq
        %v1421 = vshrl.u32 %v1420, 7
        %v1422 = vsub.s32 5, %v1421
        %v1423 = vrot.slane %v996, %v1422
        %v1424 = vlaneseq
        %v1425 = vshrl.u32 %v1424, 7
        %v1426 = vsub.s32 6, %v1425
        %v1427 = vrot.slane %v996, %v1426
        %v1428 = vlaneseq
        %v1429 = vshrl.u32 %v1428, 7
        %v1430 = vsub.s32 7, %v1429
        %v1431 = vrot.slane %v996, %v1430
        %v1432 = vlaneseq
        %v1433 = vshrl.u32 %v1432, 7
        %v1434 = vsub.s32 0, %v1433
        %v1435 = vrot.slane %v997, %v1434
        %v1436 = vlaneseq
        %v1437 = vshrl.u32 %v1436, 7
        %v1438 = vsub.s32 1, %v1437
        %v1439 = vrot.slane %v997, %v1438
        %v1440 = vlaneseq
        %v1441 = vshrl.u32 %v1440, 7
        %v1442 = vsub.s32 2, %v1441
        %v1443 = vrot.slane %v997, %v1442
        %v1444 = vlaneseq
        %v1445 = vshrl.u32 %v1444, 7
        %v1446 = vsub.s32 3, %v1445
        %v1447 = vrot.slane %v997, %v1446
        %v1448 = vlaneseq
        %v1449 = vshrl.u32 %v1448, 7
        %v1450 = vsub.s32 4, %v1449
        %v1451 = vrot.slane %v997, %v1450
        %v1452 = vlaneseq
        %v1453 = vshrl.u32 %v1452, 7
        %v1454 = vsub.s32 5, %v1453
        %v1455 = vrot.slane %v997, %v1454
        %v1456 = vlaneseq
        %v1457 = vshrl.u32 %v1456, 7
        %v1458 = vsub.s32 6, %v1457
        %v1459 = vrot.slane %v997, %v1458
        %v1460 = vlaneseq
        %v1461 = vshrl.u32 %v1460, 7
        %v1462 = vsub.s32 7, %v1461
        %v1463 = vrot.slane %v997, %v1462
        %v1464 = vlaneseq
        %v1465 = vshrl.u32 %v1464, 7
        %v1466 = vsub.s32 0, %v1465
        %v1467 = vrot.slane %v998, %v1466
        %v1468 = vlaneseq
        %v1469 = vshrl.u32 %v1468, 7
        %v1470 = vsub.s32 1, %v1469
        %v1471 = vrot.slane %v998, %v1470
        %v1472 = vlaneseq
        %v1473 = vshrl.u32 %v1472, 7
        %v1474 = vsub.s32 2, %v1473
        %v1475 = vrot.slane %v998, %v1474
        %v1476 = vlaneseq
        %v1477 = vshrl.u32 %v1476, 7
        %v1478 = vsub.s32 3, %v1477
        %v1479 = vrot.slane %v998, %v1478
        %v1480 = vlaneseq
        %v1481 = vshrl.u32 %v1480, 7
        %v1482 = vsub.s32 4, %v1481
        %v1483 = vrot.slane %v998, %v1482
        %v1484 = vlaneseq
        %v1485 = vshrl.u32 %v1484, 7
        %v1486 = vsub.s32 5, %v1485
        %v1487 = vrot.slane %v998, %v1486
        %v1488 = vlaneseq
        %v1489 = vshrl.u32 %v1488, 7
        %v1490 = vsub.s32 6, %v1489
        %v1491 = vrot.slane %v998, %v1490
        %v1492 = vlaneseq
        %v1493 = vshrl.u32 %v1492, 7
        %v1494 = vsub.s32 7, %v1493
        %v1495 = vrot.slane %v998, %v1494
        %v1496 = vlaneseq
        %v1497 = vshrl.u32 %v1496, 7
        %v1498 = vsub.s32 0, %v1497
        %v1499 = vrot.slane %v999, %v1498
        %v1500 = vlaneseq
        %v1501 = vshrl.u32 %v1500, 7
        %v1502 = vsub.s32 1, %v1501
        %v1503 = vrot.slane %v999, %v1502
        %v1504 = vlaneseq
        %v1505 = vshrl.u32 %v1504, 7
        %v1506 = vsub.s32 2, %v1505
        %v1507 = vrot.slane %v999, %v1506
        %v1508 = vlaneseq
        %v1509 = vshrl.u32 %v1508, 7
        %v1510 = vsub.s32 3, %v1509
        %v1511 = vrot.slane %v999, %v1510
        %v1512 = vlaneseq
        %v1513 = vshrl.u32 %v1512, 7
        %v1514 = vsub.s32 4, %v1513
        %v1515 = vrot.slane %v999, %v1514
        %v1516 = vlaneseq
        %v1517 = vshrl.u32 %v1516, 7
        %v1518 = vsub.s32 5, %v1517
        %v1519 = vrot.slane %v999, %v1518
        %v1520 = vlaneseq
        %v1521 = vshrl.u32 %v1520, 7
        %v1522 = vsub.s32 6, %v1521
        %v1523 = vrot.slane %v999, %v1522
        %v1524 = vlaneseq
        %v1525 = vshrl.u32 %v1524, 7
        %v1526 = vsub.s32 7, %v1525
        %v1527 = vrot.slane %v999, %v1526
        %v1912 = vunpack.c.l.b16 %v728
        %v1913 = vunpack.c.h.b16 %v728
        %v1914 = vunpack.c.l.b16 %v729
        %v1915 = vunpack.c.h.b16 %v729
        %v1916 = vunpack.c.l.b16 %v730
        %v1917 = vunpack.c.h.b16 %v730
        %v1918 = vunpack.c.l.b16 %v731
        %v1919 = vunpack.c.h.b16 %v731
        %v1920 = vunpack.c.l.b16 %v732
        %v1921 = vunpack.c.h.b16 %v732
        %v1922 = vunpack.c.l.b16 %v733
        %v1923 = vunpack.c.h.b16 %v733
        %v1924 = vunpack.c.l.b16 %v734
        %v1925 = vunpack.c.h.b16 %v734
        %v1926 = vunpack.c.l.b16 %v735
        %v1927 = vunpack.c.h.b16 %v735
        %v1928 = vunpack.c.l.b16 %v736
        %v1929 = vunpack.c.h.b16 %v736
        %v1930 = vunpack.c.l.b16 %v737
        %v1931 = vunpack.c.h.b16 %v737
        %v1932 = vunpack.c.l.b16 %v738
        %v1933 = vunpack.c.h.b16 %v738
        %v1934 = vunpack.c.l.b16 %v739
        %v1935 = vunpack.c.h.b16 %v739
        %v1936 = vunpack.c.l.b16 %v740
        %v1937 = vunpack.c.h.b16 %v740
        %v1938 = vunpack.c.l.b16 %v741
        %v1939 = vunpack.c.h.b16 %v741
        %v1940 = vunpack.c.l.b16 %v742
        %v1941 = vunpack.c.h.b16 %v742
        %v1942 = vunpack.c.l.b16 %v743
        %v1943 = vunpack.c.h.b16 %v743
        %v1944 = vunpack.c.l.b16 %v744
        %v1945 = vunpack.c.h.b16 %v744
        %v1946 = vunpack.c.l.b16 %v745
        %v1947 = vunpack.c.h.b16 %v745
        %v1948 = vunpack.c.l.b16 %v746
        %v1949 = vunpack.c.h.b16 %v746
        %v1950 = vunpack.c.l.b16 %v747
        %v1951 = vunpack.c.h.b16 %v747
        %v1952 = vunpack.c.l.b16 %v748
        %v1953 = vunpack.c.h.b16 %v748
        %v1954 = vunpack.c.l.b16 %v749
        %v1955 = vunpack.c.h.b16 %v749
        %v1956 = vunpack.c.l.b16 %v750
        %v1957 = vunpack.c.h.b16 %v750
        %v1958 = vunpack.c.l.b16 %v751
        %v1959 = vunpack.c.h.b16 %v751
        %v1960 = vunpack.c.l.b16 %v752
        %v1961 = vunpack.c.h.b16 %v752
        %v1962 = vunpack.c.l.b16 %v753
        %v1963 = vunpack.c.h.b16 %v753
        %v1964 = vunpack.c.l.b16 %v754
        %v1965 = vunpack.c.h.b16 %v754
        %v1966 = vunpack.c.l.b16 %v755
        %v1967 = vunpack.c.h.b16 %v755
        %v1968 = vunpack.c.l.b16 %v756
        %v1969 = vunpack.c.h.b16 %v756
        %v1970 = vunpack.c.l.b16 %v757
        %v1971 = vunpack.c.h.b16 %v757
        %v1972 = vunpack.c.l.b16 %v758
        %v1973 = vunpack.c.h.b16 %v758
        %v1974 = vunpack.c.l.b16 %v759
        %v1975 = vunpack.c.h.b16 %v759
        %v1976 = vunpack.c.l.b16 %v760
        %v1977 = vunpack.c.h.b16 %v760
        %v1978 = vunpack.c.l.b16 %v761
        %v1979 = vunpack.c.h.b16 %v761
        %v1980 = vunpack.c.l.b16 %v762
        %v1981 = vunpack.c.h.b16 %v762
        %v1982 = vunpack.c.l.b16 %v763
        %v1983 = vunpack.c.h.b16 %v763
        %v1984 = vunpack.c.l.b16 %v764
        %v1985 = vunpack.c.h.b16 %v764
        %v1986 = vunpack.c.l.b16 %v765
        %v1987 = vunpack.c.h.b16 %v765
        %v1988 = vunpack.c.l.b16 %v766
        %v1989 = vunpack.c.h.b16 %v766
        %v1990 = vunpack.c.l.b16 %v767
        %v1991 = vunpack.c.h.b16 %v767
        %v1992 = vunpack.c.l.b16 %v768
        %v1993 = vunpack.c.h.b16 %v768
        %v1994 = vunpack.c.l.b16 %v769
        %v1995 = vunpack.c.h.b16 %v769
        %v1996 = vunpack.c.l.b16 %v770
        %v1997 = vunpack.c.h.b16 %v770
        %v1998 = vunpack.c.l.b16 %v771
        %v1999 = vunpack.c.h.b16 %v771
        %v2000 = vunpack.c.l.b16 %v772
        %v2001 = vunpack.c.h.b16 %v772
        %v2002 = vunpack.c.l.b16 %v773
        %v2003 = vunpack.c.h.b16 %v773
        %v2004 = vunpack.c.l.b16 %v774
        %v2005 = vunpack.c.h.b16 %v774
        %v2006 = vunpack.c.l.b16 %v775
        %v2007 = vunpack.c.h.b16 %v775
        %v2008 = vunpack.c.l.b16 %v776
        %v2009 = vunpack.c.h.b16 %v776
        %v2010 = vunpack.c.l.b16 %v777
        %v2011 = vunpack.c.h.b16 %v777
        %v2012 = vunpack.c.l.b16 %v778
        %v2013 = vunpack.c.h.b16 %v778
        %v2014 = vunpack.c.l.b16 %v779
        %v2015 = vunpack.c.h.b16 %v779
        %v2016 = vunpack.c.l.b16 %v780
        %v2017 = vunpack.c.h.b16 %v780
        %v2018 = vunpack.c.l.b16 %v781
        %v2019 = vunpack.c.h.b16 %v781
        %v2020 = vunpack.c.l.b16 %v782
        %v2021 = vunpack.c.h.b16 %v782
        %v2022 = vunpack.c.l.b16 %v783
        %v2023 = vunpack.c.h.b16 %v783
        %v2024 = vunpack.c.l.b16 %v784
        %v2025 = vunpack.c.h.b16 %v784
        %v2026 = vunpack.c.l.b16 %v785
        %v2027 = vunpack.c.h.b16 %v785
        %v2028 = vunpack.c.l.b16 %v786
        %v2029 = vunpack.c.h.b16 %v786
        %v2030 = vunpack.c.l.b16 %v787
        %v2031 = vunpack.c.h.b16 %v787
        %v2032 = vunpack.c.l.b16 %v788
        %v2033 = vunpack.c.h.b16 %v788
        %v2034 = vunpack.c.l.b16 %v789
        %v2035 = vunpack.c.h.b16 %v789
        %v2036 = vunpack.c.l.b16 %v790
        %v2037 = vunpack.c.h.b16 %v790
        %v2038 = vunpack.c.l.b16 %v791
        %v2039 = vunpack.c.h.b16 %v791
        %v2040 = vunpack.c.l.b16 %v792
        %v2041 = vunpack.c.h.b16 %v792
        %v2042 = vunpack.c.l.b16 %v793
        %v2043 = vunpack.c.h.b16 %v793
        %v2044 = vunpack.c.l.b16 %v794
        %v2045 = vunpack.c.h.b16 %v794
        %v2046 = vunpack.c.l.b16 %v795
        %v2047 = vunpack.c.h.b16 %v795
        %v2048 = vunpack.c.l.b16 %v796
        %v2049 = vunpack.c.h.b16 %v796
        %v2050 = vunpack.c.l.b16 %v797
        %v2051 = vunpack.c.h.b16 %v797
        %v2052 = vunpack.c.l.b16 %v798
        %v2053 = vunpack.c.h.b16 %v798
        %v2054 = vunpack.c.l.b16 %v799
        %v2055 = vunpack.c.h.b16 %v799
        %v2056 = vunpack.c.l.b16 %v800
        %v2057 = vunpack.c.h.b16 %v800
        %v2058 = vunpack.c.l.b16 %v801
        %v2059 = vunpack.c.h.b16 %v801
        %v2060 = vunpack.c.l.b16 %v802
        %v2061 = vunpack.c.h.b16 %v802
        %v2062 = vunpack.c.l.b16 %v803
        %v2063 = vunpack.c.h.b16 %v803
        %v2064 = vunpack.c.l.b16 %v804
        %v2065 = vunpack.c.h.b16 %v804
        %v2066 = vunpack.c.l.b16 %v805
        %v2067 = vunpack.c.h.b16 %v805
        %v2068 = vunpack.c.l.b16 %v806
        %v2069 = vunpack.c.h.b16 %v806
        %v2070 = vunpack.c.l.b16 %v807
        %v2071 = vunpack.c.h.b16 %v807
        %v2072 = vunpack.c.l.b16 %v808
        %v2073 = vunpack.c.h.b16 %v808
        %v2074 = vunpack.c.l.b16 %v809
        %v2075 = vunpack.c.h.b16 %v809
        %v2076 = vunpack.c.l.b16 %v810
        %v2077 = vunpack.c.h.b16 %v810
        %v2078 = vunpack.c.l.b16 %v811
        %v2079 = vunpack.c.h.b16 %v811
        %v2080 = vunpack.c.l.b16 %v812
        %v2081 = vunpack.c.h.b16 %v812
        %v2082 = vunpack.c.l.b16 %v813
        %v2083 = vunpack.c.h.b16 %v813
        %v2084 = vunpack.c.l.b16 %v814
        %v2085 = vunpack.c.h.b16 %v814
        %v2086 = vunpack.c.l.b16 %v815
        %v2087 = vunpack.c.h.b16 %v815
        %v2088 = vunpack.c.l.b16 %v816
        %v2089 = vunpack.c.h.b16 %v816
        %v2090 = vunpack.c.l.b16 %v817
        %v2091 = vunpack.c.h.b16 %v817
        %v2092 = vunpack.c.l.b16 %v818
        %v2093 = vunpack.c.h.b16 %v818
        %v2094 = vunpack.c.l.b16 %v819
        %v2095 = vunpack.c.h.b16 %v819
        %v2096 = vunpack.c.l.b16 %v820
        %v2097 = vunpack.c.h.b16 %v820
        %v2098 = vunpack.c.l.b16 %v821
        %v2099 = vunpack.c.h.b16 %v821
        %v2100 = vunpack.c.l.b16 %v822
        %v2101 = vunpack.c.h.b16 %v822
        %v2102 = vunpack.c.l.b16 %v823
        %v2103 = vunpack.c.h.b16 %v823
        %v2104 = vunpack.c.l.b16 %v824
        %v2105 = vunpack.c.h.b16 %v824
        %v2106 = vunpack.c.l.b16 %v825
        %v2107 = vunpack.c.h.b16 %v825
        %v2108 = vunpack.c.l.b16 %v826
        %v2109 = vunpack.c.h.b16 %v826
        %v2110 = vunpack.c.l.b16 %v827
        %v2111 = vunpack.c.h.b16 %v827
        %v2112 = vunpack.c.l.b16 %v828
        %v2113 = vunpack.c.h.b16 %v828
        %v2114 = vunpack.c.l.b16 %v829
        %v2115 = vunpack.c.h.b16 %v829
        %v2116 = vunpack.c.l.b16 %v830
        %v2117 = vunpack.c.h.b16 %v830
        %v2118 = vunpack.c.l.b16 %v831
        %v2119 = vunpack.c.h.b16 %v831
        %v2120 = vunpack.c.l.b16 %v832
        %v2121 = vunpack.c.h.b16 %v832
        %v2122 = vunpack.c.l.b16 %v833
        %v2123 = vunpack.c.h.b16 %v833
        %v2124 = vunpack.c.l.b16 %v834
        %v2125 = vunpack.c.h.b16 %v834
        %v2126 = vunpack.c.l.b16 %v835
        %v2127 = vunpack.c.h.b16 %v835
        %v2128 = vunpack.c.l.b16 %v836
        %v2129 = vunpack.c.h.b16 %v836
        %v2130 = vunpack.c.l.b16 %v837
        %v2131 = vunpack.c.h.b16 %v837
        %v2132 = vunpack.c.l.b16 %v838
        %v2133 = vunpack.c.h.b16 %v838
        %v2134 = vunpack.c.l.b16 %v839
        %v2135 = vunpack.c.h.b16 %v839
        %v2136 = vunpack.c.l.b16 %v840
        %v2137 = vunpack.c.h.b16 %v840
        %v2138 = vunpack.c.l.b16 %v841
        %v2139 = vunpack.c.h.b16 %v841
        %v2140 = vunpack.c.l.b16 %v842
        %v2141 = vunpack.c.h.b16 %v842
        %v2142 = vunpack.c.l.b16 %v843
        %v2143 = vunpack.c.h.b16 %v843
        %v2144 = vunpack.c.l.b16 %v844
        %v2145 = vunpack.c.h.b16 %v844
        %v2146 = vunpack.c.l.b16 %v845
        %v2147 = vunpack.c.h.b16 %v845
        %v2148 = vunpack.c.l.b16 %v846
        %v2149 = vunpack.c.h.b16 %v846
        %v2150 = vunpack.c.l.b16 %v847
        %v2151 = vunpack.c.h.b16 %v847
        %v2152 = vunpack.c.l.b16 %v848
        %v2153 = vunpack.c.h.b16 %v848
        %v2154 = vunpack.c.l.b16 %v849
        %v2155 = vunpack.c.h.b16 %v849
        %v2156 = vunpack.c.l.b16 %v850
        %v2157 = vunpack.c.h.b16 %v850
        %v2158 = vunpack.c.l.b16 %v851
        %v2159 = vunpack.c.h.b16 %v851
        %v2160 = vunpack.c.l.b16 %v852
        %v2161 = vunpack.c.h.b16 %v852
        %v2162 = vunpack.c.l.b16 %v853
        %v2163 = vunpack.c.h.b16 %v853
        %v2164 = vunpack.c.l.b16 %v854
        %v2165 = vunpack.c.h.b16 %v854
        %v2166 = vunpack.c.l.b16 %v855
        %v2167 = vunpack.c.h.b16 %v855
        %v2168 = vunpack.c.l.b16 %v856
        %v2169 = vunpack.c.h.b16 %v856
        %v2170 = vunpack.c.l.b16 %v857
        %v2171 = vunpack.c.h.b16 %v857
        %v2172 = vunpack.c.l.b16 %v858
        %v2173 = vunpack.c.h.b16 %v858
        %v2174 = vunpack.c.l.b16 %v859
        %v2175 = vunpack.c.h.b16 %v859
        %v2176 = vunpack.c.l.b16 %v860
        %v2177 = vunpack.c.h.b16 %v860
        %v2178 = vunpack.c.l.b16 %v861
        %v2179 = vunpack.c.h.b16 %v861
        %v2180 = vunpack.c.l.b16 %v862
        %v2181 = vunpack.c.h.b16 %v862
        %v2182 = vunpack.c.l.b16 %v863
        %v2183 = vunpack.c.h.b16 %v863
        %v2184 = vunpack.c.l.b16 %v864
        %v2185 = vunpack.c.h.b16 %v864
        %v2186 = vunpack.c.l.b16 %v865
        %v2187 = vunpack.c.h.b16 %v865
        %v2188 = vunpack.c.l.b16 %v866
        %v2189 = vunpack.c.h.b16 %v866
        %v2190 = vunpack.c.l.b16 %v867
        %v2191 = vunpack.c.h.b16 %v867
        %v2192 = vunpack.c.l.b16 %v868
        %v2193 = vunpack.c.h.b16 %v868
        %v2194 = vunpack.c.l.b16 %v869
        %v2195 = vunpack.c.h.b16 %v869
        %v2196 = vunpack.c.l.b16 %v870
        %v2197 = vunpack.c.h.b16 %v870
        %v2198 = vunpack.c.l.b16 %v871
        %v2199 = vunpack.c.h.b16 %v871
        %v2200 = vunpack.c.l.b16 %v872
        %v2201 = vunpack.c.h.b16 %v872
        %v2202 = vunpack.c.l.b16 %v873
        %v2203 = vunpack.c.h.b16 %v873
        %v2204 = vunpack.c.l.b16 %v874
        %v2205 = vunpack.c.h.b16 %v874
        %v2206 = vunpack.c.l.b16 %v875
        %v2207 = vunpack.c.h.b16 %v875
        %v2208 = vunpack.c.l.b16 %v876
        %v2209 = vunpack.c.h.b16 %v876
        %v2210 = vunpack.c.l.b16 %v877
        %v2211 = vunpack.c.h.b16 %v877
        %v2212 = vunpack.c.l.b16 %v878
        %v2213 = vunpack.c.h.b16 %v878
        %v2214 = vunpack.c.l.b16 %v879
        %v2215 = vunpack.c.h.b16 %v879
        %v2216 = vunpack.c.l.b16 %v880
        %v2217 = vunpack.c.h.b16 %v880
        %v2218 = vunpack.c.l.b16 %v881
        %v2219 = vunpack.c.h.b16 %v881
        %v2220 = vunpack.c.l.b16 %v882
        %v2221 = vunpack.c.h.b16 %v882
        %v2222 = vunpack.c.l.b16 %v883
        %v2223 = vunpack.c.h.b16 %v883
        %v2224 = vunpack.c.l.b16 %v884
        %v2225 = vunpack.c.h.b16 %v884
        %v2226 = vunpack.c.l.b16 %v885
        %v2227 = vunpack.c.h.b16 %v885
        %v2228 = vunpack.c.l.b16 %v886
        %v2229 = vunpack.c.h.b16 %v886
        %v2230 = vunpack.c.l.b16 %v887
        %v2231 = vunpack.c.h.b16 %v887
        %v2232 = vunpack.c.l.b16 %v888
        %v2233 = vunpack.c.h.b16 %v888
        %v2234 = vunpack.c.l.b16 %v889
        %v2235 = vunpack.c.h.b16 %v889
        %v2236 = vunpack.c.l.b16 %v890
        %v2237 = vunpack.c.h.b16 %v890
        %v2238 = vunpack.c.l.b16 %v891
        %v2239 = vunpack.c.h.b16 %v891
        %v2240 = vunpack.c.l.b16 %v892
        %v2241 = vunpack.c.h.b16 %v892
        %v2242 = vunpack.c.l.b16 %v893
        %v2243 = vunpack.c.h.b16 %v893
        %v2244 = vunpack.c.l.b16 %v894
        %v2245 = vunpack.c.h.b16 %v894
        %v2246 = vunpack.c.l.b16 %v895
        %v2247 = vunpack.c.h.b16 %v895
        %v2248 = vunpack.c.l.b16 %v896
        %v2249 = vunpack.c.h.b16 %v896
        %v2250 = vunpack.c.l.b16 %v897
        %v2251 = vunpack.c.h.b16 %v897
        %v2252 = vunpack.c.l.b16 %v898
        %v2253 = vunpack.c.h.b16 %v898
        %v2254 = vunpack.c.l.b16 %v899
        %v2255 = vunpack.c.h.b16 %v899
        %v2256 = vunpack.c.l.b16 %v900
        %v2257 = vunpack.c.h.b16 %v900
        %v2258 = vunpack.c.l.b16 %v901
        %v2259 = vunpack.c.h.b16 %v901
        %v2260 = vunpack.c.l.b16 %v902
        %v2261 = vunpack.c.h.b16 %v902
        %v2262 = vunpack.c.l.b16 %v903
        %v2263 = vunpack.c.h.b16 %v903
        %v2264 = vunpack.c.l.b16 %v904
        %v2265 = vunpack.c.h.b16 %v904
        %v2266 = vunpack.c.l.b16 %v905
        %v2267 = vunpack.c.h.b16 %v905
        %v2268 = vunpack.c.l.b16 %v906
        %v2269 = vunpack.c.h.b16 %v906
        %v2270 = vunpack.c.l.b16 %v907
        %v2271 = vunpack.c.h.b16 %v907
        %v2272 = vunpack.c.l.b16 %v908
        %v2273 = vunpack.c.h.b16 %v908
        %v2274 = vunpack.c.l.b16 %v909
        %v2275 = vunpack.c.h.b16 %v909
        %v2276 = vunpack.c.l.b16 %v910
        %v2277 = vunpack.c.h.b16 %v910
        %v2278 = vunpack.c.l.b16 %v911
        %v2279 = vunpack.c.h.b16 %v911
        %v2280 = vunpack.c.l.b16 %v912
        %v2281 = vunpack.c.h.b16 %v912
        %v2282 = vunpack.c.l.b16 %v913
        %v2283 = vunpack.c.h.b16 %v913
        %v2284 = vunpack.c.l.b16 %v914
        %v2285 = vunpack.c.h.b16 %v914
        %v2286 = vunpack.c.l.b16 %v915
        %v2287 = vunpack.c.h.b16 %v915
        %v2288 = vunpack.c.l.b16 %v916
        %v2289 = vunpack.c.h.b16 %v916
        %v2290 = vunpack.c.l.b16 %v917
        %v2291 = vunpack.c.h.b16 %v917
        %v2292 = vunpack.c.l.b16 %v918
        %v2293 = vunpack.c.h.b16 %v918
        %v2294 = vunpack.c.l.b16 %v919
        %v2295 = vunpack.c.h.b16 %v919
        %v2296 = vunpack.c.l.b16 %v920
        %v2297 = vunpack.c.h.b16 %v920
        %v2298 = vunpack.c.l.b16 %v921
        %v2299 = vunpack.c.h.b16 %v921
        %v2300 = vunpack.c.l.b16 %v922
        %v2301 = vunpack.c.h.b16 %v922
        %v2302 = vunpack.c.l.b16 %v923
        %v2303 = vunpack.c.h.b16 %v923
        %v2304 = vunpack.c.l.b16 %v924
        %v2305 = vunpack.c.h.b16 %v924
        %v2306 = vunpack.c.l.b16 %v925
        %v2307 = vunpack.c.h.b16 %v925
        %v2308 = vunpack.c.l.b16 %v926
        %v2309 = vunpack.c.h.b16 %v926
        %v2310 = vunpack.c.l.b16 %v927
        %v2311 = vunpack.c.h.b16 %v927
        %v2312 = vunpack.c.l.b16 %v928
        %v2313 = vunpack.c.h.b16 %v928
        %v2314 = vunpack.c.l.b16 %v929
        %v2315 = vunpack.c.h.b16 %v929
        %v2316 = vunpack.c.l.b16 %v930
        %v2317 = vunpack.c.h.b16 %v930
        %v2318 = vunpack.c.l.b16 %v931
        %v2319 = vunpack.c.h.b16 %v931
        %v2320 = vunpack.c.l.b16 %v932
        %v2321 = vunpack.c.h.b16 %v932
        %v2322 = vunpack.c.l.b16 %v933
        %v2323 = vunpack.c.h.b16 %v933
        %v2324 = vunpack.c.l.b16 %v934
        %v2325 = vunpack.c.h.b16 %v934
        %v2326 = vunpack.c.l.b16 %v935
        %v2327 = vunpack.c.h.b16 %v935
        %v2328 = vunpack.c.l.b16 %v936
        %v2329 = vunpack.c.h.b16 %v936
        %v2330 = vunpack.c.l.b16 %v937
        %v2331 = vunpack.c.h.b16 %v937
        %v2332 = vunpack.c.l.b16 %v938
        %v2333 = vunpack.c.h.b16 %v938
        %v2334 = vunpack.c.l.b16 %v939
        %v2335 = vunpack.c.h.b16 %v939
        %v2336 = vunpack.c.l.b16 %v940
        %v2337 = vunpack.c.h.b16 %v940
        %v2338 = vunpack.c.l.b16 %v941
        %v2339 = vunpack.c.h.b16 %v941
        %v2340 = vunpack.c.l.b16 %v942
        %v2341 = vunpack.c.h.b16 %v942
        %v2342 = vunpack.c.l.b16 %v943
        %v2343 = vunpack.c.h.b16 %v943
        %v2344 = vunpack.c.l.b16 %v944
        %v2345 = vunpack.c.h.b16 %v944
        %v2346 = vunpack.c.l.b16 %v945
        %v2347 = vunpack.c.h.b16 %v945
        %v2348 = vunpack.c.l.b16 %v946
        %v2349 = vunpack.c.h.b16 %v946
        %v2350 = vunpack.c.l.b16 %v947
        %v2351 = vunpack.c.h.b16 %v947
        %v2352 = vunpack.c.l.b16 %v948
        %v2353 = vunpack.c.h.b16 %v948
        %v2354 = vunpack.c.l.b16 %v949
        %v2355 = vunpack.c.h.b16 %v949
        %v2356 = vunpack.c.l.b16 %v950
        %v2357 = vunpack.c.h.b16 %v950
        %v2358 = vunpack.c.l.b16 %v951
        %v2359 = vunpack.c.h.b16 %v951
        %v2360 = vunpack.c.l.b16 %v952
        %v2361 = vunpack.c.h.b16 %v952
        %v2362 = vunpack.c.l.b16 %v953
        %v2363 = vunpack.c.h.b16 %v953
        %v2364 = vunpack.c.l.b16 %v954
        %v2365 = vunpack.c.h.b16 %v954
        %v2366 = vunpack.c.l.b16 %v955
        %v2367 = vunpack.c.h.b16 %v955
        %v2368 = vunpack.c.l.b16 %v956
        %v2369 = vunpack.c.h.b16 %v956
        %v2370 = vunpack.c.l.b16 %v957
        %v2371 = vunpack.c.h.b16 %v957
        %v2372 = vunpack.c.l.b16 %v958
        %v2373 = vunpack.c.h.b16 %v958
        %v2374 = vunpack.c.l.b16 %v959
        %v2375 = vunpack.c.h.b16 %v959
        %v2376 = vunpack.c.l.b16 %v960
        %v2377 = vunpack.c.h.b16 %v960
        %v2378 = vunpack.c.l.b16 %v961
        %v2379 = vunpack.c.h.b16 %v961
        %v2380 = vunpack.c.l.b16 %v962
        %v2381 = vunpack.c.h.b16 %v962
        %v2382 = vunpack.c.l.b16 %v963
        %v2383 = vunpack.c.h.b16 %v963
        %v2384 = vunpack.c.l.b16 %v964
        %v2385 = vunpack.c.h.b16 %v964
        %v2386 = vunpack.c.l.b16 %v965
        %v2387 = vunpack.c.h.b16 %v965
        %v2388 = vunpack.c.l.b16 %v966
        %v2389 = vunpack.c.h.b16 %v966
        %v2390 = vunpack.c.l.b16 %v967
        %v2391 = vunpack.c.h.b16 %v967
        %v2392 = vunpack.c.l.b16 %v968
        %v2393 = vunpack.c.h.b16 %v968
        %v2394 = vunpack.c.l.b16 %v969
        %v2395 = vunpack.c.h.b16 %v969
        %v2396 = vunpack.c.l.b16 %v970
        %v2397 = vunpack.c.h.b16 %v970
        %v2398 = vunpack.c.l.b16 %v971
        %v2399 = vunpack.c.h.b16 %v971
        %v2400 = vunpack.c.l.b16 %v972
        %v2401 = vunpack.c.h.b16 %v972
        %v2402 = vunpack.c.l.b16 %v973
        %v2403 = vunpack.c.h.b16 %v973
        %v2404 = vunpack.c.l.b16 %v974
        %v2405 = vunpack.c.h.b16 %v974
        %v2406 = vunpack.c.l.b16 %v975
        %v2407 = vunpack.c.h.b16 %v975
        %v2408 = vunpack.c.l.b16 %v976
        %v2409 = vunpack.c.h.b16 %v976
        %v2410 = vunpack.c.l.b16 %v977
        %v2411 = vunpack.c.h.b16 %v977
        %v2412 = vunpack.c.l.b16 %v978
        %v2413 = vunpack.c.h.b16 %v978
        %v2414 = vunpack.c.l.b16 %v979
        %v2415 = vunpack.c.h.b16 %v979
        %v2416 = vunpack.c.l.b16 %v980
        %v2417 = vunpack.c.h.b16 %v980
        %v2418 = vunpack.c.l.b16 %v981
        %v2419 = vunpack.c.h.b16 %v981
        %v2420 = vunpack.c.l.b16 %v982
        %v2421 = vunpack.c.h.b16 %v982
        %v2422 = vunpack.c.l.b16 %v983
        %v2423 = vunpack.c.h.b16 %v983
        %v2424 = vpack.c.b16 %v2040, %v1912
        %v2425 = vpack.c.b16 %v2041, %v1913
        %v2426 = vpack.c.b16 %v2042, %v1914
        %v2427 = vpack.c.b16 %v2043, %v1915
        %v2428 = vpack.c.b16 %v2044, %v1916
        %v2429 = vpack.c.b16 %v2045, %v1917
        %v2430 = vpack.c.b16 %v2046, %v1918
        %v2431 = vpack.c.b16 %v2047, %v1919
        %v2432 = vpack.c.b16 %v2048, %v1920
        %v2433 = vpack.c.b16 %v2049, %v1921
        %v2434 = vpack.c.b16 %v2050, %v1922
        %v2435 = vpack.c.b16 %v2051, %v1923
        %v2436 = vpack.c.b16 %v2052, %v1924
        %v2437 = vpack.c.b16 %v2053, %v1925
        %v2438 = vpack.c.b16 %v2054, %v1926
        %v2439 = vpack.c.b16 %v2055, %v1927
        %v2440 = vpack.c.b16 %v2056, %v1928
        %v2441 = vpack.c.b16 %v2057, %v1929
        %v2442 = vpack.c.b16 %v2058, %v1930
        %v2443 = vpack.c.b16 %v2059, %v1931
        %v2444 = vpack.c.b16 %v2060, %v1932
        %v2445 = vpack.c.b16 %v2061, %v1933
        %v2446 = vpack.c.b16 %v2062, %v1934
        %v2447 = vpack.c.b16 %v2063, %v1935
        %v2448 = vpack.c.b16 %v2064, %v1936
        %v2449 = vpack.c.b16 %v2065, %v1937
        %v2450 = vpack.c.b16 %v2066, %v1938
        %v2451 = vpack.c.b16 %v2067, %v1939
        %v2452 = vpack.c.b16 %v2068, %v1940
        %v2453 = vpack.c.b16 %v2069, %v1941
        %v2454 = vpack.c.b16 %v2070, %v1942
        %v2455 = vpack.c.b16 %v2071, %v1943
        %v2456 = vpack.c.b16 %v2072, %v1944
        %v2457 = vpack.c.b16 %v2073, %v1945
        %v2458 = vpack.c.b16 %v2074, %v1946
        %v2459 = vpack.c.b16 %v2075, %v1947
        %v2460 = vpack.c.b16 %v2076, %v1948
        %v2461 = vpack.c.b16 %v2077, %v1949
        %v2462 = vpack.c.b16 %v2078, %v1950
        %v2463 = vpack.c.b16 %v2079, %v1951
        %v2464 = vpack.c.b16 %v2080, %v1952
        %v2465 = vpack.c.b16 %v2081, %v1953
        %v2466 = vpack.c.b16 %v2082, %v1954
        %v2467 = vpack.c.b16 %v2083, %v1955
        %v2468 = vpack.c.b16 %v2084, %v1956
        %v2469 = vpack.c.b16 %v2085, %v1957
        %v2470 = vpack.c.b16 %v2086, %v1958
        %v2471 = vpack.c.b16 %v2087, %v1959
        %v2472 = vpack.c.b16 %v2088, %v1960
        %v2473 = vpack.c.b16 %v2089, %v1961
        %v2474 = vpack.c.b16 %v2090, %v1962
        %v2475 = vpack.c.b16 %v2091, %v1963
        %v2476 = vpack.c.b16 %v2092, %v1964
        %v2477 = vpack.c.b16 %v2093, %v1965
        %v2478 = vpack.c.b16 %v2094, %v1966
        %v2479 = vpack.c.b16 %v2095, %v1967
        %v2480 = vpack.c.b16 %v2096, %v1968
        %v2481 = vpack.c.b16 %v2097, %v1969
        %v2482 = vpack.c.b16 %v2098, %v1970
        %v2483 = vpack.c.b16 %v2099, %v1971
        %v2484 = vpack.c.b16 %v2100, %v1972
        %v2485 = vpack.c.b16 %v2101, %v1973
        %v2486 = vpack.c.b16 %v2102, %v1974
        %v2487 = vpack.c.b16 %v2103, %v1975
        %v2488 = vpack.c.b16 %v2104, %v1976
        %v2489 = vpack.c.b16 %v2105, %v1977
        %v2490 = vpack.c.b16 %v2106, %v1978
        %v2491 = vpack.c.b16 %v2107, %v1979
        %v2492 = vpack.c.b16 %v2108, %v1980
        %v2493 = vpack.c.b16 %v2109, %v1981
        %v2494 = vpack.c.b16 %v2110, %v1982
        %v2495 = vpack.c.b16 %v2111, %v1983
        %v2496 = vpack.c.b16 %v2112, %v1984
        %v2497 = vpack.c.b16 %v2113, %v1985
        %v2498 = vpack.c.b16 %v2114, %v1986
        %v2499 = vpack.c.b16 %v2115, %v1987
        %v2500 = vpack.c.b16 %v2116, %v1988
        %v2501 = vpack.c.b16 %v2117, %v1989
        %v2502 = vpack.c.b16 %v2118, %v1990
        %v2503 = vpack.c.b16 %v2119, %v1991
        %v2504 = vpack.c.b16 %v2120, %v1992
        %v2505 = vpack.c.b16 %v2121, %v1993
        %v2506 = vpack.c.b16 %v2122, %v1994
        %v2507 = vpack.c.b16 %v2123, %v1995
        %v2508 = vpack.c.b16 %v2124, %v1996
        %v2509 = vpack.c.b16 %v2125, %v1997
        %v2510 = vpack.c.b16 %v2126, %v1998
        %v2511 = vpack.c.b16 %v2127, %v1999
        %v2512 = vpack.c.b16 %v2128, %v2000
        %v2513 = vpack.c.b16 %v2129, %v2001
        %v2514 = vpack.c.b16 %v2130, %v2002
        %v2515 = vpack.c.b16 %v2131, %v2003
        %v2516 = vpack.c.b16 %v2132, %v2004
        %v2517 = vpack.c.b16 %v2133, %v2005
        %v2518 = vpack.c.b16 %v2134, %v2006
        %v2519 = vpack.c.b16 %v2135, %v2007
        %v2520 = vpack.c.b16 %v2136, %v2008
        %v2521 = vpack.c.b16 %v2137, %v2009
        %v2522 = vpack.c.b16 %v2138, %v2010
        %v2523 = vpack.c.b16 %v2139, %v2011
        %v2524 = vpack.c.b16 %v2140, %v2012
        %v2525 = vpack.c.b16 %v2141, %v2013
        %v2526 = vpack.c.b16 %v2142, %v2014
        %v2527 = vpack.c.b16 %v2143, %v2015
        %v2528 = vpack.c.b16 %v2144, %v2016
        %v2529 = vpack.c.b16 %v2145, %v2017
        %v2530 = vpack.c.b16 %v2146, %v2018
        %v2531 = vpack.c.b16 %v2147, %v2019
        %v2532 = vpack.c.b16 %v2148, %v2020
        %v2533 = vpack.c.b16 %v2149, %v2021
        %v2534 = vpack.c.b16 %v2150, %v2022
        %v2535 = vpack.c.b16 %v2151, %v2023
        %v2536 = vpack.c.b16 %v2152, %v2024
        %v2537 = vpack.c.b16 %v2153, %v2025
        %v2538 = vpack.c.b16 %v2154, %v2026
        %v2539 = vpack.c.b16 %v2155, %v2027
        %v2540 = vpack.c.b16 %v2156, %v2028
        %v2541 = vpack.c.b16 %v2157, %v2029
        %v2542 = vpack.c.b16 %v2158, %v2030
        %v2543 = vpack.c.b16 %v2159, %v2031
        %v2544 = vpack.c.b16 %v2160, %v2032
        %v2545 = vpack.c.b16 %v2161, %v2033
        %v2546 = vpack.c.b16 %v2162, %v2034
        %v2547 = vpack.c.b16 %v2163, %v2035
        %v2548 = vpack.c.b16 %v2164, %v2036
        %v2549 = vpack.c.b16 %v2165, %v2037
        %v2550 = vpack.c.b16 %v2166, %v2038
        %v2551 = vpack.c.b16 %v2167, %v2039
        %v2552 = vpack.c.b16 %v2296, %v2168
        %v2553 = vpack.c.b16 %v2297, %v2169
        %v2554 = vpack.c.b16 %v2298, %v2170
        %v2555 = vpack.c.b16 %v2299, %v2171
        %v2556 = vpack.c.b16 %v2300, %v2172
        %v2557 = vpack.c.b16 %v2301, %v2173
        %v2558 = vpack.c.b16 %v2302, %v2174
        %v2559 = vpack.c.b16 %v2303, %v2175
        %v2560 = vpack.c.b16 %v2304, %v2176
        %v2561 = vpack.c.b16 %v2305, %v2177
        %v2562 = vpack.c.b16 %v2306, %v2178
        %v2563 = vpack.c.b16 %v2307, %v2179
        %v2564 = vpack.c.b16 %v2308, %v2180
        %v2565 = vpack.c.b16 %v2309, %v2181
        %v2566 = vpack.c.b16 %v2310, %v2182
        %v2567 = vpack.c.b16 %v2311, %v2183
        %v2568 = vpack.c.b16 %v2312, %v2184
        %v2569 = vpack.c.b16 %v2313, %v2185
        %v2570 = vpack.c.b16 %v2314, %v2186
        %v2571 = vpack.c.b16 %v2315, %v2187
        %v2572 = vpack.c.b16 %v2316, %v2188
        %v2573 = vpack.c.b16 %v2317, %v2189
        %v2574 = vpack.c.b16 %v2318, %v2190
        %v2575 = vpack.c.b16 %v2319, %v2191
        %v2576 = vpack.c.b16 %v2320, %v2192
        %v2577 = vpack.c.b16 %v2321, %v2193
        %v2578 = vpack.c.b16 %v2322, %v2194
        %v2579 = vpack.c.b16 %v2323, %v2195
        %v2580 = vpack.c.b16 %v2324, %v2196
        %v2581 = vpack.c.b16 %v2325, %v2197
        %v2582 = vpack.c.b16 %v2326, %v2198
        %v2583 = vpack.c.b16 %v2327, %v2199
        %v2584 = vpack.c.b16 %v2328, %v2200
        %v2585 = vpack.c.b16 %v2329, %v2201
        %v2586 = vpack.c.b16 %v2330, %v2202
        %v2587 = vpack.c.b16 %v2331, %v2203
        %v2588 = vpack.c.b16 %v2332, %v2204
        %v2589 = vpack.c.b16 %v2333, %v2205
        %v2590 = vpack.c.b16 %v2334, %v2206
        %v2591 = vpack.c.b16 %v2335, %v2207
        %v2592 = vpack.c.b16 %v2336, %v2208
        %v2593 = vpack.c.b16 %v2337, %v2209
        %v2594 = vpack.c.b16 %v2338, %v2210
        %v2595 = vpack.c.b16 %v2339, %v2211
        %v2596 = vpack.c.b16 %v2340, %v2212
        %v2597 = vpack.c.b16 %v2341, %v2213
        %v2598 = vpack.c.b16 %v2342, %v2214
        %v2599 = vpack.c.b16 %v2343, %v2215
        %v2600 = vpack.c.b16 %v2344, %v2216
        %v2601 = vpack.c.b16 %v2345, %v2217
        %v2602 = vpack.c.b16 %v2346, %v2218
        %v2603 = vpack.c.b16 %v2347, %v2219
        %v2604 = vpack.c.b16 %v2348, %v2220
        %v2605 = vpack.c.b16 %v2349, %v2221
        %v2606 = vpack.c.b16 %v2350, %v2222
        %v2607 = vpack.c.b16 %v2351, %v2223
        %v2608 = vpack.c.b16 %v2352, %v2224
        %v2609 = vpack.c.b16 %v2353, %v2225
        %v2610 = vpack.c.b16 %v2354, %v2226
        %v2611 = vpack.c.b16 %v2355, %v2227
        %v2612 = vpack.c.b16 %v2356, %v2228
        %v2613 = vpack.c.b16 %v2357, %v2229
        %v2614 = vpack.c.b16 %v2358, %v2230
        %v2615 = vpack.c.b16 %v2359, %v2231
        %v2616 = vpack.c.b16 %v2360, %v2232
        %v2617 = vpack.c.b16 %v2361, %v2233
        %v2618 = vpack.c.b16 %v2362, %v2234
        %v2619 = vpack.c.b16 %v2363, %v2235
        %v2620 = vpack.c.b16 %v2364, %v2236
        %v2621 = vpack.c.b16 %v2365, %v2237
        %v2622 = vpack.c.b16 %v2366, %v2238
        %v2623 = vpack.c.b16 %v2367, %v2239
        %v2624 = vpack.c.b16 %v2368, %v2240
        %v2625 = vpack.c.b16 %v2369, %v2241
        %v2626 = vpack.c.b16 %v2370, %v2242
        %v2627 = vpack.c.b16 %v2371, %v2243
        %v2628 = vpack.c.b16 %v2372, %v2244
        %v2629 = vpack.c.b16 %v2373, %v2245
        %v2630 = vpack.c.b16 %v2374, %v2246
        %v2631 = vpack.c.b16 %v2375, %v2247
        %v2632 = vpack.c.b16 %v2376, %v2248
        %v2633 = vpack.c.b16 %v2377, %v2249
        %v2634 = vpack.c.b16 %v2378, %v2250
        %v2635 = vpack.c.b16 %v2379, %v2251
        %v2636 = vpack.c.b16 %v2380, %v2252
        %v2637 = vpack.c.b16 %v2381, %v2253
        %v2638 = vpack.c.b16 %v2382, %v2254
        %v2639 = vpack.c.b16 %v2383, %v2255
        %v2640 = vpack.c.b16 %v2384, %v2256
        %v2641 = vpack.c.b16 %v2385, %v2257
        %v2642 = vpack.c.b16 %v2386, %v2258
        %v2643 = vpack.c.b16 %v2387, %v2259
        %v2644 = vpack.c.b16 %v2388, %v2260
        %v2645 = vpack.c.b16 %v2389, %v2261
        %v2646 = vpack.c.b16 %v2390, %v2262
        %v2647 = vpack.c.b16 %v2391, %v2263
        %v2648 = vpack.c.b16 %v2392, %v2264
        %v2649 = vpack.c.b16 %v2393, %v2265
        %v2650 = vpack.c.b16 %v2394, %v2266
        %v2651 = vpack.c.b16 %v2395, %v2267
        %v2652 = vpack.c.b16 %v2396, %v2268
        %v2653 = vpack.c.b16 %v2397, %v2269
        %v2654 = vpack.c.b16 %v2398, %v2270
        %v2655 = vpack.c.b16 %v2399, %v2271
        %v2656 = vpack.c.b16 %v2400, %v2272
        %v2657 = vpack.c.b16 %v2401, %v2273
        %v2658 = vpack.c.b16 %v2402, %v2274
        %v2659 = vpack.c.b16 %v2403, %v2275
        %v2660 = vpack.c.b16 %v2404, %v2276
        %v2661 = vpack.c.b16 %v2405, %v2277
        %v2662 = vpack.c.b16 %v2406, %v2278
        %v2663 = vpack.c.b16 %v2407, %v2279
        %v2664 = vpack.c.b16 %v2408, %v2280
        %v2665 = vpack.c.b16 %v2409, %v2281
        %v2666 = vpack.c.b16 %v2410, %v2282
        %v2667 = vpack.c.b16 %v2411, %v2283
        %v2668 = vpack.c.b16 %v2412, %v2284
        %v2669 = vpack.c.b16 %v2413, %v2285
        %v2670 = vpack.c.b16 %v2414, %v2286
        %v2671 = vpack.c.b16 %v2415, %v2287
        %v2672 = vpack.c.b16 %v2416, %v2288
        %v2673 = vpack.c.b16 %v2417, %v2289
        %v2674 = vpack.c.b16 %v2418, %v2290
        %v2675 = vpack.c.b16 %v2419, %v2291
        %v2676 = vpack.c.b16 %v2420, %v2292
        %v2677 = vpack.c.b16 %v2421, %v2293
        %v2678 = vpack.c.b16 %v2422, %v2294
        %v2679 = vpack.c.b16 %v2423, %v2295
        %vm2936 = vcmask 261120
        %v2938 = vsel %vm2936, %v727, 0
        %2940 = vmatprep.subr.bf16.mxu0 0
        %2941 = vmatpush1.bf16.msra.mxu0 0
        %2942 = vmatprep.subr.bf16.mxu0 0
        %2943 = vmatpush1.bf16.msra.mxu0 0
        %2944 = vmatprep.subr.bf16.mxu0 0
        %2945 = vmatpush1.bf16.msra.mxu0 0
        %2946 = vmatprep.subr.bf16.mxu0 0
        %2947 = vmatpush1.bf16.msra.mxu0 0
        %2948 = vmatprep.subr.bf16.mxu0 0
        %2949 = vmatpush1.bf16.msra.mxu0 0
        %2950 = vmatprep.subr.bf16.mxu0 0
        %2951 = vmatpush1.bf16.msra.mxu0 0
        %2952 = vmatprep.subr.bf16.mxu0 %v2553
        %2953 = vmatpush1.bf16.msra.mxu0 %v2552
        %2954 = vmatprep.subr.bf16.mxu0 %v2425
        %2955 = vmatpush1.bf16.msra.mxu0 %v2424
        %2956 = vmatprep.subr.bf16.mxu0 0
        %2957 = vmatpush2.bf16.msra.mxu0 0
        %2958 = vmatprep.subr.bf16.mxu0 0
        %2959 = vmatpush2.bf16.msra.mxu0 0
        %2960 = vmatprep.subr.bf16.mxu0 0
        %2961 = vmatpush2.bf16.msra.mxu0 0
        %2962 = vmatprep.subr.bf16.mxu0 0
        %2963 = vmatpush2.bf16.msra.mxu0 0
        %2964 = vmatprep.subr.bf16.mxu0 0
        %2965 = vmatpush2.bf16.msra.mxu0 0
        %2966 = vmatprep.subr.bf16.mxu0 0
        %2967 = vmatpush2.bf16.msra.mxu0 0
        %2968 = vmatprep.subr.bf16.mxu0 0
        %2969 = vmatpush2.bf16.msra.mxu0 0
        %2970 = vmatprep.subr.bf16.mxu0 0
        %2971 = vmatpush2.bf16.msra.mxu0 0
        %2972 = vmatprep.mubr.bf16.mxu0 0
        %2973 = vmatmul.mubr.bf16.gmra.mxu0 %v2938
        %v2974 = vpop.f32.mrf.mxu0
        %v2975 = vadd.f32 %v1019, %v2974
        %v2976 = vpop.f32.mrf.mxu0
        %v2977 = vadd.f32 %v1023, %v2976
        %v2978 = vpop.f32.mrf.mxu0
        %v2979 = vadd.f32 %v1019, %v2978
        %v2980 = vpop.f32.mrf.mxu0
        %v2981 = vadd.f32 %v1023, %v2980
        %2982 = vdwg.mxu0
        %2983 = vmatprep.subr.bf16.mxu0 0
        %2984 = vmatpush1.bf16.msra.mxu0 0
        %2985 = vmatprep.subr.bf16.mxu0 0
        %2986 = vmatpush1.bf16.msra.mxu0 0
        %2987 = vmatprep.subr.bf16.mxu0 0
        %2988 = vmatpush1.bf16.msra.mxu0 0
        %2989 = vmatprep.subr.bf16.mxu0 0
        %2990 = vmatpush1.bf16.msra.mxu0 0
        %2991 = vmatprep.subr.bf16.mxu0 0
        %2992 = vmatpush1.bf16.msra.mxu0 0
        %2993 = vmatprep.subr.bf16.mxu0 0
        %2994 = vmatpush1.bf16.msra.mxu0 0
        %2995 = vmatprep.subr.bf16.mxu0 %v2555
        %2996 = vmatpush1.bf16.msra.mxu0 %v2554
        %2997 = vmatprep.subr.bf16.mxu0 %v2427
        %2998 = vmatpush1.bf16.msra.mxu0 %v2426
        %2999 = vmatprep.subr.bf16.mxu0 0
        %3000 = vmatpush2.bf16.msra.mxu0 0
        %3001 = vmatprep.subr.bf16.mxu0 0
        %3002 = vmatpush2.bf16.msra.mxu0 0
        %3003 = vmatprep.subr.bf16.mxu0 0
        %3004 = vmatpush2.bf16.msra.mxu0 0
        %3005 = vmatprep.subr.bf16.mxu0 0
        %3006 = vmatpush2.bf16.msra.mxu0 0
        %3007 = vmatprep.subr.bf16.mxu0 0
        %3008 = vmatpush2.bf16.msra.mxu0 0
        %3009 = vmatprep.subr.bf16.mxu0 0
        %3010 = vmatpush2.bf16.msra.mxu0 0
        %3011 = vmatprep.subr.bf16.mxu0 0
        %3012 = vmatpush2.bf16.msra.mxu0 0
        %3013 = vmatprep.subr.bf16.mxu0 0
        %3014 = vmatpush2.bf16.msra.mxu0 0
        %3015 = vmatprep.mubr.bf16.mxu0 0
        %3016 = vmatmul.mubr.bf16.gmra.mxu0 %v2938
        %v3017 = vpop.f32.mrf.mxu0
        %v3018 = vadd.f32 %v1027, %v3017
        %v3019 = vpop.f32.mrf.mxu0
        %v3020 = vadd.f32 %v1031, %v3019
        %v3021 = vpop.f32.mrf.mxu0
        %v3022 = vadd.f32 %v1027, %v3021
        %v3023 = vpop.f32.mrf.mxu0
        %v3024 = vadd.f32 %v1031, %v3023
        %3025 = vdwg.mxu0
        %3026 = vmatprep.subr.bf16.mxu0 0
        %3027 = vmatpush1.bf16.msra.mxu0 0
        %3028 = vmatprep.subr.bf16.mxu0 0
        %3029 = vmatpush1.bf16.msra.mxu0 0
        %3030 = vmatprep.subr.bf16.mxu0 0
        %3031 = vmatpush1.bf16.msra.mxu0 0
        %3032 = vmatprep.subr.bf16.mxu0 0
        %3033 = vmatpush1.bf16.msra.mxu0 0
        %3034 = vmatprep.subr.bf16.mxu0 0
        %3035 = vmatpush1.bf16.msra.mxu0 0
        %3036 = vmatprep.subr.bf16.mxu0 0
        %3037 = vmatpush1.bf16.msra.mxu0 0
        %3038 = vmatprep.subr.bf16.mxu0 %v2557
        %3039 = vmatpush1.bf16.msra.mxu0 %v2556
        %3040 = vmatprep.subr.bf16.mxu0 %v2429
        %3041 = vmatpush1.bf16.msra.mxu0 %v2428
        %3042 = vmatprep.subr.bf16.mxu0 0
        %3043 = vmatpush2.bf16.msra.mxu0 0
        %3044 = vmatprep.subr.bf16.mxu0 0
        %3045 = vmatpush2.bf16.msra.mxu0 0
        %3046 = vmatprep.subr.bf16.mxu0 0
        %3047 = vmatpush2.bf16.msra.mxu0 0
        %3048 = vmatprep.subr.bf16.mxu0 0
        %3049 = vmatpush2.bf16.msra.mxu0 0
        %3050 = vmatprep.subr.bf16.mxu0 0
        %3051 = vmatpush2.bf16.msra.mxu0 0
        %3052 = vmatprep.subr.bf16.mxu0 0
        %3053 = vmatpush2.bf16.msra.mxu0 0
        %3054 = vmatprep.subr.bf16.mxu0 0
        %3055 = vmatpush2.bf16.msra.mxu0 0
        %3056 = vmatprep.subr.bf16.mxu0 0
        %3057 = vmatpush2.bf16.msra.mxu0 0
        %3058 = vmatprep.mubr.bf16.mxu0 0
        %3059 = vmatmul.mubr.bf16.gmra.mxu0 %v2938
        %v3060 = vpop.f32.mrf.mxu0
        %v3061 = vadd.f32 %v1035, %v3060
        %v3062 = vpop.f32.mrf.mxu0
        %v3063 = vadd.f32 %v1039, %v3062
        %v3064 = vpop.f32.mrf.mxu0
        %v3065 = vadd.f32 %v1035, %v3064
        %v3066 = vpop.f32.mrf.mxu0
        %v3067 = vadd.f32 %v1039, %v3066
        %3068 = vdwg.mxu0
        %3069 = vmatprep.subr.bf16.mxu0 0
        %3070 = vmatpush1.bf16.msra.mxu0 0
        %3071 = vmatprep.subr.bf16.mxu0 0
        %3072 = vmatpush1.bf16.msra.mxu0 0
        %3073 = vmatprep.subr.bf16.mxu0 0
        %3074 = vmatpush1.bf16.msra.mxu0 0
        %3075 = vmatprep.subr.bf16.mxu0 0
        %3076 = vmatpush1.bf16.msra.mxu0 0
        %3077 = vmatprep.subr.bf16.mxu0 0
        %3078 = vmatpush1.bf16.msra.mxu0 0
        %3079 = vmatprep.subr.bf16.mxu0 0
        %3080 = vmatpush1.bf16.msra.mxu0 0
        %3081 = vmatprep.subr.bf16.mxu0 %v2559
        %3082 = vmatpush1.bf16.msra.mxu0 %v2558
        %3083 = vmatprep.subr.bf16.mxu0 %v2431
        %3084 = vmatpush1.bf16.msra.mxu0 %v2430
        %3085 = vmatprep.subr.bf16.mxu0 0
        %3086 = vmatpush2.bf16.msra.mxu0 0
        %3087 = vmatprep.subr.bf16.mxu0 0
        %3088 = vmatpush2.bf16.msra.mxu0 0
        %3089 = vmatprep.subr.bf16.mxu0 0
        %3090 = vmatpush2.bf16.msra.mxu0 0
        %3091 = vmatprep.subr.bf16.mxu0 0
        %3092 = vmatpush2.bf16.msra.mxu0 0
        %3093 = vmatprep.subr.bf16.mxu0 0
        %3094 = vmatpush2.bf16.msra.mxu0 0
        %3095 = vmatprep.subr.bf16.mxu0 0
        %3096 = vmatpush2.bf16.msra.mxu0 0
        %3097 = vmatprep.subr.bf16.mxu0 0
        %3098 = vmatpush2.bf16.msra.mxu0 0
        %3099 = vmatprep.subr.bf16.mxu0 0
        %3100 = vmatpush2.bf16.msra.mxu0 0
        %3101 = vmatprep.mubr.bf16.mxu0 0
        %3102 = vmatmul.mubr.bf16.gmra.mxu0 %v2938
        %v3103 = vpop.f32.mrf.mxu0
        %v3104 = vadd.f32 %v1043, %v3103
        %v3105 = vpop.f32.mrf.mxu0
        %v3106 = vadd.f32 %v1047, %v3105
        %v3107 = vpop.f32.mrf.mxu0
        %v3108 = vadd.f32 %v1043, %v3107
        %v3109 = vpop.f32.mrf.mxu0
        %v3110 = vadd.f32 %v1047, %v3109
        %3111 = vdwg.mxu0
        %3112 = vmatprep.subr.bf16.mxu0 0
        %3113 = vmatpush1.bf16.msra.mxu0 0
        %3114 = vmatprep.subr.bf16.mxu0 0
        %3115 = vmatpush1.bf16.msra.mxu0 0
        %3116 = vmatprep.subr.bf16.mxu0 0
        %3117 = vmatpush1.bf16.msra.mxu0 0
        %3118 = vmatprep.subr.bf16.mxu0 0
        %3119 = vmatpush1.bf16.msra.mxu0 0
        %3120 = vmatprep.subr.bf16.mxu0 0
        %3121 = vmatpush1.bf16.msra.mxu0 0
        %3122 = vmatprep.subr.bf16.mxu0 0
        %3123 = vmatpush1.bf16.msra.mxu0 0
        %3124 = vmatprep.subr.bf16.mxu0 %v2561
        %3125 = vmatpush1.bf16.msra.mxu0 %v2560
        %3126 = vmatprep.subr.bf16.mxu0 %v2433
        %3127 = vmatpush1.bf16.msra.mxu0 %v2432
        %3128 = vmatprep.subr.bf16.mxu0 0
        %3129 = vmatpush2.bf16.msra.mxu0 0
        %3130 = vmatprep.subr.bf16.mxu0 0
        %3131 = vmatpush2.bf16.msra.mxu0 0
        %3132 = vmatprep.subr.bf16.mxu0 0
        %3133 = vmatpush2.bf16.msra.mxu0 0
        %3134 = vmatprep.subr.bf16.mxu0 0
        %3135 = vmatpush2.bf16.msra.mxu0 0
        %3136 = vmatprep.subr.bf16.mxu0 0
        %3137 = vmatpush2.bf16.msra.mxu0 0
        %3138 = vmatprep.subr.bf16.mxu0 0
        %3139 = vmatpush2.bf16.msra.mxu0 0
        %3140 = vmatprep.subr.bf16.mxu0 0
        %3141 = vmatpush2.bf16.msra.mxu0 0
        %3142 = vmatprep.subr.bf16.mxu0 0
        %3143 = vmatpush2.bf16.msra.mxu0 0
        %3144 = vmatprep.mubr.bf16.mxu0 0
        %3145 = vmatmul.mubr.bf16.gmra.mxu0 %v2938
        %v3146 = vpop.f32.mrf.mxu0
        %v3147 = vadd.f32 %v1051, %v3146
        %v3148 = vpop.f32.mrf.mxu0
        %v3149 = vadd.f32 %v1055, %v3148
        %v3150 = vpop.f32.mrf.mxu0
        %v3151 = vadd.f32 %v1051, %v3150
        %v3152 = vpop.f32.mrf.mxu0
        %v3153 = vadd.f32 %v1055, %v3152
        %3154 = vdwg.mxu0
        %3155 = vmatprep.subr.bf16.mxu0 0
        %3156 = vmatpush1.bf16.msra.mxu0 0
        %3157 = vmatprep.subr.bf16.mxu0 0
        %3158 = vmatpush1.bf16.msra.mxu0 0
        %3159 = vmatprep.subr.bf16.mxu0 0
        %3160 = vmatpush1.bf16.msra.mxu0 0
        %3161 = vmatprep.subr.bf16.mxu0 0
        %3162 = vmatpush1.bf16.msra.mxu0 0
        %3163 = vmatprep.subr.bf16.mxu0 0
        %3164 = vmatpush1.bf16.msra.mxu0 0
        %3165 = vmatprep.subr.bf16.mxu0 0
        %3166 = vmatpush1.bf16.msra.mxu0 0
        %3167 = vmatprep.subr.bf16.mxu0 %v2563
        %3168 = vmatpush1.bf16.msra.mxu0 %v2562
        %3169 = vmatprep.subr.bf16.mxu0 %v2435
        %3170 = vmatpush1.bf16.msra.mxu0 %v2434
        %3171 = vmatprep.subr.bf16.mxu0 0
        %3172 = vmatpush2.bf16.msra.mxu0 0
        %3173 = vmatprep.subr.bf16.mxu0 0
        %3174 = vmatpush2.bf16.msra.mxu0 0
        %3175 = vmatprep.subr.bf16.mxu0 0
        %3176 = vmatpush2.bf16.msra.mxu0 0
        %3177 = vmatprep.subr.bf16.mxu0 0
        %3178 = vmatpush2.bf16.msra.mxu0 0
        %3179 = vmatprep.subr.bf16.mxu0 0
        %3180 = vmatpush2.bf16.msra.mxu0 0
        %3181 = vmatprep.subr.bf16.mxu0 0
        %3182 = vmatpush2.bf16.msra.mxu0 0
        %3183 = vmatprep.subr.bf16.mxu0 0
        %3184 = vmatpush2.bf16.msra.mxu0 0
        %3185 = vmatprep.subr.bf16.mxu0 0
        %3186 = vmatpush2.bf16.msra.mxu0 0
        %3187 = vmatprep.mubr.bf16.mxu0 0
        %3188 = vmatmul.mubr.bf16.gmra.mxu0 %v2938
        %v3189 = vpop.f32.mrf.mxu0
        %v3190 = vadd.f32 %v1059, %v3189
        %v3191 = vpop.f32.mrf.mxu0
        %v3192 = vadd.f32 %v1063, %v3191
        %v3193 = vpop.f32.mrf.mxu0
        %v3194 = vadd.f32 %v1059, %v3193
        %v3195 = vpop.f32.mrf.mxu0
        %v3196 = vadd.f32 %v1063, %v3195
        %3197 = vdwg.mxu0
        %3198 = vmatprep.subr.bf16.mxu0 0
        %3199 = vmatpush1.bf16.msra.mxu0 0
        %3200 = vmatprep.subr.bf16.mxu0 0
        %3201 = vmatpush1.bf16.msra.mxu0 0
        %3202 = vmatprep.subr.bf16.mxu0 0
        %3203 = vmatpush1.bf16.msra.mxu0 0
        %3204 = vmatprep.subr.bf16.mxu0 0
        %3205 = vmatpush1.bf16.msra.mxu0 0
        %3206 = vmatprep.subr.bf16.mxu0 0
        %3207 = vmatpush1.bf16.msra.mxu0 0
        %3208 = vmatprep.subr.bf16.mxu0 0
        %3209 = vmatpush1.bf16.msra.mxu0 0
        %3210 = vmatprep.subr.bf16.mxu0 %v2565
        %3211 = vmatpush1.bf16.msra.mxu0 %v2564
        %3212 = vmatprep.subr.bf16.mxu0 %v2437
        %3213 = vmatpush1.bf16.msra.mxu0 %v2436
        %3214 = vmatprep.subr.bf16.mxu0 0
        %3215 = vmatpush2.bf16.msra.mxu0 0
        %3216 = vmatprep.subr.bf16.mxu0 0
        %3217 = vmatpush2.bf16.msra.mxu0 0
        %3218 = vmatprep.subr.bf16.mxu0 0
        %3219 = vmatpush2.bf16.msra.mxu0 0
        %3220 = vmatprep.subr.bf16.mxu0 0
        %3221 = vmatpush2.bf16.msra.mxu0 0
        %3222 = vmatprep.subr.bf16.mxu0 0
        %3223 = vmatpush2.bf16.msra.mxu0 0
        %3224 = vmatprep.subr.bf16.mxu0 0
        %3225 = vmatpush2.bf16.msra.mxu0 0
        %3226 = vmatprep.subr.bf16.mxu0 0
        %3227 = vmatpush2.bf16.msra.mxu0 0
        %3228 = vmatprep.subr.bf16.mxu0 0
        %3229 = vmatpush2.bf16.msra.mxu0 0
        %3230 = vmatprep.mubr.bf16.mxu0 0
        %3231 = vmatmul.mubr.bf16.gmra.mxu0 %v2938
        %v3232 = vpop.f32.mrf.mxu0
        %v3233 = vadd.f32 %v1067, %v3232
        %v3234 = vpop.f32.mrf.mxu0
        %v3235 = vadd.f32 %v1071, %v3234
        %v3236 = vpop.f32.mrf.mxu0
        %v3237 = vadd.f32 %v1067, %v3236
        %v3238 = vpop.f32.mrf.mxu0
        %v3239 = vadd.f32 %v1071, %v3238
        %3240 = vdwg.mxu0
        %3241 = vmatprep.subr.bf16.mxu0 0
        %3242 = vmatpush1.bf16.msra.mxu0 0
        %3243 = vmatprep.subr.bf16.mxu0 0
        %3244 = vmatpush1.bf16.msra.mxu0 0
        %3245 = vmatprep.subr.bf16.mxu0 0
        %3246 = vmatpush1.bf16.msra.mxu0 0
        %3247 = vmatprep.subr.bf16.mxu0 0
        %3248 = vmatpush1.bf16.msra.mxu0 0
        %3249 = vmatprep.subr.bf16.mxu0 0
        %3250 = vmatpush1.bf16.msra.mxu0 0
        %3251 = vmatprep.subr.bf16.mxu0 0
        %3252 = vmatpush1.bf16.msra.mxu0 0
        %3253 = vmatprep.subr.bf16.mxu0 %v2567
        %3254 = vmatpush1.bf16.msra.mxu0 %v2566
        %3255 = vmatprep.subr.bf16.mxu0 %v2439
        %3256 = vmatpush1.bf16.msra.mxu0 %v2438
        %3257 = vmatprep.subr.bf16.mxu0 0
        %3258 = vmatpush2.bf16.msra.mxu0 0
        %3259 = vmatprep.subr.bf16.mxu0 0
        %3260 = vmatpush2.bf16.msra.mxu0 0
        %3261 = vmatprep.subr.bf16.mxu0 0
        %3262 = vmatpush2.bf16.msra.mxu0 0
        %3263 = vmatprep.subr.bf16.mxu0 0
        %3264 = vmatpush2.bf16.msra.mxu0 0
        %3265 = vmatprep.subr.bf16.mxu0 0
        %3266 = vmatpush2.bf16.msra.mxu0 0
        %3267 = vmatprep.subr.bf16.mxu0 0
        %3268 = vmatpush2.bf16.msra.mxu0 0
        %3269 = vmatprep.subr.bf16.mxu0 0
        %3270 = vmatpush2.bf16.msra.mxu0 0
        %3271 = vmatprep.subr.bf16.mxu0 0
        %3272 = vmatpush2.bf16.msra.mxu0 0
        %3273 = vmatprep.mubr.bf16.mxu0 0
        %3274 = vmatmul.mubr.bf16.gmra.mxu0 %v2938
        %v3275 = vpop.f32.mrf.mxu0
        %v3276 = vadd.f32 %v1075, %v3275
        %v3277 = vpop.f32.mrf.mxu0
        %v3278 = vadd.f32 %v1079, %v3277
        %v3279 = vpop.f32.mrf.mxu0
        %v3280 = vadd.f32 %v1075, %v3279
        %v3281 = vpop.f32.mrf.mxu0
        %v3282 = vadd.f32 %v1079, %v3281
        %3283 = vdwg.mxu0
        %3284 = vmatprep.subr.bf16.mxu0 0
        %3285 = vmatpush1.bf16.msra.mxu0 0
        %3286 = vmatprep.subr.bf16.mxu0 0
        %3287 = vmatpush1.bf16.msra.mxu0 0
        %3288 = vmatprep.subr.bf16.mxu0 0
        %3289 = vmatpush1.bf16.msra.mxu0 0
        %3290 = vmatprep.subr.bf16.mxu0 0
        %3291 = vmatpush1.bf16.msra.mxu0 0
        %3292 = vmatprep.subr.bf16.mxu0 0
        %3293 = vmatpush1.bf16.msra.mxu0 0
        %3294 = vmatprep.subr.bf16.mxu0 0
        %3295 = vmatpush1.bf16.msra.mxu0 0
        %3296 = vmatprep.subr.bf16.mxu0 %v2569
        %3297 = vmatpush1.bf16.msra.mxu0 %v2568
        %3298 = vmatprep.subr.bf16.mxu0 %v2441
        %3299 = vmatpush1.bf16.msra.mxu0 %v2440
        %3300 = vmatprep.subr.bf16.mxu0 0
        %3301 = vmatpush2.bf16.msra.mxu0 0
        %3302 = vmatprep.subr.bf16.mxu0 0
        %3303 = vmatpush2.bf16.msra.mxu0 0
        %3304 = vmatprep.subr.bf16.mxu0 0
        %3305 = vmatpush2.bf16.msra.mxu0 0
        %3306 = vmatprep.subr.bf16.mxu0 0
        %3307 = vmatpush2.bf16.msra.mxu0 0
        %3308 = vmatprep.subr.bf16.mxu0 0
        %3309 = vmatpush2.bf16.msra.mxu0 0
        %3310 = vmatprep.subr.bf16.mxu0 0
        %3311 = vmatpush2.bf16.msra.mxu0 0
        %3312 = vmatprep.subr.bf16.mxu0 0
        %3313 = vmatpush2.bf16.msra.mxu0 0
        %3314 = vmatprep.subr.bf16.mxu0 0
        %3315 = vmatpush2.bf16.msra.mxu0 0
        %3316 = vmatprep.mubr.bf16.mxu0 0
        %3317 = vmatmul.mubr.bf16.gmra.mxu0 %v2938
        %v3318 = vpop.f32.mrf.mxu0
        %v3319 = vadd.f32 %v1083, %v3318
        %v3320 = vpop.f32.mrf.mxu0
        %v3321 = vadd.f32 %v1087, %v3320
        %v3322 = vpop.f32.mrf.mxu0
        %v3323 = vadd.f32 %v1083, %v3322
        %v3324 = vpop.f32.mrf.mxu0
        %v3325 = vadd.f32 %v1087, %v3324
        %3326 = vdwg.mxu0
        %3327 = vmatprep.subr.bf16.mxu0 0
        %3328 = vmatpush1.bf16.msra.mxu0 0
        %3329 = vmatprep.subr.bf16.mxu0 0
        %3330 = vmatpush1.bf16.msra.mxu0 0
        %3331 = vmatprep.subr.bf16.mxu0 0
        %3332 = vmatpush1.bf16.msra.mxu0 0
        %3333 = vmatprep.subr.bf16.mxu0 0
        %3334 = vmatpush1.bf16.msra.mxu0 0
        %3335 = vmatprep.subr.bf16.mxu0 0
        %3336 = vmatpush1.bf16.msra.mxu0 0
        %3337 = vmatprep.subr.bf16.mxu0 0
        %3338 = vmatpush1.bf16.msra.mxu0 0
        %3339 = vmatprep.subr.bf16.mxu0 %v2571
        %3340 = vmatpush1.bf16.msra.mxu0 %v2570
        %3341 = vmatprep.subr.bf16.mxu0 %v2443
        %3342 = vmatpush1.bf16.msra.mxu0 %v2442
        %3343 = vmatprep.subr.bf16.mxu0 0
        %3344 = vmatpush2.bf16.msra.mxu0 0
        %3345 = vmatprep.subr.bf16.mxu0 0
        %3346 = vmatpush2.bf16.msra.mxu0 0
        %3347 = vmatprep.subr.bf16.mxu0 0
        %3348 = vmatpush2.bf16.msra.mxu0 0
        %3349 = vmatprep.subr.bf16.mxu0 0
        %3350 = vmatpush2.bf16.msra.mxu0 0
        %3351 = vmatprep.subr.bf16.mxu0 0
        %3352 = vmatpush2.bf16.msra.mxu0 0
        %3353 = vmatprep.subr.bf16.mxu0 0
        %3354 = vmatpush2.bf16.msra.mxu0 0
        %3355 = vmatprep.subr.bf16.mxu0 0
        %3356 = vmatpush2.bf16.msra.mxu0 0
        %3357 = vmatprep.subr.bf16.mxu0 0
        %3358 = vmatpush2.bf16.msra.mxu0 0
        %3359 = vmatprep.mubr.bf16.mxu0 0
        %3360 = vmatmul.mubr.bf16.gmra.mxu0 %v2938
        %v3361 = vpop.f32.mrf.mxu0
        %v3362 = vadd.f32 %v1091, %v3361
        %v3363 = vpop.f32.mrf.mxu0
        %v3364 = vadd.f32 %v1095, %v3363
        %v3365 = vpop.f32.mrf.mxu0
        %v3366 = vadd.f32 %v1091, %v3365
        %v3367 = vpop.f32.mrf.mxu0
        %v3368 = vadd.f32 %v1095, %v3367
        %3369 = vdwg.mxu0
        %3370 = vmatprep.subr.bf16.mxu0 0
        %3371 = vmatpush1.bf16.msra.mxu0 0
        %3372 = vmatprep.subr.bf16.mxu0 0
        %3373 = vmatpush1.bf16.msra.mxu0 0
        %3374 = vmatprep.subr.bf16.mxu0 0
        %3375 = vmatpush1.bf16.msra.mxu0 0
        %3376 = vmatprep.subr.bf16.mxu0 0
        %3377 = vmatpush1.bf16.msra.mxu0 0
        %3378 = vmatprep.subr.bf16.mxu0 0
        %3379 = vmatpush1.bf16.msra.mxu0 0
        %3380 = vmatprep.subr.bf16.mxu0 0
        %3381 = vmatpush1.bf16.msra.mxu0 0
        %3382 = vmatprep.subr.bf16.mxu0 %v2573
        %3383 = vmatpush1.bf16.msra.mxu0 %v2572
        %3384 = vmatprep.subr.bf16.mxu0 %v2445
        %3385 = vmatpush1.bf16.msra.mxu0 %v2444
        %3386 = vmatprep.subr.bf16.mxu0 0
        %3387 = vmatpush2.bf16.msra.mxu0 0
        %3388 = vmatprep.subr.bf16.mxu0 0
        %3389 = vmatpush2.bf16.msra.mxu0 0
        %3390 = vmatprep.subr.bf16.mxu0 0
        %3391 = vmatpush2.bf16.msra.mxu0 0
        %3392 = vmatprep.subr.bf16.mxu0 0
        %3393 = vmatpush2.bf16.msra.mxu0 0
        %3394 = vmatprep.subr.bf16.mxu0 0
        %3395 = vmatpush2.bf16.msra.mxu0 0
        %3396 = vmatprep.subr.bf16.mxu0 0
        %3397 = vmatpush2.bf16.msra.mxu0 0
        %3398 = vmatprep.subr.bf16.mxu0 0
        %3399 = vmatpush2.bf16.msra.mxu0 0
        %3400 = vmatprep.subr.bf16.mxu0 0
        %3401 = vmatpush2.bf16.msra.mxu0 0
        %3402 = vmatprep.mubr.bf16.mxu0 0
        %3403 = vmatmul.mubr.bf16.gmra.mxu0 %v2938
        %v3404 = vpop.f32.mrf.mxu0
        %v3405 = vadd.f32 %v1099, %v3404
        %v3406 = vpop.f32.mrf.mxu0
        %v3407 = vadd.f32 %v1103, %v3406
        %v3408 = vpop.f32.mrf.mxu0
        %v3409 = vadd.f32 %v1099, %v3408
        %v3410 = vpop.f32.mrf.mxu0
        %v3411 = vadd.f32 %v1103, %v3410
        %3412 = vdwg.mxu0
        %3413 = vmatprep.subr.bf16.mxu0 0
        %3414 = vmatpush1.bf16.msra.mxu0 0
        %3415 = vmatprep.subr.bf16.mxu0 0
        %3416 = vmatpush1.bf16.msra.mxu0 0
        %3417 = vmatprep.subr.bf16.mxu0 0
        %3418 = vmatpush1.bf16.msra.mxu0 0
        %3419 = vmatprep.subr.bf16.mxu0 0
        %3420 = vmatpush1.bf16.msra.mxu0 0
        %3421 = vmatprep.subr.bf16.mxu0 0
        %3422 = vmatpush1.bf16.msra.mxu0 0
        %3423 = vmatprep.subr.bf16.mxu0 0
        %3424 = vmatpush1.bf16.msra.mxu0 0
        %3425 = vmatprep.subr.bf16.mxu0 %v2575
        %3426 = vmatpush1.bf16.msra.mxu0 %v2574
        %3427 = vmatprep.subr.bf16.mxu0 %v2447
        %3428 = vmatpush1.bf16.msra.mxu0 %v2446
        %3429 = vmatprep.subr.bf16.mxu0 0
        %3430 = vmatpush2.bf16.msra.mxu0 0
        %3431 = vmatprep.subr.bf16.mxu0 0
        %3432 = vmatpush2.bf16.msra.mxu0 0
        %3433 = vmatprep.subr.bf16.mxu0 0
        %3434 = vmatpush2.bf16.msra.mxu0 0
        %3435 = vmatprep.subr.bf16.mxu0 0
        %3436 = vmatpush2.bf16.msra.mxu0 0
        %3437 = vmatprep.subr.bf16.mxu0 0
        %3438 = vmatpush2.bf16.msra.mxu0 0
        %3439 = vmatprep.subr.bf16.mxu0 0
        %3440 = vmatpush2.bf16.msra.mxu0 0
        %3441 = vmatprep.subr.bf16.mxu0 0
        %3442 = vmatpush2.bf16.msra.mxu0 0
        %3443 = vmatprep.subr.bf16.mxu0 0
        %3444 = vmatpush2.bf16.msra.mxu0 0
        %3445 = vmatprep.mubr.bf16.mxu0 0
        %3446 = vmatmul.mubr.bf16.gmra.mxu0 %v2938
        %v3447 = vpop.f32.mrf.mxu0
        %v3448 = vadd.f32 %v1107, %v3447
        %v3449 = vpop.f32.mrf.mxu0
        %v3450 = vadd.f32 %v1111, %v3449
        %v3451 = vpop.f32.mrf.mxu0
        %v3452 = vadd.f32 %v1107, %v3451
        %v3453 = vpop.f32.mrf.mxu0
        %v3454 = vadd.f32 %v1111, %v3453
        %3455 = vdwg.mxu0
        %3456 = vmatprep.subr.bf16.mxu0 0
        %3457 = vmatpush1.bf16.msra.mxu0 0
        %3458 = vmatprep.subr.bf16.mxu0 0
        %3459 = vmatpush1.bf16.msra.mxu0 0
        %3460 = vmatprep.subr.bf16.mxu0 0
        %3461 = vmatpush1.bf16.msra.mxu0 0
        %3462 = vmatprep.subr.bf16.mxu0 0
        %3463 = vmatpush1.bf16.msra.mxu0 0
        %3464 = vmatprep.subr.bf16.mxu0 0
        %3465 = vmatpush1.bf16.msra.mxu0 0
        %3466 = vmatprep.subr.bf16.mxu0 0
        %3467 = vmatpush1.bf16.msra.mxu0 0
        %3468 = vmatprep.subr.bf16.mxu0 %v2577
        %3469 = vmatpush1.bf16.msra.mxu0 %v2576
        %3470 = vmatprep.subr.bf16.mxu0 %v2449
        %3471 = vmatpush1.bf16.msra.mxu0 %v2448
        %3472 = vmatprep.subr.bf16.mxu0 0
        %3473 = vmatpush2.bf16.msra.mxu0 0
        %3474 = vmatprep.subr.bf16.mxu0 0
        %3475 = vmatpush2.bf16.msra.mxu0 0
        %3476 = vmatprep.subr.bf16.mxu0 0
        %3477 = vmatpush2.bf16.msra.mxu0 0
        %3478 = vmatprep.subr.bf16.mxu0 0
        %3479 = vmatpush2.bf16.msra.mxu0 0
        %3480 = vmatprep.subr.bf16.mxu0 0
        %3481 = vmatpush2.bf16.msra.mxu0 0
        %3482 = vmatprep.subr.bf16.mxu0 0
        %3483 = vmatpush2.bf16.msra.mxu0 0
        %3484 = vmatprep.subr.bf16.mxu0 0
        %3485 = vmatpush2.bf16.msra.mxu0 0
        %3486 = vmatprep.subr.bf16.mxu0 0
        %3487 = vmatpush2.bf16.msra.mxu0 0
        %3488 = vmatprep.mubr.bf16.mxu0 0
        %3489 = vmatmul.mubr.bf16.gmra.mxu0 %v2938
        %v3490 = vpop.f32.mrf.mxu0
        %v3491 = vadd.f32 %v1115, %v3490
        %v3492 = vpop.f32.mrf.mxu0
        %v3493 = vadd.f32 %v1119, %v3492
        %v3494 = vpop.f32.mrf.mxu0
        %v3495 = vadd.f32 %v1115, %v3494
        %v3496 = vpop.f32.mrf.mxu0
        %v3497 = vadd.f32 %v1119, %v3496
        %3498 = vdwg.mxu0
        %3499 = vmatprep.subr.bf16.mxu0 0
        %3500 = vmatpush1.bf16.msra.mxu0 0
        %3501 = vmatprep.subr.bf16.mxu0 0
        %3502 = vmatpush1.bf16.msra.mxu0 0
        %3503 = vmatprep.subr.bf16.mxu0 0
        %3504 = vmatpush1.bf16.msra.mxu0 0
        %3505 = vmatprep.subr.bf16.mxu0 0
        %3506 = vmatpush1.bf16.msra.mxu0 0
        %3507 = vmatprep.subr.bf16.mxu0 0
        %3508 = vmatpush1.bf16.msra.mxu0 0
        %3509 = vmatprep.subr.bf16.mxu0 0
        %3510 = vmatpush1.bf16.msra.mxu0 0
        %3511 = vmatprep.subr.bf16.mxu0 %v2579
        %3512 = vmatpush1.bf16.msra.mxu0 %v2578
        %3513 = vmatprep.subr.bf16.mxu0 %v2451
        %3514 = vmatpush1.bf16.msra.mxu0 %v2450
        %3515 = vmatprep.subr.bf16.mxu0 0
        %3516 = vmatpush2.bf16.msra.mxu0 0
        %3517 = vmatprep.subr.bf16.mxu0 0
        %3518 = vmatpush2.bf16.msra.mxu0 0
        %3519 = vmatprep.subr.bf16.mxu0 0
        %3520 = vmatpush2.bf16.msra.mxu0 0
        %3521 = vmatprep.subr.bf16.mxu0 0
        %3522 = vmatpush2.bf16.msra.mxu0 0
        %3523 = vmatprep.subr.bf16.mxu0 0
        %3524 = vmatpush2.bf16.msra.mxu0 0
        %3525 = vmatprep.subr.bf16.mxu0 0
        %3526 = vmatpush2.bf16.msra.mxu0 0
        %3527 = vmatprep.subr.bf16.mxu0 0
        %3528 = vmatpush2.bf16.msra.mxu0 0
        %3529 = vmatprep.subr.bf16.mxu0 0
        %3530 = vmatpush2.bf16.msra.mxu0 0
        %3531 = vmatprep.mubr.bf16.mxu0 0
        %3532 = vmatmul.mubr.bf16.gmra.mxu0 %v2938
        %v3533 = vpop.f32.mrf.mxu0
        %v3534 = vadd.f32 %v1123, %v3533
        %v3535 = vpop.f32.mrf.mxu0
        %v3536 = vadd.f32 %v1127, %v3535
        %v3537 = vpop.f32.mrf.mxu0
        %v3538 = vadd.f32 %v1123, %v3537
        %v3539 = vpop.f32.mrf.mxu0
        %v3540 = vadd.f32 %v1127, %v3539
        %3541 = vdwg.mxu0
        %3542 = vmatprep.subr.bf16.mxu0 0
        %3543 = vmatpush1.bf16.msra.mxu0 0
        %3544 = vmatprep.subr.bf16.mxu0 0
        %3545 = vmatpush1.bf16.msra.mxu0 0
        %3546 = vmatprep.subr.bf16.mxu0 0
        %3547 = vmatpush1.bf16.msra.mxu0 0
        %3548 = vmatprep.subr.bf16.mxu0 0
        %3549 = vmatpush1.bf16.msra.mxu0 0
        %3550 = vmatprep.subr.bf16.mxu0 0
        %3551 = vmatpush1.bf16.msra.mxu0 0
        %3552 = vmatprep.subr.bf16.mxu0 0
        %3553 = vmatpush1.bf16.msra.mxu0 0
        %3554 = vmatprep.subr.bf16.mxu0 %v2581
        %3555 = vmatpush1.bf16.msra.mxu0 %v2580
        %3556 = vmatprep.subr.bf16.mxu0 %v2453
        %3557 = vmatpush1.bf16.msra.mxu0 %v2452
        %3558 = vmatprep.subr.bf16.mxu0 0
        %3559 = vmatpush2.bf16.msra.mxu0 0
        %3560 = vmatprep.subr.bf16.mxu0 0
        %3561 = vmatpush2.bf16.msra.mxu0 0
        %3562 = vmatprep.subr.bf16.mxu0 0
        %3563 = vmatpush2.bf16.msra.mxu0 0
        %3564 = vmatprep.subr.bf16.mxu0 0
        %3565 = vmatpush2.bf16.msra.mxu0 0
        %3566 = vmatprep.subr.bf16.mxu0 0
        %3567 = vmatpush2.bf16.msra.mxu0 0
        %3568 = vmatprep.subr.bf16.mxu0 0
        %3569 = vmatpush2.bf16.msra.mxu0 0
        %3570 = vmatprep.subr.bf16.mxu0 0
        %3571 = vmatpush2.bf16.msra.mxu0 0
        %3572 = vmatprep.subr.bf16.mxu0 0
        %3573 = vmatpush2.bf16.msra.mxu0 0
        %3574 = vmatprep.mubr.bf16.mxu0 0
        %3575 = vmatmul.mubr.bf16.gmra.mxu0 %v2938
        %v3576 = vpop.f32.mrf.mxu0
        %v3577 = vadd.f32 %v1131, %v3576
        %v3578 = vpop.f32.mrf.mxu0
        %v3579 = vadd.f32 %v1135, %v3578
        %v3580 = vpop.f32.mrf.mxu0
        %v3581 = vadd.f32 %v1131, %v3580
        %v3582 = vpop.f32.mrf.mxu0
        %v3583 = vadd.f32 %v1135, %v3582
        %3584 = vdwg.mxu0
        %3585 = vmatprep.subr.bf16.mxu0 0
        %3586 = vmatpush1.bf16.msra.mxu0 0
        %3587 = vmatprep.subr.bf16.mxu0 0
        %3588 = vmatpush1.bf16.msra.mxu0 0
        %3589 = vmatprep.subr.bf16.mxu0 0
        %3590 = vmatpush1.bf16.msra.mxu0 0
        %3591 = vmatprep.subr.bf16.mxu0 0
        %3592 = vmatpush1.bf16.msra.mxu0 0
        %3593 = vmatprep.subr.bf16.mxu0 0
        %3594 = vmatpush1.bf16.msra.mxu0 0
        %3595 = vmatprep.subr.bf16.mxu0 0
        %3596 = vmatpush1.bf16.msra.mxu0 0
        %3597 = vmatprep.subr.bf16.mxu0 %v2583
        %3598 = vmatpush1.bf16.msra.mxu0 %v2582
        %3599 = vmatprep.subr.bf16.mxu0 %v2455
        %3600 = vmatpush1.bf16.msra.mxu0 %v2454
        %3601 = vmatprep.subr.bf16.mxu0 0
        %3602 = vmatpush2.bf16.msra.mxu0 0
        %3603 = vmatprep.subr.bf16.mxu0 0
        %3604 = vmatpush2.bf16.msra.mxu0 0
        %3605 = vmatprep.subr.bf16.mxu0 0
        %3606 = vmatpush2.bf16.msra.mxu0 0
        %3607 = vmatprep.subr.bf16.mxu0 0
        %3608 = vmatpush2.bf16.msra.mxu0 0
        %3609 = vmatprep.subr.bf16.mxu0 0
        %3610 = vmatpush2.bf16.msra.mxu0 0
        %3611 = vmatprep.subr.bf16.mxu0 0
        %3612 = vmatpush2.bf16.msra.mxu0 0
        %3613 = vmatprep.subr.bf16.mxu0 0
        %3614 = vmatpush2.bf16.msra.mxu0 0
        %3615 = vmatprep.subr.bf16.mxu0 0
        %3616 = vmatpush2.bf16.msra.mxu0 0
        %3617 = vmatprep.mubr.bf16.mxu0 0
        %3618 = vmatmul.mubr.bf16.gmra.mxu0 %v2938
        %v3619 = vpop.f32.mrf.mxu0
        %v3620 = vadd.f32 %v1139, %v3619
        %v3621 = vpop.f32.mrf.mxu0
        %v3622 = vadd.f32 %v1143, %v3621
        %v3623 = vpop.f32.mrf.mxu0
        %v3624 = vadd.f32 %v1139, %v3623
        %v3625 = vpop.f32.mrf.mxu0
        %v3626 = vadd.f32 %v1143, %v3625
        %3627 = vdwg.mxu0
        %3628 = vmatprep.subr.bf16.mxu0 0
        %3629 = vmatpush1.bf16.msra.mxu0 0
        %3630 = vmatprep.subr.bf16.mxu0 0
        %3631 = vmatpush1.bf16.msra.mxu0 0
        %3632 = vmatprep.subr.bf16.mxu0 0
        %3633 = vmatpush1.bf16.msra.mxu0 0
        %3634 = vmatprep.subr.bf16.mxu0 0
        %3635 = vmatpush1.bf16.msra.mxu0 0
        %3636 = vmatprep.subr.bf16.mxu0 0
        %3637 = vmatpush1.bf16.msra.mxu0 0
        %3638 = vmatprep.subr.bf16.mxu0 0
        %3639 = vmatpush1.bf16.msra.mxu0 0
        %3640 = vmatprep.subr.bf16.mxu0 %v2585
        %3641 = vmatpush1.bf16.msra.mxu0 %v2584
        %3642 = vmatprep.subr.bf16.mxu0 %v2457
        %3643 = vmatpush1.bf16.msra.mxu0 %v2456
        %3644 = vmatprep.subr.bf16.mxu0 0
        %3645 = vmatpush2.bf16.msra.mxu0 0
        %3646 = vmatprep.subr.bf16.mxu0 0
        %3647 = vmatpush2.bf16.msra.mxu0 0
        %3648 = vmatprep.subr.bf16.mxu0 0
        %3649 = vmatpush2.bf16.msra.mxu0 0
        %3650 = vmatprep.subr.bf16.mxu0 0
        %3651 = vmatpush2.bf16.msra.mxu0 0
        %3652 = vmatprep.subr.bf16.mxu0 0
        %3653 = vmatpush2.bf16.msra.mxu0 0
        %3654 = vmatprep.subr.bf16.mxu0 0
        %3655 = vmatpush2.bf16.msra.mxu0 0
        %3656 = vmatprep.subr.bf16.mxu0 0
        %3657 = vmatpush2.bf16.msra.mxu0 0
        %3658 = vmatprep.subr.bf16.mxu0 0
        %3659 = vmatpush2.bf16.msra.mxu0 0
        %3660 = vmatprep.mubr.bf16.mxu0 0
        %3661 = vmatmul.mubr.bf16.gmra.mxu0 %v2938
        %v3662 = vpop.f32.mrf.mxu0
        %v3663 = vadd.f32 %v1147, %v3662
        %v3664 = vpop.f32.mrf.mxu0
        %v3665 = vadd.f32 %v1151, %v3664
        %v3666 = vpop.f32.mrf.mxu0
        %v3667 = vadd.f32 %v1147, %v3666
        %v3668 = vpop.f32.mrf.mxu0
        %v3669 = vadd.f32 %v1151, %v3668
        %3670 = vdwg.mxu0
        %3671 = vmatprep.subr.bf16.mxu0 0
        %3672 = vmatpush1.bf16.msra.mxu0 0
        %3673 = vmatprep.subr.bf16.mxu0 0
        %3674 = vmatpush1.bf16.msra.mxu0 0
        %3675 = vmatprep.subr.bf16.mxu0 0
        %3676 = vmatpush1.bf16.msra.mxu0 0
        %3677 = vmatprep.subr.bf16.mxu0 0
        %3678 = vmatpush1.bf16.msra.mxu0 0
        %3679 = vmatprep.subr.bf16.mxu0 0
        %3680 = vmatpush1.bf16.msra.mxu0 0
        %3681 = vmatprep.subr.bf16.mxu0 0
        %3682 = vmatpush1.bf16.msra.mxu0 0
        %3683 = vmatprep.subr.bf16.mxu0 %v2587
        %3684 = vmatpush1.bf16.msra.mxu0 %v2586
        %3685 = vmatprep.subr.bf16.mxu0 %v2459
        %3686 = vmatpush1.bf16.msra.mxu0 %v2458
        %3687 = vmatprep.subr.bf16.mxu0 0
        %3688 = vmatpush2.bf16.msra.mxu0 0
        %3689 = vmatprep.subr.bf16.mxu0 0
        %3690 = vmatpush2.bf16.msra.mxu0 0
        %3691 = vmatprep.subr.bf16.mxu0 0
        %3692 = vmatpush2.bf16.msra.mxu0 0
        %3693 = vmatprep.subr.bf16.mxu0 0
        %3694 = vmatpush2.bf16.msra.mxu0 0
        %3695 = vmatprep.subr.bf16.mxu0 0
        %3696 = vmatpush2.bf16.msra.mxu0 0
        %3697 = vmatprep.subr.bf16.mxu0 0
        %3698 = vmatpush2.bf16.msra.mxu0 0
        %3699 = vmatprep.subr.bf16.mxu0 0
        %3700 = vmatpush2.bf16.msra.mxu0 0
        %3701 = vmatprep.subr.bf16.mxu0 0
        %3702 = vmatpush2.bf16.msra.mxu0 0
        %3703 = vmatprep.mubr.bf16.mxu0 0
        %3704 = vmatmul.mubr.bf16.gmra.mxu0 %v2938
        %v3705 = vpop.f32.mrf.mxu0
        %v3706 = vadd.f32 %v1155, %v3705
        %v3707 = vpop.f32.mrf.mxu0
        %v3708 = vadd.f32 %v1159, %v3707
        %v3709 = vpop.f32.mrf.mxu0
        %v3710 = vadd.f32 %v1155, %v3709
        %v3711 = vpop.f32.mrf.mxu0
        %v3712 = vadd.f32 %v1159, %v3711
        %3713 = vdwg.mxu0
        %3714 = vmatprep.subr.bf16.mxu0 0
        %3715 = vmatpush1.bf16.msra.mxu0 0
        %3716 = vmatprep.subr.bf16.mxu0 0
        %3717 = vmatpush1.bf16.msra.mxu0 0
        %3718 = vmatprep.subr.bf16.mxu0 0
        %3719 = vmatpush1.bf16.msra.mxu0 0
        %3720 = vmatprep.subr.bf16.mxu0 0
        %3721 = vmatpush1.bf16.msra.mxu0 0
        %3722 = vmatprep.subr.bf16.mxu0 0
        %3723 = vmatpush1.bf16.msra.mxu0 0
        %3724 = vmatprep.subr.bf16.mxu0 0
        %3725 = vmatpush1.bf16.msra.mxu0 0
        %3726 = vmatprep.subr.bf16.mxu0 %v2589
        %3727 = vmatpush1.bf16.msra.mxu0 %v2588
        %3728 = vmatprep.subr.bf16.mxu0 %v2461
        %3729 = vmatpush1.bf16.msra.mxu0 %v2460
        %3730 = vmatprep.subr.bf16.mxu0 0
        %3731 = vmatpush2.bf16.msra.mxu0 0
        %3732 = vmatprep.subr.bf16.mxu0 0
        %3733 = vmatpush2.bf16.msra.mxu0 0
        %3734 = vmatprep.subr.bf16.mxu0 0
        %3735 = vmatpush2.bf16.msra.mxu0 0
        %3736 = vmatprep.subr.bf16.mxu0 0
        %3737 = vmatpush2.bf16.msra.mxu0 0
        %3738 = vmatprep.subr.bf16.mxu0 0
        %3739 = vmatpush2.bf16.msra.mxu0 0
        %3740 = vmatprep.subr.bf16.mxu0 0
        %3741 = vmatpush2.bf16.msra.mxu0 0
        %3742 = vmatprep.subr.bf16.mxu0 0
        %3743 = vmatpush2.bf16.msra.mxu0 0
        %3744 = vmatprep.subr.bf16.mxu0 0
        %3745 = vmatpush2.bf16.msra.mxu0 0
        %3746 = vmatprep.mubr.bf16.mxu0 0
        %3747 = vmatmul.mubr.bf16.gmra.mxu0 %v2938
        %v3748 = vpop.f32.mrf.mxu0
        %v3749 = vadd.f32 %v1163, %v3748
        %v3750 = vpop.f32.mrf.mxu0
        %v3751 = vadd.f32 %v1167, %v3750
        %v3752 = vpop.f32.mrf.mxu0
        %v3753 = vadd.f32 %v1163, %v3752
        %v3754 = vpop.f32.mrf.mxu0
        %v3755 = vadd.f32 %v1167, %v3754
        %3756 = vdwg.mxu0
        %3757 = vmatprep.subr.bf16.mxu0 0
        %3758 = vmatpush1.bf16.msra.mxu0 0
        %3759 = vmatprep.subr.bf16.mxu0 0
        %3760 = vmatpush1.bf16.msra.mxu0 0
        %3761 = vmatprep.subr.bf16.mxu0 0
        %3762 = vmatpush1.bf16.msra.mxu0 0
        %3763 = vmatprep.subr.bf16.mxu0 0
        %3764 = vmatpush1.bf16.msra.mxu0 0
        %3765 = vmatprep.subr.bf16.mxu0 0
        %3766 = vmatpush1.bf16.msra.mxu0 0
        %3767 = vmatprep.subr.bf16.mxu0 0
        %3768 = vmatpush1.bf16.msra.mxu0 0
        %3769 = vmatprep.subr.bf16.mxu0 %v2591
        %3770 = vmatpush1.bf16.msra.mxu0 %v2590
        %3771 = vmatprep.subr.bf16.mxu0 %v2463
        %3772 = vmatpush1.bf16.msra.mxu0 %v2462
        %3773 = vmatprep.subr.bf16.mxu0 0
        %3774 = vmatpush2.bf16.msra.mxu0 0
        %3775 = vmatprep.subr.bf16.mxu0 0
        %3776 = vmatpush2.bf16.msra.mxu0 0
        %3777 = vmatprep.subr.bf16.mxu0 0
        %3778 = vmatpush2.bf16.msra.mxu0 0
        %3779 = vmatprep.subr.bf16.mxu0 0
        %3780 = vmatpush2.bf16.msra.mxu0 0
        %3781 = vmatprep.subr.bf16.mxu0 0
        %3782 = vmatpush2.bf16.msra.mxu0 0
        %3783 = vmatprep.subr.bf16.mxu0 0
        %3784 = vmatpush2.bf16.msra.mxu0 0
        %3785 = vmatprep.subr.bf16.mxu0 0
        %3786 = vmatpush2.bf16.msra.mxu0 0
        %3787 = vmatprep.subr.bf16.mxu0 0
        %3788 = vmatpush2.bf16.msra.mxu0 0
        %3789 = vmatprep.mubr.bf16.mxu0 0
        %3790 = vmatmul.mubr.bf16.gmra.mxu0 %v2938
        %v3791 = vpop.f32.mrf.mxu0
        %v3792 = vadd.f32 %v1171, %v3791
        %v3793 = vpop.f32.mrf.mxu0
        %v3794 = vadd.f32 %v1175, %v3793
        %v3795 = vpop.f32.mrf.mxu0
        %v3796 = vadd.f32 %v1171, %v3795
        %v3797 = vpop.f32.mrf.mxu0
        %v3798 = vadd.f32 %v1175, %v3797
        %3799 = vdwg.mxu0
        %3800 = vmatprep.subr.bf16.mxu0 0
        %3801 = vmatpush1.bf16.msra.mxu0 0
        %3802 = vmatprep.subr.bf16.mxu0 0
        %3803 = vmatpush1.bf16.msra.mxu0 0
        %3804 = vmatprep.subr.bf16.mxu0 0
        %3805 = vmatpush1.bf16.msra.mxu0 0
        %3806 = vmatprep.subr.bf16.mxu0 0
        %3807 = vmatpush1.bf16.msra.mxu0 0
        %3808 = vmatprep.subr.bf16.mxu0 0
        %3809 = vmatpush1.bf16.msra.mxu0 0
        %3810 = vmatprep.subr.bf16.mxu0 0
        %3811 = vmatpush1.bf16.msra.mxu0 0
        %3812 = vmatprep.subr.bf16.mxu0 %v2593
        %3813 = vmatpush1.bf16.msra.mxu0 %v2592
        %3814 = vmatprep.subr.bf16.mxu0 %v2465
        %3815 = vmatpush1.bf16.msra.mxu0 %v2464
        %3816 = vmatprep.subr.bf16.mxu0 0
        %3817 = vmatpush2.bf16.msra.mxu0 0
        %3818 = vmatprep.subr.bf16.mxu0 0
        %3819 = vmatpush2.bf16.msra.mxu0 0
        %3820 = vmatprep.subr.bf16.mxu0 0
        %3821 = vmatpush2.bf16.msra.mxu0 0
        %3822 = vmatprep.subr.bf16.mxu0 0
        %3823 = vmatpush2.bf16.msra.mxu0 0
        %3824 = vmatprep.subr.bf16.mxu0 0
        %3825 = vmatpush2.bf16.msra.mxu0 0
        %3826 = vmatprep.subr.bf16.mxu0 0
        %3827 = vmatpush2.bf16.msra.mxu0 0
        %3828 = vmatprep.subr.bf16.mxu0 0
        %3829 = vmatpush2.bf16.msra.mxu0 0
        %3830 = vmatprep.subr.bf16.mxu0 0
        %3831 = vmatpush2.bf16.msra.mxu0 0
        %3832 = vmatprep.mubr.bf16.mxu0 0
        %3833 = vmatmul.mubr.bf16.gmra.mxu0 %v2938
        %v3834 = vpop.f32.mrf.mxu0
        %v3835 = vadd.f32 %v1179, %v3834
        %v3836 = vpop.f32.mrf.mxu0
        %v3837 = vadd.f32 %v1183, %v3836
        %v3838 = vpop.f32.mrf.mxu0
        %v3839 = vadd.f32 %v1179, %v3838
        %v3840 = vpop.f32.mrf.mxu0
        %v3841 = vadd.f32 %v1183, %v3840
        %3842 = vdwg.mxu0
        %3843 = vmatprep.subr.bf16.mxu0 0
        %3844 = vmatpush1.bf16.msra.mxu0 0
        %3845 = vmatprep.subr.bf16.mxu0 0
        %3846 = vmatpush1.bf16.msra.mxu0 0
        %3847 = vmatprep.subr.bf16.mxu0 0
        %3848 = vmatpush1.bf16.msra.mxu0 0
        %3849 = vmatprep.subr.bf16.mxu0 0
        %3850 = vmatpush1.bf16.msra.mxu0 0
        %3851 = vmatprep.subr.bf16.mxu0 0
        %3852 = vmatpush1.bf16.msra.mxu0 0
        %3853 = vmatprep.subr.bf16.mxu0 0
        %3854 = vmatpush1.bf16.msra.mxu0 0
        %3855 = vmatprep.subr.bf16.mxu0 %v2595
        %3856 = vmatpush1.bf16.msra.mxu0 %v2594
        %3857 = vmatprep.subr.bf16.mxu0 %v2467
        %3858 = vmatpush1.bf16.msra.mxu0 %v2466
        %3859 = vmatprep.subr.bf16.mxu0 0
        %3860 = vmatpush2.bf16.msra.mxu0 0
        %3861 = vmatprep.subr.bf16.mxu0 0
        %3862 = vmatpush2.bf16.msra.mxu0 0
        %3863 = vmatprep.subr.bf16.mxu0 0
        %3864 = vmatpush2.bf16.msra.mxu0 0
        %3865 = vmatprep.subr.bf16.mxu0 0
        %3866 = vmatpush2.bf16.msra.mxu0 0
        %3867 = vmatprep.subr.bf16.mxu0 0
        %3868 = vmatpush2.bf16.msra.mxu0 0
        %3869 = vmatprep.subr.bf16.mxu0 0
        %3870 = vmatpush2.bf16.msra.mxu0 0
        %3871 = vmatprep.subr.bf16.mxu0 0
        %3872 = vmatpush2.bf16.msra.mxu0 0
        %3873 = vmatprep.subr.bf16.mxu0 0
        %3874 = vmatpush2.bf16.msra.mxu0 0
        %3875 = vmatprep.mubr.bf16.mxu0 0
        %3876 = vmatmul.mubr.bf16.gmra.mxu0 %v2938
        %v3877 = vpop.f32.mrf.mxu0
        %v3878 = vadd.f32 %v1187, %v3877
        %v3879 = vpop.f32.mrf.mxu0
        %v3880 = vadd.f32 %v1191, %v3879
        %v3881 = vpop.f32.mrf.mxu0
        %v3882 = vadd.f32 %v1187, %v3881
        %v3883 = vpop.f32.mrf.mxu0
        %v3884 = vadd.f32 %v1191, %v3883
        %3885 = vdwg.mxu0
        %3886 = vmatprep.subr.bf16.mxu0 0
        %3887 = vmatpush1.bf16.msra.mxu0 0
        %3888 = vmatprep.subr.bf16.mxu0 0
        %3889 = vmatpush1.bf16.msra.mxu0 0
        %3890 = vmatprep.subr.bf16.mxu0 0
        %3891 = vmatpush1.bf16.msra.mxu0 0
        %3892 = vmatprep.subr.bf16.mxu0 0
        %3893 = vmatpush1.bf16.msra.mxu0 0
        %3894 = vmatprep.subr.bf16.mxu0 0
        %3895 = vmatpush1.bf16.msra.mxu0 0
        %3896 = vmatprep.subr.bf16.mxu0 0
        %3897 = vmatpush1.bf16.msra.mxu0 0
        %3898 = vmatprep.subr.bf16.mxu0 %v2597
        %3899 = vmatpush1.bf16.msra.mxu0 %v2596
        %3900 = vmatprep.subr.bf16.mxu0 %v2469
        %3901 = vmatpush1.bf16.msra.mxu0 %v2468
        %3902 = vmatprep.subr.bf16.mxu0 0
        %3903 = vmatpush2.bf16.msra.mxu0 0
        %3904 = vmatprep.subr.bf16.mxu0 0
        %3905 = vmatpush2.bf16.msra.mxu0 0
        %3906 = vmatprep.subr.bf16.mxu0 0
        %3907 = vmatpush2.bf16.msra.mxu0 0
        %3908 = vmatprep.subr.bf16.mxu0 0
        %3909 = vmatpush2.bf16.msra.mxu0 0
        %3910 = vmatprep.subr.bf16.mxu0 0
        %3911 = vmatpush2.bf16.msra.mxu0 0
        %3912 = vmatprep.subr.bf16.mxu0 0
        %3913 = vmatpush2.bf16.msra.mxu0 0
        %3914 = vmatprep.subr.bf16.mxu0 0
        %3915 = vmatpush2.bf16.msra.mxu0 0
        %3916 = vmatprep.subr.bf16.mxu0 0
        %3917 = vmatpush2.bf16.msra.mxu0 0
        %3918 = vmatprep.mubr.bf16.mxu0 0
        %3919 = vmatmul.mubr.bf16.gmra.mxu0 %v2938
        %v3920 = vpop.f32.mrf.mxu0
        %v3921 = vadd.f32 %v1195, %v3920
        %v3922 = vpop.f32.mrf.mxu0
        %v3923 = vadd.f32 %v1199, %v3922
        %v3924 = vpop.f32.mrf.mxu0
        %v3925 = vadd.f32 %v1195, %v3924
        %v3926 = vpop.f32.mrf.mxu0
        %v3927 = vadd.f32 %v1199, %v3926
        %3928 = vdwg.mxu0
        %3929 = vmatprep.subr.bf16.mxu0 0
        %3930 = vmatpush1.bf16.msra.mxu0 0
        %3931 = vmatprep.subr.bf16.mxu0 0
        %3932 = vmatpush1.bf16.msra.mxu0 0
        %3933 = vmatprep.subr.bf16.mxu0 0
        %3934 = vmatpush1.bf16.msra.mxu0 0
        %3935 = vmatprep.subr.bf16.mxu0 0
        %3936 = vmatpush1.bf16.msra.mxu0 0
        %3937 = vmatprep.subr.bf16.mxu0 0
        %3938 = vmatpush1.bf16.msra.mxu0 0
        %3939 = vmatprep.subr.bf16.mxu0 0
        %3940 = vmatpush1.bf16.msra.mxu0 0
        %3941 = vmatprep.subr.bf16.mxu0 %v2599
        %3942 = vmatpush1.bf16.msra.mxu0 %v2598
        %3943 = vmatprep.subr.bf16.mxu0 %v2471
        %3944 = vmatpush1.bf16.msra.mxu0 %v2470
        %3945 = vmatprep.subr.bf16.mxu0 0
        %3946 = vmatpush2.bf16.msra.mxu0 0
        %3947 = vmatprep.subr.bf16.mxu0 0
        %3948 = vmatpush2.bf16.msra.mxu0 0
        %3949 = vmatprep.subr.bf16.mxu0 0
        %3950 = vmatpush2.bf16.msra.mxu0 0
        %3951 = vmatprep.subr.bf16.mxu0 0
        %3952 = vmatpush2.bf16.msra.mxu0 0
        %3953 = vmatprep.subr.bf16.mxu0 0
        %3954 = vmatpush2.bf16.msra.mxu0 0
        %3955 = vmatprep.subr.bf16.mxu0 0
        %3956 = vmatpush2.bf16.msra.mxu0 0
        %3957 = vmatprep.subr.bf16.mxu0 0
        %3958 = vmatpush2.bf16.msra.mxu0 0
        %3959 = vmatprep.subr.bf16.mxu0 0
        %3960 = vmatpush2.bf16.msra.mxu0 0
        %3961 = vmatprep.mubr.bf16.mxu0 0
        %3962 = vmatmul.mubr.bf16.gmra.mxu0 %v2938
        %v3963 = vpop.f32.mrf.mxu0
        %v3964 = vadd.f32 %v1203, %v3963
        %v3965 = vpop.f32.mrf.mxu0
        %v3966 = vadd.f32 %v1207, %v3965
        %v3967 = vpop.f32.mrf.mxu0
        %v3968 = vadd.f32 %v1203, %v3967
        %v3969 = vpop.f32.mrf.mxu0
        %v3970 = vadd.f32 %v1207, %v3969
        %3971 = vdwg.mxu0
        %3972 = vmatprep.subr.bf16.mxu0 0
        %3973 = vmatpush1.bf16.msra.mxu0 0
        %3974 = vmatprep.subr.bf16.mxu0 0
        %3975 = vmatpush1.bf16.msra.mxu0 0
        %3976 = vmatprep.subr.bf16.mxu0 0
        %3977 = vmatpush1.bf16.msra.mxu0 0
        %3978 = vmatprep.subr.bf16.mxu0 0
        %3979 = vmatpush1.bf16.msra.mxu0 0
        %3980 = vmatprep.subr.bf16.mxu0 0
        %3981 = vmatpush1.bf16.msra.mxu0 0
        %3982 = vmatprep.subr.bf16.mxu0 0
        %3983 = vmatpush1.bf16.msra.mxu0 0
        %3984 = vmatprep.subr.bf16.mxu0 %v2601
        %3985 = vmatpush1.bf16.msra.mxu0 %v2600
        %3986 = vmatprep.subr.bf16.mxu0 %v2473
        %3987 = vmatpush1.bf16.msra.mxu0 %v2472
        %3988 = vmatprep.subr.bf16.mxu0 0
        %3989 = vmatpush2.bf16.msra.mxu0 0
        %3990 = vmatprep.subr.bf16.mxu0 0
        %3991 = vmatpush2.bf16.msra.mxu0 0
        %3992 = vmatprep.subr.bf16.mxu0 0
        %3993 = vmatpush2.bf16.msra.mxu0 0
        %3994 = vmatprep.subr.bf16.mxu0 0
        %3995 = vmatpush2.bf16.msra.mxu0 0
        %3996 = vmatprep.subr.bf16.mxu0 0
        %3997 = vmatpush2.bf16.msra.mxu0 0
        %3998 = vmatprep.subr.bf16.mxu0 0
        %3999 = vmatpush2.bf16.msra.mxu0 0
        %4000 = vmatprep.subr.bf16.mxu0 0
        %4001 = vmatpush2.bf16.msra.mxu0 0
        %4002 = vmatprep.subr.bf16.mxu0 0
        %4003 = vmatpush2.bf16.msra.mxu0 0
        %4004 = vmatprep.mubr.bf16.mxu0 0
        %4005 = vmatmul.mubr.bf16.gmra.mxu0 %v2938
        %v4006 = vpop.f32.mrf.mxu0
        %v4007 = vadd.f32 %v1211, %v4006
        %v4008 = vpop.f32.mrf.mxu0
        %v4009 = vadd.f32 %v1215, %v4008
        %v4010 = vpop.f32.mrf.mxu0
        %v4011 = vadd.f32 %v1211, %v4010
        %v4012 = vpop.f32.mrf.mxu0
        %v4013 = vadd.f32 %v1215, %v4012
        %4014 = vdwg.mxu0
        %4015 = vmatprep.subr.bf16.mxu0 0
        %4016 = vmatpush1.bf16.msra.mxu0 0
        %4017 = vmatprep.subr.bf16.mxu0 0
        %4018 = vmatpush1.bf16.msra.mxu0 0
        %4019 = vmatprep.subr.bf16.mxu0 0
        %4020 = vmatpush1.bf16.msra.mxu0 0
        %4021 = vmatprep.subr.bf16.mxu0 0
        %4022 = vmatpush1.bf16.msra.mxu0 0
        %4023 = vmatprep.subr.bf16.mxu0 0
        %4024 = vmatpush1.bf16.msra.mxu0 0
        %4025 = vmatprep.subr.bf16.mxu0 0
        %4026 = vmatpush1.bf16.msra.mxu0 0
        %4027 = vmatprep.subr.bf16.mxu0 %v2603
        %4028 = vmatpush1.bf16.msra.mxu0 %v2602
        %4029 = vmatprep.subr.bf16.mxu0 %v2475
        %4030 = vmatpush1.bf16.msra.mxu0 %v2474
        %4031 = vmatprep.subr.bf16.mxu0 0
        %4032 = vmatpush2.bf16.msra.mxu0 0
        %4033 = vmatprep.subr.bf16.mxu0 0
        %4034 = vmatpush2.bf16.msra.mxu0 0
        %4035 = vmatprep.subr.bf16.mxu0 0
        %4036 = vmatpush2.bf16.msra.mxu0 0
        %4037 = vmatprep.subr.bf16.mxu0 0
        %4038 = vmatpush2.bf16.msra.mxu0 0
        %4039 = vmatprep.subr.bf16.mxu0 0
        %4040 = vmatpush2.bf16.msra.mxu0 0
        %4041 = vmatprep.subr.bf16.mxu0 0
        %4042 = vmatpush2.bf16.msra.mxu0 0
        %4043 = vmatprep.subr.bf16.mxu0 0
        %4044 = vmatpush2.bf16.msra.mxu0 0
        %4045 = vmatprep.subr.bf16.mxu0 0
        %4046 = vmatpush2.bf16.msra.mxu0 0
        %4047 = vmatprep.mubr.bf16.mxu0 0
        %4048 = vmatmul.mubr.bf16.gmra.mxu0 %v2938
        %v4049 = vpop.f32.mrf.mxu0
        %v4050 = vadd.f32 %v1219, %v4049
        %v4051 = vpop.f32.mrf.mxu0
        %v4052 = vadd.f32 %v1223, %v4051
        %v4053 = vpop.f32.mrf.mxu0
        %v4054 = vadd.f32 %v1219, %v4053
        %v4055 = vpop.f32.mrf.mxu0
        %v4056 = vadd.f32 %v1223, %v4055
        %4057 = vdwg.mxu0
        %4058 = vmatprep.subr.bf16.mxu0 0
        %4059 = vmatpush1.bf16.msra.mxu0 0
        %4060 = vmatprep.subr.bf16.mxu0 0
        %4061 = vmatpush1.bf16.msra.mxu0 0
        %4062 = vmatprep.subr.bf16.mxu0 0
        %4063 = vmatpush1.bf16.msra.mxu0 0
        %4064 = vmatprep.subr.bf16.mxu0 0
        %4065 = vmatpush1.bf16.msra.mxu0 0
        %4066 = vmatprep.subr.bf16.mxu0 0
        %4067 = vmatpush1.bf16.msra.mxu0 0
        %4068 = vmatprep.subr.bf16.mxu0 0
        %4069 = vmatpush1.bf16.msra.mxu0 0
        %4070 = vmatprep.subr.bf16.mxu0 %v2605
        %4071 = vmatpush1.bf16.msra.mxu0 %v2604
        %4072 = vmatprep.subr.bf16.mxu0 %v2477
        %4073 = vmatpush1.bf16.msra.mxu0 %v2476
        %4074 = vmatprep.subr.bf16.mxu0 0
        %4075 = vmatpush2.bf16.msra.mxu0 0
        %4076 = vmatprep.subr.bf16.mxu0 0
        %4077 = vmatpush2.bf16.msra.mxu0 0
        %4078 = vmatprep.subr.bf16.mxu0 0
        %4079 = vmatpush2.bf16.msra.mxu0 0
        %4080 = vmatprep.subr.bf16.mxu0 0
        %4081 = vmatpush2.bf16.msra.mxu0 0
        %4082 = vmatprep.subr.bf16.mxu0 0
        %4083 = vmatpush2.bf16.msra.mxu0 0
        %4084 = vmatprep.subr.bf16.mxu0 0
        %4085 = vmatpush2.bf16.msra.mxu0 0
        %4086 = vmatprep.subr.bf16.mxu0 0
        %4087 = vmatpush2.bf16.msra.mxu0 0
        %4088 = vmatprep.subr.bf16.mxu0 0
        %4089 = vmatpush2.bf16.msra.mxu0 0
        %4090 = vmatprep.mubr.bf16.mxu0 0
        %4091 = vmatmul.mubr.bf16.gmra.mxu0 %v2938
        %v4092 = vpop.f32.mrf.mxu0
        %v4093 = vadd.f32 %v1227, %v4092
        %v4094 = vpop.f32.mrf.mxu0
        %v4095 = vadd.f32 %v1231, %v4094
        %v4096 = vpop.f32.mrf.mxu0
        %v4097 = vadd.f32 %v1227, %v4096
        %v4098 = vpop.f32.mrf.mxu0
        %v4099 = vadd.f32 %v1231, %v4098
        %4100 = vdwg.mxu0
        %4101 = vmatprep.subr.bf16.mxu0 0
        %4102 = vmatpush1.bf16.msra.mxu0 0
        %4103 = vmatprep.subr.bf16.mxu0 0
        %4104 = vmatpush1.bf16.msra.mxu0 0
        %4105 = vmatprep.subr.bf16.mxu0 0
        %4106 = vmatpush1.bf16.msra.mxu0 0
        %4107 = vmatprep.subr.bf16.mxu0 0
        %4108 = vmatpush1.bf16.msra.mxu0 0
        %4109 = vmatprep.subr.bf16.mxu0 0
        %4110 = vmatpush1.bf16.msra.mxu0 0
        %4111 = vmatprep.subr.bf16.mxu0 0
        %4112 = vmatpush1.bf16.msra.mxu0 0
        %4113 = vmatprep.subr.bf16.mxu0 %v2607
        %4114 = vmatpush1.bf16.msra.mxu0 %v2606
        %4115 = vmatprep.subr.bf16.mxu0 %v2479
        %4116 = vmatpush1.bf16.msra.mxu0 %v2478
        %4117 = vmatprep.subr.bf16.mxu0 0
        %4118 = vmatpush2.bf16.msra.mxu0 0
        %4119 = vmatprep.subr.bf16.mxu0 0
        %4120 = vmatpush2.bf16.msra.mxu0 0
        %4121 = vmatprep.subr.bf16.mxu0 0
        %4122 = vmatpush2.bf16.msra.mxu0 0
        %4123 = vmatprep.subr.bf16.mxu0 0
        %4124 = vmatpush2.bf16.msra.mxu0 0
        %4125 = vmatprep.subr.bf16.mxu0 0
        %4126 = vmatpush2.bf16.msra.mxu0 0
        %4127 = vmatprep.subr.bf16.mxu0 0
        %4128 = vmatpush2.bf16.msra.mxu0 0
        %4129 = vmatprep.subr.bf16.mxu0 0
        %4130 = vmatpush2.bf16.msra.mxu0 0
        %4131 = vmatprep.subr.bf16.mxu0 0
        %4132 = vmatpush2.bf16.msra.mxu0 0
        %4133 = vmatprep.mubr.bf16.mxu0 0
        %4134 = vmatmul.mubr.bf16.gmra.mxu0 %v2938
        %v4135 = vpop.f32.mrf.mxu0
        %v4136 = vadd.f32 %v1235, %v4135
        %v4137 = vpop.f32.mrf.mxu0
        %v4138 = vadd.f32 %v1239, %v4137
        %v4139 = vpop.f32.mrf.mxu0
        %v4140 = vadd.f32 %v1235, %v4139
        %v4141 = vpop.f32.mrf.mxu0
        %v4142 = vadd.f32 %v1239, %v4141
        %4143 = vdwg.mxu0
        %4144 = vmatprep.subr.bf16.mxu0 0
        %4145 = vmatpush1.bf16.msra.mxu0 0
        %4146 = vmatprep.subr.bf16.mxu0 0
        %4147 = vmatpush1.bf16.msra.mxu0 0
        %4148 = vmatprep.subr.bf16.mxu0 0
        %4149 = vmatpush1.bf16.msra.mxu0 0
        %4150 = vmatprep.subr.bf16.mxu0 0
        %4151 = vmatpush1.bf16.msra.mxu0 0
        %4152 = vmatprep.subr.bf16.mxu0 0
        %4153 = vmatpush1.bf16.msra.mxu0 0
        %4154 = vmatprep.subr.bf16.mxu0 0
        %4155 = vmatpush1.bf16.msra.mxu0 0
        %4156 = vmatprep.subr.bf16.mxu0 %v2609
        %4157 = vmatpush1.bf16.msra.mxu0 %v2608
        %4158 = vmatprep.subr.bf16.mxu0 %v2481
        %4159 = vmatpush1.bf16.msra.mxu0 %v2480
        %4160 = vmatprep.subr.bf16.mxu0 0
        %4161 = vmatpush2.bf16.msra.mxu0 0
        %4162 = vmatprep.subr.bf16.mxu0 0
        %4163 = vmatpush2.bf16.msra.mxu0 0
        %4164 = vmatprep.subr.bf16.mxu0 0
        %4165 = vmatpush2.bf16.msra.mxu0 0
        %4166 = vmatprep.subr.bf16.mxu0 0
        %4167 = vmatpush2.bf16.msra.mxu0 0
        %4168 = vmatprep.subr.bf16.mxu0 0
        %4169 = vmatpush2.bf16.msra.mxu0 0
        %4170 = vmatprep.subr.bf16.mxu0 0
        %4171 = vmatpush2.bf16.msra.mxu0 0
        %4172 = vmatprep.subr.bf16.mxu0 0
        %4173 = vmatpush2.bf16.msra.mxu0 0
        %4174 = vmatprep.subr.bf16.mxu0 0
        %4175 = vmatpush2.bf16.msra.mxu0 0
        %4176 = vmatprep.mubr.bf16.mxu0 0
        %4177 = vmatmul.mubr.bf16.gmra.mxu0 %v2938
        %v4178 = vpop.f32.mrf.mxu0
        %v4179 = vadd.f32 %v1243, %v4178
        %v4180 = vpop.f32.mrf.mxu0
        %v4181 = vadd.f32 %v1247, %v4180
        %v4182 = vpop.f32.mrf.mxu0
        %v4183 = vadd.f32 %v1243, %v4182
        %v4184 = vpop.f32.mrf.mxu0
        %v4185 = vadd.f32 %v1247, %v4184
        %4186 = vdwg.mxu0
        %4187 = vmatprep.subr.bf16.mxu0 0
        %4188 = vmatpush1.bf16.msra.mxu0 0
        %4189 = vmatprep.subr.bf16.mxu0 0
        %4190 = vmatpush1.bf16.msra.mxu0 0
        %4191 = vmatprep.subr.bf16.mxu0 0
        %4192 = vmatpush1.bf16.msra.mxu0 0
        %4193 = vmatprep.subr.bf16.mxu0 0
        %4194 = vmatpush1.bf16.msra.mxu0 0
        %4195 = vmatprep.subr.bf16.mxu0 0
        %4196 = vmatpush1.bf16.msra.mxu0 0
        %4197 = vmatprep.subr.bf16.mxu0 0
        %4198 = vmatpush1.bf16.msra.mxu0 0
        %4199 = vmatprep.subr.bf16.mxu0 %v2611
        %4200 = vmatpush1.bf16.msra.mxu0 %v2610
        %4201 = vmatprep.subr.bf16.mxu0 %v2483
        %4202 = vmatpush1.bf16.msra.mxu0 %v2482
        %4203 = vmatprep.subr.bf16.mxu0 0
        %4204 = vmatpush2.bf16.msra.mxu0 0
        %4205 = vmatprep.subr.bf16.mxu0 0
        %4206 = vmatpush2.bf16.msra.mxu0 0
        %4207 = vmatprep.subr.bf16.mxu0 0
        %4208 = vmatpush2.bf16.msra.mxu0 0
        %4209 = vmatprep.subr.bf16.mxu0 0
        %4210 = vmatpush2.bf16.msra.mxu0 0
        %4211 = vmatprep.subr.bf16.mxu0 0
        %4212 = vmatpush2.bf16.msra.mxu0 0
        %4213 = vmatprep.subr.bf16.mxu0 0
        %4214 = vmatpush2.bf16.msra.mxu0 0
        %4215 = vmatprep.subr.bf16.mxu0 0
        %4216 = vmatpush2.bf16.msra.mxu0 0
        %4217 = vmatprep.subr.bf16.mxu0 0
        %4218 = vmatpush2.bf16.msra.mxu0 0
        %4219 = vmatprep.mubr.bf16.mxu0 0
        %4220 = vmatmul.mubr.bf16.gmra.mxu0 %v2938
        %v4221 = vpop.f32.mrf.mxu0
        %v4222 = vadd.f32 %v1251, %v4221
        %v4223 = vpop.f32.mrf.mxu0
        %v4224 = vadd.f32 %v1255, %v4223
        %v4225 = vpop.f32.mrf.mxu0
        %v4226 = vadd.f32 %v1251, %v4225
        %v4227 = vpop.f32.mrf.mxu0
        %v4228 = vadd.f32 %v1255, %v4227
        %4229 = vdwg.mxu0
        %4230 = vmatprep.subr.bf16.mxu0 0
        %4231 = vmatpush1.bf16.msra.mxu0 0
        %4232 = vmatprep.subr.bf16.mxu0 0
        %4233 = vmatpush1.bf16.msra.mxu0 0
        %4234 = vmatprep.subr.bf16.mxu0 0
        %4235 = vmatpush1.bf16.msra.mxu0 0
        %4236 = vmatprep.subr.bf16.mxu0 0
        %4237 = vmatpush1.bf16.msra.mxu0 0
        %4238 = vmatprep.subr.bf16.mxu0 0
        %4239 = vmatpush1.bf16.msra.mxu0 0
        %4240 = vmatprep.subr.bf16.mxu0 0
        %4241 = vmatpush1.bf16.msra.mxu0 0
        %4242 = vmatprep.subr.bf16.mxu0 %v2613
        %4243 = vmatpush1.bf16.msra.mxu0 %v2612
        %4244 = vmatprep.subr.bf16.mxu0 %v2485
        %4245 = vmatpush1.bf16.msra.mxu0 %v2484
        %4246 = vmatprep.subr.bf16.mxu0 0
        %4247 = vmatpush2.bf16.msra.mxu0 0
        %4248 = vmatprep.subr.bf16.mxu0 0
        %4249 = vmatpush2.bf16.msra.mxu0 0
        %4250 = vmatprep.subr.bf16.mxu0 0
        %4251 = vmatpush2.bf16.msra.mxu0 0
        %4252 = vmatprep.subr.bf16.mxu0 0
        %4253 = vmatpush2.bf16.msra.mxu0 0
        %4254 = vmatprep.subr.bf16.mxu0 0
        %4255 = vmatpush2.bf16.msra.mxu0 0
        %4256 = vmatprep.subr.bf16.mxu0 0
        %4257 = vmatpush2.bf16.msra.mxu0 0
        %4258 = vmatprep.subr.bf16.mxu0 0
        %4259 = vmatpush2.bf16.msra.mxu0 0
        %4260 = vmatprep.subr.bf16.mxu0 0
        %4261 = vmatpush2.bf16.msra.mxu0 0
        %4262 = vmatprep.mubr.bf16.mxu0 0
        %4263 = vmatmul.mubr.bf16.gmra.mxu0 %v2938
        %v4264 = vpop.f32.mrf.mxu0
        %v4265 = vadd.f32 %v1259, %v4264
        %v4266 = vpop.f32.mrf.mxu0
        %v4267 = vadd.f32 %v1263, %v4266
        %v4268 = vpop.f32.mrf.mxu0
        %v4269 = vadd.f32 %v1259, %v4268
        %v4270 = vpop.f32.mrf.mxu0
        %v4271 = vadd.f32 %v1263, %v4270
        %4272 = vdwg.mxu0
        %4273 = vmatprep.subr.bf16.mxu0 0
        %4274 = vmatpush1.bf16.msra.mxu0 0
        %4275 = vmatprep.subr.bf16.mxu0 0
        %4276 = vmatpush1.bf16.msra.mxu0 0
        %4277 = vmatprep.subr.bf16.mxu0 0
        %4278 = vmatpush1.bf16.msra.mxu0 0
        %4279 = vmatprep.subr.bf16.mxu0 0
        %4280 = vmatpush1.bf16.msra.mxu0 0
        %4281 = vmatprep.subr.bf16.mxu0 0
        %4282 = vmatpush1.bf16.msra.mxu0 0
        %4283 = vmatprep.subr.bf16.mxu0 0
        %4284 = vmatpush1.bf16.msra.mxu0 0
        %4285 = vmatprep.subr.bf16.mxu0 %v2615
        %4286 = vmatpush1.bf16.msra.mxu0 %v2614
        %4287 = vmatprep.subr.bf16.mxu0 %v2487
        %4288 = vmatpush1.bf16.msra.mxu0 %v2486
        %4289 = vmatprep.subr.bf16.mxu0 0
        %4290 = vmatpush2.bf16.msra.mxu0 0
        %4291 = vmatprep.subr.bf16.mxu0 0
        %4292 = vmatpush2.bf16.msra.mxu0 0
        %4293 = vmatprep.subr.bf16.mxu0 0
        %4294 = vmatpush2.bf16.msra.mxu0 0
        %4295 = vmatprep.subr.bf16.mxu0 0
        %4296 = vmatpush2.bf16.msra.mxu0 0
        %4297 = vmatprep.subr.bf16.mxu0 0
        %4298 = vmatpush2.bf16.msra.mxu0 0
        %4299 = vmatprep.subr.bf16.mxu0 0
        %4300 = vmatpush2.bf16.msra.mxu0 0
        %4301 = vmatprep.subr.bf16.mxu0 0
        %4302 = vmatpush2.bf16.msra.mxu0 0
        %4303 = vmatprep.subr.bf16.mxu0 0
        %4304 = vmatpush2.bf16.msra.mxu0 0
        %4305 = vmatprep.mubr.bf16.mxu0 0
        %4306 = vmatmul.mubr.bf16.gmra.mxu0 %v2938
        %v4307 = vpop.f32.mrf.mxu0
        %v4308 = vadd.f32 %v1267, %v4307
        %v4309 = vpop.f32.mrf.mxu0
        %v4310 = vadd.f32 %v1271, %v4309
        %v4311 = vpop.f32.mrf.mxu0
        %v4312 = vadd.f32 %v1267, %v4311
        %v4313 = vpop.f32.mrf.mxu0
        %v4314 = vadd.f32 %v1271, %v4313
        %4315 = vdwg.mxu0
        %4316 = vmatprep.subr.bf16.mxu0 0
        %4317 = vmatpush1.bf16.msra.mxu0 0
        %4318 = vmatprep.subr.bf16.mxu0 0
        %4319 = vmatpush1.bf16.msra.mxu0 0
        %4320 = vmatprep.subr.bf16.mxu0 0
        %4321 = vmatpush1.bf16.msra.mxu0 0
        %4322 = vmatprep.subr.bf16.mxu0 0
        %4323 = vmatpush1.bf16.msra.mxu0 0
        %4324 = vmatprep.subr.bf16.mxu0 0
        %4325 = vmatpush1.bf16.msra.mxu0 0
        %4326 = vmatprep.subr.bf16.mxu0 0
        %4327 = vmatpush1.bf16.msra.mxu0 0
        %4328 = vmatprep.subr.bf16.mxu0 %v2617
        %4329 = vmatpush1.bf16.msra.mxu0 %v2616
        %4330 = vmatprep.subr.bf16.mxu0 %v2489
        %4331 = vmatpush1.bf16.msra.mxu0 %v2488
        %4332 = vmatprep.subr.bf16.mxu0 0
        %4333 = vmatpush2.bf16.msra.mxu0 0
        %4334 = vmatprep.subr.bf16.mxu0 0
        %4335 = vmatpush2.bf16.msra.mxu0 0
        %4336 = vmatprep.subr.bf16.mxu0 0
        %4337 = vmatpush2.bf16.msra.mxu0 0
        %4338 = vmatprep.subr.bf16.mxu0 0
        %4339 = vmatpush2.bf16.msra.mxu0 0
        %4340 = vmatprep.subr.bf16.mxu0 0
        %4341 = vmatpush2.bf16.msra.mxu0 0
        %4342 = vmatprep.subr.bf16.mxu0 0
        %4343 = vmatpush2.bf16.msra.mxu0 0
        %4344 = vmatprep.subr.bf16.mxu0 0
        %4345 = vmatpush2.bf16.msra.mxu0 0
        %4346 = vmatprep.subr.bf16.mxu0 0
        %4347 = vmatpush2.bf16.msra.mxu0 0
        %4348 = vmatprep.mubr.bf16.mxu0 0
        %4349 = vmatmul.mubr.bf16.gmra.mxu0 %v2938
        %v4350 = vpop.f32.mrf.mxu0
        %v4351 = vadd.f32 %v1275, %v4350
        %v4352 = vpop.f32.mrf.mxu0
        %v4353 = vadd.f32 %v1279, %v4352
        %v4354 = vpop.f32.mrf.mxu0
        %v4355 = vadd.f32 %v1275, %v4354
        %v4356 = vpop.f32.mrf.mxu0
        %v4357 = vadd.f32 %v1279, %v4356
        %4358 = vdwg.mxu0
        %4359 = vmatprep.subr.bf16.mxu0 0
        %4360 = vmatpush1.bf16.msra.mxu0 0
        %4361 = vmatprep.subr.bf16.mxu0 0
        %4362 = vmatpush1.bf16.msra.mxu0 0
        %4363 = vmatprep.subr.bf16.mxu0 0
        %4364 = vmatpush1.bf16.msra.mxu0 0
        %4365 = vmatprep.subr.bf16.mxu0 0
        %4366 = vmatpush1.bf16.msra.mxu0 0
        %4367 = vmatprep.subr.bf16.mxu0 0
        %4368 = vmatpush1.bf16.msra.mxu0 0
        %4369 = vmatprep.subr.bf16.mxu0 0
        %4370 = vmatpush1.bf16.msra.mxu0 0
        %4371 = vmatprep.subr.bf16.mxu0 %v2619
        %4372 = vmatpush1.bf16.msra.mxu0 %v2618
        %4373 = vmatprep.subr.bf16.mxu0 %v2491
        %4374 = vmatpush1.bf16.msra.mxu0 %v2490
        %4375 = vmatprep.subr.bf16.mxu0 0
        %4376 = vmatpush2.bf16.msra.mxu0 0
        %4377 = vmatprep.subr.bf16.mxu0 0
        %4378 = vmatpush2.bf16.msra.mxu0 0
        %4379 = vmatprep.subr.bf16.mxu0 0
        %4380 = vmatpush2.bf16.msra.mxu0 0
        %4381 = vmatprep.subr.bf16.mxu0 0
        %4382 = vmatpush2.bf16.msra.mxu0 0
        %4383 = vmatprep.subr.bf16.mxu0 0
        %4384 = vmatpush2.bf16.msra.mxu0 0
        %4385 = vmatprep.subr.bf16.mxu0 0
        %4386 = vmatpush2.bf16.msra.mxu0 0
        %4387 = vmatprep.subr.bf16.mxu0 0
        %4388 = vmatpush2.bf16.msra.mxu0 0
        %4389 = vmatprep.subr.bf16.mxu0 0
        %4390 = vmatpush2.bf16.msra.mxu0 0
        %4391 = vmatprep.mubr.bf16.mxu0 0
        %4392 = vmatmul.mubr.bf16.gmra.mxu0 %v2938
        %v4393 = vpop.f32.mrf.mxu0
        %v4394 = vadd.f32 %v1283, %v4393
        %v4395 = vpop.f32.mrf.mxu0
        %v4396 = vadd.f32 %v1287, %v4395
        %v4397 = vpop.f32.mrf.mxu0
        %v4398 = vadd.f32 %v1283, %v4397
        %v4399 = vpop.f32.mrf.mxu0
        %v4400 = vadd.f32 %v1287, %v4399
        %4401 = vdwg.mxu0
        %4402 = vmatprep.subr.bf16.mxu0 0
        %4403 = vmatpush1.bf16.msra.mxu0 0
        %4404 = vmatprep.subr.bf16.mxu0 0
        %4405 = vmatpush1.bf16.msra.mxu0 0
        %4406 = vmatprep.subr.bf16.mxu0 0
        %4407 = vmatpush1.bf16.msra.mxu0 0
        %4408 = vmatprep.subr.bf16.mxu0 0
        %4409 = vmatpush1.bf16.msra.mxu0 0
        %4410 = vmatprep.subr.bf16.mxu0 0
        %4411 = vmatpush1.bf16.msra.mxu0 0
        %4412 = vmatprep.subr.bf16.mxu0 0
        %4413 = vmatpush1.bf16.msra.mxu0 0
        %4414 = vmatprep.subr.bf16.mxu0 %v2621
        %4415 = vmatpush1.bf16.msra.mxu0 %v2620
        %4416 = vmatprep.subr.bf16.mxu0 %v2493
        %4417 = vmatpush1.bf16.msra.mxu0 %v2492
        %4418 = vmatprep.subr.bf16.mxu0 0
        %4419 = vmatpush2.bf16.msra.mxu0 0
        %4420 = vmatprep.subr.bf16.mxu0 0
        %4421 = vmatpush2.bf16.msra.mxu0 0
        %4422 = vmatprep.subr.bf16.mxu0 0
        %4423 = vmatpush2.bf16.msra.mxu0 0
        %4424 = vmatprep.subr.bf16.mxu0 0
        %4425 = vmatpush2.bf16.msra.mxu0 0
        %4426 = vmatprep.subr.bf16.mxu0 0
        %4427 = vmatpush2.bf16.msra.mxu0 0
        %4428 = vmatprep.subr.bf16.mxu0 0
        %4429 = vmatpush2.bf16.msra.mxu0 0
        %4430 = vmatprep.subr.bf16.mxu0 0
        %4431 = vmatpush2.bf16.msra.mxu0 0
        %4432 = vmatprep.subr.bf16.mxu0 0
        %4433 = vmatpush2.bf16.msra.mxu0 0
        %4434 = vmatprep.mubr.bf16.mxu0 0
        %4435 = vmatmul.mubr.bf16.gmra.mxu0 %v2938
        %v4436 = vpop.f32.mrf.mxu0
        %v4437 = vadd.f32 %v1291, %v4436
        %v4438 = vpop.f32.mrf.mxu0
        %v4439 = vadd.f32 %v1295, %v4438
        %v4440 = vpop.f32.mrf.mxu0
        %v4441 = vadd.f32 %v1291, %v4440
        %v4442 = vpop.f32.mrf.mxu0
        %v4443 = vadd.f32 %v1295, %v4442
        %4444 = vdwg.mxu0
        %4445 = vmatprep.subr.bf16.mxu0 0
        %4446 = vmatpush1.bf16.msra.mxu0 0
        %4447 = vmatprep.subr.bf16.mxu0 0
        %4448 = vmatpush1.bf16.msra.mxu0 0
        %4449 = vmatprep.subr.bf16.mxu0 0
        %4450 = vmatpush1.bf16.msra.mxu0 0
        %4451 = vmatprep.subr.bf16.mxu0 0
        %4452 = vmatpush1.bf16.msra.mxu0 0
        %4453 = vmatprep.subr.bf16.mxu0 0
        %4454 = vmatpush1.bf16.msra.mxu0 0
        %4455 = vmatprep.subr.bf16.mxu0 0
        %4456 = vmatpush1.bf16.msra.mxu0 0
        %4457 = vmatprep.subr.bf16.mxu0 %v2623
        %4458 = vmatpush1.bf16.msra.mxu0 %v2622
        %4459 = vmatprep.subr.bf16.mxu0 %v2495
        %4460 = vmatpush1.bf16.msra.mxu0 %v2494
        %4461 = vmatprep.subr.bf16.mxu0 0
        %4462 = vmatpush2.bf16.msra.mxu0 0
        %4463 = vmatprep.subr.bf16.mxu0 0
        %4464 = vmatpush2.bf16.msra.mxu0 0
        %4465 = vmatprep.subr.bf16.mxu0 0
        %4466 = vmatpush2.bf16.msra.mxu0 0
        %4467 = vmatprep.subr.bf16.mxu0 0
        %4468 = vmatpush2.bf16.msra.mxu0 0
        %4469 = vmatprep.subr.bf16.mxu0 0
        %4470 = vmatpush2.bf16.msra.mxu0 0
        %4471 = vmatprep.subr.bf16.mxu0 0
        %4472 = vmatpush2.bf16.msra.mxu0 0
        %4473 = vmatprep.subr.bf16.mxu0 0
        %4474 = vmatpush2.bf16.msra.mxu0 0
        %4475 = vmatprep.subr.bf16.mxu0 0
        %4476 = vmatpush2.bf16.msra.mxu0 0
        %4477 = vmatprep.mubr.bf16.mxu0 0
        %4478 = vmatmul.mubr.bf16.gmra.mxu0 %v2938
        %v4479 = vpop.f32.mrf.mxu0
        %v4480 = vadd.f32 %v1299, %v4479
        %v4481 = vpop.f32.mrf.mxu0
        %v4482 = vadd.f32 %v1303, %v4481
        %v4483 = vpop.f32.mrf.mxu0
        %v4484 = vadd.f32 %v1299, %v4483
        %v4485 = vpop.f32.mrf.mxu0
        %v4486 = vadd.f32 %v1303, %v4485
        %4487 = vdwg.mxu0
        %4488 = vmatprep.subr.bf16.mxu0 0
        %4489 = vmatpush1.bf16.msra.mxu0 0
        %4490 = vmatprep.subr.bf16.mxu0 0
        %4491 = vmatpush1.bf16.msra.mxu0 0
        %4492 = vmatprep.subr.bf16.mxu0 0
        %4493 = vmatpush1.bf16.msra.mxu0 0
        %4494 = vmatprep.subr.bf16.mxu0 0
        %4495 = vmatpush1.bf16.msra.mxu0 0
        %4496 = vmatprep.subr.bf16.mxu0 0
        %4497 = vmatpush1.bf16.msra.mxu0 0
        %4498 = vmatprep.subr.bf16.mxu0 0
        %4499 = vmatpush1.bf16.msra.mxu0 0
        %4500 = vmatprep.subr.bf16.mxu0 %v2625
        %4501 = vmatpush1.bf16.msra.mxu0 %v2624
        %4502 = vmatprep.subr.bf16.mxu0 %v2497
        %4503 = vmatpush1.bf16.msra.mxu0 %v2496
        %4504 = vmatprep.subr.bf16.mxu0 0
        %4505 = vmatpush2.bf16.msra.mxu0 0
        %4506 = vmatprep.subr.bf16.mxu0 0
        %4507 = vmatpush2.bf16.msra.mxu0 0
        %4508 = vmatprep.subr.bf16.mxu0 0
        %4509 = vmatpush2.bf16.msra.mxu0 0
        %4510 = vmatprep.subr.bf16.mxu0 0
        %4511 = vmatpush2.bf16.msra.mxu0 0
        %4512 = vmatprep.subr.bf16.mxu0 0
        %4513 = vmatpush2.bf16.msra.mxu0 0
        %4514 = vmatprep.subr.bf16.mxu0 0
        %4515 = vmatpush2.bf16.msra.mxu0 0
        %4516 = vmatprep.subr.bf16.mxu0 0
        %4517 = vmatpush2.bf16.msra.mxu0 0
        %4518 = vmatprep.subr.bf16.mxu0 0
        %4519 = vmatpush2.bf16.msra.mxu0 0
        %4520 = vmatprep.mubr.bf16.mxu0 0
        %4521 = vmatmul.mubr.bf16.gmra.mxu0 %v2938
        %v4522 = vpop.f32.mrf.mxu0
        %v4523 = vadd.f32 %v1307, %v4522
        %v4524 = vpop.f32.mrf.mxu0
        %v4525 = vadd.f32 %v1311, %v4524
        %v4526 = vpop.f32.mrf.mxu0
        %v4527 = vadd.f32 %v1307, %v4526
        %v4528 = vpop.f32.mrf.mxu0
        %v4529 = vadd.f32 %v1311, %v4528
        %4530 = vdwg.mxu0
        %4531 = vmatprep.subr.bf16.mxu0 0
        %4532 = vmatpush1.bf16.msra.mxu0 0
        %4533 = vmatprep.subr.bf16.mxu0 0
        %4534 = vmatpush1.bf16.msra.mxu0 0
        %4535 = vmatprep.subr.bf16.mxu0 0
        %4536 = vmatpush1.bf16.msra.mxu0 0
        %4537 = vmatprep.subr.bf16.mxu0 0
        %4538 = vmatpush1.bf16.msra.mxu0 0
        %4539 = vmatprep.subr.bf16.mxu0 0
        %4540 = vmatpush1.bf16.msra.mxu0 0
        %4541 = vmatprep.subr.bf16.mxu0 0
        %4542 = vmatpush1.bf16.msra.mxu0 0
        %4543 = vmatprep.subr.bf16.mxu0 %v2627
        %4544 = vmatpush1.bf16.msra.mxu0 %v2626
        %4545 = vmatprep.subr.bf16.mxu0 %v2499
        %4546 = vmatpush1.bf16.msra.mxu0 %v2498
        %4547 = vmatprep.subr.bf16.mxu0 0
        %4548 = vmatpush2.bf16.msra.mxu0 0
        %4549 = vmatprep.subr.bf16.mxu0 0
        %4550 = vmatpush2.bf16.msra.mxu0 0
        %4551 = vmatprep.subr.bf16.mxu0 0
        %4552 = vmatpush2.bf16.msra.mxu0 0
        %4553 = vmatprep.subr.bf16.mxu0 0
        %4554 = vmatpush2.bf16.msra.mxu0 0
        %4555 = vmatprep.subr.bf16.mxu0 0
        %4556 = vmatpush2.bf16.msra.mxu0 0
        %4557 = vmatprep.subr.bf16.mxu0 0
        %4558 = vmatpush2.bf16.msra.mxu0 0
        %4559 = vmatprep.subr.bf16.mxu0 0
        %4560 = vmatpush2.bf16.msra.mxu0 0
        %4561 = vmatprep.subr.bf16.mxu0 0
        %4562 = vmatpush2.bf16.msra.mxu0 0
        %4563 = vmatprep.mubr.bf16.mxu0 0
        %4564 = vmatmul.mubr.bf16.gmra.mxu0 %v2938
        %v4565 = vpop.f32.mrf.mxu0
        %v4566 = vadd.f32 %v1315, %v4565
        %v4567 = vpop.f32.mrf.mxu0
        %v4568 = vadd.f32 %v1319, %v4567
        %v4569 = vpop.f32.mrf.mxu0
        %v4570 = vadd.f32 %v1315, %v4569
        %v4571 = vpop.f32.mrf.mxu0
        %v4572 = vadd.f32 %v1319, %v4571
        %4573 = vdwg.mxu0
        %4574 = vmatprep.subr.bf16.mxu0 0
        %4575 = vmatpush1.bf16.msra.mxu0 0
        %4576 = vmatprep.subr.bf16.mxu0 0
        %4577 = vmatpush1.bf16.msra.mxu0 0
        %4578 = vmatprep.subr.bf16.mxu0 0
        %4579 = vmatpush1.bf16.msra.mxu0 0
        %4580 = vmatprep.subr.bf16.mxu0 0
        %4581 = vmatpush1.bf16.msra.mxu0 0
        %4582 = vmatprep.subr.bf16.mxu0 0
        %4583 = vmatpush1.bf16.msra.mxu0 0
        %4584 = vmatprep.subr.bf16.mxu0 0
        %4585 = vmatpush1.bf16.msra.mxu0 0
        %4586 = vmatprep.subr.bf16.mxu0 %v2629
        %4587 = vmatpush1.bf16.msra.mxu0 %v2628
        %4588 = vmatprep.subr.bf16.mxu0 %v2501
        %4589 = vmatpush1.bf16.msra.mxu0 %v2500
        %4590 = vmatprep.subr.bf16.mxu0 0
        %4591 = vmatpush2.bf16.msra.mxu0 0
        %4592 = vmatprep.subr.bf16.mxu0 0
        %4593 = vmatpush2.bf16.msra.mxu0 0
        %4594 = vmatprep.subr.bf16.mxu0 0
        %4595 = vmatpush2.bf16.msra.mxu0 0
        %4596 = vmatprep.subr.bf16.mxu0 0
        %4597 = vmatpush2.bf16.msra.mxu0 0
        %4598 = vmatprep.subr.bf16.mxu0 0
        %4599 = vmatpush2.bf16.msra.mxu0 0
        %4600 = vmatprep.subr.bf16.mxu0 0
        %4601 = vmatpush2.bf16.msra.mxu0 0
        %4602 = vmatprep.subr.bf16.mxu0 0
        %4603 = vmatpush2.bf16.msra.mxu0 0
        %4604 = vmatprep.subr.bf16.mxu0 0
        %4605 = vmatpush2.bf16.msra.mxu0 0
        %4606 = vmatprep.mubr.bf16.mxu0 0
        %4607 = vmatmul.mubr.bf16.gmra.mxu0 %v2938
        %v4608 = vpop.f32.mrf.mxu0
        %v4609 = vadd.f32 %v1323, %v4608
        %v4610 = vpop.f32.mrf.mxu0
        %v4611 = vadd.f32 %v1327, %v4610
        %v4612 = vpop.f32.mrf.mxu0
        %v4613 = vadd.f32 %v1323, %v4612
        %v4614 = vpop.f32.mrf.mxu0
        %v4615 = vadd.f32 %v1327, %v4614
        %4616 = vdwg.mxu0
        %4617 = vmatprep.subr.bf16.mxu0 0
        %4618 = vmatpush1.bf16.msra.mxu0 0
        %4619 = vmatprep.subr.bf16.mxu0 0
        %4620 = vmatpush1.bf16.msra.mxu0 0
        %4621 = vmatprep.subr.bf16.mxu0 0
        %4622 = vmatpush1.bf16.msra.mxu0 0
        %4623 = vmatprep.subr.bf16.mxu0 0
        %4624 = vmatpush1.bf16.msra.mxu0 0
        %4625 = vmatprep.subr.bf16.mxu0 0
        %4626 = vmatpush1.bf16.msra.mxu0 0
        %4627 = vmatprep.subr.bf16.mxu0 0
        %4628 = vmatpush1.bf16.msra.mxu0 0
        %4629 = vmatprep.subr.bf16.mxu0 %v2631
        %4630 = vmatpush1.bf16.msra.mxu0 %v2630
        %4631 = vmatprep.subr.bf16.mxu0 %v2503
        %4632 = vmatpush1.bf16.msra.mxu0 %v2502
        %4633 = vmatprep.subr.bf16.mxu0 0
        %4634 = vmatpush2.bf16.msra.mxu0 0
        %4635 = vmatprep.subr.bf16.mxu0 0
        %4636 = vmatpush2.bf16.msra.mxu0 0
        %4637 = vmatprep.subr.bf16.mxu0 0
        %4638 = vmatpush2.bf16.msra.mxu0 0
        %4639 = vmatprep.subr.bf16.mxu0 0
        %4640 = vmatpush2.bf16.msra.mxu0 0
        %4641 = vmatprep.subr.bf16.mxu0 0
        %4642 = vmatpush2.bf16.msra.mxu0 0
        %4643 = vmatprep.subr.bf16.mxu0 0
        %4644 = vmatpush2.bf16.msra.mxu0 0
        %4645 = vmatprep.subr.bf16.mxu0 0
        %4646 = vmatpush2.bf16.msra.mxu0 0
        %4647 = vmatprep.subr.bf16.mxu0 0
        %4648 = vmatpush2.bf16.msra.mxu0 0
        %4649 = vmatprep.mubr.bf16.mxu0 0
        %4650 = vmatmul.mubr.bf16.gmra.mxu0 %v2938
        %v4651 = vpop.f32.mrf.mxu0
        %v4652 = vadd.f32 %v1331, %v4651
        %v4653 = vpop.f32.mrf.mxu0
        %v4654 = vadd.f32 %v1335, %v4653
        %v4655 = vpop.f32.mrf.mxu0
        %v4656 = vadd.f32 %v1331, %v4655
        %v4657 = vpop.f32.mrf.mxu0
        %v4658 = vadd.f32 %v1335, %v4657
        %4659 = vdwg.mxu0
        %4660 = vmatprep.subr.bf16.mxu0 0
        %4661 = vmatpush1.bf16.msra.mxu0 0
        %4662 = vmatprep.subr.bf16.mxu0 0
        %4663 = vmatpush1.bf16.msra.mxu0 0
        %4664 = vmatprep.subr.bf16.mxu0 0
        %4665 = vmatpush1.bf16.msra.mxu0 0
        %4666 = vmatprep.subr.bf16.mxu0 0
        %4667 = vmatpush1.bf16.msra.mxu0 0
        %4668 = vmatprep.subr.bf16.mxu0 0
        %4669 = vmatpush1.bf16.msra.mxu0 0
        %4670 = vmatprep.subr.bf16.mxu0 0
        %4671 = vmatpush1.bf16.msra.mxu0 0
        %4672 = vmatprep.subr.bf16.mxu0 %v2633
        %4673 = vmatpush1.bf16.msra.mxu0 %v2632
        %4674 = vmatprep.subr.bf16.mxu0 %v2505
        %4675 = vmatpush1.bf16.msra.mxu0 %v2504
        %4676 = vmatprep.subr.bf16.mxu0 0
        %4677 = vmatpush2.bf16.msra.mxu0 0
        %4678 = vmatprep.subr.bf16.mxu0 0
        %4679 = vmatpush2.bf16.msra.mxu0 0
        %4680 = vmatprep.subr.bf16.mxu0 0
        %4681 = vmatpush2.bf16.msra.mxu0 0
        %4682 = vmatprep.subr.bf16.mxu0 0
        %4683 = vmatpush2.bf16.msra.mxu0 0
        %4684 = vmatprep.subr.bf16.mxu0 0
        %4685 = vmatpush2.bf16.msra.mxu0 0
        %4686 = vmatprep.subr.bf16.mxu0 0
        %4687 = vmatpush2.bf16.msra.mxu0 0
        %4688 = vmatprep.subr.bf16.mxu0 0
        %4689 = vmatpush2.bf16.msra.mxu0 0
        %4690 = vmatprep.subr.bf16.mxu0 0
        %4691 = vmatpush2.bf16.msra.mxu0 0
        %4692 = vmatprep.mubr.bf16.mxu0 0
        %4693 = vmatmul.mubr.bf16.gmra.mxu0 %v2938
        %v4694 = vpop.f32.mrf.mxu0
        %v4695 = vadd.f32 %v1339, %v4694
        %v4696 = vpop.f32.mrf.mxu0
        %v4697 = vadd.f32 %v1343, %v4696
        %v4698 = vpop.f32.mrf.mxu0
        %v4699 = vadd.f32 %v1339, %v4698
        %v4700 = vpop.f32.mrf.mxu0
        %v4701 = vadd.f32 %v1343, %v4700
        %4702 = vdwg.mxu0
        %4703 = vmatprep.subr.bf16.mxu0 0
        %4704 = vmatpush1.bf16.msra.mxu0 0
        %4705 = vmatprep.subr.bf16.mxu0 0
        %4706 = vmatpush1.bf16.msra.mxu0 0
        %4707 = vmatprep.subr.bf16.mxu0 0
        %4708 = vmatpush1.bf16.msra.mxu0 0
        %4709 = vmatprep.subr.bf16.mxu0 0
        %4710 = vmatpush1.bf16.msra.mxu0 0
        %4711 = vmatprep.subr.bf16.mxu0 0
        %4712 = vmatpush1.bf16.msra.mxu0 0
        %4713 = vmatprep.subr.bf16.mxu0 0
        %4714 = vmatpush1.bf16.msra.mxu0 0
        %4715 = vmatprep.subr.bf16.mxu0 %v2635
        %4716 = vmatpush1.bf16.msra.mxu0 %v2634
        %4717 = vmatprep.subr.bf16.mxu0 %v2507
        %4718 = vmatpush1.bf16.msra.mxu0 %v2506
        %4719 = vmatprep.subr.bf16.mxu0 0
        %4720 = vmatpush2.bf16.msra.mxu0 0
        %4721 = vmatprep.subr.bf16.mxu0 0
        %4722 = vmatpush2.bf16.msra.mxu0 0
        %4723 = vmatprep.subr.bf16.mxu0 0
        %4724 = vmatpush2.bf16.msra.mxu0 0
        %4725 = vmatprep.subr.bf16.mxu0 0
        %4726 = vmatpush2.bf16.msra.mxu0 0
        %4727 = vmatprep.subr.bf16.mxu0 0
        %4728 = vmatpush2.bf16.msra.mxu0 0
        %4729 = vmatprep.subr.bf16.mxu0 0
        %4730 = vmatpush2.bf16.msra.mxu0 0
        %4731 = vmatprep.subr.bf16.mxu0 0
        %4732 = vmatpush2.bf16.msra.mxu0 0
        %4733 = vmatprep.subr.bf16.mxu0 0
        %4734 = vmatpush2.bf16.msra.mxu0 0
        %4735 = vmatprep.mubr.bf16.mxu0 0
        %4736 = vmatmul.mubr.bf16.gmra.mxu0 %v2938
        %v4737 = vpop.f32.mrf.mxu0
        %v4738 = vadd.f32 %v1347, %v4737
        %v4739 = vpop.f32.mrf.mxu0
        %v4740 = vadd.f32 %v1351, %v4739
        %v4741 = vpop.f32.mrf.mxu0
        %v4742 = vadd.f32 %v1347, %v4741
        %v4743 = vpop.f32.mrf.mxu0
        %v4744 = vadd.f32 %v1351, %v4743
        %4745 = vdwg.mxu0
        %4746 = vmatprep.subr.bf16.mxu0 0
        %4747 = vmatpush1.bf16.msra.mxu0 0
        %4748 = vmatprep.subr.bf16.mxu0 0
        %4749 = vmatpush1.bf16.msra.mxu0 0
        %4750 = vmatprep.subr.bf16.mxu0 0
        %4751 = vmatpush1.bf16.msra.mxu0 0
        %4752 = vmatprep.subr.bf16.mxu0 0
        %4753 = vmatpush1.bf16.msra.mxu0 0
        %4754 = vmatprep.subr.bf16.mxu0 0
        %4755 = vmatpush1.bf16.msra.mxu0 0
        %4756 = vmatprep.subr.bf16.mxu0 0
        %4757 = vmatpush1.bf16.msra.mxu0 0
        %4758 = vmatprep.subr.bf16.mxu0 %v2637
        %4759 = vmatpush1.bf16.msra.mxu0 %v2636
        %4760 = vmatprep.subr.bf16.mxu0 %v2509
        %4761 = vmatpush1.bf16.msra.mxu0 %v2508
        %4762 = vmatprep.subr.bf16.mxu0 0
        %4763 = vmatpush2.bf16.msra.mxu0 0
        %4764 = vmatprep.subr.bf16.mxu0 0
        %4765 = vmatpush2.bf16.msra.mxu0 0
        %4766 = vmatprep.subr.bf16.mxu0 0
        %4767 = vmatpush2.bf16.msra.mxu0 0
        %4768 = vmatprep.subr.bf16.mxu0 0
        %4769 = vmatpush2.bf16.msra.mxu0 0
        %4770 = vmatprep.subr.bf16.mxu0 0
        %4771 = vmatpush2.bf16.msra.mxu0 0
        %4772 = vmatprep.subr.bf16.mxu0 0
        %4773 = vmatpush2.bf16.msra.mxu0 0
        %4774 = vmatprep.subr.bf16.mxu0 0
        %4775 = vmatpush2.bf16.msra.mxu0 0
        %4776 = vmatprep.subr.bf16.mxu0 0
        %4777 = vmatpush2.bf16.msra.mxu0 0
        %4778 = vmatprep.mubr.bf16.mxu0 0
        %4779 = vmatmul.mubr.bf16.gmra.mxu0 %v2938
        %v4780 = vpop.f32.mrf.mxu0
        %v4781 = vadd.f32 %v1355, %v4780
        %v4782 = vpop.f32.mrf.mxu0
        %v4783 = vadd.f32 %v1359, %v4782
        %v4784 = vpop.f32.mrf.mxu0
        %v4785 = vadd.f32 %v1355, %v4784
        %v4786 = vpop.f32.mrf.mxu0
        %v4787 = vadd.f32 %v1359, %v4786
        %4788 = vdwg.mxu0
        %4789 = vmatprep.subr.bf16.mxu0 0
        %4790 = vmatpush1.bf16.msra.mxu0 0
        %4791 = vmatprep.subr.bf16.mxu0 0
        %4792 = vmatpush1.bf16.msra.mxu0 0
        %4793 = vmatprep.subr.bf16.mxu0 0
        %4794 = vmatpush1.bf16.msra.mxu0 0
        %4795 = vmatprep.subr.bf16.mxu0 0
        %4796 = vmatpush1.bf16.msra.mxu0 0
        %4797 = vmatprep.subr.bf16.mxu0 0
        %4798 = vmatpush1.bf16.msra.mxu0 0
        %4799 = vmatprep.subr.bf16.mxu0 0
        %4800 = vmatpush1.bf16.msra.mxu0 0
        %4801 = vmatprep.subr.bf16.mxu0 %v2639
        %4802 = vmatpush1.bf16.msra.mxu0 %v2638
        %4803 = vmatprep.subr.bf16.mxu0 %v2511
        %4804 = vmatpush1.bf16.msra.mxu0 %v2510
        %4805 = vmatprep.subr.bf16.mxu0 0
        %4806 = vmatpush2.bf16.msra.mxu0 0
        %4807 = vmatprep.subr.bf16.mxu0 0
        %4808 = vmatpush2.bf16.msra.mxu0 0
        %4809 = vmatprep.subr.bf16.mxu0 0
        %4810 = vmatpush2.bf16.msra.mxu0 0
        %4811 = vmatprep.subr.bf16.mxu0 0
        %4812 = vmatpush2.bf16.msra.mxu0 0
        %4813 = vmatprep.subr.bf16.mxu0 0
        %4814 = vmatpush2.bf16.msra.mxu0 0
        %4815 = vmatprep.subr.bf16.mxu0 0
        %4816 = vmatpush2.bf16.msra.mxu0 0
        %4817 = vmatprep.subr.bf16.mxu0 0
        %4818 = vmatpush2.bf16.msra.mxu0 0
        %4819 = vmatprep.subr.bf16.mxu0 0
        %4820 = vmatpush2.bf16.msra.mxu0 0
        %4821 = vmatprep.mubr.bf16.mxu0 0
        %4822 = vmatmul.mubr.bf16.gmra.mxu0 %v2938
        %v4823 = vpop.f32.mrf.mxu0
        %v4824 = vadd.f32 %v1363, %v4823
        %v4825 = vpop.f32.mrf.mxu0
        %v4826 = vadd.f32 %v1367, %v4825
        %v4827 = vpop.f32.mrf.mxu0
        %v4828 = vadd.f32 %v1363, %v4827
        %v4829 = vpop.f32.mrf.mxu0
        %v4830 = vadd.f32 %v1367, %v4829
        %4831 = vdwg.mxu0
        %4832 = vmatprep.subr.bf16.mxu0 0
        %4833 = vmatpush1.bf16.msra.mxu0 0
        %4834 = vmatprep.subr.bf16.mxu0 0
        %4835 = vmatpush1.bf16.msra.mxu0 0
        %4836 = vmatprep.subr.bf16.mxu0 0
        %4837 = vmatpush1.bf16.msra.mxu0 0
        %4838 = vmatprep.subr.bf16.mxu0 0
        %4839 = vmatpush1.bf16.msra.mxu0 0
        %4840 = vmatprep.subr.bf16.mxu0 0
        %4841 = vmatpush1.bf16.msra.mxu0 0
        %4842 = vmatprep.subr.bf16.mxu0 0
        %4843 = vmatpush1.bf16.msra.mxu0 0
        %4844 = vmatprep.subr.bf16.mxu0 %v2641
        %4845 = vmatpush1.bf16.msra.mxu0 %v2640
        %4846 = vmatprep.subr.bf16.mxu0 %v2513
        %4847 = vmatpush1.bf16.msra.mxu0 %v2512
        %4848 = vmatprep.subr.bf16.mxu0 0
        %4849 = vmatpush2.bf16.msra.mxu0 0
        %4850 = vmatprep.subr.bf16.mxu0 0
        %4851 = vmatpush2.bf16.msra.mxu0 0
        %4852 = vmatprep.subr.bf16.mxu0 0
        %4853 = vmatpush2.bf16.msra.mxu0 0
        %4854 = vmatprep.subr.bf16.mxu0 0
        %4855 = vmatpush2.bf16.msra.mxu0 0
        %4856 = vmatprep.subr.bf16.mxu0 0
        %4857 = vmatpush2.bf16.msra.mxu0 0
        %4858 = vmatprep.subr.bf16.mxu0 0
        %4859 = vmatpush2.bf16.msra.mxu0 0
        %4860 = vmatprep.subr.bf16.mxu0 0
        %4861 = vmatpush2.bf16.msra.mxu0 0
        %4862 = vmatprep.subr.bf16.mxu0 0
        %4863 = vmatpush2.bf16.msra.mxu0 0
        %4864 = vmatprep.mubr.bf16.mxu0 0
        %4865 = vmatmul.mubr.bf16.gmra.mxu0 %v2938
        %v4866 = vpop.f32.mrf.mxu0
        %v4867 = vadd.f32 %v1371, %v4866
        %v4868 = vpop.f32.mrf.mxu0
        %v4869 = vadd.f32 %v1375, %v4868
        %v4870 = vpop.f32.mrf.mxu0
        %v4871 = vadd.f32 %v1371, %v4870
        %v4872 = vpop.f32.mrf.mxu0
        %v4873 = vadd.f32 %v1375, %v4872
        %4874 = vdwg.mxu0
        %4875 = vmatprep.subr.bf16.mxu0 0
        %4876 = vmatpush1.bf16.msra.mxu0 0
        %4877 = vmatprep.subr.bf16.mxu0 0
        %4878 = vmatpush1.bf16.msra.mxu0 0
        %4879 = vmatprep.subr.bf16.mxu0 0
        %4880 = vmatpush1.bf16.msra.mxu0 0
        %4881 = vmatprep.subr.bf16.mxu0 0
        %4882 = vmatpush1.bf16.msra.mxu0 0
        %4883 = vmatprep.subr.bf16.mxu0 0
        %4884 = vmatpush1.bf16.msra.mxu0 0
        %4885 = vmatprep.subr.bf16.mxu0 0
        %4886 = vmatpush1.bf16.msra.mxu0 0
        %4887 = vmatprep.subr.bf16.mxu0 %v2643
        %4888 = vmatpush1.bf16.msra.mxu0 %v2642
        %4889 = vmatprep.subr.bf16.mxu0 %v2515
        %4890 = vmatpush1.bf16.msra.mxu0 %v2514
        %4891 = vmatprep.subr.bf16.mxu0 0
        %4892 = vmatpush2.bf16.msra.mxu0 0
        %4893 = vmatprep.subr.bf16.mxu0 0
        %4894 = vmatpush2.bf16.msra.mxu0 0
        %4895 = vmatprep.subr.bf16.mxu0 0
        %4896 = vmatpush2.bf16.msra.mxu0 0
        %4897 = vmatprep.subr.bf16.mxu0 0
        %4898 = vmatpush2.bf16.msra.mxu0 0
        %4899 = vmatprep.subr.bf16.mxu0 0
        %4900 = vmatpush2.bf16.msra.mxu0 0
        %4901 = vmatprep.subr.bf16.mxu0 0
        %4902 = vmatpush2.bf16.msra.mxu0 0
        %4903 = vmatprep.subr.bf16.mxu0 0
        %4904 = vmatpush2.bf16.msra.mxu0 0
        %4905 = vmatprep.subr.bf16.mxu0 0
        %4906 = vmatpush2.bf16.msra.mxu0 0
        %4907 = vmatprep.mubr.bf16.mxu0 0
        %4908 = vmatmul.mubr.bf16.gmra.mxu0 %v2938
        %v4909 = vpop.f32.mrf.mxu0
        %v4910 = vadd.f32 %v1379, %v4909
        %v4911 = vpop.f32.mrf.mxu0
        %v4912 = vadd.f32 %v1383, %v4911
        %v4913 = vpop.f32.mrf.mxu0
        %v4914 = vadd.f32 %v1379, %v4913
        %v4915 = vpop.f32.mrf.mxu0
        %v4916 = vadd.f32 %v1383, %v4915
        %4917 = vdwg.mxu0
        %4918 = vmatprep.subr.bf16.mxu0 0
        %4919 = vmatpush1.bf16.msra.mxu0 0
        %4920 = vmatprep.subr.bf16.mxu0 0
        %4921 = vmatpush1.bf16.msra.mxu0 0
        %4922 = vmatprep.subr.bf16.mxu0 0
        %4923 = vmatpush1.bf16.msra.mxu0 0
        %4924 = vmatprep.subr.bf16.mxu0 0
        %4925 = vmatpush1.bf16.msra.mxu0 0
        %4926 = vmatprep.subr.bf16.mxu0 0
        %4927 = vmatpush1.bf16.msra.mxu0 0
        %4928 = vmatprep.subr.bf16.mxu0 0
        %4929 = vmatpush1.bf16.msra.mxu0 0
        %4930 = vmatprep.subr.bf16.mxu0 %v2645
        %4931 = vmatpush1.bf16.msra.mxu0 %v2644
        %4932 = vmatprep.subr.bf16.mxu0 %v2517
        %4933 = vmatpush1.bf16.msra.mxu0 %v2516
        %4934 = vmatprep.subr.bf16.mxu0 0
        %4935 = vmatpush2.bf16.msra.mxu0 0
        %4936 = vmatprep.subr.bf16.mxu0 0
        %4937 = vmatpush2.bf16.msra.mxu0 0
        %4938 = vmatprep.subr.bf16.mxu0 0
        %4939 = vmatpush2.bf16.msra.mxu0 0
        %4940 = vmatprep.subr.bf16.mxu0 0
        %4941 = vmatpush2.bf16.msra.mxu0 0
        %4942 = vmatprep.subr.bf16.mxu0 0
        %4943 = vmatpush2.bf16.msra.mxu0 0
        %4944 = vmatprep.subr.bf16.mxu0 0
        %4945 = vmatpush2.bf16.msra.mxu0 0
        %4946 = vmatprep.subr.bf16.mxu0 0
        %4947 = vmatpush2.bf16.msra.mxu0 0
        %4948 = vmatprep.subr.bf16.mxu0 0
        %4949 = vmatpush2.bf16.msra.mxu0 0
        %4950 = vmatprep.mubr.bf16.mxu0 0
        %4951 = vmatmul.mubr.bf16.gmra.mxu0 %v2938
        %v4952 = vpop.f32.mrf.mxu0
        %v4953 = vadd.f32 %v1387, %v4952
        %v4954 = vpop.f32.mrf.mxu0
        %v4955 = vadd.f32 %v1391, %v4954
        %v4956 = vpop.f32.mrf.mxu0
        %v4957 = vadd.f32 %v1387, %v4956
        %v4958 = vpop.f32.mrf.mxu0
        %v4959 = vadd.f32 %v1391, %v4958
        %4960 = vdwg.mxu0
        %4961 = vmatprep.subr.bf16.mxu0 0
        %4962 = vmatpush1.bf16.msra.mxu0 0
        %4963 = vmatprep.subr.bf16.mxu0 0
        %4964 = vmatpush1.bf16.msra.mxu0 0
        %4965 = vmatprep.subr.bf16.mxu0 0
        %4966 = vmatpush1.bf16.msra.mxu0 0
        %4967 = vmatprep.subr.bf16.mxu0 0
        %4968 = vmatpush1.bf16.msra.mxu0 0
        %4969 = vmatprep.subr.bf16.mxu0 0
        %4970 = vmatpush1.bf16.msra.mxu0 0
        %4971 = vmatprep.subr.bf16.mxu0 0
        %4972 = vmatpush1.bf16.msra.mxu0 0
        %4973 = vmatprep.subr.bf16.mxu0 %v2647
        %4974 = vmatpush1.bf16.msra.mxu0 %v2646
        %4975 = vmatprep.subr.bf16.mxu0 %v2519
        %4976 = vmatpush1.bf16.msra.mxu0 %v2518
        %4977 = vmatprep.subr.bf16.mxu0 0
        %4978 = vmatpush2.bf16.msra.mxu0 0
        %4979 = vmatprep.subr.bf16.mxu0 0
        %4980 = vmatpush2.bf16.msra.mxu0 0
        %4981 = vmatprep.subr.bf16.mxu0 0
        %4982 = vmatpush2.bf16.msra.mxu0 0
        %4983 = vmatprep.subr.bf16.mxu0 0
        %4984 = vmatpush2.bf16.msra.mxu0 0
        %4985 = vmatprep.subr.bf16.mxu0 0
        %4986 = vmatpush2.bf16.msra.mxu0 0
        %4987 = vmatprep.subr.bf16.mxu0 0
        %4988 = vmatpush2.bf16.msra.mxu0 0
        %4989 = vmatprep.subr.bf16.mxu0 0
        %4990 = vmatpush2.bf16.msra.mxu0 0
        %4991 = vmatprep.subr.bf16.mxu0 0
        %4992 = vmatpush2.bf16.msra.mxu0 0
        %4993 = vmatprep.mubr.bf16.mxu0 0
        %4994 = vmatmul.mubr.bf16.gmra.mxu0 %v2938
        %v4995 = vpop.f32.mrf.mxu0
        %v4996 = vadd.f32 %v1395, %v4995
        %v4997 = vpop.f32.mrf.mxu0
        %v4998 = vadd.f32 %v1399, %v4997
        %v4999 = vpop.f32.mrf.mxu0
        %v5000 = vadd.f32 %v1395, %v4999
        %v5001 = vpop.f32.mrf.mxu0
        %v5002 = vadd.f32 %v1399, %v5001
        %5003 = vdwg.mxu0
        %5004 = vmatprep.subr.bf16.mxu0 0
        %5005 = vmatpush1.bf16.msra.mxu0 0
        %5006 = vmatprep.subr.bf16.mxu0 0
        %5007 = vmatpush1.bf16.msra.mxu0 0
        %5008 = vmatprep.subr.bf16.mxu0 0
        %5009 = vmatpush1.bf16.msra.mxu0 0
        %5010 = vmatprep.subr.bf16.mxu0 0
        %5011 = vmatpush1.bf16.msra.mxu0 0
        %5012 = vmatprep.subr.bf16.mxu0 0
        %5013 = vmatpush1.bf16.msra.mxu0 0
        %5014 = vmatprep.subr.bf16.mxu0 0
        %5015 = vmatpush1.bf16.msra.mxu0 0
        %5016 = vmatprep.subr.bf16.mxu0 %v2649
        %5017 = vmatpush1.bf16.msra.mxu0 %v2648
        %5018 = vmatprep.subr.bf16.mxu0 %v2521
        %5019 = vmatpush1.bf16.msra.mxu0 %v2520
        %5020 = vmatprep.subr.bf16.mxu0 0
        %5021 = vmatpush2.bf16.msra.mxu0 0
        %5022 = vmatprep.subr.bf16.mxu0 0
        %5023 = vmatpush2.bf16.msra.mxu0 0
        %5024 = vmatprep.subr.bf16.mxu0 0
        %5025 = vmatpush2.bf16.msra.mxu0 0
        %5026 = vmatprep.subr.bf16.mxu0 0
        %5027 = vmatpush2.bf16.msra.mxu0 0
        %5028 = vmatprep.subr.bf16.mxu0 0
        %5029 = vmatpush2.bf16.msra.mxu0 0
        %5030 = vmatprep.subr.bf16.mxu0 0
        %5031 = vmatpush2.bf16.msra.mxu0 0
        %5032 = vmatprep.subr.bf16.mxu0 0
        %5033 = vmatpush2.bf16.msra.mxu0 0
        %5034 = vmatprep.subr.bf16.mxu0 0
        %5035 = vmatpush2.bf16.msra.mxu0 0
        %5036 = vmatprep.mubr.bf16.mxu0 0
        %5037 = vmatmul.mubr.bf16.gmra.mxu0 %v2938
        %v5038 = vpop.f32.mrf.mxu0
        %v5039 = vadd.f32 %v1403, %v5038
        %v5040 = vpop.f32.mrf.mxu0
        %v5041 = vadd.f32 %v1407, %v5040
        %v5042 = vpop.f32.mrf.mxu0
        %v5043 = vadd.f32 %v1403, %v5042
        %v5044 = vpop.f32.mrf.mxu0
        %v5045 = vadd.f32 %v1407, %v5044
        %5046 = vdwg.mxu0
        %5047 = vmatprep.subr.bf16.mxu0 0
        %5048 = vmatpush1.bf16.msra.mxu0 0
        %5049 = vmatprep.subr.bf16.mxu0 0
        %5050 = vmatpush1.bf16.msra.mxu0 0
        %5051 = vmatprep.subr.bf16.mxu0 0
        %5052 = vmatpush1.bf16.msra.mxu0 0
        %5053 = vmatprep.subr.bf16.mxu0 0
        %5054 = vmatpush1.bf16.msra.mxu0 0
        %5055 = vmatprep.subr.bf16.mxu0 0
        %5056 = vmatpush1.bf16.msra.mxu0 0
        %5057 = vmatprep.subr.bf16.mxu0 0
        %5058 = vmatpush1.bf16.msra.mxu0 0
        %5059 = vmatprep.subr.bf16.mxu0 %v2651
        %5060 = vmatpush1.bf16.msra.mxu0 %v2650
        %5061 = vmatprep.subr.bf16.mxu0 %v2523
        %5062 = vmatpush1.bf16.msra.mxu0 %v2522
        %5063 = vmatprep.subr.bf16.mxu0 0
        %5064 = vmatpush2.bf16.msra.mxu0 0
        %5065 = vmatprep.subr.bf16.mxu0 0
        %5066 = vmatpush2.bf16.msra.mxu0 0
        %5067 = vmatprep.subr.bf16.mxu0 0
        %5068 = vmatpush2.bf16.msra.mxu0 0
        %5069 = vmatprep.subr.bf16.mxu0 0
        %5070 = vmatpush2.bf16.msra.mxu0 0
        %5071 = vmatprep.subr.bf16.mxu0 0
        %5072 = vmatpush2.bf16.msra.mxu0 0
        %5073 = vmatprep.subr.bf16.mxu0 0
        %5074 = vmatpush2.bf16.msra.mxu0 0
        %5075 = vmatprep.subr.bf16.mxu0 0
        %5076 = vmatpush2.bf16.msra.mxu0 0
        %5077 = vmatprep.subr.bf16.mxu0 0
        %5078 = vmatpush2.bf16.msra.mxu0 0
        %5079 = vmatprep.mubr.bf16.mxu0 0
        %5080 = vmatmul.mubr.bf16.gmra.mxu0 %v2938
        %v5081 = vpop.f32.mrf.mxu0
        %v5082 = vadd.f32 %v1411, %v5081
        %v5083 = vpop.f32.mrf.mxu0
        %v5084 = vadd.f32 %v1415, %v5083
        %v5085 = vpop.f32.mrf.mxu0
        %v5086 = vadd.f32 %v1411, %v5085
        %v5087 = vpop.f32.mrf.mxu0
        %v5088 = vadd.f32 %v1415, %v5087
        %5089 = vdwg.mxu0
        %5090 = vmatprep.subr.bf16.mxu0 0
        %5091 = vmatpush1.bf16.msra.mxu0 0
        %5092 = vmatprep.subr.bf16.mxu0 0
        %5093 = vmatpush1.bf16.msra.mxu0 0
        %5094 = vmatprep.subr.bf16.mxu0 0
        %5095 = vmatpush1.bf16.msra.mxu0 0
        %5096 = vmatprep.subr.bf16.mxu0 0
        %5097 = vmatpush1.bf16.msra.mxu0 0
        %5098 = vmatprep.subr.bf16.mxu0 0
        %5099 = vmatpush1.bf16.msra.mxu0 0
        %5100 = vmatprep.subr.bf16.mxu0 0
        %5101 = vmatpush1.bf16.msra.mxu0 0
        %5102 = vmatprep.subr.bf16.mxu0 %v2653
        %5103 = vmatpush1.bf16.msra.mxu0 %v2652
        %5104 = vmatprep.subr.bf16.mxu0 %v2525
        %5105 = vmatpush1.bf16.msra.mxu0 %v2524
        %5106 = vmatprep.subr.bf16.mxu0 0
        %5107 = vmatpush2.bf16.msra.mxu0 0
        %5108 = vmatprep.subr.bf16.mxu0 0
        %5109 = vmatpush2.bf16.msra.mxu0 0
        %5110 = vmatprep.subr.bf16.mxu0 0
        %5111 = vmatpush2.bf16.msra.mxu0 0
        %5112 = vmatprep.subr.bf16.mxu0 0
        %5113 = vmatpush2.bf16.msra.mxu0 0
        %5114 = vmatprep.subr.bf16.mxu0 0
        %5115 = vmatpush2.bf16.msra.mxu0 0
        %5116 = vmatprep.subr.bf16.mxu0 0
        %5117 = vmatpush2.bf16.msra.mxu0 0
        %5118 = vmatprep.subr.bf16.mxu0 0
        %5119 = vmatpush2.bf16.msra.mxu0 0
        %5120 = vmatprep.subr.bf16.mxu0 0
        %5121 = vmatpush2.bf16.msra.mxu0 0
        %5122 = vmatprep.mubr.bf16.mxu0 0
        %5123 = vmatmul.mubr.bf16.gmra.mxu0 %v2938
        %v5124 = vpop.f32.mrf.mxu0
        %v5125 = vadd.f32 %v1419, %v5124
        %v5126 = vpop.f32.mrf.mxu0
        %v5127 = vadd.f32 %v1423, %v5126
        %v5128 = vpop.f32.mrf.mxu0
        %v5129 = vadd.f32 %v1419, %v5128
        %v5130 = vpop.f32.mrf.mxu0
        %v5131 = vadd.f32 %v1423, %v5130
        %5132 = vdwg.mxu0
        %5133 = vmatprep.subr.bf16.mxu0 0
        %5134 = vmatpush1.bf16.msra.mxu0 0
        %5135 = vmatprep.subr.bf16.mxu0 0
        %5136 = vmatpush1.bf16.msra.mxu0 0
        %5137 = vmatprep.subr.bf16.mxu0 0
        %5138 = vmatpush1.bf16.msra.mxu0 0
        %5139 = vmatprep.subr.bf16.mxu0 0
        %5140 = vmatpush1.bf16.msra.mxu0 0
        %5141 = vmatprep.subr.bf16.mxu0 0
        %5142 = vmatpush1.bf16.msra.mxu0 0
        %5143 = vmatprep.subr.bf16.mxu0 0
        %5144 = vmatpush1.bf16.msra.mxu0 0
        %5145 = vmatprep.subr.bf16.mxu0 %v2655
        %5146 = vmatpush1.bf16.msra.mxu0 %v2654
        %5147 = vmatprep.subr.bf16.mxu0 %v2527
        %5148 = vmatpush1.bf16.msra.mxu0 %v2526
        %5149 = vmatprep.subr.bf16.mxu0 0
        %5150 = vmatpush2.bf16.msra.mxu0 0
        %5151 = vmatprep.subr.bf16.mxu0 0
        %5152 = vmatpush2.bf16.msra.mxu0 0
        %5153 = vmatprep.subr.bf16.mxu0 0
        %5154 = vmatpush2.bf16.msra.mxu0 0
        %5155 = vmatprep.subr.bf16.mxu0 0
        %5156 = vmatpush2.bf16.msra.mxu0 0
        %5157 = vmatprep.subr.bf16.mxu0 0
        %5158 = vmatpush2.bf16.msra.mxu0 0
        %5159 = vmatprep.subr.bf16.mxu0 0
        %5160 = vmatpush2.bf16.msra.mxu0 0
        %5161 = vmatprep.subr.bf16.mxu0 0
        %5162 = vmatpush2.bf16.msra.mxu0 0
        %5163 = vmatprep.subr.bf16.mxu0 0
        %5164 = vmatpush2.bf16.msra.mxu0 0
        %5165 = vmatprep.mubr.bf16.mxu0 0
        %5166 = vmatmul.mubr.bf16.gmra.mxu0 %v2938
        %v5167 = vpop.f32.mrf.mxu0
        %v5168 = vadd.f32 %v1427, %v5167
        %v5169 = vpop.f32.mrf.mxu0
        %v5170 = vadd.f32 %v1431, %v5169
        %v5171 = vpop.f32.mrf.mxu0
        %v5172 = vadd.f32 %v1427, %v5171
        %v5173 = vpop.f32.mrf.mxu0
        %v5174 = vadd.f32 %v1431, %v5173
        %5175 = vdwg.mxu0
        %5176 = vmatprep.subr.bf16.mxu0 0
        %5177 = vmatpush1.bf16.msra.mxu0 0
        %5178 = vmatprep.subr.bf16.mxu0 0
        %5179 = vmatpush1.bf16.msra.mxu0 0
        %5180 = vmatprep.subr.bf16.mxu0 0
        %5181 = vmatpush1.bf16.msra.mxu0 0
        %5182 = vmatprep.subr.bf16.mxu0 0
        %5183 = vmatpush1.bf16.msra.mxu0 0
        %5184 = vmatprep.subr.bf16.mxu0 0
        %5185 = vmatpush1.bf16.msra.mxu0 0
        %5186 = vmatprep.subr.bf16.mxu0 0
        %5187 = vmatpush1.bf16.msra.mxu0 0
        %5188 = vmatprep.subr.bf16.mxu0 %v2657
        %5189 = vmatpush1.bf16.msra.mxu0 %v2656
        %5190 = vmatprep.subr.bf16.mxu0 %v2529
        %5191 = vmatpush1.bf16.msra.mxu0 %v2528
        %5192 = vmatprep.subr.bf16.mxu0 0
        %5193 = vmatpush2.bf16.msra.mxu0 0
        %5194 = vmatprep.subr.bf16.mxu0 0
        %5195 = vmatpush2.bf16.msra.mxu0 0
        %5196 = vmatprep.subr.bf16.mxu0 0
        %5197 = vmatpush2.bf16.msra.mxu0 0
        %5198 = vmatprep.subr.bf16.mxu0 0
        %5199 = vmatpush2.bf16.msra.mxu0 0
        %5200 = vmatprep.subr.bf16.mxu0 0
        %5201 = vmatpush2.bf16.msra.mxu0 0
        %5202 = vmatprep.subr.bf16.mxu0 0
        %5203 = vmatpush2.bf16.msra.mxu0 0
        %5204 = vmatprep.subr.bf16.mxu0 0
        %5205 = vmatpush2.bf16.msra.mxu0 0
        %5206 = vmatprep.subr.bf16.mxu0 0
        %5207 = vmatpush2.bf16.msra.mxu0 0
        %5208 = vmatprep.mubr.bf16.mxu0 0
        %5209 = vmatmul.mubr.bf16.gmra.mxu0 %v2938
        %v5210 = vpop.f32.mrf.mxu0
        %v5211 = vadd.f32 %v1435, %v5210
        %v5212 = vpop.f32.mrf.mxu0
        %v5213 = vadd.f32 %v1439, %v5212
        %v5214 = vpop.f32.mrf.mxu0
        %v5215 = vadd.f32 %v1435, %v5214
        %v5216 = vpop.f32.mrf.mxu0
        %v5217 = vadd.f32 %v1439, %v5216
        %5218 = vdwg.mxu0
        %5219 = vmatprep.subr.bf16.mxu0 0
        %5220 = vmatpush1.bf16.msra.mxu0 0
        %5221 = vmatprep.subr.bf16.mxu0 0
        %5222 = vmatpush1.bf16.msra.mxu0 0
        %5223 = vmatprep.subr.bf16.mxu0 0
        %5224 = vmatpush1.bf16.msra.mxu0 0
        %5225 = vmatprep.subr.bf16.mxu0 0
        %5226 = vmatpush1.bf16.msra.mxu0 0
        %5227 = vmatprep.subr.bf16.mxu0 0
        %5228 = vmatpush1.bf16.msra.mxu0 0
        %5229 = vmatprep.subr.bf16.mxu0 0
        %5230 = vmatpush1.bf16.msra.mxu0 0
        %5231 = vmatprep.subr.bf16.mxu0 %v2659
        %5232 = vmatpush1.bf16.msra.mxu0 %v2658
        %5233 = vmatprep.subr.bf16.mxu0 %v2531
        %5234 = vmatpush1.bf16.msra.mxu0 %v2530
        %5235 = vmatprep.subr.bf16.mxu0 0
        %5236 = vmatpush2.bf16.msra.mxu0 0
        %5237 = vmatprep.subr.bf16.mxu0 0
        %5238 = vmatpush2.bf16.msra.mxu0 0
        %5239 = vmatprep.subr.bf16.mxu0 0
        %5240 = vmatpush2.bf16.msra.mxu0 0
        %5241 = vmatprep.subr.bf16.mxu0 0
        %5242 = vmatpush2.bf16.msra.mxu0 0
        %5243 = vmatprep.subr.bf16.mxu0 0
        %5244 = vmatpush2.bf16.msra.mxu0 0
        %5245 = vmatprep.subr.bf16.mxu0 0
        %5246 = vmatpush2.bf16.msra.mxu0 0
        %5247 = vmatprep.subr.bf16.mxu0 0
        %5248 = vmatpush2.bf16.msra.mxu0 0
        %5249 = vmatprep.subr.bf16.mxu0 0
        %5250 = vmatpush2.bf16.msra.mxu0 0
        %5251 = vmatprep.mubr.bf16.mxu0 0
        %5252 = vmatmul.mubr.bf16.gmra.mxu0 %v2938
        %v5253 = vpop.f32.mrf.mxu0
        %v5254 = vadd.f32 %v1443, %v5253
        %v5255 = vpop.f32.mrf.mxu0
        %v5256 = vadd.f32 %v1447, %v5255
        %v5257 = vpop.f32.mrf.mxu0
        %v5258 = vadd.f32 %v1443, %v5257
        %v5259 = vpop.f32.mrf.mxu0
        %v5260 = vadd.f32 %v1447, %v5259
        %5261 = vdwg.mxu0
        %5262 = vmatprep.subr.bf16.mxu0 0
        %5263 = vmatpush1.bf16.msra.mxu0 0
        %5264 = vmatprep.subr.bf16.mxu0 0
        %5265 = vmatpush1.bf16.msra.mxu0 0
        %5266 = vmatprep.subr.bf16.mxu0 0
        %5267 = vmatpush1.bf16.msra.mxu0 0
        %5268 = vmatprep.subr.bf16.mxu0 0
        %5269 = vmatpush1.bf16.msra.mxu0 0
        %5270 = vmatprep.subr.bf16.mxu0 0
        %5271 = vmatpush1.bf16.msra.mxu0 0
        %5272 = vmatprep.subr.bf16.mxu0 0
        %5273 = vmatpush1.bf16.msra.mxu0 0
        %5274 = vmatprep.subr.bf16.mxu0 %v2661
        %5275 = vmatpush1.bf16.msra.mxu0 %v2660
        %5276 = vmatprep.subr.bf16.mxu0 %v2533
        %5277 = vmatpush1.bf16.msra.mxu0 %v2532
        %5278 = vmatprep.subr.bf16.mxu0 0
        %5279 = vmatpush2.bf16.msra.mxu0 0
        %5280 = vmatprep.subr.bf16.mxu0 0
        %5281 = vmatpush2.bf16.msra.mxu0 0
        %5282 = vmatprep.subr.bf16.mxu0 0
        %5283 = vmatpush2.bf16.msra.mxu0 0
        %5284 = vmatprep.subr.bf16.mxu0 0
        %5285 = vmatpush2.bf16.msra.mxu0 0
        %5286 = vmatprep.subr.bf16.mxu0 0
        %5287 = vmatpush2.bf16.msra.mxu0 0
        %5288 = vmatprep.subr.bf16.mxu0 0
        %5289 = vmatpush2.bf16.msra.mxu0 0
        %5290 = vmatprep.subr.bf16.mxu0 0
        %5291 = vmatpush2.bf16.msra.mxu0 0
        %5292 = vmatprep.subr.bf16.mxu0 0
        %5293 = vmatpush2.bf16.msra.mxu0 0
        %5294 = vmatprep.mubr.bf16.mxu0 0
        %5295 = vmatmul.mubr.bf16.gmra.mxu0 %v2938
        %v5296 = vpop.f32.mrf.mxu0
        %v5297 = vadd.f32 %v1451, %v5296
        %v5298 = vpop.f32.mrf.mxu0
        %v5299 = vadd.f32 %v1455, %v5298
        %v5300 = vpop.f32.mrf.mxu0
        %v5301 = vadd.f32 %v1451, %v5300
        %v5302 = vpop.f32.mrf.mxu0
        %v5303 = vadd.f32 %v1455, %v5302
        %5304 = vdwg.mxu0
        %5305 = vmatprep.subr.bf16.mxu0 0
        %5306 = vmatpush1.bf16.msra.mxu0 0
        %5307 = vmatprep.subr.bf16.mxu0 0
        %5308 = vmatpush1.bf16.msra.mxu0 0
        %5309 = vmatprep.subr.bf16.mxu0 0
        %5310 = vmatpush1.bf16.msra.mxu0 0
        %5311 = vmatprep.subr.bf16.mxu0 0
        %5312 = vmatpush1.bf16.msra.mxu0 0
        %5313 = vmatprep.subr.bf16.mxu0 0
        %5314 = vmatpush1.bf16.msra.mxu0 0
        %5315 = vmatprep.subr.bf16.mxu0 0
        %5316 = vmatpush1.bf16.msra.mxu0 0
        %5317 = vmatprep.subr.bf16.mxu0 %v2663
        %5318 = vmatpush1.bf16.msra.mxu0 %v2662
        %5319 = vmatprep.subr.bf16.mxu0 %v2535
        %5320 = vmatpush1.bf16.msra.mxu0 %v2534
        %5321 = vmatprep.subr.bf16.mxu0 0
        %5322 = vmatpush2.bf16.msra.mxu0 0
        %5323 = vmatprep.subr.bf16.mxu0 0
        %5324 = vmatpush2.bf16.msra.mxu0 0
        %5325 = vmatprep.subr.bf16.mxu0 0
        %5326 = vmatpush2.bf16.msra.mxu0 0
        %5327 = vmatprep.subr.bf16.mxu0 0
        %5328 = vmatpush2.bf16.msra.mxu0 0
        %5329 = vmatprep.subr.bf16.mxu0 0
        %5330 = vmatpush2.bf16.msra.mxu0 0
        %5331 = vmatprep.subr.bf16.mxu0 0
        %5332 = vmatpush2.bf16.msra.mxu0 0
        %5333 = vmatprep.subr.bf16.mxu0 0
        %5334 = vmatpush2.bf16.msra.mxu0 0
        %5335 = vmatprep.subr.bf16.mxu0 0
        %5336 = vmatpush2.bf16.msra.mxu0 0
        %5337 = vmatprep.mubr.bf16.mxu0 0
        %5338 = vmatmul.mubr.bf16.gmra.mxu0 %v2938
        %v5339 = vpop.f32.mrf.mxu0
        %v5340 = vadd.f32 %v1459, %v5339
        %v5341 = vpop.f32.mrf.mxu0
        %v5342 = vadd.f32 %v1463, %v5341
        %v5343 = vpop.f32.mrf.mxu0
        %v5344 = vadd.f32 %v1459, %v5343
        %v5345 = vpop.f32.mrf.mxu0
        %v5346 = vadd.f32 %v1463, %v5345
        %5347 = vdwg.mxu0
        %5348 = vmatprep.subr.bf16.mxu0 0
        %5349 = vmatpush1.bf16.msra.mxu0 0
        %5350 = vmatprep.subr.bf16.mxu0 0
        %5351 = vmatpush1.bf16.msra.mxu0 0
        %5352 = vmatprep.subr.bf16.mxu0 0
        %5353 = vmatpush1.bf16.msra.mxu0 0
        %5354 = vmatprep.subr.bf16.mxu0 0
        %5355 = vmatpush1.bf16.msra.mxu0 0
        %5356 = vmatprep.subr.bf16.mxu0 0
        %5357 = vmatpush1.bf16.msra.mxu0 0
        %5358 = vmatprep.subr.bf16.mxu0 0
        %5359 = vmatpush1.bf16.msra.mxu0 0
        %5360 = vmatprep.subr.bf16.mxu0 %v2665
        %5361 = vmatpush1.bf16.msra.mxu0 %v2664
        %5362 = vmatprep.subr.bf16.mxu0 %v2537
        %5363 = vmatpush1.bf16.msra.mxu0 %v2536
        %5364 = vmatprep.subr.bf16.mxu0 0
        %5365 = vmatpush2.bf16.msra.mxu0 0
        %5366 = vmatprep.subr.bf16.mxu0 0
        %5367 = vmatpush2.bf16.msra.mxu0 0
        %5368 = vmatprep.subr.bf16.mxu0 0
        %5369 = vmatpush2.bf16.msra.mxu0 0
        %5370 = vmatprep.subr.bf16.mxu0 0
        %5371 = vmatpush2.bf16.msra.mxu0 0
        %5372 = vmatprep.subr.bf16.mxu0 0
        %5373 = vmatpush2.bf16.msra.mxu0 0
        %5374 = vmatprep.subr.bf16.mxu0 0
        %5375 = vmatpush2.bf16.msra.mxu0 0
        %5376 = vmatprep.subr.bf16.mxu0 0
        %5377 = vmatpush2.bf16.msra.mxu0 0
        %5378 = vmatprep.subr.bf16.mxu0 0
        %5379 = vmatpush2.bf16.msra.mxu0 0
        %5380 = vmatprep.mubr.bf16.mxu0 0
        %5381 = vmatmul.mubr.bf16.gmra.mxu0 %v2938
        %v5382 = vpop.f32.mrf.mxu0
        %v5383 = vadd.f32 %v1467, %v5382
        %v5384 = vpop.f32.mrf.mxu0
        %v5385 = vadd.f32 %v1471, %v5384
        %v5386 = vpop.f32.mrf.mxu0
        %v5387 = vadd.f32 %v1467, %v5386
        %v5388 = vpop.f32.mrf.mxu0
        %v5389 = vadd.f32 %v1471, %v5388
        %5390 = vdwg.mxu0
        %5391 = vmatprep.subr.bf16.mxu0 0
        %5392 = vmatpush1.bf16.msra.mxu0 0
        %5393 = vmatprep.subr.bf16.mxu0 0
        %5394 = vmatpush1.bf16.msra.mxu0 0
        %5395 = vmatprep.subr.bf16.mxu0 0
        %5396 = vmatpush1.bf16.msra.mxu0 0
        %5397 = vmatprep.subr.bf16.mxu0 0
        %5398 = vmatpush1.bf16.msra.mxu0 0
        %5399 = vmatprep.subr.bf16.mxu0 0
        %5400 = vmatpush1.bf16.msra.mxu0 0
        %5401 = vmatprep.subr.bf16.mxu0 0
        %5402 = vmatpush1.bf16.msra.mxu0 0
        %5403 = vmatprep.subr.bf16.mxu0 %v2667
        %5404 = vmatpush1.bf16.msra.mxu0 %v2666
        %5405 = vmatprep.subr.bf16.mxu0 %v2539
        %5406 = vmatpush1.bf16.msra.mxu0 %v2538
        %5407 = vmatprep.subr.bf16.mxu0 0
        %5408 = vmatpush2.bf16.msra.mxu0 0
        %5409 = vmatprep.subr.bf16.mxu0 0
        %5410 = vmatpush2.bf16.msra.mxu0 0
        %5411 = vmatprep.subr.bf16.mxu0 0
        %5412 = vmatpush2.bf16.msra.mxu0 0
        %5413 = vmatprep.subr.bf16.mxu0 0
        %5414 = vmatpush2.bf16.msra.mxu0 0
        %5415 = vmatprep.subr.bf16.mxu0 0
        %5416 = vmatpush2.bf16.msra.mxu0 0
        %5417 = vmatprep.subr.bf16.mxu0 0
        %5418 = vmatpush2.bf16.msra.mxu0 0
        %5419 = vmatprep.subr.bf16.mxu0 0
        %5420 = vmatpush2.bf16.msra.mxu0 0
        %5421 = vmatprep.subr.bf16.mxu0 0
        %5422 = vmatpush2.bf16.msra.mxu0 0
        %5423 = vmatprep.mubr.bf16.mxu0 0
        %5424 = vmatmul.mubr.bf16.gmra.mxu0 %v2938
        %v5425 = vpop.f32.mrf.mxu0
        %v5426 = vadd.f32 %v1475, %v5425
        %v5427 = vpop.f32.mrf.mxu0
        %v5428 = vadd.f32 %v1479, %v5427
        %v5429 = vpop.f32.mrf.mxu0
        %v5430 = vadd.f32 %v1475, %v5429
        %v5431 = vpop.f32.mrf.mxu0
        %v5432 = vadd.f32 %v1479, %v5431
        %5433 = vdwg.mxu0
        %5434 = vmatprep.subr.bf16.mxu0 0
        %5435 = vmatpush1.bf16.msra.mxu0 0
        %5436 = vmatprep.subr.bf16.mxu0 0
        %5437 = vmatpush1.bf16.msra.mxu0 0
        %5438 = vmatprep.subr.bf16.mxu0 0
        %5439 = vmatpush1.bf16.msra.mxu0 0
        %5440 = vmatprep.subr.bf16.mxu0 0
        %5441 = vmatpush1.bf16.msra.mxu0 0
        %5442 = vmatprep.subr.bf16.mxu0 0
        %5443 = vmatpush1.bf16.msra.mxu0 0
        %5444 = vmatprep.subr.bf16.mxu0 0
        %5445 = vmatpush1.bf16.msra.mxu0 0
        %5446 = vmatprep.subr.bf16.mxu0 %v2669
        %5447 = vmatpush1.bf16.msra.mxu0 %v2668
        %5448 = vmatprep.subr.bf16.mxu0 %v2541
        %5449 = vmatpush1.bf16.msra.mxu0 %v2540
        %5450 = vmatprep.subr.bf16.mxu0 0
        %5451 = vmatpush2.bf16.msra.mxu0 0
        %5452 = vmatprep.subr.bf16.mxu0 0
        %5453 = vmatpush2.bf16.msra.mxu0 0
        %5454 = vmatprep.subr.bf16.mxu0 0
        %5455 = vmatpush2.bf16.msra.mxu0 0
        %5456 = vmatprep.subr.bf16.mxu0 0
        %5457 = vmatpush2.bf16.msra.mxu0 0
        %5458 = vmatprep.subr.bf16.mxu0 0
        %5459 = vmatpush2.bf16.msra.mxu0 0
        %5460 = vmatprep.subr.bf16.mxu0 0
        %5461 = vmatpush2.bf16.msra.mxu0 0
        %5462 = vmatprep.subr.bf16.mxu0 0
        %5463 = vmatpush2.bf16.msra.mxu0 0
        %5464 = vmatprep.subr.bf16.mxu0 0
        %5465 = vmatpush2.bf16.msra.mxu0 0
        %5466 = vmatprep.mubr.bf16.mxu0 0
        %5467 = vmatmul.mubr.bf16.gmra.mxu0 %v2938
        %v5468 = vpop.f32.mrf.mxu0
        %v5469 = vadd.f32 %v1483, %v5468
        %v5470 = vpop.f32.mrf.mxu0
        %v5471 = vadd.f32 %v1487, %v5470
        %v5472 = vpop.f32.mrf.mxu0
        %v5473 = vadd.f32 %v1483, %v5472
        %v5474 = vpop.f32.mrf.mxu0
        %v5475 = vadd.f32 %v1487, %v5474
        %5476 = vdwg.mxu0
        %5477 = vmatprep.subr.bf16.mxu0 0
        %5478 = vmatpush1.bf16.msra.mxu0 0
        %5479 = vmatprep.subr.bf16.mxu0 0
        %5480 = vmatpush1.bf16.msra.mxu0 0
        %5481 = vmatprep.subr.bf16.mxu0 0
        %5482 = vmatpush1.bf16.msra.mxu0 0
        %5483 = vmatprep.subr.bf16.mxu0 0
        %5484 = vmatpush1.bf16.msra.mxu0 0
        %5485 = vmatprep.subr.bf16.mxu0 0
        %5486 = vmatpush1.bf16.msra.mxu0 0
        %5487 = vmatprep.subr.bf16.mxu0 0
        %5488 = vmatpush1.bf16.msra.mxu0 0
        %5489 = vmatprep.subr.bf16.mxu0 %v2671
        %5490 = vmatpush1.bf16.msra.mxu0 %v2670
        %5491 = vmatprep.subr.bf16.mxu0 %v2543
        %5492 = vmatpush1.bf16.msra.mxu0 %v2542
        %5493 = vmatprep.subr.bf16.mxu0 0
        %5494 = vmatpush2.bf16.msra.mxu0 0
        %5495 = vmatprep.subr.bf16.mxu0 0
        %5496 = vmatpush2.bf16.msra.mxu0 0
        %5497 = vmatprep.subr.bf16.mxu0 0
        %5498 = vmatpush2.bf16.msra.mxu0 0
        %5499 = vmatprep.subr.bf16.mxu0 0
        %5500 = vmatpush2.bf16.msra.mxu0 0
        %5501 = vmatprep.subr.bf16.mxu0 0
        %5502 = vmatpush2.bf16.msra.mxu0 0
        %5503 = vmatprep.subr.bf16.mxu0 0
        %5504 = vmatpush2.bf16.msra.mxu0 0
        %5505 = vmatprep.subr.bf16.mxu0 0
        %5506 = vmatpush2.bf16.msra.mxu0 0
        %5507 = vmatprep.subr.bf16.mxu0 0
        %5508 = vmatpush2.bf16.msra.mxu0 0
        %5509 = vmatprep.mubr.bf16.mxu0 0
        %5510 = vmatmul.mubr.bf16.gmra.mxu0 %v2938
        %v5511 = vpop.f32.mrf.mxu0
        %v5512 = vadd.f32 %v1491, %v5511
        %v5513 = vpop.f32.mrf.mxu0
        %v5514 = vadd.f32 %v1495, %v5513
        %v5515 = vpop.f32.mrf.mxu0
        %v5516 = vadd.f32 %v1491, %v5515
        %v5517 = vpop.f32.mrf.mxu0
        %v5518 = vadd.f32 %v1495, %v5517
        %5519 = vdwg.mxu0
        %5520 = vmatprep.subr.bf16.mxu0 0
        %5521 = vmatpush1.bf16.msra.mxu0 0
        %5522 = vmatprep.subr.bf16.mxu0 0
        %5523 = vmatpush1.bf16.msra.mxu0 0
        %5524 = vmatprep.subr.bf16.mxu0 0
        %5525 = vmatpush1.bf16.msra.mxu0 0
        %5526 = vmatprep.subr.bf16.mxu0 0
        %5527 = vmatpush1.bf16.msra.mxu0 0
        %5528 = vmatprep.subr.bf16.mxu0 0
        %5529 = vmatpush1.bf16.msra.mxu0 0
        %5530 = vmatprep.subr.bf16.mxu0 0
        %5531 = vmatpush1.bf16.msra.mxu0 0
        %5532 = vmatprep.subr.bf16.mxu0 %v2673
        %5533 = vmatpush1.bf16.msra.mxu0 %v2672
        %5534 = vmatprep.subr.bf16.mxu0 %v2545
        %5535 = vmatpush1.bf16.msra.mxu0 %v2544
        %5536 = vmatprep.subr.bf16.mxu0 0
        %5537 = vmatpush2.bf16.msra.mxu0 0
        %5538 = vmatprep.subr.bf16.mxu0 0
        %5539 = vmatpush2.bf16.msra.mxu0 0
        %5540 = vmatprep.subr.bf16.mxu0 0
        %5541 = vmatpush2.bf16.msra.mxu0 0
        %5542 = vmatprep.subr.bf16.mxu0 0
        %5543 = vmatpush2.bf16.msra.mxu0 0
        %5544 = vmatprep.subr.bf16.mxu0 0
        %5545 = vmatpush2.bf16.msra.mxu0 0
        %5546 = vmatprep.subr.bf16.mxu0 0
        %5547 = vmatpush2.bf16.msra.mxu0 0
        %5548 = vmatprep.subr.bf16.mxu0 0
        %5549 = vmatpush2.bf16.msra.mxu0 0
        %5550 = vmatprep.subr.bf16.mxu0 0
        %5551 = vmatpush2.bf16.msra.mxu0 0
        %5552 = vmatprep.mubr.bf16.mxu0 0
        %5553 = vmatmul.mubr.bf16.gmra.mxu0 %v2938
        %v5554 = vpop.f32.mrf.mxu0
        %v5555 = vadd.f32 %v1499, %v5554
        %v5556 = vpop.f32.mrf.mxu0
        %v5557 = vadd.f32 %v1503, %v5556
        %v5558 = vpop.f32.mrf.mxu0
        %v5559 = vadd.f32 %v1499, %v5558
        %v5560 = vpop.f32.mrf.mxu0
        %v5561 = vadd.f32 %v1503, %v5560
        %5562 = vdwg.mxu0
        %5563 = vmatprep.subr.bf16.mxu0 0
        %5564 = vmatpush1.bf16.msra.mxu0 0
        %5565 = vmatprep.subr.bf16.mxu0 0
        %5566 = vmatpush1.bf16.msra.mxu0 0
        %5567 = vmatprep.subr.bf16.mxu0 0
        %5568 = vmatpush1.bf16.msra.mxu0 0
        %5569 = vmatprep.subr.bf16.mxu0 0
        %5570 = vmatpush1.bf16.msra.mxu0 0
        %5571 = vmatprep.subr.bf16.mxu0 0
        %5572 = vmatpush1.bf16.msra.mxu0 0
        %5573 = vmatprep.subr.bf16.mxu0 0
        %5574 = vmatpush1.bf16.msra.mxu0 0
        %5575 = vmatprep.subr.bf16.mxu0 %v2675
        %5576 = vmatpush1.bf16.msra.mxu0 %v2674
        %5577 = vmatprep.subr.bf16.mxu0 %v2547
        %5578 = vmatpush1.bf16.msra.mxu0 %v2546
        %5579 = vmatprep.subr.bf16.mxu0 0
        %5580 = vmatpush2.bf16.msra.mxu0 0
        %5581 = vmatprep.subr.bf16.mxu0 0
        %5582 = vmatpush2.bf16.msra.mxu0 0
        %5583 = vmatprep.subr.bf16.mxu0 0
        %5584 = vmatpush2.bf16.msra.mxu0 0
        %5585 = vmatprep.subr.bf16.mxu0 0
        %5586 = vmatpush2.bf16.msra.mxu0 0
        %5587 = vmatprep.subr.bf16.mxu0 0
        %5588 = vmatpush2.bf16.msra.mxu0 0
        %5589 = vmatprep.subr.bf16.mxu0 0
        %5590 = vmatpush2.bf16.msra.mxu0 0
        %5591 = vmatprep.subr.bf16.mxu0 0
        %5592 = vmatpush2.bf16.msra.mxu0 0
        %5593 = vmatprep.subr.bf16.mxu0 0
        %5594 = vmatpush2.bf16.msra.mxu0 0
        %5595 = vmatprep.mubr.bf16.mxu0 0
        %5596 = vmatmul.mubr.bf16.gmra.mxu0 %v2938
        %v5597 = vpop.f32.mrf.mxu0
        %v5598 = vadd.f32 %v1507, %v5597
        %v5599 = vpop.f32.mrf.mxu0
        %v5600 = vadd.f32 %v1511, %v5599
        %v5601 = vpop.f32.mrf.mxu0
        %v5602 = vadd.f32 %v1507, %v5601
        %v5603 = vpop.f32.mrf.mxu0
        %v5604 = vadd.f32 %v1511, %v5603
        %5605 = vdwg.mxu0
        %5606 = vmatprep.subr.bf16.mxu0 0
        %5607 = vmatpush1.bf16.msra.mxu0 0
        %5608 = vmatprep.subr.bf16.mxu0 0
        %5609 = vmatpush1.bf16.msra.mxu0 0
        %5610 = vmatprep.subr.bf16.mxu0 0
        %5611 = vmatpush1.bf16.msra.mxu0 0
        %5612 = vmatprep.subr.bf16.mxu0 0
        %5613 = vmatpush1.bf16.msra.mxu0 0
        %5614 = vmatprep.subr.bf16.mxu0 0
        %5615 = vmatpush1.bf16.msra.mxu0 0
        %5616 = vmatprep.subr.bf16.mxu0 0
        %5617 = vmatpush1.bf16.msra.mxu0 0
        %5618 = vmatprep.subr.bf16.mxu0 %v2677
        %5619 = vmatpush1.bf16.msra.mxu0 %v2676
        %5620 = vmatprep.subr.bf16.mxu0 %v2549
        %5621 = vmatpush1.bf16.msra.mxu0 %v2548
        %5622 = vmatprep.subr.bf16.mxu0 0
        %5623 = vmatpush2.bf16.msra.mxu0 0
        %5624 = vmatprep.subr.bf16.mxu0 0
        %5625 = vmatpush2.bf16.msra.mxu0 0
        %5626 = vmatprep.subr.bf16.mxu0 0
        %5627 = vmatpush2.bf16.msra.mxu0 0
        %5628 = vmatprep.subr.bf16.mxu0 0
        %5629 = vmatpush2.bf16.msra.mxu0 0
        %5630 = vmatprep.subr.bf16.mxu0 0
        %5631 = vmatpush2.bf16.msra.mxu0 0
        %5632 = vmatprep.subr.bf16.mxu0 0
        %5633 = vmatpush2.bf16.msra.mxu0 0
        %5634 = vmatprep.subr.bf16.mxu0 0
        %5635 = vmatpush2.bf16.msra.mxu0 0
        %5636 = vmatprep.subr.bf16.mxu0 0
        %5637 = vmatpush2.bf16.msra.mxu0 0
        %5638 = vmatprep.mubr.bf16.mxu0 0
        %5639 = vmatmul.mubr.bf16.gmra.mxu0 %v2938
        %v5640 = vpop.f32.mrf.mxu0
        %v5641 = vadd.f32 %v1515, %v5640
        %v5642 = vpop.f32.mrf.mxu0
        %v5643 = vadd.f32 %v1519, %v5642
        %v5644 = vpop.f32.mrf.mxu0
        %v5645 = vadd.f32 %v1515, %v5644
        %v5646 = vpop.f32.mrf.mxu0
        %v5647 = vadd.f32 %v1519, %v5646
        %5648 = vdwg.mxu0
        %5649 = vmatprep.subr.bf16.mxu0 0
        %5650 = vmatpush1.bf16.msra.mxu0 0
        %5651 = vmatprep.subr.bf16.mxu0 0
        %5652 = vmatpush1.bf16.msra.mxu0 0
        %5653 = vmatprep.subr.bf16.mxu0 0
        %5654 = vmatpush1.bf16.msra.mxu0 0
        %5655 = vmatprep.subr.bf16.mxu0 0
        %5656 = vmatpush1.bf16.msra.mxu0 0
        %5657 = vmatprep.subr.bf16.mxu0 0
        %5658 = vmatpush1.bf16.msra.mxu0 0
        %5659 = vmatprep.subr.bf16.mxu0 0
        %5660 = vmatpush1.bf16.msra.mxu0 0
        %5661 = vmatprep.subr.bf16.mxu0 %v2679
        %5662 = vmatpush1.bf16.msra.mxu0 %v2678
        %5663 = vmatprep.subr.bf16.mxu0 %v2551
        %5664 = vmatpush1.bf16.msra.mxu0 %v2550
        %5665 = vmatprep.subr.bf16.mxu0 0
        %5666 = vmatpush2.bf16.msra.mxu0 0
        %5667 = vmatprep.subr.bf16.mxu0 0
        %5668 = vmatpush2.bf16.msra.mxu0 0
        %5669 = vmatprep.subr.bf16.mxu0 0
        %5670 = vmatpush2.bf16.msra.mxu0 0
        %5671 = vmatprep.subr.bf16.mxu0 0
        %5672 = vmatpush2.bf16.msra.mxu0 0
        %5673 = vmatprep.subr.bf16.mxu0 0
        %5674 = vmatpush2.bf16.msra.mxu0 0
        %5675 = vmatprep.subr.bf16.mxu0 0
        %5676 = vmatpush2.bf16.msra.mxu0 0
        %5677 = vmatprep.subr.bf16.mxu0 0
        %5678 = vmatpush2.bf16.msra.mxu0 0
        %5679 = vmatprep.subr.bf16.mxu0 0
        %5680 = vmatpush2.bf16.msra.mxu0 0
        %5681 = vmatprep.mubr.bf16.mxu0 0
        %5682 = vmatmul.mubr.bf16.gmra.mxu0 %v2938
        %v5683 = vpop.f32.mrf.mxu0
        %v5684 = vadd.f32 %v1523, %v5683
        %v5685 = vpop.f32.mrf.mxu0
        %v5686 = vadd.f32 %v1527, %v5685
        %v5687 = vpop.f32.mrf.mxu0
        %v5688 = vadd.f32 %v1523, %v5687
        %v5689 = vpop.f32.mrf.mxu0
        %v5690 = vadd.f32 %v1527, %v5689
        %5691 = vdwg.mxu0
        %5692 = vst [vmem:[%s712] sm:$0xff] %v2975
        %5693 = vst [vmem:[%s712 + $0x8] sm:$0xff] %v2977
        %5694 = vst [vmem:[%s712 + $0x10] sm:$0xff] %v3018
        %5695 = vst [vmem:[%s712 + $0x18] sm:$0xff] %v3020
        %5696 = vst [vmem:[%s712 + $0x20] sm:$0xff] %v3061
        %5697 = vst [vmem:[%s712 + $0x28] sm:$0xff] %v3063
        %5698 = vst [vmem:[%s712 + $0x30] sm:$0xff] %v3104
        %5699 = vst [vmem:[%s712 + $0x38] sm:$0xff] %v3106
        %5700 = vst [vmem:[%s712 + $0x40] sm:$0xff] %v3147
        %5701 = vst [vmem:[%s712 + $0x48] sm:$0xff] %v3149
        %5702 = vst [vmem:[%s712 + $0x50] sm:$0xff] %v3190
        %5703 = vst [vmem:[%s712 + $0x58] sm:$0xff] %v3192
        %5704 = vst [vmem:[%s712 + $0x60] sm:$0xff] %v3233
        %5705 = vst [vmem:[%s712 + $0x68] sm:$0xff] %v3235
        %5706 = vst [vmem:[%s712 + $0x70] sm:$0xff] %v3276
        %5707 = vst [vmem:[%s712 + $0x78] sm:$0xff] %v3278
        %5708 = vst [vmem:[%s712 + $0x80] sm:$0xff] %v3319
        %5709 = vst [vmem:[%s712 + $0x88] sm:$0xff] %v3321
        %5710 = vst [vmem:[%s712 + $0x90] sm:$0xff] %v3362
        %5711 = vst [vmem:[%s712 + $0x98] sm:$0xff] %v3364
        %5712 = vst [vmem:[%s712 + $0xa0] sm:$0xff] %v3405
        %5713 = vst [vmem:[%s712 + $0xa8] sm:$0xff] %v3407
        %5714 = vst [vmem:[%s712 + $0xb0] sm:$0xff] %v3448
        %5715 = vst [vmem:[%s712 + $0xb8] sm:$0xff] %v3450
        %5716 = vst [vmem:[%s712 + $0xc0] sm:$0xff] %v3491
        %5717 = vst [vmem:[%s712 + $0xc8] sm:$0xff] %v3493
        %5718 = vst [vmem:[%s712 + $0xd0] sm:$0xff] %v3534
        %5719 = vst [vmem:[%s712 + $0xd8] sm:$0xff] %v3536
        %5720 = vst [vmem:[%s712 + $0xe0] sm:$0xff] %v3577
        %5721 = vst [vmem:[%s712 + $0xe8] sm:$0xff] %v3579
        %5722 = vst [vmem:[%s712 + $0xf0] sm:$0xff] %v3620
        %5723 = vst [vmem:[%s712 + $0xf8] sm:$0xff] %v3622
        %5724 = vst [vmem:[%s712 + $0x100] sm:$0xff] %v3663
        %5725 = vst [vmem:[%s712 + $0x108] sm:$0xff] %v3665
        %5726 = vst [vmem:[%s712 + $0x110] sm:$0xff] %v3706
        %5727 = vst [vmem:[%s712 + $0x118] sm:$0xff] %v3708
        %5728 = vst [vmem:[%s712 + $0x120] sm:$0xff] %v3749
        %5729 = vst [vmem:[%s712 + $0x128] sm:$0xff] %v3751
        %5730 = vst [vmem:[%s712 + $0x130] sm:$0xff] %v3792
        %5731 = vst [vmem:[%s712 + $0x138] sm:$0xff] %v3794
        %5732 = vst [vmem:[%s712 + $0x140] sm:$0xff] %v3835
        %5733 = vst [vmem:[%s712 + $0x148] sm:$0xff] %v3837
        %5734 = vst [vmem:[%s712 + $0x150] sm:$0xff] %v3878
        %5735 = vst [vmem:[%s712 + $0x158] sm:$0xff] %v3880
        %5736 = vst [vmem:[%s712 + $0x160] sm:$0xff] %v3921
        %5737 = vst [vmem:[%s712 + $0x168] sm:$0xff] %v3923
        %5738 = vst [vmem:[%s712 + $0x170] sm:$0xff] %v3964
        %5739 = vst [vmem:[%s712 + $0x178] sm:$0xff] %v3966
        %5740 = vst [vmem:[%s712 + $0x180] sm:$0xff] %v4007
        %5741 = vst [vmem:[%s712 + $0x188] sm:$0xff] %v4009
        %5742 = vst [vmem:[%s712 + $0x190] sm:$0xff] %v4050
        %5743 = vst [vmem:[%s712 + $0x198] sm:$0xff] %v4052
        %5744 = vst [vmem:[%s712 + $0x1a0] sm:$0xff] %v4093
        %5745 = vst [vmem:[%s712 + $0x1a8] sm:$0xff] %v4095
        %5746 = vst [vmem:[%s712 + $0x1b0] sm:$0xff] %v4136
        %5747 = vst [vmem:[%s712 + $0x1b8] sm:$0xff] %v4138
        %5748 = vst [vmem:[%s712 + $0x1c0] sm:$0xff] %v4179
        %5749 = vst [vmem:[%s712 + $0x1c8] sm:$0xff] %v4181
        %5750 = vst [vmem:[%s712 + $0x1d0] sm:$0xff] %v4222
        %5751 = vst [vmem:[%s712 + $0x1d8] sm:$0xff] %v4224
        %5752 = vst [vmem:[%s712 + $0x1e0] sm:$0xff] %v4265
        %5753 = vst [vmem:[%s712 + $0x1e8] sm:$0xff] %v4267
        %5754 = vst [vmem:[%s712 + $0x1f0] sm:$0xff] %v4308
        %5755 = vst [vmem:[%s712 + $0x1f8] sm:$0xff] %v4310
        %5756 = vst [vmem:[%s712 + $0x200] sm:$0xff] %v4351
        %5757 = vst [vmem:[%s712 + $0x208] sm:$0xff] %v4353
        %5758 = vst [vmem:[%s712 + $0x210] sm:$0xff] %v4394
        %5759 = vst [vmem:[%s712 + $0x218] sm:$0xff] %v4396
        %5760 = vst [vmem:[%s712 + $0x220] sm:$0xff] %v4437
        %5761 = vst [vmem:[%s712 + $0x228] sm:$0xff] %v4439
        %5762 = vst [vmem:[%s712 + $0x230] sm:$0xff] %v4480
        %5763 = vst [vmem:[%s712 + $0x238] sm:$0xff] %v4482
        %5764 = vst [vmem:[%s712 + $0x240] sm:$0xff] %v4523
        %5765 = vst [vmem:[%s712 + $0x248] sm:$0xff] %v4525
        %5766 = vst [vmem:[%s712 + $0x250] sm:$0xff] %v4566
        %5767 = vst [vmem:[%s712 + $0x258] sm:$0xff] %v4568
        %5768 = vst [vmem:[%s712 + $0x260] sm:$0xff] %v4609
        %5769 = vst [vmem:[%s712 + $0x268] sm:$0xff] %v4611
        %5770 = vst [vmem:[%s712 + $0x270] sm:$0xff] %v4652
        %5771 = vst [vmem:[%s712 + $0x278] sm:$0xff] %v4654
        %5772 = vst [vmem:[%s712 + $0x280] sm:$0xff] %v4695
        %5773 = vst [vmem:[%s712 + $0x288] sm:$0xff] %v4697
        %5774 = vst [vmem:[%s712 + $0x290] sm:$0xff] %v4738
        %5775 = vst [vmem:[%s712 + $0x298] sm:$0xff] %v4740
        %5776 = vst [vmem:[%s712 + $0x2a0] sm:$0xff] %v4781
        %5777 = vst [vmem:[%s712 + $0x2a8] sm:$0xff] %v4783
        %5778 = vst [vmem:[%s712 + $0x2b0] sm:$0xff] %v4824
        %5779 = vst [vmem:[%s712 + $0x2b8] sm:$0xff] %v4826
        %5780 = vst [vmem:[%s712 + $0x2c0] sm:$0xff] %v4867
        %5781 = vst [vmem:[%s712 + $0x2c8] sm:$0xff] %v4869
        %5782 = vst [vmem:[%s712 + $0x2d0] sm:$0xff] %v4910
        %5783 = vst [vmem:[%s712 + $0x2d8] sm:$0xff] %v4912
        %5784 = vst [vmem:[%s712 + $0x2e0] sm:$0xff] %v4953
        %5785 = vst [vmem:[%s712 + $0x2e8] sm:$0xff] %v4955
        %5786 = vst [vmem:[%s712 + $0x2f0] sm:$0xff] %v4996
        %5787 = vst [vmem:[%s712 + $0x2f8] sm:$0xff] %v4998
        %5788 = vst [vmem:[%s712 + $0x300] sm:$0xff] %v5039
        %5789 = vst [vmem:[%s712 + $0x308] sm:$0xff] %v5041
        %5790 = vst [vmem:[%s712 + $0x310] sm:$0xff] %v5082
        %5791 = vst [vmem:[%s712 + $0x318] sm:$0xff] %v5084
        %5792 = vst [vmem:[%s712 + $0x320] sm:$0xff] %v5125
        %5793 = vst [vmem:[%s712 + $0x328] sm:$0xff] %v5127
        %5794 = vst [vmem:[%s712 + $0x330] sm:$0xff] %v5168
        %5795 = vst [vmem:[%s712 + $0x338] sm:$0xff] %v5170
        %5796 = vst [vmem:[%s712 + $0x340] sm:$0xff] %v5211
        %5797 = vst [vmem:[%s712 + $0x348] sm:$0xff] %v5213
        %5798 = vst [vmem:[%s712 + $0x350] sm:$0xff] %v5254
        %5799 = vst [vmem:[%s712 + $0x358] sm:$0xff] %v5256
        %5800 = vst [vmem:[%s712 + $0x360] sm:$0xff] %v5297
        %5801 = vst [vmem:[%s712 + $0x368] sm:$0xff] %v5299
        %5802 = vst [vmem:[%s712 + $0x370] sm:$0xff] %v5340
        %5803 = vst [vmem:[%s712 + $0x378] sm:$0xff] %v5342
        %5804 = vst [vmem:[%s712 + $0x380] sm:$0xff] %v5383
        %5805 = vst [vmem:[%s712 + $0x388] sm:$0xff] %v5385
        %5806 = vst [vmem:[%s712 + $0x390] sm:$0xff] %v5426
        %5807 = vst [vmem:[%s712 + $0x398] sm:$0xff] %v5428
        %5808 = vst [vmem:[%s712 + $0x3a0] sm:$0xff] %v5469
        %5809 = vst [vmem:[%s712 + $0x3a8] sm:$0xff] %v5471
        %5810 = vst [vmem:[%s712 + $0x3b0] sm:$0xff] %v5512
        %5811 = vst [vmem:[%s712 + $0x3b8] sm:$0xff] %v5514
        %5812 = vst [vmem:[%s712 + $0x3c0] sm:$0xff] %v5555
        %5813 = vst [vmem:[%s712 + $0x3c8] sm:$0xff] %v5557
        %5814 = vst [vmem:[%s712 + $0x3d0] sm:$0xff] %v5598
        %5815 = vst [vmem:[%s712 + $0x3d8] sm:$0xff] %v5600
        %5816 = vst [vmem:[%s712 + $0x3e0] sm:$0xff] %v5641
        %5817 = vst [vmem:[%s712 + $0x3e8] sm:$0xff] %v5643
        %5818 = vst [vmem:[%s712 + $0x3f0] sm:$0xff] %v5684
        %5819 = vst [vmem:[%s712 + $0x3f8] sm:$0xff] %v5686
        %5820 = vst [vmem:[%s712 + $0x400] sm:$0xff] %v2979
        %5821 = vst [vmem:[%s712 + $0x408] sm:$0xff] %v2981
        %5822 = vst [vmem:[%s712 + $0x410] sm:$0xff] %v3022
        %5823 = vst [vmem:[%s712 + $0x418] sm:$0xff] %v3024
        %5824 = vst [vmem:[%s712 + $0x420] sm:$0xff] %v3065
        %5825 = vst [vmem:[%s712 + $0x428] sm:$0xff] %v3067
        %5826 = vst [vmem:[%s712 + $0x430] sm:$0xff] %v3108
        %5827 = vst [vmem:[%s712 + $0x438] sm:$0xff] %v3110
        %5828 = vst [vmem:[%s712 + $0x440] sm:$0xff] %v3151
        %5829 = vst [vmem:[%s712 + $0x448] sm:$0xff] %v3153
        %5830 = vst [vmem:[%s712 + $0x450] sm:$0xff] %v3194
        %5831 = vst [vmem:[%s712 + $0x458] sm:$0xff] %v3196
        %5832 = vst [vmem:[%s712 + $0x460] sm:$0xff] %v3237
        %5833 = vst [vmem:[%s712 + $0x468] sm:$0xff] %v3239
        %5834 = vst [vmem:[%s712 + $0x470] sm:$0xff] %v3280
        %5835 = vst [vmem:[%s712 + $0x478] sm:$0xff] %v3282
        %5836 = vst [vmem:[%s712 + $0x480] sm:$0xff] %v3323
        %5837 = vst [vmem:[%s712 + $0x488] sm:$0xff] %v3325
        %5838 = vst [vmem:[%s712 + $0x490] sm:$0xff] %v3366
        %5839 = vst [vmem:[%s712 + $0x498] sm:$0xff] %v3368
        %5840 = vst [vmem:[%s712 + $0x4a0] sm:$0xff] %v3409
        %5841 = vst [vmem:[%s712 + $0x4a8] sm:$0xff] %v3411
        %5842 = vst [vmem:[%s712 + $0x4b0] sm:$0xff] %v3452
        %5843 = vst [vmem:[%s712 + $0x4b8] sm:$0xff] %v3454
        %5844 = vst [vmem:[%s712 + $0x4c0] sm:$0xff] %v3495
        %5845 = vst [vmem:[%s712 + $0x4c8] sm:$0xff] %v3497
        %5846 = vst [vmem:[%s712 + $0x4d0] sm:$0xff] %v3538
        %5847 = vst [vmem:[%s712 + $0x4d8] sm:$0xff] %v3540
        %5848 = vst [vmem:[%s712 + $0x4e0] sm:$0xff] %v3581
        %5849 = vst [vmem:[%s712 + $0x4e8] sm:$0xff] %v3583
        %5850 = vst [vmem:[%s712 + $0x4f0] sm:$0xff] %v3624
        %5851 = vst [vmem:[%s712 + $0x4f8] sm:$0xff] %v3626
        %5852 = vst [vmem:[%s712 + $0x500] sm:$0xff] %v3667
        %5853 = vst [vmem:[%s712 + $0x508] sm:$0xff] %v3669
        %5854 = vst [vmem:[%s712 + $0x510] sm:$0xff] %v3710
        %5855 = vst [vmem:[%s712 + $0x518] sm:$0xff] %v3712
        %5856 = vst [vmem:[%s712 + $0x520] sm:$0xff] %v3753
        %5857 = vst [vmem:[%s712 + $0x528] sm:$0xff] %v3755
        %5858 = vst [vmem:[%s712 + $0x530] sm:$0xff] %v3796
        %5859 = vst [vmem:[%s712 + $0x538] sm:$0xff] %v3798
        %5860 = vst [vmem:[%s712 + $0x540] sm:$0xff] %v3839
        %5861 = vst [vmem:[%s712 + $0x548] sm:$0xff] %v3841
        %5862 = vst [vmem:[%s712 + $0x550] sm:$0xff] %v3882
        %5863 = vst [vmem:[%s712 + $0x558] sm:$0xff] %v3884
        %5864 = vst [vmem:[%s712 + $0x560] sm:$0xff] %v3925
        %5865 = vst [vmem:[%s712 + $0x568] sm:$0xff] %v3927
        %5866 = vst [vmem:[%s712 + $0x570] sm:$0xff] %v3968
        %5867 = vst [vmem:[%s712 + $0x578] sm:$0xff] %v3970
        %5868 = vst [vmem:[%s712 + $0x580] sm:$0xff] %v4011
        %5869 = vst [vmem:[%s712 + $0x588] sm:$0xff] %v4013
        %5870 = vst [vmem:[%s712 + $0x590] sm:$0xff] %v4054
        %5871 = vst [vmem:[%s712 + $0x598] sm:$0xff] %v4056
        %5872 = vst [vmem:[%s712 + $0x5a0] sm:$0xff] %v4097
        %5873 = vst [vmem:[%s712 + $0x5a8] sm:$0xff] %v4099
        %5874 = vst [vmem:[%s712 + $0x5b0] sm:$0xff] %v4140
        %5875 = vst [vmem:[%s712 + $0x5b8] sm:$0xff] %v4142
        %5876 = vst [vmem:[%s712 + $0x5c0] sm:$0xff] %v4183
        %5877 = vst [vmem:[%s712 + $0x5c8] sm:$0xff] %v4185
        %5878 = vst [vmem:[%s712 + $0x5d0] sm:$0xff] %v4226
        %5879 = vst [vmem:[%s712 + $0x5d8] sm:$0xff] %v4228
        %5880 = vst [vmem:[%s712 + $0x5e0] sm:$0xff] %v4269
        %5881 = vst [vmem:[%s712 + $0x5e8] sm:$0xff] %v4271
        %5882 = vst [vmem:[%s712 + $0x5f0] sm:$0xff] %v4312
        %5883 = vst [vmem:[%s712 + $0x5f8] sm:$0xff] %v4314
        %5884 = vst [vmem:[%s712 + $0x600] sm:$0xff] %v4355
        %5885 = vst [vmem:[%s712 + $0x608] sm:$0xff] %v4357
        %5886 = vst [vmem:[%s712 + $0x610] sm:$0xff] %v4398
        %5887 = vst [vmem:[%s712 + $0x618] sm:$0xff] %v4400
        %5888 = vst [vmem:[%s712 + $0x620] sm:$0xff] %v4441
        %5889 = vst [vmem:[%s712 + $0x628] sm:$0xff] %v4443
        %5890 = vst [vmem:[%s712 + $0x630] sm:$0xff] %v4484
        %5891 = vst [vmem:[%s712 + $0x638] sm:$0xff] %v4486
        %5892 = vst [vmem:[%s712 + $0x640] sm:$0xff] %v4527
        %5893 = vst [vmem:[%s712 + $0x648] sm:$0xff] %v4529
        %5894 = vst [vmem:[%s712 + $0x650] sm:$0xff] %v4570
        %5895 = vst [vmem:[%s712 + $0x658] sm:$0xff] %v4572
        %5896 = vst [vmem:[%s712 + $0x660] sm:$0xff] %v4613
        %5897 = vst [vmem:[%s712 + $0x668] sm:$0xff] %v4615
        %5898 = vst [vmem:[%s712 + $0x670] sm:$0xff] %v4656
        %5899 = vst [vmem:[%s712 + $0x678] sm:$0xff] %v4658
        %5900 = vst [vmem:[%s712 + $0x680] sm:$0xff] %v4699
        %5901 = vst [vmem:[%s712 + $0x688] sm:$0xff] %v4701
        %5902 = vst [vmem:[%s712 + $0x690] sm:$0xff] %v4742
        %5903 = vst [vmem:[%s712 + $0x698] sm:$0xff] %v4744
        %5904 = vst [vmem:[%s712 + $0x6a0] sm:$0xff] %v4785
        %5905 = vst [vmem:[%s712 + $0x6a8] sm:$0xff] %v4787
        %5906 = vst [vmem:[%s712 + $0x6b0] sm:$0xff] %v4828
        %5907 = vst [vmem:[%s712 + $0x6b8] sm:$0xff] %v4830
        %5908 = vst [vmem:[%s712 + $0x6c0] sm:$0xff] %v4871
        %5909 = vst [vmem:[%s712 + $0x6c8] sm:$0xff] %v4873
        %5910 = vst [vmem:[%s712 + $0x6d0] sm:$0xff] %v4914
        %5911 = vst [vmem:[%s712 + $0x6d8] sm:$0xff] %v4916
        %5912 = vst [vmem:[%s712 + $0x6e0] sm:$0xff] %v4957
        %5913 = vst [vmem:[%s712 + $0x6e8] sm:$0xff] %v4959
        %5914 = vst [vmem:[%s712 + $0x6f0] sm:$0xff] %v5000
        %5915 = vst [vmem:[%s712 + $0x6f8] sm:$0xff] %v5002
        %5916 = vst [vmem:[%s712 + $0x700] sm:$0xff] %v5043
        %5917 = vst [vmem:[%s712 + $0x708] sm:$0xff] %v5045
        %5918 = vst [vmem:[%s712 + $0x710] sm:$0xff] %v5086
        %5919 = vst [vmem:[%s712 + $0x718] sm:$0xff] %v5088
        %5920 = vst [vmem:[%s712 + $0x720] sm:$0xff] %v5129
        %5921 = vst [vmem:[%s712 + $0x728] sm:$0xff] %v5131
        %5922 = vst [vmem:[%s712 + $0x730] sm:$0xff] %v5172
        %5923 = vst [vmem:[%s712 + $0x738] sm:$0xff] %v5174
        %5924 = vst [vmem:[%s712 + $0x740] sm:$0xff] %v5215
        %5925 = vst [vmem:[%s712 + $0x748] sm:$0xff] %v5217
        %5926 = vst [vmem:[%s712 + $0x750] sm:$0xff] %v5258
        %5927 = vst [vmem:[%s712 + $0x758] sm:$0xff] %v5260
        %5928 = vst [vmem:[%s712 + $0x760] sm:$0xff] %v5301
        %5929 = vst [vmem:[%s712 + $0x768] sm:$0xff] %v5303
        %5930 = vst [vmem:[%s712 + $0x770] sm:$0xff] %v5344
        %5931 = vst [vmem:[%s712 + $0x778] sm:$0xff] %v5346
        %5932 = vst [vmem:[%s712 + $0x780] sm:$0xff] %v5387
        %5933 = vst [vmem:[%s712 + $0x788] sm:$0xff] %v5389
        %5934 = vst [vmem:[%s712 + $0x790] sm:$0xff] %v5430
        %5935 = vst [vmem:[%s712 + $0x798] sm:$0xff] %v5432
        %5936 = vst [vmem:[%s712 + $0x7a0] sm:$0xff] %v5473
        %5937 = vst [vmem:[%s712 + $0x7a8] sm:$0xff] %v5475
        %5938 = vst [vmem:[%s712 + $0x7b0] sm:$0xff] %v5516
        %5939 = vst [vmem:[%s712 + $0x7b8] sm:$0xff] %v5518
        %5940 = vst [vmem:[%s712 + $0x7c0] sm:$0xff] %v5559
        %5941 = vst [vmem:[%s712 + $0x7c8] sm:$0xff] %v5561
        %5942 = vst [vmem:[%s712 + $0x7d0] sm:$0xff] %v5602
        %5943 = vst [vmem:[%s712 + $0x7d8] sm:$0xff] %v5604
        %5944 = vst [vmem:[%s712 + $0x7e0] sm:$0xff] %v5645
        %5945 = vst [vmem:[%s712 + $0x7e8] sm:$0xff] %v5647
        %5946 = vst [vmem:[%s712 + $0x7f0] sm:$0xff] %v5688
        %5947 = vst [vmem:[%s712 + $0x7f8] sm:$0xff] %v5690
        %s5948 = sand.u32 %s98, 1
        %s5949 = scalar_lea.sflag [#allocation4], %s5948
        %s5950 = sand.u32 %s98, 1
        %s5951 = smul.addr %s5950, 2048
        %s5952 = scalar_lea.vmem [#allocation3], %s5951
        // Predicated region
        $region56: #{decoder_train_forward.3} parent=50 // pred_check
          %p5953 = pneg %p108
        $region57: #{decoder_train_forward.3} parent=50 // pred_check_branch
          %5955 = sbr.rel (%p5953) target = $region59
        $region58: #{decoder_train_forward.3} parent=50 // pred_region
          %s5956 = smul.u32 128, %s17
          %s5957 = ssub.s32 251, %s5956
          %p5958 = scmp.lt.s32.totalorder %s5957, 128
          %s5959 = scalar_select %p5958, %s5957, 128
          %s5960 = smul.u32 256, %s5959
          %s5962 = ssub.s32 32768, %s5960
          %5963 = vsyncadd %s5949, %s5962
          %p5964 = scmp.ne.s32.totalorder 0, %s5960
          %s5965 = smul.addr %s5956, 128
          %s5966 = scalar_lea.hbm %s3, %s5965
          %s5967 = smul.u32 %s5959, 8
          %s5968 = smul.u32 %s5967, 2
          %s5969 = sshll.u32 %s5952, 4
          %s5970 = int_to_ptr.vmem [resolvable:$true] %s5969
          %s5971 = sshll.u32 %s5968, 4
          %5975 = dma.vmem_to_hbm [thread:$0]  (%p5964), %s5970, %s5971, %s5966, %s5949, 16384, 32128, %s5967
        $region59: #{decoder_train_forward.3} parent=50 // pred_fallthru
          _
      $region51: #{decoder_train_forward.3} parent=5 // pred_fallthru
        _
      %p5976 = scmp.le.s32.totalorder 2, %s12
      // Predicated region
      $region60: #{decoder_train_forward.3} parent=5 // pred_check
        %p5977 = pneg %p5976
      $region61: #{decoder_train_forward.3} parent=5 // pred_check_branch
        %5979 = sbr.rel (%p5977) target = $region63
      $region62: #{decoder_train_forward.3} parent=5 // pred_region
        %s5980 = ssub.s32 %s12, 2
        // Predicated region
        $region64: #{decoder_train_forward.3} parent=62 // pred_check
          %p5981 = pneg %p114
        $region65: #{decoder_train_forward.3} parent=62 // pred_check_branch
          %5983 = sbr.rel (%p5981) target = $region67
        $region66: #{decoder_train_forward.3} parent=62 // pred_region
          %s5984 = sand.u32 %s99, 1
          %s5985 = scalar_lea.sflag [#allocation4], %s5984
          %s5986 = sand.u32 %s99, 1
          %s5987 = smul.addr %s5986, 2048
          %s5988 = scalar_lea.vmem [#allocation3], %s5987
          %5989 = dma.done %s5985, 32768
        $region67: #{decoder_train_forward.3} parent=62 // pred_fallthru
          _
      $region63: #{decoder_train_forward.3} parent=5 // pred_fallthru
        _
    $region6: #{decoder_train_forward.3} parent=1 // loop_footer
      %s16 = sadd.s32 1, %s12
    $region7: #{decoder_train_forward.3} parent=1 // loop_footer_branch
      %11 = sbr.rel target = $region3
    $region8: #{decoder_train_forward.3} parent=1 // loop_exit
      _
    %5990 = vsyncpa [#allocation4], 1
    %s5991 = scalar_lea.sflag [#allocation4], 1
    %5992 = vsyncpa %s5991, 1

</llo_original>
